<compile_context>
chip_gen: v7x
topology: tpu7x:2x2x1
jax: 0.10.0
libtpu: 0.0.40
codegen_flags: <defaults>
</compile_context>

<pallas_src>
import functools

import jax
import jax.numpy as jnp
from jax.experimental import pallas as pl
from jax.experimental.pallas import tpu as pltpu


# ---------------------------------------------------------------------------
# Pallas kernel 1: lane-dense transposed GEMM + bias + activation
#   out (N, tm) = act( W (N, K) @ P (K, tm) + b (N, 1) )
# ---------------------------------------------------------------------------
def _gemm_t_bias_act_kernel(w_ref, p_ref, b_ref, o_ref, *, act):
    acc = jnp.dot(w_ref[...], p_ref[...], preferred_element_type=jnp.float32)
    acc = acc + b_ref[...]                      # (N, 1) f32, broadcast over lanes
    if act == "relu":
        acc = jnp.maximum(acc, 0.0)
    elif act == "sigmoid":
        # exp and approximate reciprocal both go to the EUP slot (off the VALU path).
        acc = pl.reciprocal(1.0 + jnp.exp(-acc), approx=True)
    o_ref[...] = acc.astype(o_ref.dtype)


def gemm_t_bias_act(w, p, b, act="none", out_dtype=jnp.float32, tm=512):
    """w: (N, K), p: (K, M), b: (N,) -> act(w @ p + b[:, None]) of shape (N, M)."""
    N, K = w.shape
    K2, M = p.shape
    assert K == K2
    # Tile over M (lane dim). tm is a multiple of 128; if M fits in one tile use the
    # full dim (always a legal block shape).
    tm_eff = M if M <= tm else tm
    grid_m = pl.cdiv(M, tm_eff)
    kernel = functools.partial(_gemm_t_bias_act_kernel, act=act)
    return pl.pallas_call(
        kernel,
        out_shape=jax.ShapeDtypeStruct((N, M), out_dtype),
        grid=(grid_m,),
        in_specs=[
            pl.BlockSpec((N, K), lambda m: (0, 0)),        # weights: resident
            pl.BlockSpec((K, tm_eff), lambda m: (0, m)),   # patches: streamed over M
            pl.BlockSpec((N, 1), lambda m: (0, 0)),        # bias: resident
        ],
        out_specs=pl.BlockSpec((N, tm_eff), lambda m: (0, m)),
        compiler_params=pltpu.CompilerParams(dimension_semantics=("parallel",)),
    )(w.astype(jnp.bfloat16), p.astype(jnp.bfloat16),
      b.reshape(N, 1).astype(jnp.float32))


# ---------------------------------------------------------------------------
# Pallas kernel 2: fused fc_enc (no act) + fc_dec (ReLU)
#   d = relu( (x @ We + be) @ Wd + bd );  the latent z never leaves VMEM/vregs.
# ---------------------------------------------------------------------------
def _fc_fused_kernel(x_ref, we_ref, be_ref, wd_ref, bd_ref, o_ref):
    z = jnp.dot(x_ref[...], we_ref[...], preferred_element_type=jnp.float32)
    z = z + be_ref[...]                                        # encoder Linear
    d = jnp.dot(z.astype(jnp.bfloat16), wd_ref[...],
                preferred_element_type=jnp.float32)
    d = jnp.maximum(d + bd_ref[...], 0.0)                      # decoder Linear + ReLU
    o_ref[...] = d.astype(o_ref.dtype)


def fc_enc_dec(flat, we, be, wd, bd, out_dtype=jnp.float32, tb=128):
    """flat: (B, Din); we: (L, Din); wd: (Dout, L)  ->  (B, Dout) lane-dense output."""
    B, Din = flat.shape
    L = we.shape[0]
    Dout = wd.shape[0]
    tb_eff = B if B <= tb else tb
    grid_b = pl.cdiv(B, tb_eff)
    return pl.pallas_call(
        _fc_fused_kernel,
        out_shape=jax.ShapeDtypeStruct((B, Dout), out_dtype),
        grid=(grid_b,),
        in_specs=[
            pl.BlockSpec((tb_eff, Din), lambda i: (i, 0)),
            pl.BlockSpec((Din, L), lambda i: (0, 0)),
            pl.BlockSpec((1, L), lambda i: (0, 0)),
            pl.BlockSpec((L, Dout), lambda i: (0, 0)),
            pl.BlockSpec((1, Dout), lambda i: (0, 0)),
        ],
        out_specs=pl.BlockSpec((tb_eff, Dout), lambda i: (i, 0)),
        compiler_params=pltpu.CompilerParams(dimension_semantics=("parallel",)),
    )(flat.astype(jnp.bfloat16),
      we.T.astype(jnp.bfloat16), be.reshape(1, L).astype(jnp.float32),
      wd.T.astype(jnp.bfloat16), bd.reshape(1, Dout).astype(jnp.float32))


# ---------------------------------------------------------------------------
# Plain-JAX glue (channel-first activations: (C, B, H, W))
# ---------------------------------------------------------------------------
def _im2col_cf(x_cf, kh, kw, stride, pad):
    """x_cf: (C, B, H, W) -> patches (C*kh*kw, B*Ho*Wo); K ordered (C, kh, kw) to match
    PyTorch's weight.reshape(O, C*kh*kw). No transposes needed in this layout."""
    C, B, H, W = x_cf.shape
    xp = jnp.pad(x_cf, ((0, 0), (0, 0), (pad, pad), (pad, pad)))
    Ho = (H + 2 * pad - kh) // stride + 1
    Wo = (W + 2 * pad - kw) // stride + 1
    slices = []
    for i in range(kh):
        for j in range(kw):
            slices.append(xp[:, :, i:i + stride * Ho:stride, j:j + stride * Wo:stride])
    p = jnp.stack(slices, axis=1)                      # (C, kh*kw, B, Ho, Wo)
    return p.reshape(C * kh * kw, B * Ho * Wo), Ho, Wo


def _dilate_and_pad_cf(x_cf, stride, pad_lo, pad_hi):
    C, B, H, W = x_cf.shape
    Hd = (H - 1) * stride + 1
    Wd = (W - 1) * stride + 1
    y = jnp.zeros((C, B, Hd, Wd), x_cf.dtype).at[:, :, ::stride, ::stride].set(x_cf)
    return jnp.pad(y, ((0, 0), (0, 0), (pad_lo, pad_hi), (pad_lo, pad_hi)))


def conv2d_cf(x_cf, w, b, stride, pad, act, out_dtype=jnp.float32):
    """PyTorch Conv2d: w (O, C, kh, kw). Channel-first in/out: (C,B,H,W)->(O,B,Ho,Wo)."""
    O, C, kh, kw = w.shape
    B = x_cf.shape[1]
    patches, Ho, Wo = _im2col_cf(x_cf, kh, kw, stride, pad)
    wmat = w.reshape(O, C * kh * kw)
    y = gemm_t_bias_act(wmat, patches, b, act, out_dtype=out_dtype)   # (O, B*Ho*Wo)
    return y.reshape(O, B, Ho, Wo)


def conv_transpose2d_cf(x_cf, w, b, stride, pad, out_pad, act, out_dtype=jnp.float32):
    """PyTorch ConvTranspose2d: w (Cin, Cout, kh, kw). Lowered to
    zero-dilate + asymmetric pad + stride-1 conv with spatially flipped kernel."""
    Cin, Cout, kh, kw = w.shape
    B = x_cf.shape[1]
    pad_lo = kh - 1 - pad
    pad_hi = kh - 1 - pad + out_pad
    xd = _dilate_and_pad_cf(x_cf, stride, pad_lo, pad_hi)
    patches, Ho, Wo = _im2col_cf(xd, kh, kw, 1, 0)
    w_eq = jnp.flip(w, axis=(2, 3)).transpose(1, 0, 2, 3)             # (Cout, Cin, kh, kw)
    wmat = w_eq.reshape(Cout, Cin * kh * kw)
    y = gemm_t_bias_act(wmat, patches, b, act, out_dtype=out_dtype)   # (Cout, B*Ho*Wo)
    return y.reshape(Cout, B, Ho, Wo)


# ---------------------------------------------------------------------------
# Model: deterministic parameter init (PyTorch-like uniform, fixed PRNG key)
# ---------------------------------------------------------------------------
LATENT_DIM = 32


def init_params(key, latent_dim=LATENT_DIM):
    ks = jax.random.split(key, 12)

    def u(k, shape, fan_in):
        bound = 1.0 / jnp.sqrt(jnp.float32(fan_in))
        return jax.random.uniform(k, shape, jnp.float32, -bound, bound)

    return {
        "conv1_w": u(ks[0], (32, 1, 3, 3), 1 * 9),
        "conv1_b": u(ks[1], (32,), 1 * 9),
        "conv2_w": u(ks[2], (64, 32, 3, 3), 32 * 9),
        "conv2_b": u(ks[3], (64,), 32 * 9),
        "fc_enc_w": u(ks[4], (latent_dim, 64 * 7 * 7), 64 * 7 * 7),
        "fc_enc_b": u(ks[5], (latent_dim,), 64 * 7 * 7),
        "fc_dec_w": u(ks[6], (64 * 7 * 7, latent_dim), latent_dim),
        "fc_dec_b": u(ks[7], (64 * 7 * 7,), latent_dim),
        "deconv1_w": u(ks[8], (64, 32, 3, 3), 64 * 9),   # ConvTranspose2d: (Cin, Cout, kh, kw)
        "deconv1_b": u(ks[9], (32,), 64 * 9),
        "deconv2_w": u(ks[10], (32, 1, 3, 3), 32 * 9),
        "deconv2_b": u(ks[11], (1,), 32 * 9),
    }


def autoencoder_forward(params, x):
    """x: (B, 1, 28, 28) NCHW float32 -> (B, 1, 28, 28) float32."""
    B = x.shape[0]
    x_cf = x.transpose(1, 0, 2, 3)                                           # (1, B, 28, 28)
    # encoder
    h = conv2d_cf(x_cf, params["conv1_w"], params["conv1_b"], 2, 1, "relu",
                  out_dtype=jnp.bfloat16)                                    # (32, B, 14, 14)
    h = conv2d_cf(h, params["conv2_w"], params["conv2_b"], 2, 1, "relu",
                  out_dtype=jnp.bfloat16)                                    # (64, B, 7, 7)
    flat = h.transpose(1, 0, 2, 3).reshape(B, -1)                            # nn.Flatten: (C,H,W) order
    # fused fc_enc + fc_dec (latent never touches HBM)
    d = fc_enc_dec(flat, params["fc_enc_w"], params["fc_enc_b"],
                   params["fc_dec_w"], params["fc_dec_b"],
                   out_dtype=jnp.bfloat16)                                   # (B, 3136)
    # decoder
    d = d.reshape(B, 64, 7, 7).transpose(1, 0, 2, 3)                         # nn.Unflatten -> (64, B, 7, 7)
    d = conv_transpose2d_cf(d, params["deconv1_w"], params["deconv1_b"], 2, 1, 1,
                            "relu", out_dtype=jnp.bfloat16)                  # (32, B, 14, 14)
    d = conv_transpose2d_cf(d, params["deconv2_w"], params["deconv2_b"], 2, 1, 1,
                            "sigmoid", out_dtype=jnp.float32)                # (1, B, 28, 28)
    return d.transpose(1, 0, 2, 3)                                           # (B, 1, 28, 28)


# ---------------------------------------------------------------------------
# Pure-JAX f32 reference (XLA convs) for correctness check
# ---------------------------------------------------------------------------
def reference_forward(params, x):
    def conv(h, w, b, stride, pad, lhs_dil=None, extra_hi=0):
        dn = jax.lax.conv_dimension_numbers(h.shape, w.shape, ("NCHW", "OIHW", "NCHW"))
        return jax.lax.conv_general_dilated(
            h, w, (stride, stride),
            [(pad, pad + extra_hi), (pad, pad + extra_hi)],
            lhs_dilation=lhs_dil, dimension_numbers=dn,
        ) + b[None, :, None, None]

    B = x.shape[0]
    h = jax.nn.relu(conv(x, params["conv1_w"], params["conv1_b"], 2, 1))
    h = jax.nn.relu(conv(h, params["conv2_w"], params["conv2_b"], 2, 1))
    z = h.reshape(B, -1) @ params["fc_enc_w"].T + params["fc_enc_b"]
    d = jax.nn.relu(z @ params["fc_dec_w"].T + params["fc_dec_b"]).reshape(B, 64, 7, 7)
    w1 = jnp.flip(params["deconv1_w"], axis=(2, 3)).transpose(1, 0, 2, 3)
    d = jax.nn.relu(conv(d, w1, params["deconv1_b"], 1, 1, lhs_dil=(2, 2), extra_hi=1))
    w2 = jnp.flip(params["deconv2_w"], axis=(2, 3)).transpose(1, 0, 2, 3)
    d = jax.nn.sigmoid(conv(d, w2, params["deconv2_b"], 1, 1, lhs_dil=(2, 2), extra_hi=1))
    return d


if __name__ == "__main__":
    key = jax.random.PRNGKey(0)
    k_param, k_x = jax.random.split(key)
    params = init_params(k_param)
    # batch=2, channels=1, spatial=28x28 (implied by the 64*7*7 Linear in the module)
    x = jax.random.uniform(k_x, (2, 1, 28, 28), jnp.float32)

    out = jax.jit(autoencoder_forward)(params, x)
    out = jax.block_until_ready(out)
    assert out.shape == (2, 1, 28, 28), out.shape
    assert out.dtype == jnp.float32

    ref = jax.block_until_ready(reference_forward(params, x))
    # Tolerance accounts for bf16 MXU operands / bf16 intermediate activations vs the
    # all-f32 XLA reference; ordering bugs would produce O(0.2+) errors.
    max_err = float(jnp.max(jnp.abs(out - ref)))
    assert max_err < 5e-2, f"mismatch vs reference: {max_err}"

    print("KERNEL_OK")
</pallas_src>

<mosaic_0001>
module attributes {stable_mosaic.version = 11 : i64} {
  func.func @_gemm_t_bias_act_kernel(%arg0: i32, %arg1: memref<32x9xbf16, #tpu.memory_space<vmem>>, %arg2: memref<9x392xbf16, #tpu.memory_space<vmem>>, %arg3: memref<32x1xf32, #tpu.memory_space<vmem>>, %arg4: memref<32x392xbf16, #tpu.memory_space<vmem>>) attributes {dimension_semantics = [#tpu.dimension_semantics<parallel>], iteration_bounds = array<i64: 1>, scalar_prefetch = 0 : i64, scratch_operands = 0 : i64, tpu.core_type = #tpu.core_type<tc>, window_params = [{pipeline_mode = #tpu.pipeline_mode<synchronous>, transform_indices = @transform_0, window_bounds = array<i64: 32, 9>}, {transform_indices = @transform_1, window_bounds = array<i64: 9, 392>}, {pipeline_mode = #tpu.pipeline_mode<synchronous>, transform_indices = @transform_2, window_bounds = array<i64: 32, 1>}, {transform_indices = @transform_3, window_bounds = array<i64: 32, 392>}]} {
    %c0 = arith.constant 0 : index
    %c0_0 = arith.constant 0 : index
    %0 = vector.load %arg1[%c0, %c0_0] : memref<32x9xbf16, #tpu.memory_space<vmem>>, vector<32x9xbf16>
    %c0_1 = arith.constant 0 : index
    %c0_2 = arith.constant 0 : index
    %1 = vector.load %arg2[%c0_1, %c0_2] : memref<9x392xbf16, #tpu.memory_space<vmem>>, vector<9x392xbf16>
    %cst = arith.constant dense<0.000000e+00> : vector<32x392xf32>
    %2 = tpu.matmul %0, %1, %cst {dimension_numbers = #tpu.dot_dimension_numbers<[1], [0], [0], [1], [0, 0, 1, 1], [], []>} : vector<32x9xbf16>, vector<9x392xbf16>, vector<32x392xf32> -> vector<32x392xf32>
    %c0_3 = arith.constant 0 : index
    %c0_4 = arith.constant 0 : index
    %3 = vector.load %arg3[%c0_3, %c0_4] : memref<32x1xf32, #tpu.memory_space<vmem>>, vector<32x1xf32>
    %4 = vector.broadcast %3 : vector<32x1xf32> to vector<32x392xf32>
    %5 = arith.addf %2, %4 : vector<32x392xf32>
    %cst_5 = arith.constant 0.000000e+00 : f32
    %6 = vector.broadcast %cst_5 : f32 to vector<32x392xf32>
    %7 = arith.maximumf %5, %6 : vector<32x392xf32>
    %8 = arith.truncf %7 : vector<32x392xf32> to vector<32x392xbf16>
    %c0_6 = arith.constant 0 : index
    %c0_7 = arith.constant 0 : index
    %9 = vector.load %arg4[%c0_6, %c0_7] : memref<32x392xbf16, #tpu.memory_space<vmem>>, vector<32x392xbf16>
    tpu.vector_store %arg4[%c0_6, %c0_7], %8 {strides = array<i32>} : memref<32x392xbf16, #tpu.memory_space<vmem>>, vector<32x392xbf16>,
    return
  }
  func.func @transform_0(%arg0: i32) -> (i32, i32) {
    %c0_i32 = arith.constant 0 : i32
    %c0_i32_0 = arith.constant 0 : i32
    %c0_i32_1 = arith.constant 0 : i32
    return %c0_i32, %c0_i32_0 : i32, i32
  }
  func.func @transform_1(%arg0: i32) -> (i32, i32) {
    %c0_i32 = arith.constant 0 : i32
    %c0_i32_0 = arith.constant 0 : i32
    return %c0_i32, %arg0 : i32, i32
  }
  func.func @transform_2(%arg0: i32) -> (i32, i32) {
    %c0_i32 = arith.constant 0 : i32
    %c0_i32_0 = arith.constant 0 : i32
    %c0_i32_1 = arith.constant 0 : i32
    return %c0_i32, %c0_i32_0 : i32, i32
  }
  func.func @transform_3(%arg0: i32) -> (i32, i32) {
    %c0_i32 = arith.constant 0 : i32
    %c0_i32_0 = arith.constant 0 : i32
    return %c0_i32, %arg0 : i32, i32
  }
}

module attributes {stable_mosaic.version = 11 : i64} {
  func.func @_gemm_t_bias_act_kernel(%arg0: i32, %arg1: memref<64x288xbf16, #tpu.memory_space<vmem>>, %arg2: memref<288x98xbf16, #tpu.memory_space<vmem>>, %arg3: memref<64x1xf32, #tpu.memory_space<vmem>>, %arg4: memref<64x98xbf16, #tpu.memory_space<vmem>>) attributes {dimension_semantics = [#tpu.dimension_semantics<parallel>], iteration_bounds = array<i64: 1>, scalar_prefetch = 0 : i64, scratch_operands = 0 : i64, tpu.core_type = #tpu.core_type<tc>, window_params = [{pipeline_mode = #tpu.pipeline_mode<synchronous>, transform_indices = @transform_0, window_bounds = array<i64: 64, 288>}, {transform_indices = @transform_1, window_bounds = array<i64: 288, 98>}, {pipeline_mode = #tpu.pipeline_mode<synchronous>, transform_indices = @transform_2, window_bounds = array<i64: 64, 1>}, {transform_indices = @transform_3, window_bounds = array<i64: 64, 98>}]} {
    %c0 = arith.constant 0 : index
    %c0_0 = arith.constant 0 : index
    %0 = vector.load %arg1[%c0, %c0_0] : memref<64x288xbf16, #tpu.memory_space<vmem>>, vector<64x288xbf16>
    %c0_1 = arith.constant 0 : index
    %c0_2 = arith.constant 0 : index
    %1 = vector.load %arg2[%c0_1, %c0_2] : memref<288x98xbf16, #tpu.memory_space<vmem>>, vector<288x98xbf16>
    %cst = arith.constant dense<0.000000e+00> : vector<64x98xf32>
    %2 = tpu.matmul %0, %1, %cst {dimension_numbers = #tpu.dot_dimension_numbers<[1], [0], [0], [1], [0, 0, 1, 1], [], []>} : vector<64x288xbf16>, vector<288x98xbf16>, vector<64x98xf32> -> vector<64x98xf32>
    %c0_3 = arith.constant 0 : index
    %c0_4 = arith.constant 0 : index
    %3 = vector.load %arg3[%c0_3, %c0_4] : memref<64x1xf32, #tpu.memory_space<vmem>>, vector<64x1xf32>
    %4 = vector.broadcast %3 : vector<64x1xf32> to vector<64x98xf32>
    %5 = arith.addf %2, %4 : vector<64x98xf32>
    %cst_5 = arith.constant 0.000000e+00 : f32
    %6 = vector.broadcast %cst_5 : f32 to vector<64x98xf32>
    %7 = arith.maximumf %5, %6 : vector<64x98xf32>
    %8 = arith.truncf %7 : vector<64x98xf32> to vector<64x98xbf16>
    %c0_6 = arith.constant 0 : index
    %c0_7 = arith.constant 0 : index
    %9 = vector.load %arg4[%c0_6, %c0_7] : memref<64x98xbf16, #tpu.memory_space<vmem>>, vector<64x98xbf16>
    tpu.vector_store %arg4[%c0_6, %c0_7], %8 {strides = array<i32>} : memref<64x98xbf16, #tpu.memory_space<vmem>>, vector<64x98xbf16>,
    return
  }
  func.func @transform_0(%arg0: i32) -> (i32, i32) {
    %c0_i32 = arith.constant 0 : i32
    %c0_i32_0 = arith.constant 0 : i32
    %c0_i32_1 = arith.constant 0 : i32
    return %c0_i32, %c0_i32_0 : i32, i32
  }
  func.func @transform_1(%arg0: i32) -> (i32, i32) {
    %c0_i32 = arith.constant 0 : i32
    %c0_i32_0 = arith.constant 0 : i32
    return %c0_i32, %arg0 : i32, i32
  }
  func.func @transform_2(%arg0: i32) -> (i32, i32) {
    %c0_i32 = arith.constant 0 : i32
    %c0_i32_0 = arith.constant 0 : i32
    %c0_i32_1 = arith.constant 0 : i32
    return %c0_i32, %c0_i32_0 : i32, i32
  }
  func.func @transform_3(%arg0: i32) -> (i32, i32) {
    %c0_i32 = arith.constant 0 : i32
    %c0_i32_0 = arith.constant 0 : i32
    return %c0_i32, %arg0 : i32, i32
  }
}

module attributes {stable_mosaic.version = 11 : i64} {
  func.func @_fc_fused_kernel(%arg0: i32, %arg1: memref<2x3136xbf16, #tpu.memory_space<vmem>>, %arg2: memref<3136x32xbf16, #tpu.memory_space<vmem>>, %arg3: memref<1x32xf32, #tpu.memory_space<vmem>>, %arg4: memref<32x3136xbf16, #tpu.memory_space<vmem>>, %arg5: memref<1x3136xf32, #tpu.memory_space<vmem>>, %arg6: memref<2x3136xbf16, #tpu.memory_space<vmem>>) attributes {dimension_semantics = [#tpu.dimension_semantics<parallel>], iteration_bounds = array<i64: 1>, scalar_prefetch = 0 : i64, scratch_operands = 0 : i64, tpu.core_type = #tpu.core_type<tc>, window_params = [{transform_indices = @transform_0, window_bounds = array<i64: 2, 3136>}, {pipeline_mode = #tpu.pipeline_mode<synchronous>, transform_indices = @transform_1, window_bounds = array<i64: 3136, 32>}, {pipeline_mode = #tpu.pipeline_mode<synchronous>, transform_indices = @transform_2, window_bounds = array<i64: 1, 32>}, {pipeline_mode = #tpu.pipeline_mode<synchronous>, transform_indices = @transform_3, window_bounds = array<i64: 32, 3136>}, {pipeline_mode = #tpu.pipeline_mode<synchronous>, transform_indices = @transform_4, window_bounds = array<i64: 1, 3136>}, {transform_indices = @transform_5, window_bounds = array<i64: 2, 3136>}]} {
    %c0 = arith.constant 0 : index
    %c0_0 = arith.constant 0 : index
    %0 = vector.load %arg1[%c0, %c0_0] : memref<2x3136xbf16, #tpu.memory_space<vmem>>, vector<2x3136xbf16>
    %c0_1 = arith.constant 0 : index
    %c0_2 = arith.constant 0 : index
    %1 = vector.load %arg2[%c0_1, %c0_2] : memref<3136x32xbf16, #tpu.memory_space<vmem>>, vector<3136x32xbf16>
    %cst = arith.constant dense<0.000000e+00> : vector<2x32xf32>
    %2 = tpu.matmul %0, %1, %cst {dimension_numbers = #tpu.dot_dimension_numbers<[1], [0], [0], [1], [0, 0, 1, 1], [], []>} : vector<2x3136xbf16>, vector<3136x32xbf16>, vector<2x32xf32> -> vector<2x32xf32>
    %c0_3 = arith.constant 0 : index
    %c0_4 = arith.constant 0 : index
    %3 = vector.load %arg3[%c0_3, %c0_4] : memref<1x32xf32, #tpu.memory_space<vmem>>, vector<1x32xf32>
    %4 = vector.broadcast %3 : vector<1x32xf32> to vector<2x32xf32>
    %5 = arith.addf %2, %4 : vector<2x32xf32>
    %6 = arith.truncf %5 : vector<2x32xf32> to vector<2x32xbf16>
    %c0_5 = arith.constant 0 : index
    %c0_6 = arith.constant 0 : index
    %7 = vector.load %arg4[%c0_5, %c0_6] : memref<32x3136xbf16, #tpu.memory_space<vmem>>, vector<32x3136xbf16>
    %cst_7 = arith.constant dense<0.000000e+00> : vector<2x3136xf32>
    %8 = tpu.matmul %6, %7, %cst_7 {dimension_numbers = #tpu.dot_dimension_numbers<[1], [0], [0], [1], [0, 0, 1, 1], [], []>} : vector<2x32xbf16>, vector<32x3136xbf16>, vector<2x3136xf32> -> vector<2x3136xf32>
    %c0_8 = arith.constant 0 : index
    %c0_9 = arith.constant 0 : index
    %9 = vector.load %arg5[%c0_8, %c0_9] : memref<1x3136xf32, #tpu.memory_space<vmem>>, vector<1x3136xf32>
    %10 = vector.broadcast %9 : vector<1x3136xf32> to vector<2x3136xf32>
    %11 = arith.addf %8, %10 : vector<2x3136xf32>
    %cst_10 = arith.constant 0.000000e+00 : f32
    %12 = vector.broadcast %cst_10 : f32 to vector<2x3136xf32>
    %13 = arith.maximumf %11, %12 : vector<2x3136xf32>
    %14 = arith.truncf %13 : vector<2x3136xf32> to vector<2x3136xbf16>
    %c0_11 = arith.constant 0 : index
    %c0_12 = arith.constant 0 : index
    %15 = vector.load %arg6[%c0_11, %c0_12] : memref<2x3136xbf16, #tpu.memory_space<vmem>>, vector<2x3136xbf16>
    tpu.vector_store %arg6[%c0_11, %c0_12], %14 {strides = array<i32>} : memref<2x3136xbf16, #tpu.memory_space<vmem>>, vector<2x3136xbf16>,
    return
  }
  func.func @transform_0(%arg0: i32) -> (i32, i32) {
    %c0_i32 = arith.constant 0 : i32
    %c0_i32_0 = arith.constant 0 : i32
    return %arg0, %c0_i32 : i32, i32
  }
  func.func @transform_1(%arg0: i32) -> (i32, i32) {
    %c0_i32 = arith.constant 0 : i32
    %c0_i32_0 = arith.constant 0 : i32
    %c0_i32_1 = arith.constant 0 : i32
    return %c0_i32, %c0_i32_0 : i32, i32
  }
  func.func @transform_2(%arg0: i32) -> (i32, i32) {
    %c0_i32 = arith.constant 0 : i32
    %c0_i32_0 = arith.constant 0 : i32
    %c0_i32_1 = arith.constant 0 : i32
    return %c0_i32, %c0_i32_0 : i32, i32
  }
  func.func @transform_3(%arg0: i32) -> (i32, i32) {
    %c0_i32 = arith.constant 0 : i32
    %c0_i32_0 = arith.constant 0 : i32
    %c0_i32_1 = arith.constant 0 : i32
    return %c0_i32, %c0_i32_0 : i32, i32
  }
  func.func @transform_4(%arg0: i32) -> (i32, i32) {
    %c0_i32 = arith.constant 0 : i32
    %c0_i32_0 = arith.constant 0 : i32
    %c0_i32_1 = arith.constant 0 : i32
    return %c0_i32, %c0_i32_0 : i32, i32
  }
  func.func @transform_5(%arg0: i32) -> (i32, i32) {
    %c0_i32 = arith.constant 0 : i32
    %c0_i32_0 = arith.constant 0 : i32
    return %arg0, %c0_i32 : i32, i32
  }
}

module attributes {stable_mosaic.version = 11 : i64} {
  func.func @_gemm_t_bias_act_kernel(%arg0: i32, %arg1: memref<32x576xbf16, #tpu.memory_space<vmem>>, %arg2: memref<576x392xbf16, #tpu.memory_space<vmem>>, %arg3: memref<32x1xf32, #tpu.memory_space<vmem>>, %arg4: memref<32x392xbf16, #tpu.memory_space<vmem>>) attributes {dimension_semantics = [#tpu.dimension_semantics<parallel>], iteration_bounds = array<i64: 1>, scalar_prefetch = 0 : i64, scratch_operands = 0 : i64, tpu.core_type = #tpu.core_type<tc>, window_params = [{pipeline_mode = #tpu.pipeline_mode<synchronous>, transform_indices = @transform_0, window_bounds = array<i64: 32, 576>}, {transform_indices = @transform_1, window_bounds = array<i64: 576, 392>}, {pipeline_mode = #tpu.pipeline_mode<synchronous>, transform_indices = @transform_2, window_bounds = array<i64: 32, 1>}, {transform_indices = @transform_3, window_bounds = array<i64: 32, 392>}]} {
    %c0 = arith.constant 0 : index
    %c0_0 = arith.constant 0 : index
    %0 = vector.load %arg1[%c0, %c0_0] : memref<32x576xbf16, #tpu.memory_space<vmem>>, vector<32x576xbf16>
    %c0_1 = arith.constant 0 : index
    %c0_2 = arith.constant 0 : index
    %1 = vector.load %arg2[%c0_1, %c0_2] : memref<576x392xbf16, #tpu.memory_space<vmem>>, vector<576x392xbf16>
    %cst = arith.constant dense<0.000000e+00> : vector<32x392xf32>
    %2 = tpu.matmul %0, %1, %cst {dimension_numbers = #tpu.dot_dimension_numbers<[1], [0], [0], [1], [0, 0, 1, 1], [], []>} : vector<32x576xbf16>, vector<576x392xbf16>, vector<32x392xf32> -> vector<32x392xf32>
    %c0_3 = arith.constant 0 : index
    %c0_4 = arith.constant 0 : index
    %3 = vector.load %arg3[%c0_3, %c0_4] : memref<32x1xf32, #tpu.memory_space<vmem>>, vector<32x1xf32>
    %4 = vector.broadcast %3 : vector<32x1xf32> to vector<32x392xf32>
    %5 = arith.addf %2, %4 : vector<32x392xf32>
    %cst_5 = arith.constant 0.000000e+00 : f32
    %6 = vector.broadcast %cst_5 : f32 to vector<32x392xf32>
    %7 = arith.maximumf %5, %6 : vector<32x392xf32>
    %8 = arith.truncf %7 : vector<32x392xf32> to vector<32x392xbf16>
    %c0_6 = arith.constant 0 : index
    %c0_7 = arith.constant 0 : index
    %9 = vector.load %arg4[%c0_6, %c0_7] : memref<32x392xbf16, #tpu.memory_space<vmem>>, vector<32x392xbf16>
    tpu.vector_store %arg4[%c0_6, %c0_7], %8 {strides = array<i32>} : memref<32x392xbf16, #tpu.memory_space<vmem>>, vector<32x392xbf16>,
    return
  }
  func.func @transform_0(%arg0: i32) -> (i32, i32) {
    %c0_i32 = arith.constant 0 : i32
    %c0_i32_0 = arith.constant 0 : i32
    %c0_i32_1 = arith.constant 0 : i32
    return %c0_i32, %c0_i32_0 : i32, i32
  }
  func.func @transform_1(%arg0: i32) -> (i32, i32) {
    %c0_i32 = arith.constant 0 : i32
    %c0_i32_0 = arith.constant 0 : i32
    return %c0_i32, %arg0 : i32, i32
  }
  func.func @transform_2(%arg0: i32) -> (i32, i32) {
    %c0_i32 = arith.constant 0 : i32
    %c0_i32_0 = arith.constant 0 : i32
    %c0_i32_1 = arith.constant 0 : i32
    return %c0_i32, %c0_i32_0 : i32, i32
  }
  func.func @transform_3(%arg0: i32) -> (i32, i32) {
    %c0_i32 = arith.constant 0 : i32
    %c0_i32_0 = arith.constant 0 : i32
    return %c0_i32, %arg0 : i32, i32
  }
}

module attributes {stable_mosaic.version = 11 : i64} {
  func.func @_gemm_t_bias_act_kernel(%arg0: i32, %arg1: memref<1x288xbf16, #tpu.memory_space<vmem>>, %arg2: memref<288x512xbf16, #tpu.memory_space<vmem>>, %arg3: memref<1x1xf32, #tpu.memory_space<vmem>>, %arg4: memref<1x512xf32, #tpu.memory_space<vmem>>) attributes {dimension_semantics = [#tpu.dimension_semantics<parallel>], iteration_bounds = array<i64: 4>, scalar_prefetch = 0 : i64, scratch_operands = 0 : i64, tpu.core_type = #tpu.core_type<tc>, window_params = [{pipeline_mode = #tpu.pipeline_mode<synchronous>, transform_indices = @transform_0, window_bounds = array<i64: 1, 288>}, {transform_indices = @transform_1, window_bounds = array<i64: 288, 512>}, {pipeline_mode = #tpu.pipeline_mode<synchronous>, transform_indices = @transform_2, window_bounds = array<i64: 1, 1>}, {transform_indices = @transform_3, window_bounds = array<i64: 1, 512>}]} {
    %c0 = arith.constant 0 : index
    %c0_0 = arith.constant 0 : index
    %0 = vector.load %arg1[%c0, %c0_0] : memref<1x288xbf16, #tpu.memory_space<vmem>>, vector<1x288xbf16>
    %c0_1 = arith.constant 0 : index
    %c0_2 = arith.constant 0 : index
    %1 = vector.load %arg2[%c0_1, %c0_2] : memref<288x512xbf16, #tpu.memory_space<vmem>>, vector<288x512xbf16>
    %cst = arith.constant dense<0.000000e+00> : vector<1x512xf32>
    %2 = tpu.matmul %0, %1, %cst {dimension_numbers = #tpu.dot_dimension_numbers<[1], [0], [0], [1], [0, 0, 1, 1], [], []>} : vector<1x288xbf16>, vector<288x512xbf16>, vector<1x512xf32> -> vector<1x512xf32>
    %c0_3 = arith.constant 0 : index
    %c0_4 = arith.constant 0 : index
    %3 = vector.load %arg3[%c0_3, %c0_4] : memref<1x1xf32, #tpu.memory_space<vmem>>, vector<1x1xf32>
    %4 = vector.broadcast %3 : vector<1x1xf32> to vector<1x512xf32>
    %5 = arith.addf %2, %4 : vector<1x512xf32>
    %cst_5 = arith.constant 0.000000e+00 : f32
    %6 = vector.broadcast %cst_5 : f32 to vector<1x512xf32>
    %7 = arith.subf %6, %5 : vector<1x512xf32>
    %8 = math.exp %7 : vector<1x512xf32>
    %cst_6 = arith.constant 1.000000e+00 : f32
    %9 = vector.broadcast %cst_6 : f32 to vector<1x512xf32>
    %10 = arith.addf %9, %8 : vector<1x512xf32>
    %11 = tpu.reciprocal %10 {approx = true} : vector<1x512xf32> -> vector<1x512xf32>
    %c0_7 = arith.constant 0 : index
    %c0_8 = arith.constant 0 : index
    %12 = vector.load %arg4[%c0_7, %c0_8] : memref<1x512xf32, #tpu.memory_space<vmem>>, vector<1x512xf32>
    tpu.vector_store %arg4[%c0_7, %c0_8], %11 {strides = array<i32>} : memref<1x512xf32, #tpu.memory_space<vmem>>, vector<1x512xf32>,
    return
  }
  func.func @transform_0(%arg0: i32) -> (i32, i32) {
    %c0_i32 = arith.constant 0 : i32
    %c0_i32_0 = arith.constant 0 : i32
    %c0_i32_1 = arith.constant 0 : i32
    return %c0_i32, %c0_i32_0 : i32, i32
  }
  func.func @transform_1(%arg0: i32) -> (i32, i32) {
    %c0_i32 = arith.constant 0 : i32
    %c0_i32_0 = arith.constant 0 : i32
    return %c0_i32, %arg0 : i32, i32
  }
  func.func @transform_2(%arg0: i32) -> (i32, i32) {
    %c0_i32 = arith.constant 0 : i32
    %c0_i32_0 = arith.constant 0 : i32
    %c0_i32_1 = arith.constant 0 : i32
    return %c0_i32, %c0_i32_0 : i32, i32
  }
  func.func @transform_3(%arg0: i32) -> (i32, i32) {
    %c0_i32 = arith.constant 0 : i32
    %c0_i32_0 = arith.constant 0 : i32
    return %c0_i32, %arg0 : i32, i32
  }
}

</mosaic_0001>

<llo_original>
// kernel: autoencoder_forward.5
$region0: #{autoencoder_forward.5}
  #allocation0 [shape = 'u32[]', space=smem, size = 0x4, offset = 0x4, fixed_abs, tag = 'smem constant byte address 0x4 - core index']
  #allocation1 [shape = 'u32[144,128]{1,0:T(1,128)}', space=vmem, size = 0x12000, scoped, tag = 'internal scratch']
  %s0 = inlined_call_operand.vmem [shape: bf16[32,9], index: 0, kind: input, shape index: {}]
  %s1 = inlined_call_operand.vmem [shape: bf16[9,392], index: 1, kind: input, shape index: {}]
  %s2 = inlined_call_operand.vmem [shape: f32[32,1], index: 2, kind: input, shape index: {}]
  %s3 = inlined_call_operand.vmem [shape: bf16[32,392], index: 3, kind: output, shape index: {}]
  %s4 = sld [smem:[#allocation0]]
  $region22: #{autoencoder_forward.5} parent=0
    _
  %s6 = ssub.s32 1, %s4
  %s7 = scalar_select 0, %s6, %s4
  // Predicated region
  $region2: #{autoencoder_forward.5} parent=0 // pred_check
    _
  $region3: #{autoencoder_forward.5} parent=0 // pred_check_branch
    %9 = sbr.rel (0) target = $region5
  $region4: #{autoencoder_forward.5} parent=0 // pred_region
    _
  $region5: #{autoencoder_forward.5} parent=0 // pred_fallthru
    _
  // Predicated region
  $region6: #{autoencoder_forward.5} parent=0 // pred_check
    _
  $region7: #{autoencoder_forward.5} parent=0 // pred_check_branch
    %11 = sbr.rel (0) target = $region9
  $region8: #{autoencoder_forward.5} parent=0 // pred_region
    _
  $region9: #{autoencoder_forward.5} parent=0 // pred_fallthru
    _
  // Predicated region
  $region10: #{autoencoder_forward.5} parent=0 // pred_check
    _
  $region11: #{autoencoder_forward.5} parent=0 // pred_check_branch
    %13 = sbr.rel (0) target = $region13
  $region12: #{autoencoder_forward.5} parent=0 // pred_region
    _
  $region13: #{autoencoder_forward.5} parent=0 // pred_fallthru
    _
  %v15 = vld [vmem:[%s0] sm:$0xf]
  %v16 = vld [vmem:[%s0 + $0x4] sm:$0xf]
  %v17 = vld [vmem:[%s0 + $0x8] sm:$0xf]
  %v18 = vld [vmem:[%s0 + $0xc] sm:$0xf]
  %v19 = vld [vmem:[%s1] sm:$0xff]
  %v20 = vld [vmem:[%s1 + $0x8] sm:$0xff]
  %v21 = vld [vmem:[%s1 + $0x10] sm:$0x11]
  %v22 = vld [vmem:[%s1 + $0x18] sm:$0x11]
  %v23 = vld [vmem:[%s2] sm:$0xff]
  %v24 = vld [vmem:[%s2 + $0x8] sm:$0xff]
  %v25 = vld [vmem:[%s2 + $0x10] sm:$0xff]
  %v26 = vld [vmem:[%s2 + $0x18] sm:$0xff]
  %28 = vset.pattern.permute.xlu0 0
  %29 = vperm.xlu0 %28, %v23
  %v30 = vpop.permute.xlu0 %29
  %33 = vset.pattern.permute.xlu0 0
  %34 = vperm.xlu0 %33, %v24
  %v35 = vpop.permute.xlu0 %34
  %38 = vset.pattern.permute.xlu0 0
  %39 = vperm.xlu0 %38, %v25
  %v40 = vpop.permute.xlu0 %39
  %43 = vset.pattern.permute.xlu0 0
  %44 = vperm.xlu0 %43, %v26
  %v45 = vpop.permute.xlu0 %44
  %v51 = vunpack.c.l.b16 %v15
  %v52 = vunpack.c.l.b16 %v16
  %v53 = vunpack.c.l.b16 %v17
  %v54 = vunpack.c.l.b16 %v18
  %v55 = vpack.c.b16 %v52, %v51
  %v56 = vpack.c.b16 %v54, %v53
  %v61 = vunpack.c.l.b16 %v19
  %v62 = vunpack.c.h.b16 %v19
  %v63 = vunpack.c.l.b16 %v20
  %v64 = vunpack.c.h.b16 %v20
  %v65 = vunpack.c.l.b16 %v21
  %v66 = vunpack.c.h.b16 %v21
  %v67 = vunpack.c.l.b16 %v22
  %v68 = vunpack.c.h.b16 %v22
  %v69 = vpack.c.b16 %v65, %v61
  %v70 = vpack.c.b16 %v66, %v62
  %v71 = vpack.c.b16 %v67, %v63
  %v72 = vpack.c.b16 %v68, %v64
  %vm73 = vcmask 72704
  %v75 = vsel %vm73, %v55, 0
  %v78 = vsel %vm73, %v56, 0
  %vm80 = vcmask 1043456
  %vm81 = vcmask 1044480
  %v82 = vsel %vm80, 4294967295, 65535
  %v83 = vsel %vm81, %v82, 0
  %v85 = vand.u32 %v69, %v83
  %v88 = vand.u32 %v70, %v83
  %v91 = vand.u32 %v71, %v83
  %v94 = vand.u32 %v72, %v83
  %96 = vmatprep.subr.bf16.mxu0 %v88
  %97 = vmatpush1.bf16.msra.mxu0 %v85
  %98 = vmatprep.subr.bf16.mxu0 0
  %99 = vmatpush1.bf16.msra.mxu0 0
  %100 = vmatprep.subr.bf16.mxu0 0
  %101 = vmatpush1.bf16.msra.mxu0 0
  %102 = vmatprep.subr.bf16.mxu0 0
  %103 = vmatpush1.bf16.msra.mxu0 0
  %104 = vmatprep.subr.bf16.mxu0 0
  %105 = vmatpush1.bf16.msra.mxu0 0
  %106 = vmatprep.subr.bf16.mxu0 0
  %107 = vmatpush1.bf16.msra.mxu0 0
  %108 = vmatprep.subr.bf16.mxu0 0
  %109 = vmatpush1.bf16.msra.mxu0 0
  %110 = vmatprep.subr.bf16.mxu0 0
  %111 = vmatpush1.bf16.msra.mxu0 0
  %112 = vmatprep.subr.bf16.mxu0 0
  %113 = vmatpush1.bf16.msra.mxu0 0
  %114 = vmatprep.subr.bf16.mxu0 0
  %115 = vmatpush1.bf16.msra.mxu0 0
  %116 = vmatprep.subr.bf16.mxu0 0
  %117 = vmatpush1.bf16.msra.mxu0 0
  %118 = vmatprep.subr.bf16.mxu0 0
  %119 = vmatpush1.bf16.msra.mxu0 0
  %120 = vmatprep.subr.bf16.mxu0 0
  %121 = vmatpush1.bf16.msra.mxu0 0
  %122 = vmatprep.subr.bf16.mxu0 0
  %123 = vmatpush1.bf16.msra.mxu0 0
  %124 = vmatprep.subr.bf16.mxu0 0
  %125 = vmatpush1.bf16.msra.mxu0 0
  %126 = vmatprep.subr.bf16.mxu0 0
  %127 = vmatpush1.bf16.msra.mxu0 0
  %128 = vmatprep.mubr.bf16.mxu0 0
  %129 = vmatmul.mubr.bf16.gmra.mrb[0].mxu0 %v75
  %v130 = vpop.f32.mrb[0].mxu0
  %v131 = vadd.f32 %v30, %v130
  %v132 = vpop.f32.mrb[0].mxu0
  %v133 = vadd.f32 %v30, %v132
  %v134 = vpop.f32.mrb[0].mxu0
  %v135 = vadd.f32 %v35, %v134
  %v136 = vpop.f32.mrb[0].mxu0
  %v137 = vadd.f32 %v35, %v136
  %138 = vmatprep.mubr.bf16.mxu0 0
  %139 = vmatmul.mubr.bf16.gmra.mrb[0].mxu0 %v78
  %v140 = vpop.f32.mrb[0].mxu0
  %v141 = vadd.f32 %v40, %v140
  %v142 = vpop.f32.mrb[0].mxu0
  %v143 = vadd.f32 %v40, %v142
  %v144 = vpop.f32.mrb[0].mxu0
  %v145 = vadd.f32 %v45, %v144
  %v146 = vpop.f32.mrb[0].mxu0
  %v147 = vadd.f32 %v45, %v146
  %148 = vdwg.mxu0
  %149 = vmatprep.subr.bf16.mxu0 %v94
  %150 = vmatpush1.bf16.msra.mxu0 %v91
  %151 = vmatprep.subr.bf16.mxu0 0
  %152 = vmatpush1.bf16.msra.mxu0 0
  %153 = vmatprep.subr.bf16.mxu0 0
  %154 = vmatpush1.bf16.msra.mxu0 0
  %155 = vmatprep.subr.bf16.mxu0 0
  %156 = vmatpush1.bf16.msra.mxu0 0
  %157 = vmatprep.subr.bf16.mxu0 0
  %158 = vmatpush1.bf16.msra.mxu0 0
  %159 = vmatprep.subr.bf16.mxu0 0
  %160 = vmatpush1.bf16.msra.mxu0 0
  %161 = vmatprep.subr.bf16.mxu0 0
  %162 = vmatpush1.bf16.msra.mxu0 0
  %163 = vmatprep.subr.bf16.mxu0 0
  %164 = vmatpush1.bf16.msra.mxu0 0
  %165 = vmatprep.subr.bf16.mxu0 0
  %166 = vmatpush1.bf16.msra.mxu0 0
  %167 = vmatprep.subr.bf16.mxu0 0
  %168 = vmatpush1.bf16.msra.mxu0 0
  %169 = vmatprep.subr.bf16.mxu0 0
  %170 = vmatpush1.bf16.msra.mxu0 0
  %171 = vmatprep.subr.bf16.mxu0 0
  %172 = vmatpush1.bf16.msra.mxu0 0
  %173 = vmatprep.subr.bf16.mxu0 0
  %174 = vmatpush1.bf16.msra.mxu0 0
  %175 = vmatprep.subr.bf16.mxu0 0
  %176 = vmatpush1.bf16.msra.mxu0 0
  %177 = vmatprep.subr.bf16.mxu0 0
  %178 = vmatpush1.bf16.msra.mxu0 0
  %179 = vmatprep.subr.bf16.mxu0 0
  %180 = vmatpush1.bf16.msra.mxu0 0
  %181 = vmatprep.mubr.bf16.mxu0 0
  %182 = vmatmul.mubr.bf16.gmra.mrb[0].mxu0 %v75
  %v183 = vpop.f32.mrb[0].mxu0
  %v184 = vadd.f32 %v30, %v183
  %v185 = vpop.f32.mrb[0].mxu0
  %v186 = vadd.f32 %v30, %v185
  %v187 = vpop.f32.mrb[0].mxu0
  %v188 = vadd.f32 %v35, %v187
  %v189 = vpop.f32.mrb[0].mxu0
  %v190 = vadd.f32 %v35, %v189
  %191 = vmatprep.mubr.bf16.mxu0 0
  %192 = vmatmul.mubr.bf16.gmra.mrb[0].mxu0 %v78
  %v193 = vpop.f32.mrb[0].mxu0
  %v194 = vadd.f32 %v40, %v193
  %v195 = vpop.f32.mrb[0].mxu0
  %v196 = vadd.f32 %v40, %v195
  %v197 = vpop.f32.mrb[0].mxu0
  %v198 = vadd.f32 %v45, %v197
  %v199 = vpop.f32.mrb[0].mxu0
  %v200 = vadd.f32 %v45, %v199
  %201 = vdwg.mxu0
  %v202 = vmax.f32 %v131, 0.0
  %v203 = vmax.f32 %v133, 0.0
  %v204 = vmax.f32 %v184, 0.0
  %v205 = vmax.f32 %v186, 0.0
  %v206 = vmax.f32 %v135, 0.0
  %v207 = vmax.f32 %v137, 0.0
  %v208 = vmax.f32 %v188, 0.0
  %v209 = vmax.f32 %v190, 0.0
  %v210 = vmax.f32 %v141, 0.0
  %v211 = vmax.f32 %v143, 0.0
  %v212 = vmax.f32 %v194, 0.0
  %v213 = vmax.f32 %v196, 0.0
  %v214 = vmax.f32 %v145, 0.0
  %v215 = vmax.f32 %v147, 0.0
  %v216 = vmax.f32 %v198, 0.0
  %v217 = vmax.f32 %v200, 0.0
  %v218 = vpack.c.bf16 %v206, %v202
  %v219 = vpack.c.bf16 %v207, %v203
  %v220 = vpack.c.bf16 %v208, %v204
  %v221 = vpack.c.bf16 %v209, %v205
  %v222 = vpack.c.bf16 %v214, %v210
  %v223 = vpack.c.bf16 %v215, %v211
  %v224 = vpack.c.bf16 %v216, %v212
  %v225 = vpack.c.bf16 %v217, %v213
  %v234 = vunpack.c.l.b16 %v218
  %v235 = vunpack.c.l.b16 %v219
  %v236 = vunpack.c.l.b16 %v220
  %v237 = vunpack.c.l.b16 %v221
  %v238 = vunpack.c.h.b16 %v218
  %v239 = vunpack.c.h.b16 %v219
  %v240 = vunpack.c.h.b16 %v220
  %v241 = vunpack.c.h.b16 %v221
  %v242 = vunpack.c.l.b16 %v222
  %v243 = vunpack.c.l.b16 %v223
  %v244 = vunpack.c.l.b16 %v224
  %v245 = vunpack.c.l.b16 %v225
  %v246 = vunpack.c.h.b16 %v222
  %v247 = vunpack.c.h.b16 %v223
  %v248 = vunpack.c.h.b16 %v224
  %v249 = vunpack.c.h.b16 %v225
  %v250 = vpack.c.b16 %v235, %v234
  %v251 = vpack.c.b16 %v237, %v236
  %v252 = vpack.c.b16 %v239, %v238
  %v253 = vpack.c.b16 %v241, %v240
  %v254 = vpack.c.b16 %v243, %v242
  %v255 = vpack.c.b16 %v245, %v244
  %v256 = vpack.c.b16 %v247, %v246
  %v257 = vpack.c.b16 %v249, %v248
  %266 = vst [vmem:[%s3] sm:$0xff] %v250
  %vm267 = vcmask 64516
  %vm268 = vmor %vm267, %vm80
  %269 = vst.msk [vmem:[%s3 + $0x8] sm:$0xff] %vm268, %v251
  %270 = vst [vmem:[%s3 + $0x10] sm:$0xff] %v252
  %271 = vst.msk [vmem:[%s3 + $0x18] sm:$0xff] %vm268, %v253
  %272 = vst [vmem:[%s3 + $0x20] sm:$0xff] %v254
  %273 = vst.msk [vmem:[%s3 + $0x28] sm:$0xff] %vm268, %v255
  %274 = vst [vmem:[%s3 + $0x30] sm:$0xff] %v256
  %275 = vst.msk [vmem:[%s3 + $0x38] sm:$0xff] %vm268, %v257
  // Predicated region
  $region14: #{autoencoder_forward.5} parent=0 // pred_check
    _
  $region15: #{autoencoder_forward.5} parent=0 // pred_check_branch
    %277 = sbr.rel (0) target = $region17
  $region16: #{autoencoder_forward.5} parent=0 // pred_region
    _
  $region17: #{autoencoder_forward.5} parent=0 // pred_fallthru
    _
  // Predicated region
  $region18: #{autoencoder_forward.5} parent=0 // pred_check
    _
  $region19: #{autoencoder_forward.5} parent=0 // pred_check_branch
    %279 = sbr.rel (0) target = $region21
  $region20: #{autoencoder_forward.5} parent=0 // pred_region
    _
  $region21: #{autoencoder_forward.5} parent=0 // pred_fallthru
    _

// kernel: autoencoder_forward.6
$region0: #{autoencoder_forward.6}
  #allocation0 [shape = 'u32[]', space=smem, size = 0x4, offset = 0x4, fixed_abs, tag = 'smem constant byte address 0x4 - core index']
  #allocation1 [shape = 'u32[144,128]{1,0:T(1,128)}', space=vmem, size = 0x12000, scoped, tag = 'internal scratch']
  %s0 = inlined_call_operand.vmem [shape: bf16[64,288], index: 0, kind: input, shape index: {}]
  %s1 = inlined_call_operand.vmem [shape: bf16[288,98], index: 1, kind: input, shape index: {}]
  %s2 = inlined_call_operand.vmem [shape: f32[64,1], index: 2, kind: input, shape index: {}]
  %s3 = inlined_call_operand.vmem [shape: bf16[64,98], index: 3, kind: output, shape index: {}]
  %s4 = sld [smem:[#allocation0]]
  $region22: #{autoencoder_forward.6} parent=0
    _
  %s6 = ssub.s32 1, %s4
  %s7 = scalar_select 0, %s6, %s4
  // Predicated region
  $region2: #{autoencoder_forward.6} parent=0 // pred_check
    _
  $region3: #{autoencoder_forward.6} parent=0 // pred_check_branch
    %9 = sbr.rel (0) target = $region5
  $region4: #{autoencoder_forward.6} parent=0 // pred_region
    _
  $region5: #{autoencoder_forward.6} parent=0 // pred_fallthru
    _
  // Predicated region
  $region6: #{autoencoder_forward.6} parent=0 // pred_check
    _
  $region7: #{autoencoder_forward.6} parent=0 // pred_check_branch
    %11 = sbr.rel (0) target = $region9
  $region8: #{autoencoder_forward.6} parent=0 // pred_region
    _
  $region9: #{autoencoder_forward.6} parent=0 // pred_fallthru
    _
  // Predicated region
  $region10: #{autoencoder_forward.6} parent=0 // pred_check
    _
  $region11: #{autoencoder_forward.6} parent=0 // pred_check_branch
    %13 = sbr.rel (0) target = $region13
  $region12: #{autoencoder_forward.6} parent=0 // pred_region
    _
  $region13: #{autoencoder_forward.6} parent=0 // pred_fallthru
    _
  %v15 = vld [vmem:[%s0] sm:$0xff]
  %v16 = vld [vmem:[%s0 + $0x8] sm:$0xf]
  %v17 = vld [vmem:[%s0 + $0xc] sm:$0xff]
  %v18 = vld [vmem:[%s0 + $0x14] sm:$0xf]
  %v19 = vld [vmem:[%s0 + $0x18] sm:$0xff]
  %v20 = vld [vmem:[%s0 + $0x20] sm:$0xf]
  %v21 = vld [vmem:[%s0 + $0x24] sm:$0xff]
  %v22 = vld [vmem:[%s0 + $0x2c] sm:$0xf]
  %v23 = vld [vmem:[%s0 + $0x30] sm:$0xff]
  %v24 = vld [vmem:[%s0 + $0x38] sm:$0xf]
  %v25 = vld [vmem:[%s0 + $0x3c] sm:$0xff]
  %v26 = vld [vmem:[%s0 + $0x44] sm:$0xf]
  %v27 = vld [vmem:[%s0 + $0x48] sm:$0xff]
  %v28 = vld [vmem:[%s0 + $0x50] sm:$0xf]
  %v29 = vld [vmem:[%s0 + $0x54] sm:$0xff]
  %v30 = vld [vmem:[%s0 + $0x5c] sm:$0xf]
  %v31 = vld [vmem:[%s1] sm:$0xf]
  %v32 = vld [vmem:[%s1 + $0x4] sm:$0xf]
  %v33 = vld [vmem:[%s1 + $0x8] sm:$0xf]
  %v34 = vld [vmem:[%s1 + $0xc] sm:$0xf]
  %v35 = vld [vmem:[%s1 + $0x10] sm:$0xf]
  %v36 = vld [vmem:[%s1 + $0x14] sm:$0xf]
  %v37 = vld [vmem:[%s1 + $0x18] sm:$0xf]
  %v38 = vld [vmem:[%s1 + $0x1c] sm:$0xf]
  %v39 = vld [vmem:[%s1 + $0x20] sm:$0xf]
  %v40 = vld [vmem:[%s1 + $0x24] sm:$0xf]
  %v41 = vld [vmem:[%s1 + $0x28] sm:$0xf]
  %v42 = vld [vmem:[%s1 + $0x2c] sm:$0xf]
  %v43 = vld [vmem:[%s1 + $0x30] sm:$0xf]
  %v44 = vld [vmem:[%s1 + $0x34] sm:$0xf]
  %v45 = vld [vmem:[%s1 + $0x38] sm:$0xf]
  %v46 = vld [vmem:[%s1 + $0x3c] sm:$0xf]
  %v47 = vld [vmem:[%s1 + $0x40] sm:$0xf]
  %v48 = vld [vmem:[%s1 + $0x44] sm:$0xf]
  %v49 = vld [vmem:[%s1 + $0x48] sm:$0xf]
  %v50 = vld [vmem:[%s1 + $0x4c] sm:$0xf]
  %v51 = vld [vmem:[%s1 + $0x50] sm:$0xf]
  %v52 = vld [vmem:[%s1 + $0x54] sm:$0xf]
  %v53 = vld [vmem:[%s1 + $0x58] sm:$0xf]
  %v54 = vld [vmem:[%s1 + $0x5c] sm:$0xf]
  %v55 = vld [vmem:[%s1 + $0x60] sm:$0xf]
  %v56 = vld [vmem:[%s1 + $0x64] sm:$0xf]
  %v57 = vld [vmem:[%s1 + $0x68] sm:$0xf]
  %v58 = vld [vmem:[%s1 + $0x6c] sm:$0xf]
  %v59 = vld [vmem:[%s1 + $0x70] sm:$0xf]
  %v60 = vld [vmem:[%s1 + $0x74] sm:$0xf]
  %v61 = vld [vmem:[%s1 + $0x78] sm:$0xf]
  %v62 = vld [vmem:[%s1 + $0x7c] sm:$0xf]
  %v63 = vld [vmem:[%s1 + $0x80] sm:$0xf]
  %v64 = vld [vmem:[%s1 + $0x84] sm:$0xf]
  %v65 = vld [vmem:[%s1 + $0x88] sm:$0xf]
  %v66 = vld [vmem:[%s1 + $0x8c] sm:$0xf]
  %v67 = vld [vmem:[%s2] sm:$0xff]
  %v68 = vld [vmem:[%s2 + $0x8] sm:$0xff]
  %v69 = vld [vmem:[%s2 + $0x10] sm:$0xff]
  %v70 = vld [vmem:[%s2 + $0x18] sm:$0xff]
  %v71 = vld [vmem:[%s2 + $0x20] sm:$0xff]
  %v72 = vld [vmem:[%s2 + $0x28] sm:$0xff]
  %v73 = vld [vmem:[%s2 + $0x30] sm:$0xff]
  %v74 = vld [vmem:[%s2 + $0x38] sm:$0xff]
  %76 = vset.pattern.permute.xlu0 0
  %77 = vperm.xlu0 %76, %v67
  %v78 = vpop.permute.xlu0 %77
  %81 = vset.pattern.permute.xlu0 0
  %82 = vperm.xlu0 %81, %v68
  %v83 = vpop.permute.xlu0 %82
  %86 = vset.pattern.permute.xlu0 0
  %87 = vperm.xlu0 %86, %v69
  %v88 = vpop.permute.xlu0 %87
  %91 = vset.pattern.permute.xlu0 0
  %92 = vperm.xlu0 %91, %v70
  %v93 = vpop.permute.xlu0 %92
  %96 = vset.pattern.permute.xlu0 0
  %97 = vperm.xlu0 %96, %v71
  %v98 = vpop.permute.xlu0 %97
  %101 = vset.pattern.permute.xlu0 0
  %102 = vperm.xlu0 %101, %v72
  %v103 = vpop.permute.xlu0 %102
  %106 = vset.pattern.permute.xlu0 0
  %107 = vperm.xlu0 %106, %v73
  %v108 = vpop.permute.xlu0 %107
  %111 = vset.pattern.permute.xlu0 0
  %112 = vperm.xlu0 %111, %v74
  %v113 = vpop.permute.xlu0 %112
  %v131 = vunpack.c.l.b16 %v15
  %v132 = vunpack.c.h.b16 %v15
  %v133 = vunpack.c.l.b16 %v16
  %v134 = vunpack.c.l.b16 %v17
  %v135 = vunpack.c.h.b16 %v17
  %v136 = vunpack.c.l.b16 %v18
  %v137 = vunpack.c.l.b16 %v19
  %v138 = vunpack.c.h.b16 %v19
  %v139 = vunpack.c.l.b16 %v20
  %v140 = vunpack.c.l.b16 %v21
  %v141 = vunpack.c.h.b16 %v21
  %v142 = vunpack.c.l.b16 %v22
  %v143 = vunpack.c.l.b16 %v23
  %v144 = vunpack.c.h.b16 %v23
  %v145 = vunpack.c.l.b16 %v24
  %v146 = vunpack.c.l.b16 %v25
  %v147 = vunpack.c.h.b16 %v25
  %v148 = vunpack.c.l.b16 %v26
  %v149 = vunpack.c.l.b16 %v27
  %v150 = vunpack.c.h.b16 %v27
  %v151 = vunpack.c.l.b16 %v28
  %v152 = vunpack.c.l.b16 %v29
  %v153 = vunpack.c.h.b16 %v29
  %v154 = vunpack.c.l.b16 %v30
  %v155 = vpack.c.b16 %v134, %v131
  %v156 = vpack.c.b16 %v135, %v132
  %v157 = vpack.c.b16 %v136, %v133
  %v158 = vpack.c.b16 %v140, %v137
  %v159 = vpack.c.b16 %v141, %v138
  %v160 = vpack.c.b16 %v142, %v139
  %v161 = vpack.c.b16 %v146, %v143
  %v162 = vpack.c.b16 %v147, %v144
  %v163 = vpack.c.b16 %v148, %v145
  %v164 = vpack.c.b16 %v152, %v149
  %v165 = vpack.c.b16 %v153, %v150
  %v166 = vpack.c.b16 %v154, %v151
  %v211 = vunpack.c.l.b16 %v31
  %v212 = vunpack.c.l.b16 %v32
  %v213 = vunpack.c.l.b16 %v33
  %v214 = vunpack.c.l.b16 %v34
  %v215 = vunpack.c.l.b16 %v35
  %v216 = vunpack.c.l.b16 %v36
  %v217 = vunpack.c.l.b16 %v37
  %v218 = vunpack.c.l.b16 %v38
  %v219 = vunpack.c.l.b16 %v39
  %v220 = vunpack.c.l.b16 %v40
  %v221 = vunpack.c.l.b16 %v41
  %v222 = vunpack.c.l.b16 %v42
  %v223 = vunpack.c.l.b16 %v43
  %v224 = vunpack.c.l.b16 %v44
  %v225 = vunpack.c.l.b16 %v45
  %v226 = vunpack.c.l.b16 %v46
  %v227 = vunpack.c.l.b16 %v47
  %v228 = vunpack.c.l.b16 %v48
  %v229 = vunpack.c.l.b16 %v49
  %v230 = vunpack.c.l.b16 %v50
  %v231 = vunpack.c.l.b16 %v51
  %v232 = vunpack.c.l.b16 %v52
  %v233 = vunpack.c.l.b16 %v53
  %v234 = vunpack.c.l.b16 %v54
  %v235 = vunpack.c.l.b16 %v55
  %v236 = vunpack.c.l.b16 %v56
  %v237 = vunpack.c.l.b16 %v57
  %v238 = vunpack.c.l.b16 %v58
  %v239 = vunpack.c.l.b16 %v59
  %v240 = vunpack.c.l.b16 %v60
  %v241 = vunpack.c.l.b16 %v61
  %v242 = vunpack.c.l.b16 %v62
  %v243 = vunpack.c.l.b16 %v63
  %v244 = vunpack.c.l.b16 %v64
  %v245 = vunpack.c.l.b16 %v65
  %v246 = vunpack.c.l.b16 %v66
  %v247 = vpack.c.b16 %v212, %v211
  %v248 = vpack.c.b16 %v214, %v213
  %v249 = vpack.c.b16 %v216, %v215
  %v250 = vpack.c.b16 %v218, %v217
  %v251 = vpack.c.b16 %v220, %v219
  %v252 = vpack.c.b16 %v222, %v221
  %v253 = vpack.c.b16 %v224, %v223
  %v254 = vpack.c.b16 %v226, %v225
  %v255 = vpack.c.b16 %v228, %v227
  %v256 = vpack.c.b16 %v230, %v229
  %v257 = vpack.c.b16 %v232, %v231
  %v258 = vpack.c.b16 %v234, %v233
  %v259 = vpack.c.b16 %v236, %v235
  %v260 = vpack.c.b16 %v238, %v237
  %v261 = vpack.c.b16 %v240, %v239
  %v262 = vpack.c.b16 %v242, %v241
  %v263 = vpack.c.b16 %v244, %v243
  %v264 = vpack.c.b16 %v246, %v245
  %vm283 = vcmask 261120
  %v285 = vsel %vm283, %v157, 0
  %v288 = vsel %vm283, %v160, 0
  %v291 = vsel %vm283, %v163, 0
  %v294 = vsel %vm283, %v166, 0
  %296 = vmatprep.subr.bf16.mxu0 0
  %297 = vmatpush1.bf16.msra.mxu0 %v247
  %298 = vmatprep.subr.bf16.mxu0 0
  %299 = vmatpush1.bf16.msra.mxu0 %v248
  %300 = vmatprep.subr.bf16.mxu0 0
  %301 = vmatpush1.bf16.msra.mxu0 %v249
  %302 = vmatprep.subr.bf16.mxu0 0
  %303 = vmatpush1.bf16.msra.mxu0 %v250
  %304 = vmatprep.subr.bf16.mxu0 0
  %305 = vmatpush1.bf16.msra.mxu0 %v251
  %306 = vmatprep.subr.bf16.mxu0 0
  %307 = vmatpush1.bf16.msra.mxu0 %v252
  %308 = vmatprep.subr.bf16.mxu0 0
  %309 = vmatpush1.bf16.msra.mxu0 %v253
  %310 = vmatprep.subr.bf16.mxu0 0
  %311 = vmatpush1.bf16.msra.mxu0 %v254
  %312 = vmatprep.subr.bf16.mxu0 0
  %313 = vmatpush1.bf16.msra.mxu0 %v255
  %314 = vmatprep.subr.bf16.mxu0 0
  %315 = vmatpush1.bf16.msra.mxu0 %v256
  %316 = vmatprep.subr.bf16.mxu0 0
  %317 = vmatpush1.bf16.msra.mxu0 %v257
  %318 = vmatprep.subr.bf16.mxu0 0
  %319 = vmatpush1.bf16.msra.mxu0 %v258
  %320 = vmatprep.subr.bf16.mxu0 0
  %321 = vmatpush1.bf16.msra.mxu0 %v259
  %322 = vmatprep.subr.bf16.mxu0 0
  %323 = vmatpush1.bf16.msra.mxu0 %v260
  %324 = vmatprep.subr.bf16.mxu0 0
  %325 = vmatpush1.bf16.msra.mxu0 %v261
  %326 = vmatprep.subr.bf16.mxu0 0
  %327 = vmatpush1.bf16.msra.mxu0 %v262
  %328 = vmatprep.mubr.bf16.mxu0 %v156
  %329 = vmatmul.mubr.bf16.gmra.mrb[0].mxu0 %v155
  %v330 = vpop.f32.mrb[0].mxu0
  %v331 = vadd.f32 %v78, %v330
  %v332 = vpop.f32.mrb[0].mxu0
  %v333 = vpop.f32.mrb[0].mxu0
  %v334 = vadd.f32 %v83, %v333
  %v335 = vpop.f32.mrb[0].mxu0
  %336 = vmatprep.mubr.bf16.mxu0 %v159
  %337 = vmatmul.mubr.bf16.gmra.mrb[0].mxu0 %v158
  %v338 = vpop.f32.mrb[0].mxu0
  %v339 = vadd.f32 %v88, %v338
  %v340 = vpop.f32.mrb[0].mxu0
  %v341 = vpop.f32.mrb[0].mxu0
  %v342 = vadd.f32 %v93, %v341
  %v343 = vpop.f32.mrb[0].mxu0
  %344 = vmatprep.mubr.bf16.mxu0 %v162
  %345 = vmatmul.mubr.bf16.gmra.mrb[0].mxu0 %v161
  %v346 = vpop.f32.mrb[0].mxu0
  %v347 = vadd.f32 %v98, %v346
  %v348 = vpop.f32.mrb[0].mxu0
  %v349 = vpop.f32.mrb[0].mxu0
  %v350 = vadd.f32 %v103, %v349
  %v351 = vpop.f32.mrb[0].mxu0
  %352 = vmatprep.mubr.bf16.mxu0 %v165
  %353 = vmatmul.mubr.bf16.gmra.mrb[0].mxu0 %v164
  %v354 = vpop.f32.mrb[0].mxu0
  %v355 = vadd.f32 %v108, %v354
  %v356 = vpop.f32.mrb[0].mxu0
  %v357 = vpop.f32.mrb[0].mxu0
  %v358 = vadd.f32 %v113, %v357
  %v359 = vpop.f32.mrb[0].mxu0
  %360 = vdwg.mxu0
  %361 = vmatprep.subr.bf16.mxu0 0
  %362 = vmatpush1.bf16.msra.mxu0 %v263
  %363 = vmatprep.subr.bf16.mxu0 0
  %364 = vmatpush1.bf16.msra.mxu0 %v264
  %365 = vmatprep.subr.bf16.mxu0 0
  %366 = vmatpush1.bf16.msra.mxu0 0
  %367 = vmatprep.subr.bf16.mxu0 0
  %368 = vmatpush1.bf16.msra.mxu0 0
  %369 = vmatprep.subr.bf16.mxu0 0
  %370 = vmatpush1.bf16.msra.mxu0 0
  %371 = vmatprep.subr.bf16.mxu0 0
  %372 = vmatpush1.bf16.msra.mxu0 0
  %373 = vmatprep.subr.bf16.mxu0 0
  %374 = vmatpush1.bf16.msra.mxu0 0
  %375 = vmatprep.subr.bf16.mxu0 0
  %376 = vmatpush1.bf16.msra.mxu0 0
  %377 = vmatprep.subr.bf16.mxu0 0
  %378 = vmatpush1.bf16.msra.mxu0 0
  %379 = vmatprep.subr.bf16.mxu0 0
  %380 = vmatpush1.bf16.msra.mxu0 0
  %381 = vmatprep.subr.bf16.mxu0 0
  %382 = vmatpush1.bf16.msra.mxu0 0
  %383 = vmatprep.subr.bf16.mxu0 0
  %384 = vmatpush1.bf16.msra.mxu0 0
  %385 = vmatprep.subr.bf16.mxu0 0
  %386 = vmatpush1.bf16.msra.mxu0 0
  %387 = vmatprep.subr.bf16.mxu0 0
  %388 = vmatpush1.bf16.msra.mxu0 0
  %389 = vmatprep.subr.bf16.mxu0 0
  %390 = vmatpush1.bf16.msra.mxu0 0
  %391 = vmatprep.subr.bf16.mxu0 0
  %392 = vmatpush1.bf16.msra.mxu0 0
  %393 = vmatprep.mubr.bf16.mxu0 0
  %394 = vmatmul.mubr.bf16.gmra.mrb[0].mxu0 %v285
  %v395 = vpop.f32.mrb[0].mxu0
  %v396 = vadd.f32 %v331, %v395
  %v397 = vpop.f32.mrb[0].mxu0
  %v398 = vpop.f32.mrb[0].mxu0
  %v399 = vadd.f32 %v334, %v398
  %v400 = vpop.f32.mrb[0].mxu0
  %401 = vmatprep.mubr.bf16.mxu0 0
  %402 = vmatmul.mubr.bf16.gmra.mrb[0].mxu0 %v288
  %v403 = vpop.f32.mrb[0].mxu0
  %v404 = vadd.f32 %v339, %v403
  %v405 = vpop.f32.mrb[0].mxu0
  %v406 = vpop.f32.mrb[0].mxu0
  %v407 = vadd.f32 %v342, %v406
  %v408 = vpop.f32.mrb[0].mxu0
  %409 = vmatprep.mubr.bf16.mxu0 0
  %410 = vmatmul.mubr.bf16.gmra.mrb[0].mxu0 %v291
  %v411 = vpop.f32.mrb[0].mxu0
  %v412 = vadd.f32 %v347, %v411
  %v413 = vpop.f32.mrb[0].mxu0
  %v414 = vpop.f32.mrb[0].mxu0
  %v415 = vadd.f32 %v350, %v414
  %v416 = vpop.f32.mrb[0].mxu0
  %417 = vmatprep.mubr.bf16.mxu0 0
  %418 = vmatmul.mubr.bf16.gmra.mrb[0].mxu0 %v294
  %v419 = vpop.f32.mrb[0].mxu0
  %v420 = vadd.f32 %v355, %v419
  %v421 = vpop.f32.mrb[0].mxu0
  %v422 = vpop.f32.mrb[0].mxu0
  %v423 = vadd.f32 %v358, %v422
  %v424 = vpop.f32.mrb[0].mxu0
  %425 = vdwg.mxu0
  %v426 = vmax.f32 %v396, 0.0
  %v427 = vmax.f32 %v399, 0.0
  %v428 = vmax.f32 %v404, 0.0
  %v429 = vmax.f32 %v407, 0.0
  %v430 = vmax.f32 %v412, 0.0
  %v431 = vmax.f32 %v415, 0.0
  %v432 = vmax.f32 %v420, 0.0
  %v433 = vmax.f32 %v423, 0.0
  %v434 = vpack.c.bf16 %v427, %v426
  %v435 = vpack.c.bf16 %v429, %v428
  %v436 = vpack.c.bf16 %v431, %v430
  %v437 = vpack.c.bf16 %v433, %v432
  %v442 = vunpack.c.l.b16 %v434
  %v443 = vunpack.c.h.b16 %v434
  %v444 = vunpack.c.l.b16 %v435
  %v445 = vunpack.c.h.b16 %v435
  %v446 = vunpack.c.l.b16 %v436
  %v447 = vunpack.c.h.b16 %v436
  %v448 = vunpack.c.l.b16 %v437
  %v449 = vunpack.c.h.b16 %v437
  %v450 = vpack.c.b16 %v442, %v442
  %v451 = vpack.c.b16 %v443, %v443
  %v452 = vpack.c.b16 %v444, %v444
  %v453 = vpack.c.b16 %v445, %v445
  %v454 = vpack.c.b16 %v446, %v446
  %v455 = vpack.c.b16 %v447, %v447
  %v456 = vpack.c.b16 %v448, %v448
  %v457 = vpack.c.b16 %v449, %v449
  %vm466 = vcmask 797696
  %467 = vst.msk [vmem:[%s3] sm:$0xf] %vm466, %v450
  %468 = vst.msk [vmem:[%s3 + $0x4] sm:$0xf] %vm466, %v451
  %469 = vst.msk [vmem:[%s3 + $0x8] sm:$0xf] %vm466, %v452
  %470 = vst.msk [vmem:[%s3 + $0xc] sm:$0xf] %vm466, %v453
  %471 = vst.msk [vmem:[%s3 + $0x10] sm:$0xf] %vm466, %v454
  %472 = vst.msk [vmem:[%s3 + $0x14] sm:$0xf] %vm466, %v455
  %473 = vst.msk [vmem:[%s3 + $0x18] sm:$0xf] %vm466, %v456
  %474 = vst.msk [vmem:[%s3 + $0x1c] sm:$0xf] %vm466, %v457
  // Predicated region
  $region14: #{autoencoder_forward.6} parent=0 // pred_check
    _
  $region15: #{autoencoder_forward.6} parent=0 // pred_check_branch
    %476 = sbr.rel (0) target = $region17
  $region16: #{autoencoder_forward.6} parent=0 // pred_region
    _
  $region17: #{autoencoder_forward.6} parent=0 // pred_fallthru
    _
  // Predicated region
  $region18: #{autoencoder_forward.6} parent=0 // pred_check
    _
  $region19: #{autoencoder_forward.6} parent=0 // pred_check_branch
    %478 = sbr.rel (0) target = $region21
  $region20: #{autoencoder_forward.6} parent=0 // pred_region
    _
  $region21: #{autoencoder_forward.6} parent=0 // pred_fallthru
    _

// kernel: autoencoder_forward.7
$region0: #{autoencoder_forward.7}
  #allocation0 [shape = 'u32[]', space=smem, size = 0x4, offset = 0x4, fixed_abs, tag = 'smem constant byte address 0x4 - core index']
  #allocation1 [shape = 'u32[144,128]{1,0:T(1,128)}', space=vmem, size = 0x12000, scoped, tag = 'internal scratch']
  %s0 = inlined_call_operand.vmem [shape: bf16[2,3136], index: 0, kind: input, shape index: {}]
  %s1 = inlined_call_operand.vmem [shape: bf16[3136,32], index: 1, kind: input, shape index: {}]
  %s2 = inlined_call_operand.vmem [shape: f32[1,32], index: 2, kind: input, shape index: {}]
  %s3 = inlined_call_operand.vmem [shape: bf16[32,3136], index: 3, kind: input, shape index: {}]
  %s4 = inlined_call_operand.vmem [shape: f32[1,3136], index: 4, kind: input, shape index: {}]
  %s5 = inlined_call_operand.vmem [shape: bf16[2,3136], index: 5, kind: output, shape index: {}]
  %s6 = sld [smem:[#allocation0]]
  $region30: #{autoencoder_forward.7} parent=0
    _
  %s8 = ssub.s32 1, %s6
  %s9 = scalar_select 0, %s8, %s6
  // Predicated region
  $region2: #{autoencoder_forward.7} parent=0 // pred_check
    _
  $region3: #{autoencoder_forward.7} parent=0 // pred_check_branch
    %11 = sbr.rel (0) target = $region5
  $region4: #{autoencoder_forward.7} parent=0 // pred_region
    _
  $region5: #{autoencoder_forward.7} parent=0 // pred_fallthru
    _
  // Predicated region
  $region6: #{autoencoder_forward.7} parent=0 // pred_check
    _
  $region7: #{autoencoder_forward.7} parent=0 // pred_check_branch
    %13 = sbr.rel (0) target = $region9
  $region8: #{autoencoder_forward.7} parent=0 // pred_region
    _
  $region9: #{autoencoder_forward.7} parent=0 // pred_fallthru
    _
  // Predicated region
  $region10: #{autoencoder_forward.7} parent=0 // pred_check
    _
  $region11: #{autoencoder_forward.7} parent=0 // pred_check_branch
    %15 = sbr.rel (0) target = $region13
  $region12: #{autoencoder_forward.7} parent=0 // pred_region
    _
  $region13: #{autoencoder_forward.7} parent=0 // pred_fallthru
    _
  // Predicated region
  $region14: #{autoencoder_forward.7} parent=0 // pred_check
    _
  $region15: #{autoencoder_forward.7} parent=0 // pred_check_branch
    %17 = sbr.rel (0) target = $region17
  $region16: #{autoencoder_forward.7} parent=0 // pred_region
    _
  $region17: #{autoencoder_forward.7} parent=0 // pred_fallthru
    _
  // Predicated region
  $region18: #{autoencoder_forward.7} parent=0 // pred_check
    _
  $region19: #{autoencoder_forward.7} parent=0 // pred_check_branch
    %19 = sbr.rel (0) target = $region21
  $region20: #{autoencoder_forward.7} parent=0 // pred_region
    _
  $region21: #{autoencoder_forward.7} parent=0 // pred_fallthru
    _
  %v21 = vld [vmem:[%s0] sm:$0xff]
  %v22 = vld [vmem:[%s0 + $0x8] sm:$0xff]
  %v23 = vld [vmem:[%s0 + $0x10] sm:$0xff]
  %v24 = vld [vmem:[%s0 + $0x18] sm:$0x1]
  %v25 = vld [vmem:[%s1] sm:$0xf]
  %v26 = vld [vmem:[%s1 + $0x4] sm:$0xf]
  %v27 = vld [vmem:[%s1 + $0x8] sm:$0xf]
  %v28 = vld [vmem:[%s1 + $0xc] sm:$0xf]
  %v29 = vld [vmem:[%s1 + $0x10] sm:$0xf]
  %v30 = vld [vmem:[%s1 + $0x14] sm:$0xf]
  %v31 = vld [vmem:[%s1 + $0x18] sm:$0xf]
  %v32 = vld [vmem:[%s1 + $0x1c] sm:$0xf]
  %v33 = vld [vmem:[%s1 + $0x20] sm:$0xf]
  %v34 = vld [vmem:[%s1 + $0x24] sm:$0xf]
  %v35 = vld [vmem:[%s1 + $0x28] sm:$0xf]
  %v36 = vld [vmem:[%s1 + $0x2c] sm:$0xf]
  %v37 = vld [vmem:[%s1 + $0x30] sm:$0xf]
  %v38 = vld [vmem:[%s1 + $0x34] sm:$0xf]
  %v39 = vld [vmem:[%s1 + $0x38] sm:$0xf]
  %v40 = vld [vmem:[%s1 + $0x3c] sm:$0xf]
  %v41 = vld [vmem:[%s1 + $0x40] sm:$0xf]
  %v42 = vld [vmem:[%s1 + $0x44] sm:$0xf]
  %v43 = vld [vmem:[%s1 + $0x48] sm:$0xf]
  %v44 = vld [vmem:[%s1 + $0x4c] sm:$0xf]
  %v45 = vld [vmem:[%s1 + $0x50] sm:$0xf]
  %v46 = vld [vmem:[%s1 + $0x54] sm:$0xf]
  %v47 = vld [vmem:[%s1 + $0x58] sm:$0xf]
  %v48 = vld [vmem:[%s1 + $0x5c] sm:$0xf]
  %v49 = vld [vmem:[%s1 + $0x60] sm:$0xf]
  %v50 = vld [vmem:[%s1 + $0x64] sm:$0xf]
  %v51 = vld [vmem:[%s1 + $0x68] sm:$0xf]
  %v52 = vld [vmem:[%s1 + $0x6c] sm:$0xf]
  %v53 = vld [vmem:[%s1 + $0x70] sm:$0xf]
  %v54 = vld [vmem:[%s1 + $0x74] sm:$0xf]
  %v55 = vld [vmem:[%s1 + $0x78] sm:$0xf]
  %v56 = vld [vmem:[%s1 + $0x7c] sm:$0xf]
  %v57 = vld [vmem:[%s1 + $0x80] sm:$0xf]
  %v58 = vld [vmem:[%s1 + $0x84] sm:$0xf]
  %v59 = vld [vmem:[%s1 + $0x88] sm:$0xf]
  %v60 = vld [vmem:[%s1 + $0x8c] sm:$0xf]
  %v61 = vld [vmem:[%s1 + $0x90] sm:$0xf]
  %v62 = vld [vmem:[%s1 + $0x94] sm:$0xf]
  %v63 = vld [vmem:[%s1 + $0x98] sm:$0xf]
  %v64 = vld [vmem:[%s1 + $0x9c] sm:$0xf]
  %v65 = vld [vmem:[%s1 + $0xa0] sm:$0xf]
  %v66 = vld [vmem:[%s1 + $0xa4] sm:$0xf]
  %v67 = vld [vmem:[%s1 + $0xa8] sm:$0xf]
  %v68 = vld [vmem:[%s1 + $0xac] sm:$0xf]
  %v69 = vld [vmem:[%s1 + $0xb0] sm:$0xf]
  %v70 = vld [vmem:[%s1 + $0xb4] sm:$0xf]
  %v71 = vld [vmem:[%s1 + $0xb8] sm:$0xf]
  %v72 = vld [vmem:[%s1 + $0xbc] sm:$0xf]
  %v73 = vld [vmem:[%s1 + $0xc0] sm:$0xf]
  %v74 = vld [vmem:[%s1 + $0xc4] sm:$0xf]
  %v75 = vld [vmem:[%s1 + $0xc8] sm:$0xf]
  %v76 = vld [vmem:[%s1 + $0xcc] sm:$0xf]
  %v77 = vld [vmem:[%s1 + $0xd0] sm:$0xf]
  %v78 = vld [vmem:[%s1 + $0xd4] sm:$0xf]
  %v79 = vld [vmem:[%s1 + $0xd8] sm:$0xf]
  %v80 = vld [vmem:[%s1 + $0xdc] sm:$0xf]
  %v81 = vld [vmem:[%s1 + $0xe0] sm:$0xf]
  %v82 = vld [vmem:[%s1 + $0xe4] sm:$0xf]
  %v83 = vld [vmem:[%s1 + $0xe8] sm:$0xf]
  %v84 = vld [vmem:[%s1 + $0xec] sm:$0xf]
  %v85 = vld [vmem:[%s1 + $0xf0] sm:$0xf]
  %v86 = vld [vmem:[%s1 + $0xf4] sm:$0xf]
  %v87 = vld [vmem:[%s1 + $0xf8] sm:$0xf]
  %v88 = vld [vmem:[%s1 + $0xfc] sm:$0xf]
  %v89 = vld [vmem:[%s1 + $0x100] sm:$0xf]
  %v90 = vld [vmem:[%s1 + $0x104] sm:$0xf]
  %v91 = vld [vmem:[%s1 + $0x108] sm:$0xf]
  %v92 = vld [vmem:[%s1 + $0x10c] sm:$0xf]
  %v93 = vld [vmem:[%s1 + $0x110] sm:$0xf]
  %v94 = vld [vmem:[%s1 + $0x114] sm:$0xf]
  %v95 = vld [vmem:[%s1 + $0x118] sm:$0xf]
  %v96 = vld [vmem:[%s1 + $0x11c] sm:$0xf]
  %v97 = vld [vmem:[%s1 + $0x120] sm:$0xf]
  %v98 = vld [vmem:[%s1 + $0x124] sm:$0xf]
  %v99 = vld [vmem:[%s1 + $0x128] sm:$0xf]
  %v100 = vld [vmem:[%s1 + $0x12c] sm:$0xf]
  %v101 = vld [vmem:[%s1 + $0x130] sm:$0xf]
  %v102 = vld [vmem:[%s1 + $0x134] sm:$0xf]
  %v103 = vld [vmem:[%s1 + $0x138] sm:$0xf]
  %v104 = vld [vmem:[%s1 + $0x13c] sm:$0xf]
  %v105 = vld [vmem:[%s1 + $0x140] sm:$0xf]
  %v106 = vld [vmem:[%s1 + $0x144] sm:$0xf]
  %v107 = vld [vmem:[%s1 + $0x148] sm:$0xf]
  %v108 = vld [vmem:[%s1 + $0x14c] sm:$0xf]
  %v109 = vld [vmem:[%s1 + $0x150] sm:$0xf]
  %v110 = vld [vmem:[%s1 + $0x154] sm:$0xf]
  %v111 = vld [vmem:[%s1 + $0x158] sm:$0xf]
  %v112 = vld [vmem:[%s1 + $0x15c] sm:$0xf]
  %v113 = vld [vmem:[%s1 + $0x160] sm:$0xf]
  %v114 = vld [vmem:[%s1 + $0x164] sm:$0xf]
  %v115 = vld [vmem:[%s1 + $0x168] sm:$0xf]
  %v116 = vld [vmem:[%s1 + $0x16c] sm:$0xf]
  %v117 = vld [vmem:[%s1 + $0x170] sm:$0xf]
  %v118 = vld [vmem:[%s1 + $0x174] sm:$0xf]
  %v119 = vld [vmem:[%s1 + $0x178] sm:$0xf]
  %v120 = vld [vmem:[%s1 + $0x17c] sm:$0xf]
  %v121 = vld [vmem:[%s1 + $0x180] sm:$0xf]
  %v122 = vld [vmem:[%s1 + $0x184] sm:$0xf]
  %v123 = vld [vmem:[%s1 + $0x188] sm:$0xf]
  %v124 = vld [vmem:[%s1 + $0x18c] sm:$0xf]
  %v125 = vld [vmem:[%s1 + $0x190] sm:$0xf]
  %v126 = vld [vmem:[%s1 + $0x194] sm:$0xf]
  %v127 = vld [vmem:[%s1 + $0x198] sm:$0xf]
  %v128 = vld [vmem:[%s1 + $0x19c] sm:$0xf]
  %v129 = vld [vmem:[%s1 + $0x1a0] sm:$0xf]
  %v130 = vld [vmem:[%s1 + $0x1a4] sm:$0xf]
  %v131 = vld [vmem:[%s1 + $0x1a8] sm:$0xf]
  %v132 = vld [vmem:[%s1 + $0x1ac] sm:$0xf]
  %v133 = vld [vmem:[%s1 + $0x1b0] sm:$0xf]
  %v134 = vld [vmem:[%s1 + $0x1b4] sm:$0xf]
  %v135 = vld [vmem:[%s1 + $0x1b8] sm:$0xf]
  %v136 = vld [vmem:[%s1 + $0x1bc] sm:$0xf]
  %v137 = vld [vmem:[%s1 + $0x1c0] sm:$0xf]
  %v138 = vld [vmem:[%s1 + $0x1c4] sm:$0xf]
  %v139 = vld [vmem:[%s1 + $0x1c8] sm:$0xf]
  %v140 = vld [vmem:[%s1 + $0x1cc] sm:$0xf]
  %v141 = vld [vmem:[%s1 + $0x1d0] sm:$0xf]
  %v142 = vld [vmem:[%s1 + $0x1d4] sm:$0xf]
  %v143 = vld [vmem:[%s1 + $0x1d8] sm:$0xf]
  %v144 = vld [vmem:[%s1 + $0x1dc] sm:$0xf]
  %v145 = vld [vmem:[%s1 + $0x1e0] sm:$0xf]
  %v146 = vld [vmem:[%s1 + $0x1e4] sm:$0xf]
  %v147 = vld [vmem:[%s1 + $0x1e8] sm:$0xf]
  %v148 = vld [vmem:[%s1 + $0x1ec] sm:$0xf]
  %v149 = vld [vmem:[%s1 + $0x1f0] sm:$0xf]
  %v150 = vld [vmem:[%s1 + $0x1f4] sm:$0xf]
  %v151 = vld [vmem:[%s1 + $0x1f8] sm:$0xf]
  %v152 = vld [vmem:[%s1 + $0x1fc] sm:$0xf]
  %v153 = vld [vmem:[%s1 + $0x200] sm:$0xf]
  %v154 = vld [vmem:[%s1 + $0x204] sm:$0xf]
  %v155 = vld [vmem:[%s1 + $0x208] sm:$0xf]
  %v156 = vld [vmem:[%s1 + $0x20c] sm:$0xf]
  %v157 = vld [vmem:[%s1 + $0x210] sm:$0xf]
  %v158 = vld [vmem:[%s1 + $0x214] sm:$0xf]
  %v159 = vld [vmem:[%s1 + $0x218] sm:$0xf]
  %v160 = vld [vmem:[%s1 + $0x21c] sm:$0xf]
  %v161 = vld [vmem:[%s1 + $0x220] sm:$0xf]
  %v162 = vld [vmem:[%s1 + $0x224] sm:$0xf]
  %v163 = vld [vmem:[%s1 + $0x228] sm:$0xf]
  %v164 = vld [vmem:[%s1 + $0x22c] sm:$0xf]
  %v165 = vld [vmem:[%s1 + $0x230] sm:$0xf]
  %v166 = vld [vmem:[%s1 + $0x234] sm:$0xf]
  %v167 = vld [vmem:[%s1 + $0x238] sm:$0xf]
  %v168 = vld [vmem:[%s1 + $0x23c] sm:$0xf]
  %v169 = vld [vmem:[%s1 + $0x240] sm:$0xf]
  %v170 = vld [vmem:[%s1 + $0x244] sm:$0xf]
  %v171 = vld [vmem:[%s1 + $0x248] sm:$0xf]
  %v172 = vld [vmem:[%s1 + $0x24c] sm:$0xf]
  %v173 = vld [vmem:[%s1 + $0x250] sm:$0xf]
  %v174 = vld [vmem:[%s1 + $0x254] sm:$0xf]
  %v175 = vld [vmem:[%s1 + $0x258] sm:$0xf]
  %v176 = vld [vmem:[%s1 + $0x25c] sm:$0xf]
  %v177 = vld [vmem:[%s1 + $0x260] sm:$0xf]
  %v178 = vld [vmem:[%s1 + $0x264] sm:$0xf]
  %v179 = vld [vmem:[%s1 + $0x268] sm:$0xf]
  %v180 = vld [vmem:[%s1 + $0x26c] sm:$0xf]
  %v181 = vld [vmem:[%s1 + $0x270] sm:$0xf]
  %v182 = vld [vmem:[%s1 + $0x274] sm:$0xf]
  %v183 = vld [vmem:[%s1 + $0x278] sm:$0xf]
  %v184 = vld [vmem:[%s1 + $0x27c] sm:$0xf]
  %v185 = vld [vmem:[%s1 + $0x280] sm:$0xf]
  %v186 = vld [vmem:[%s1 + $0x284] sm:$0xf]
  %v187 = vld [vmem:[%s1 + $0x288] sm:$0xf]
  %v188 = vld [vmem:[%s1 + $0x28c] sm:$0xf]
  %v189 = vld [vmem:[%s1 + $0x290] sm:$0xf]
  %v190 = vld [vmem:[%s1 + $0x294] sm:$0xf]
  %v191 = vld [vmem:[%s1 + $0x298] sm:$0xf]
  %v192 = vld [vmem:[%s1 + $0x29c] sm:$0xf]
  %v193 = vld [vmem:[%s1 + $0x2a0] sm:$0xf]
  %v194 = vld [vmem:[%s1 + $0x2a4] sm:$0xf]
  %v195 = vld [vmem:[%s1 + $0x2a8] sm:$0xf]
  %v196 = vld [vmem:[%s1 + $0x2ac] sm:$0xf]
  %v197 = vld [vmem:[%s1 + $0x2b0] sm:$0xf]
  %v198 = vld [vmem:[%s1 + $0x2b4] sm:$0xf]
  %v199 = vld [vmem:[%s1 + $0x2b8] sm:$0xf]
  %v200 = vld [vmem:[%s1 + $0x2bc] sm:$0xf]
  %v201 = vld [vmem:[%s1 + $0x2c0] sm:$0xf]
  %v202 = vld [vmem:[%s1 + $0x2c4] sm:$0xf]
  %v203 = vld [vmem:[%s1 + $0x2c8] sm:$0xf]
  %v204 = vld [vmem:[%s1 + $0x2cc] sm:$0xf]
  %v205 = vld [vmem:[%s1 + $0x2d0] sm:$0xf]
  %v206 = vld [vmem:[%s1 + $0x2d4] sm:$0xf]
  %v207 = vld [vmem:[%s1 + $0x2d8] sm:$0xf]
  %v208 = vld [vmem:[%s1 + $0x2dc] sm:$0xf]
  %v209 = vld [vmem:[%s1 + $0x2e0] sm:$0xf]
  %v210 = vld [vmem:[%s1 + $0x2e4] sm:$0xf]
  %v211 = vld [vmem:[%s1 + $0x2e8] sm:$0xf]
  %v212 = vld [vmem:[%s1 + $0x2ec] sm:$0xf]
  %v213 = vld [vmem:[%s1 + $0x2f0] sm:$0xf]
  %v214 = vld [vmem:[%s1 + $0x2f4] sm:$0xf]
  %v215 = vld [vmem:[%s1 + $0x2f8] sm:$0xf]
  %v216 = vld [vmem:[%s1 + $0x2fc] sm:$0xf]
  %v217 = vld [vmem:[%s1 + $0x300] sm:$0xf]
  %v218 = vld [vmem:[%s1 + $0x304] sm:$0xf]
  %v219 = vld [vmem:[%s1 + $0x308] sm:$0xf]
  %v220 = vld [vmem:[%s1 + $0x30c] sm:$0xf]
  %v221 = vld [vmem:[%s1 + $0x310] sm:$0xf]
  %v222 = vld [vmem:[%s1 + $0x314] sm:$0xf]
  %v223 = vld [vmem:[%s1 + $0x318] sm:$0xf]
  %v224 = vld [vmem:[%s1 + $0x31c] sm:$0xf]
  %v225 = vld [vmem:[%s1 + $0x320] sm:$0xf]
  %v226 = vld [vmem:[%s1 + $0x324] sm:$0xf]
  %v227 = vld [vmem:[%s1 + $0x328] sm:$0xf]
  %v228 = vld [vmem:[%s1 + $0x32c] sm:$0xf]
  %v229 = vld [vmem:[%s1 + $0x330] sm:$0xf]
  %v230 = vld [vmem:[%s1 + $0x334] sm:$0xf]
  %v231 = vld [vmem:[%s1 + $0x338] sm:$0xf]
  %v232 = vld [vmem:[%s1 + $0x33c] sm:$0xf]
  %v233 = vld [vmem:[%s1 + $0x340] sm:$0xf]
  %v234 = vld [vmem:[%s1 + $0x344] sm:$0xf]
  %v235 = vld [vmem:[%s1 + $0x348] sm:$0xf]
  %v236 = vld [vmem:[%s1 + $0x34c] sm:$0xf]
  %v237 = vld [vmem:[%s1 + $0x350] sm:$0xf]
  %v238 = vld [vmem:[%s1 + $0x354] sm:$0xf]
  %v239 = vld [vmem:[%s1 + $0x358] sm:$0xf]
  %v240 = vld [vmem:[%s1 + $0x35c] sm:$0xf]
  %v241 = vld [vmem:[%s1 + $0x360] sm:$0xf]
  %v242 = vld [vmem:[%s1 + $0x364] sm:$0xf]
  %v243 = vld [vmem:[%s1 + $0x368] sm:$0xf]
  %v244 = vld [vmem:[%s1 + $0x36c] sm:$0xf]
  %v245 = vld [vmem:[%s1 + $0x370] sm:$0xf]
  %v246 = vld [vmem:[%s1 + $0x374] sm:$0xf]
  %v247 = vld [vmem:[%s1 + $0x378] sm:$0xf]
  %v248 = vld [vmem:[%s1 + $0x37c] sm:$0xf]
  %v249 = vld [vmem:[%s1 + $0x380] sm:$0xf]
  %v250 = vld [vmem:[%s1 + $0x384] sm:$0xf]
  %v251 = vld [vmem:[%s1 + $0x388] sm:$0xf]
  %v252 = vld [vmem:[%s1 + $0x38c] sm:$0xf]
  %v253 = vld [vmem:[%s1 + $0x390] sm:$0xf]
  %v254 = vld [vmem:[%s1 + $0x394] sm:$0xf]
  %v255 = vld [vmem:[%s1 + $0x398] sm:$0xf]
  %v256 = vld [vmem:[%s1 + $0x39c] sm:$0xf]
  %v257 = vld [vmem:[%s1 + $0x3a0] sm:$0xf]
  %v258 = vld [vmem:[%s1 + $0x3a4] sm:$0xf]
  %v259 = vld [vmem:[%s1 + $0x3a8] sm:$0xf]
  %v260 = vld [vmem:[%s1 + $0x3ac] sm:$0xf]
  %v261 = vld [vmem:[%s1 + $0x3b0] sm:$0xf]
  %v262 = vld [vmem:[%s1 + $0x3b4] sm:$0xf]
  %v263 = vld [vmem:[%s1 + $0x3b8] sm:$0xf]
  %v264 = vld [vmem:[%s1 + $0x3bc] sm:$0xf]
  %v265 = vld [vmem:[%s1 + $0x3c0] sm:$0xf]
  %v266 = vld [vmem:[%s1 + $0x3c4] sm:$0xf]
  %v267 = vld [vmem:[%s1 + $0x3c8] sm:$0xf]
  %v268 = vld [vmem:[%s1 + $0x3cc] sm:$0xf]
  %v269 = vld [vmem:[%s1 + $0x3d0] sm:$0xf]
  %v270 = vld [vmem:[%s1 + $0x3d4] sm:$0xf]
  %v271 = vld [vmem:[%s1 + $0x3d8] sm:$0xf]
  %v272 = vld [vmem:[%s1 + $0x3dc] sm:$0xf]
  %v273 = vld [vmem:[%s1 + $0x3e0] sm:$0xf]
  %v274 = vld [vmem:[%s1 + $0x3e4] sm:$0xf]
  %v275 = vld [vmem:[%s1 + $0x3e8] sm:$0xf]
  %v276 = vld [vmem:[%s1 + $0x3ec] sm:$0xf]
  %v277 = vld [vmem:[%s1 + $0x3f0] sm:$0xf]
  %v278 = vld [vmem:[%s1 + $0x3f4] sm:$0xf]
  %v279 = vld [vmem:[%s1 + $0x3f8] sm:$0xf]
  %v280 = vld [vmem:[%s1 + $0x3fc] sm:$0xf]
  %v281 = vld [vmem:[%s1 + $0x400] sm:$0xf]
  %v282 = vld [vmem:[%s1 + $0x404] sm:$0xf]
  %v283 = vld [vmem:[%s1 + $0x408] sm:$0xf]
  %v284 = vld [vmem:[%s1 + $0x40c] sm:$0xf]
  %v285 = vld [vmem:[%s1 + $0x410] sm:$0xf]
  %v286 = vld [vmem:[%s1 + $0x414] sm:$0xf]
  %v287 = vld [vmem:[%s1 + $0x418] sm:$0xf]
  %v288 = vld [vmem:[%s1 + $0x41c] sm:$0xf]
  %v289 = vld [vmem:[%s1 + $0x420] sm:$0xf]
  %v290 = vld [vmem:[%s1 + $0x424] sm:$0xf]
  %v291 = vld [vmem:[%s1 + $0x428] sm:$0xf]
  %v292 = vld [vmem:[%s1 + $0x42c] sm:$0xf]
  %v293 = vld [vmem:[%s1 + $0x430] sm:$0xf]
  %v294 = vld [vmem:[%s1 + $0x434] sm:$0xf]
  %v295 = vld [vmem:[%s1 + $0x438] sm:$0xf]
  %v296 = vld [vmem:[%s1 + $0x43c] sm:$0xf]
  %v297 = vld [vmem:[%s1 + $0x440] sm:$0xf]
  %v298 = vld [vmem:[%s1 + $0x444] sm:$0xf]
  %v299 = vld [vmem:[%s1 + $0x448] sm:$0xf]
  %v300 = vld [vmem:[%s1 + $0x44c] sm:$0xf]
  %v301 = vld [vmem:[%s1 + $0x450] sm:$0xf]
  %v302 = vld [vmem:[%s1 + $0x454] sm:$0xf]
  %v303 = vld [vmem:[%s1 + $0x458] sm:$0xf]
  %v304 = vld [vmem:[%s1 + $0x45c] sm:$0xf]
  %v305 = vld [vmem:[%s1 + $0x460] sm:$0xf]
  %v306 = vld [vmem:[%s1 + $0x464] sm:$0xf]
  %v307 = vld [vmem:[%s1 + $0x468] sm:$0xf]
  %v308 = vld [vmem:[%s1 + $0x46c] sm:$0xf]
  %v309 = vld [vmem:[%s1 + $0x470] sm:$0xf]
  %v310 = vld [vmem:[%s1 + $0x474] sm:$0xf]
  %v311 = vld [vmem:[%s1 + $0x478] sm:$0xf]
  %v312 = vld [vmem:[%s1 + $0x47c] sm:$0xf]
  %v313 = vld [vmem:[%s1 + $0x480] sm:$0xf]
  %v314 = vld [vmem:[%s1 + $0x484] sm:$0xf]
  %v315 = vld [vmem:[%s1 + $0x488] sm:$0xf]
  %v316 = vld [vmem:[%s1 + $0x48c] sm:$0xf]
  %v317 = vld [vmem:[%s1 + $0x490] sm:$0xf]
  %v318 = vld [vmem:[%s1 + $0x494] sm:$0xf]
  %v319 = vld [vmem:[%s1 + $0x498] sm:$0xf]
  %v320 = vld [vmem:[%s1 + $0x49c] sm:$0xf]
  %v321 = vld [vmem:[%s1 + $0x4a0] sm:$0xf]
  %v322 = vld [vmem:[%s1 + $0x4a4] sm:$0xf]
  %v323 = vld [vmem:[%s1 + $0x4a8] sm:$0xf]
  %v324 = vld [vmem:[%s1 + $0x4ac] sm:$0xf]
  %v325 = vld [vmem:[%s1 + $0x4b0] sm:$0xf]
  %v326 = vld [vmem:[%s1 + $0x4b4] sm:$0xf]
  %v327 = vld [vmem:[%s1 + $0x4b8] sm:$0xf]
  %v328 = vld [vmem:[%s1 + $0x4bc] sm:$0xf]
  %v329 = vld [vmem:[%s1 + $0x4c0] sm:$0xf]
  %v330 = vld [vmem:[%s1 + $0x4c4] sm:$0xf]
  %v331 = vld [vmem:[%s1 + $0x4c8] sm:$0xf]
  %v332 = vld [vmem:[%s1 + $0x4cc] sm:$0xf]
  %v333 = vld [vmem:[%s1 + $0x4d0] sm:$0xf]
  %v334 = vld [vmem:[%s1 + $0x4d4] sm:$0xf]
  %v335 = vld [vmem:[%s1 + $0x4d8] sm:$0xf]
  %v336 = vld [vmem:[%s1 + $0x4dc] sm:$0xf]
  %v337 = vld [vmem:[%s1 + $0x4e0] sm:$0xf]
  %v338 = vld [vmem:[%s1 + $0x4e4] sm:$0xf]
  %v339 = vld [vmem:[%s1 + $0x4e8] sm:$0xf]
  %v340 = vld [vmem:[%s1 + $0x4ec] sm:$0xf]
  %v341 = vld [vmem:[%s1 + $0x4f0] sm:$0xf]
  %v342 = vld [vmem:[%s1 + $0x4f4] sm:$0xf]
  %v343 = vld [vmem:[%s1 + $0x4f8] sm:$0xf]
  %v344 = vld [vmem:[%s1 + $0x4fc] sm:$0xf]
  %v345 = vld [vmem:[%s1 + $0x500] sm:$0xf]
  %v346 = vld [vmem:[%s1 + $0x504] sm:$0xf]
  %v347 = vld [vmem:[%s1 + $0x508] sm:$0xf]
  %v348 = vld [vmem:[%s1 + $0x50c] sm:$0xf]
  %v349 = vld [vmem:[%s1 + $0x510] sm:$0xf]
  %v350 = vld [vmem:[%s1 + $0x514] sm:$0xf]
  %v351 = vld [vmem:[%s1 + $0x518] sm:$0xf]
  %v352 = vld [vmem:[%s1 + $0x51c] sm:$0xf]
  %v353 = vld [vmem:[%s1 + $0x520] sm:$0xf]
  %v354 = vld [vmem:[%s1 + $0x524] sm:$0xf]
  %v355 = vld [vmem:[%s1 + $0x528] sm:$0xf]
  %v356 = vld [vmem:[%s1 + $0x52c] sm:$0xf]
  %v357 = vld [vmem:[%s1 + $0x530] sm:$0xf]
  %v358 = vld [vmem:[%s1 + $0x534] sm:$0xf]
  %v359 = vld [vmem:[%s1 + $0x538] sm:$0xf]
  %v360 = vld [vmem:[%s1 + $0x53c] sm:$0xf]
  %v361 = vld [vmem:[%s1 + $0x540] sm:$0xf]
  %v362 = vld [vmem:[%s1 + $0x544] sm:$0xf]
  %v363 = vld [vmem:[%s1 + $0x548] sm:$0xf]
  %v364 = vld [vmem:[%s1 + $0x54c] sm:$0xf]
  %v365 = vld [vmem:[%s1 + $0x550] sm:$0xf]
  %v366 = vld [vmem:[%s1 + $0x554] sm:$0xf]
  %v367 = vld [vmem:[%s1 + $0x558] sm:$0xf]
  %v368 = vld [vmem:[%s1 + $0x55c] sm:$0xf]
  %v369 = vld [vmem:[%s1 + $0x560] sm:$0xf]
  %v370 = vld [vmem:[%s1 + $0x564] sm:$0xf]
  %v371 = vld [vmem:[%s1 + $0x568] sm:$0xf]
  %v372 = vld [vmem:[%s1 + $0x56c] sm:$0xf]
  %v373 = vld [vmem:[%s1 + $0x570] sm:$0xf]
  %v374 = vld [vmem:[%s1 + $0x574] sm:$0xf]
  %v375 = vld [vmem:[%s1 + $0x578] sm:$0xf]
  %v376 = vld [vmem:[%s1 + $0x57c] sm:$0xf]
  %v377 = vld [vmem:[%s1 + $0x580] sm:$0xf]
  %v378 = vld [vmem:[%s1 + $0x584] sm:$0xf]
  %v379 = vld [vmem:[%s1 + $0x588] sm:$0xf]
  %v380 = vld [vmem:[%s1 + $0x58c] sm:$0xf]
  %v381 = vld [vmem:[%s1 + $0x590] sm:$0xf]
  %v382 = vld [vmem:[%s1 + $0x594] sm:$0xf]
  %v383 = vld [vmem:[%s1 + $0x598] sm:$0xf]
  %v384 = vld [vmem:[%s1 + $0x59c] sm:$0xf]
  %v385 = vld [vmem:[%s1 + $0x5a0] sm:$0xf]
  %v386 = vld [vmem:[%s1 + $0x5a4] sm:$0xf]
  %v387 = vld [vmem:[%s1 + $0x5a8] sm:$0xf]
  %v388 = vld [vmem:[%s1 + $0x5ac] sm:$0xf]
  %v389 = vld [vmem:[%s1 + $0x5b0] sm:$0xf]
  %v390 = vld [vmem:[%s1 + $0x5b4] sm:$0xf]
  %v391 = vld [vmem:[%s1 + $0x5b8] sm:$0xf]
  %v392 = vld [vmem:[%s1 + $0x5bc] sm:$0xf]
  %v393 = vld [vmem:[%s1 + $0x5c0] sm:$0xf]
  %v394 = vld [vmem:[%s1 + $0x5c4] sm:$0xf]
  %v395 = vld [vmem:[%s1 + $0x5c8] sm:$0xf]
  %v396 = vld [vmem:[%s1 + $0x5cc] sm:$0xf]
  %v397 = vld [vmem:[%s1 + $0x5d0] sm:$0xf]
  %v398 = vld [vmem:[%s1 + $0x5d4] sm:$0xf]
  %v399 = vld [vmem:[%s1 + $0x5d8] sm:$0xf]
  %v400 = vld [vmem:[%s1 + $0x5dc] sm:$0xf]
  %v401 = vld [vmem:[%s1 + $0x5e0] sm:$0xf]
  %v402 = vld [vmem:[%s1 + $0x5e4] sm:$0xf]
  %v403 = vld [vmem:[%s1 + $0x5e8] sm:$0xf]
  %v404 = vld [vmem:[%s1 + $0x5ec] sm:$0xf]
  %v405 = vld [vmem:[%s1 + $0x5f0] sm:$0xf]
  %v406 = vld [vmem:[%s1 + $0x5f4] sm:$0xf]
  %v407 = vld [vmem:[%s1 + $0x5f8] sm:$0xf]
  %v408 = vld [vmem:[%s1 + $0x5fc] sm:$0xf]
  %v409 = vld [vmem:[%s1 + $0x600] sm:$0xf]
  %v410 = vld [vmem:[%s1 + $0x604] sm:$0xf]
  %v411 = vld [vmem:[%s1 + $0x608] sm:$0xf]
  %v412 = vld [vmem:[%s1 + $0x60c] sm:$0xf]
  %v413 = vld [vmem:[%s1 + $0x610] sm:$0xf]
  %v414 = vld [vmem:[%s1 + $0x614] sm:$0xf]
  %v415 = vld [vmem:[%s1 + $0x618] sm:$0xf]
  %v416 = vld [vmem:[%s1 + $0x61c] sm:$0xf]
  %v417 = vld [vmem:[%s2] sm:$0x1]
  %v419 = vlaneseq
  %v420 = vshrl.u32 %v419, 7
  %v421 = vsub.s32 0, %v420
  %v422 = vrot.slane %v417, %v421
  %v428 = vcombine.high %v21, %v21
  %v430 = vunpack.c.l.s4 1966171168
  %v431 = vunpack.c.0.s8 %v430
  %v432 = vlaneseq
  %v433 = vshrl.u32 %v432, 7
  %v434 = vsub.s32 %v431, %v433
  %v435 = vrot.slane %v21, %v434
  %v437 = vunpack.c.l.s4 1966171168
  %v438 = vunpack.c.0.s8 %v437
  %v439 = vlaneseq
  %v440 = vshrl.u32 %v439, 7
  %v441 = vsub.s32 %v438, %v440
  %v442 = vrot.slane %v428, %v441
  %v443 = vcombine.high %v435, %v435
  %v444 = vcombine.high %v442, %v442
  %v446 = vunpack.c.l.s4 1966171168
  %v447 = vunpack.c.0.s8 %v446
  %v448 = vlaneseq
  %v449 = vshrl.u32 %v448, 7
  %v450 = vsub.s32 %v447, %v449
  %v451 = vrot.slane %v435, %v450
  %v453 = vunpack.c.l.s4 1966171168
  %v454 = vunpack.c.0.s8 %v453
  %v455 = vlaneseq
  %v456 = vshrl.u32 %v455, 7
  %v457 = vsub.s32 %v454, %v456
  %v458 = vrot.slane %v442, %v457
  %v460 = vunpack.c.l.s4 1966171168
  %v461 = vunpack.c.0.s8 %v460
  %v462 = vlaneseq
  %v463 = vshrl.u32 %v462, 7
  %v464 = vsub.s32 %v461, %v463
  %v465 = vrot.slane %v443, %v464
  %v467 = vunpack.c.l.s4 1966171168
  %v468 = vunpack.c.0.s8 %v467
  %v469 = vlaneseq
  %v470 = vshrl.u32 %v469, 7
  %v471 = vsub.s32 %v468, %v470
  %v472 = vrot.slane %v444, %v471
  %v473 = vcombine.high %v451, %v451
  %v474 = vcombine.high %v458, %v458
  %v475 = vcombine.high %v465, %v465
  %v476 = vcombine.high %v472, %v472
  %v477 = vcombine.high %v22, %v22
  %v479 = vunpack.c.l.s4 1966171168
  %v480 = vunpack.c.0.s8 %v479
  %v481 = vlaneseq
  %v482 = vshrl.u32 %v481, 7
  %v483 = vsub.s32 %v480, %v482
  %v484 = vrot.slane %v22, %v483
  %v486 = vunpack.c.l.s4 1966171168
  %v487 = vunpack.c.0.s8 %v486
  %v488 = vlaneseq
  %v489 = vshrl.u32 %v488, 7
  %v490 = vsub.s32 %v487, %v489
  %v491 = vrot.slane %v477, %v490
  %v492 = vcombine.high %v484, %v484
  %v493 = vcombine.high %v491, %v491
  %v495 = vunpack.c.l.s4 1966171168
  %v496 = vunpack.c.0.s8 %v495
  %v497 = vlaneseq
  %v498 = vshrl.u32 %v497, 7
  %v499 = vsub.s32 %v496, %v498
  %v500 = vrot.slane %v484, %v499
  %v502 = vunpack.c.l.s4 1966171168
  %v503 = vunpack.c.0.s8 %v502
  %v504 = vlaneseq
  %v505 = vshrl.u32 %v504, 7
  %v506 = vsub.s32 %v503, %v505
  %v507 = vrot.slane %v491, %v506
  %v509 = vunpack.c.l.s4 1966171168
  %v510 = vunpack.c.0.s8 %v509
  %v511 = vlaneseq
  %v512 = vshrl.u32 %v511, 7
  %v513 = vsub.s32 %v510, %v512
  %v514 = vrot.slane %v492, %v513
  %v516 = vunpack.c.l.s4 1966171168
  %v517 = vunpack.c.0.s8 %v516
  %v518 = vlaneseq
  %v519 = vshrl.u32 %v518, 7
  %v520 = vsub.s32 %v517, %v519
  %v521 = vrot.slane %v493, %v520
  %v522 = vcombine.high %v500, %v500
  %v523 = vcombine.high %v507, %v507
  %v524 = vcombine.high %v514, %v514
  %v525 = vcombine.high %v521, %v521
  %v526 = vcombine.high %v23, %v23
  %v528 = vunpack.c.l.s4 1966171168
  %v529 = vunpack.c.0.s8 %v528
  %v530 = vlaneseq
  %v531 = vshrl.u32 %v530, 7
  %v532 = vsub.s32 %v529, %v531
  %v533 = vrot.slane %v23, %v532
  %v535 = vunpack.c.l.s4 1966171168
  %v536 = vunpack.c.0.s8 %v535
  %v537 = vlaneseq
  %v538 = vshrl.u32 %v537, 7
  %v539 = vsub.s32 %v536, %v538
  %v540 = vrot.slane %v526, %v539
  %v541 = vcombine.high %v533, %v533
  %v542 = vcombine.high %v540, %v540
  %v544 = vunpack.c.l.s4 1966171168
  %v545 = vunpack.c.0.s8 %v544
  %v546 = vlaneseq
  %v547 = vshrl.u32 %v546, 7
  %v548 = vsub.s32 %v545, %v547
  %v549 = vrot.slane %v533, %v548
  %v551 = vunpack.c.l.s4 1966171168
  %v552 = vunpack.c.0.s8 %v551
  %v553 = vlaneseq
  %v554 = vshrl.u32 %v553, 7
  %v555 = vsub.s32 %v552, %v554
  %v556 = vrot.slane %v540, %v555
  %v558 = vunpack.c.l.s4 1966171168
  %v559 = vunpack.c.0.s8 %v558
  %v560 = vlaneseq
  %v561 = vshrl.u32 %v560, 7
  %v562 = vsub.s32 %v559, %v561
  %v563 = vrot.slane %v541, %v562
  %v565 = vunpack.c.l.s4 1966171168
  %v566 = vunpack.c.0.s8 %v565
  %v567 = vlaneseq
  %v568 = vshrl.u32 %v567, 7
  %v569 = vsub.s32 %v566, %v568
  %v570 = vrot.slane %v542, %v569
  %v571 = vcombine.high %v549, %v549
  %v572 = vcombine.high %v556, %v556
  %v573 = vcombine.high %v563, %v563
  %v574 = vcombine.high %v570, %v570
  %v576 = vunpack.c.l.s4 1966171168
  %v577 = vunpack.c.0.s8 %v576
  %v578 = vlaneseq
  %v579 = vshrl.u32 %v578, 7
  %v580 = vsub.s32 %v577, %v579
  %v581 = vrot.slane %v24, %v580
  %v583 = vunpack.c.l.s4 1966171168
  %v584 = vunpack.c.0.s8 %v583
  %v585 = vlaneseq
  %v586 = vshrl.u32 %v585, 7
  %v587 = vsub.s32 %v584, %v586
  %v588 = vrot.slane %v581, %v587
  %v1005 = vunpack.c.l.b16 %v25
  %v1006 = vunpack.c.l.b16 %v26
  %v1007 = vunpack.c.l.b16 %v27
  %v1008 = vunpack.c.l.b16 %v28
  %v1009 = vunpack.c.l.b16 %v29
  %v1010 = vunpack.c.l.b16 %v30
  %v1011 = vunpack.c.l.b16 %v31
  %v1012 = vunpack.c.l.b16 %v32
  %v1013 = vunpack.c.l.b16 %v33
  %v1014 = vunpack.c.l.b16 %v34
  %v1015 = vunpack.c.l.b16 %v35
  %v1016 = vunpack.c.l.b16 %v36
  %v1017 = vunpack.c.l.b16 %v37
  %v1018 = vunpack.c.l.b16 %v38
  %v1019 = vunpack.c.l.b16 %v39
  %v1020 = vunpack.c.l.b16 %v40
  %v1021 = vunpack.c.l.b16 %v41
  %v1022 = vunpack.c.l.b16 %v42
  %v1023 = vunpack.c.l.b16 %v43
  %v1024 = vunpack.c.l.b16 %v44
  %v1025 = vunpack.c.l.b16 %v45
  %v1026 = vunpack.c.l.b16 %v46
  %v1027 = vunpack.c.l.b16 %v47
  %v1028 = vunpack.c.l.b16 %v48
  %v1029 = vunpack.c.l.b16 %v49
  %v1030 = vunpack.c.l.b16 %v50
  %v1031 = vunpack.c.l.b16 %v51
  %v1032 = vunpack.c.l.b16 %v52
  %v1033 = vunpack.c.l.b16 %v53
  %v1034 = vunpack.c.l.b16 %v54
  %v1035 = vunpack.c.l.b16 %v55
  %v1036 = vunpack.c.l.b16 %v56
  %v1037 = vunpack.c.l.b16 %v57
  %v1038 = vunpack.c.l.b16 %v58
  %v1039 = vunpack.c.l.b16 %v59
  %v1040 = vunpack.c.l.b16 %v60
  %v1041 = vunpack.c.l.b16 %v61
  %v1042 = vunpack.c.l.b16 %v62
  %v1043 = vunpack.c.l.b16 %v63
  %v1044 = vunpack.c.l.b16 %v64
  %v1045 = vunpack.c.l.b16 %v65
  %v1046 = vunpack.c.l.b16 %v66
  %v1047 = vunpack.c.l.b16 %v67
  %v1048 = vunpack.c.l.b16 %v68
  %v1049 = vunpack.c.l.b16 %v69
  %v1050 = vunpack.c.l.b16 %v70
  %v1051 = vunpack.c.l.b16 %v71
  %v1052 = vunpack.c.l.b16 %v72
  %v1053 = vunpack.c.l.b16 %v73
  %v1054 = vunpack.c.l.b16 %v74
  %v1055 = vunpack.c.l.b16 %v75
  %v1056 = vunpack.c.l.b16 %v76
  %v1057 = vunpack.c.l.b16 %v77
  %v1058 = vunpack.c.l.b16 %v78
  %v1059 = vunpack.c.l.b16 %v79
  %v1060 = vunpack.c.l.b16 %v80
  %v1061 = vunpack.c.l.b16 %v81
  %v1062 = vunpack.c.l.b16 %v82
  %v1063 = vunpack.c.l.b16 %v83
  %v1064 = vunpack.c.l.b16 %v84
  %v1065 = vunpack.c.l.b16 %v85
  %v1066 = vunpack.c.l.b16 %v86
  %v1067 = vunpack.c.l.b16 %v87
  %v1068 = vunpack.c.l.b16 %v88
  %v1069 = vunpack.c.l.b16 %v89
  %v1070 = vunpack.c.l.b16 %v90
  %v1071 = vunpack.c.l.b16 %v91
  %v1072 = vunpack.c.l.b16 %v92
  %v1073 = vunpack.c.l.b16 %v93
  %v1074 = vunpack.c.l.b16 %v94
  %v1075 = vunpack.c.l.b16 %v95
  %v1076 = vunpack.c.l.b16 %v96
  %v1077 = vunpack.c.l.b16 %v97
  %v1078 = vunpack.c.l.b16 %v98
  %v1079 = vunpack.c.l.b16 %v99
  %v1080 = vunpack.c.l.b16 %v100
  %v1081 = vunpack.c.l.b16 %v101
  %v1082 = vunpack.c.l.b16 %v102
  %v1083 = vunpack.c.l.b16 %v103
  %v1084 = vunpack.c.l.b16 %v104
  %v1085 = vunpack.c.l.b16 %v105
  %v1086 = vunpack.c.l.b16 %v106
  %v1087 = vunpack.c.l.b16 %v107
  %v1088 = vunpack.c.l.b16 %v108
  %v1089 = vunpack.c.l.b16 %v109
  %v1090 = vunpack.c.l.b16 %v110
  %v1091 = vunpack.c.l.b16 %v111
  %v1092 = vunpack.c.l.b16 %v112
  %v1093 = vunpack.c.l.b16 %v113
  %v1094 = vunpack.c.l.b16 %v114
  %v1095 = vunpack.c.l.b16 %v115
  %v1096 = vunpack.c.l.b16 %v116
  %v1097 = vunpack.c.l.b16 %v117
  %v1098 = vunpack.c.l.b16 %v118
  %v1099 = vunpack.c.l.b16 %v119
  %v1100 = vunpack.c.l.b16 %v120
  %v1101 = vunpack.c.l.b16 %v121
  %v1102 = vunpack.c.l.b16 %v122
  %v1103 = vunpack.c.l.b16 %v123
  %v1104 = vunpack.c.l.b16 %v124
  %v1105 = vunpack.c.l.b16 %v125
  %v1106 = vunpack.c.l.b16 %v126
  %v1107 = vunpack.c.l.b16 %v127
  %v1108 = vunpack.c.l.b16 %v128
  %v1109 = vunpack.c.l.b16 %v129
  %v1110 = vunpack.c.l.b16 %v130
  %v1111 = vunpack.c.l.b16 %v131
  %v1112 = vunpack.c.l.b16 %v132
  %v1113 = vunpack.c.l.b16 %v133
  %v1114 = vunpack.c.l.b16 %v134
  %v1115 = vunpack.c.l.b16 %v135
  %v1116 = vunpack.c.l.b16 %v136
  %v1117 = vunpack.c.l.b16 %v137
  %v1118 = vunpack.c.l.b16 %v138
  %v1119 = vunpack.c.l.b16 %v139
  %v1120 = vunpack.c.l.b16 %v140
  %v1121 = vunpack.c.l.b16 %v141
  %v1122 = vunpack.c.l.b16 %v142
  %v1123 = vunpack.c.l.b16 %v143
  %v1124 = vunpack.c.l.b16 %v144
  %v1125 = vunpack.c.l.b16 %v145
  %v1126 = vunpack.c.l.b16 %v146
  %v1127 = vunpack.c.l.b16 %v147
  %v1128 = vunpack.c.l.b16 %v148
  %v1129 = vunpack.c.l.b16 %v149
  %v1130 = vunpack.c.l.b16 %v150
  %v1131 = vunpack.c.l.b16 %v151
  %v1132 = vunpack.c.l.b16 %v152
  %v1133 = vunpack.c.l.b16 %v153
  %v1134 = vunpack.c.l.b16 %v154
  %v1135 = vunpack.c.l.b16 %v155
  %v1136 = vunpack.c.l.b16 %v156
  %v1137 = vunpack.c.l.b16 %v157
  %v1138 = vunpack.c.l.b16 %v158
  %v1139 = vunpack.c.l.b16 %v159
  %v1140 = vunpack.c.l.b16 %v160
  %v1141 = vunpack.c.l.b16 %v161
  %v1142 = vunpack.c.l.b16 %v162
  %v1143 = vunpack.c.l.b16 %v163
  %v1144 = vunpack.c.l.b16 %v164
  %v1145 = vunpack.c.l.b16 %v165
  %v1146 = vunpack.c.l.b16 %v166
  %v1147 = vunpack.c.l.b16 %v167
  %v1148 = vunpack.c.l.b16 %v168
  %v1149 = vunpack.c.l.b16 %v169
  %v1150 = vunpack.c.l.b16 %v170
  %v1151 = vunpack.c.l.b16 %v171
  %v1152 = vunpack.c.l.b16 %v172
  %v1153 = vunpack.c.l.b16 %v173
  %v1154 = vunpack.c.l.b16 %v174
  %v1155 = vunpack.c.l.b16 %v175
  %v1156 = vunpack.c.l.b16 %v176
  %v1157 = vunpack.c.l.b16 %v177
  %v1158 = vunpack.c.l.b16 %v178
  %v1159 = vunpack.c.l.b16 %v179
  %v1160 = vunpack.c.l.b16 %v180
  %v1161 = vunpack.c.l.b16 %v181
  %v1162 = vunpack.c.l.b16 %v182
  %v1163 = vunpack.c.l.b16 %v183
  %v1164 = vunpack.c.l.b16 %v184
  %v1165 = vunpack.c.l.b16 %v185
  %v1166 = vunpack.c.l.b16 %v186
  %v1167 = vunpack.c.l.b16 %v187
  %v1168 = vunpack.c.l.b16 %v188
  %v1169 = vunpack.c.l.b16 %v189
  %v1170 = vunpack.c.l.b16 %v190
  %v1171 = vunpack.c.l.b16 %v191
  %v1172 = vunpack.c.l.b16 %v192
  %v1173 = vunpack.c.l.b16 %v193
  %v1174 = vunpack.c.l.b16 %v194
  %v1175 = vunpack.c.l.b16 %v195
  %v1176 = vunpack.c.l.b16 %v196
  %v1177 = vunpack.c.l.b16 %v197
  %v1178 = vunpack.c.l.b16 %v198
  %v1179 = vunpack.c.l.b16 %v199
  %v1180 = vunpack.c.l.b16 %v200
  %v1181 = vunpack.c.l.b16 %v201
  %v1182 = vunpack.c.l.b16 %v202
  %v1183 = vunpack.c.l.b16 %v203
  %v1184 = vunpack.c.l.b16 %v204
  %v1185 = vunpack.c.l.b16 %v205
  %v1186 = vunpack.c.l.b16 %v206
  %v1187 = vunpack.c.l.b16 %v207
  %v1188 = vunpack.c.l.b16 %v208
  %v1189 = vunpack.c.l.b16 %v209
  %v1190 = vunpack.c.l.b16 %v210
  %v1191 = vunpack.c.l.b16 %v211
  %v1192 = vunpack.c.l.b16 %v212
  %v1193 = vunpack.c.l.b16 %v213
  %v1194 = vunpack.c.l.b16 %v214
  %v1195 = vunpack.c.l.b16 %v215
  %v1196 = vunpack.c.l.b16 %v216
  %v1197 = vunpack.c.l.b16 %v217
  %v1198 = vunpack.c.l.b16 %v218
  %v1199 = vunpack.c.l.b16 %v219
  %v1200 = vunpack.c.l.b16 %v220
  %v1201 = vunpack.c.l.b16 %v221
  %v1202 = vunpack.c.l.b16 %v222
  %v1203 = vunpack.c.l.b16 %v223
  %v1204 = vunpack.c.l.b16 %v224
  %v1205 = vunpack.c.l.b16 %v225
  %v1206 = vunpack.c.l.b16 %v226
  %v1207 = vunpack.c.l.b16 %v227
  %v1208 = vunpack.c.l.b16 %v228
  %v1209 = vunpack.c.l.b16 %v229
  %v1210 = vunpack.c.l.b16 %v230
  %v1211 = vunpack.c.l.b16 %v231
  %v1212 = vunpack.c.l.b16 %v232
  %v1213 = vunpack.c.l.b16 %v233
  %v1214 = vunpack.c.l.b16 %v234
  %v1215 = vunpack.c.l.b16 %v235
  %v1216 = vunpack.c.l.b16 %v236
  %v1217 = vunpack.c.l.b16 %v237
  %v1218 = vunpack.c.l.b16 %v238
  %v1219 = vunpack.c.l.b16 %v239
  %v1220 = vunpack.c.l.b16 %v240
  %v1221 = vunpack.c.l.b16 %v241
  %v1222 = vunpack.c.l.b16 %v242
  %v1223 = vunpack.c.l.b16 %v243
  %v1224 = vunpack.c.l.b16 %v244
  %v1225 = vunpack.c.l.b16 %v245
  %v1226 = vunpack.c.l.b16 %v246
  %v1227 = vunpack.c.l.b16 %v247
  %v1228 = vunpack.c.l.b16 %v248
  %v1229 = vunpack.c.l.b16 %v249
  %v1230 = vunpack.c.l.b16 %v250
  %v1231 = vunpack.c.l.b16 %v251
  %v1232 = vunpack.c.l.b16 %v252
  %v1233 = vunpack.c.l.b16 %v253
  %v1234 = vunpack.c.l.b16 %v254
  %v1235 = vunpack.c.l.b16 %v255
  %v1236 = vunpack.c.l.b16 %v256
  %v1237 = vunpack.c.l.b16 %v257
  %v1238 = vunpack.c.l.b16 %v258
  %v1239 = vunpack.c.l.b16 %v259
  %v1240 = vunpack.c.l.b16 %v260
  %v1241 = vunpack.c.l.b16 %v261
  %v1242 = vunpack.c.l.b16 %v262
  %v1243 = vunpack.c.l.b16 %v263
  %v1244 = vunpack.c.l.b16 %v264
  %v1245 = vunpack.c.l.b16 %v265
  %v1246 = vunpack.c.l.b16 %v266
  %v1247 = vunpack.c.l.b16 %v267
  %v1248 = vunpack.c.l.b16 %v268
  %v1249 = vunpack.c.l.b16 %v269
  %v1250 = vunpack.c.l.b16 %v270
  %v1251 = vunpack.c.l.b16 %v271
  %v1252 = vunpack.c.l.b16 %v272
  %v1253 = vunpack.c.l.b16 %v273
  %v1254 = vunpack.c.l.b16 %v274
  %v1255 = vunpack.c.l.b16 %v275
  %v1256 = vunpack.c.l.b16 %v276
  %v1257 = vunpack.c.l.b16 %v277
  %v1258 = vunpack.c.l.b16 %v278
  %v1259 = vunpack.c.l.b16 %v279
  %v1260 = vunpack.c.l.b16 %v280
  %v1261 = vunpack.c.l.b16 %v281
  %v1262 = vunpack.c.l.b16 %v282
  %v1263 = vunpack.c.l.b16 %v283
  %v1264 = vunpack.c.l.b16 %v284
  %v1265 = vunpack.c.l.b16 %v285
  %v1266 = vunpack.c.l.b16 %v286
  %v1267 = vunpack.c.l.b16 %v287
  %v1268 = vunpack.c.l.b16 %v288
  %v1269 = vunpack.c.l.b16 %v289
  %v1270 = vunpack.c.l.b16 %v290
  %v1271 = vunpack.c.l.b16 %v291
  %v1272 = vunpack.c.l.b16 %v292
  %v1273 = vunpack.c.l.b16 %v293
  %v1274 = vunpack.c.l.b16 %v294
  %v1275 = vunpack.c.l.b16 %v295
  %v1276 = vunpack.c.l.b16 %v296
  %v1277 = vunpack.c.l.b16 %v297
  %v1278 = vunpack.c.l.b16 %v298
  %v1279 = vunpack.c.l.b16 %v299
  %v1280 = vunpack.c.l.b16 %v300
  %v1281 = vunpack.c.l.b16 %v301
  %v1282 = vunpack.c.l.b16 %v302
  %v1283 = vunpack.c.l.b16 %v303
  %v1284 = vunpack.c.l.b16 %v304
  %v1285 = vunpack.c.l.b16 %v305
  %v1286 = vunpack.c.l.b16 %v306
  %v1287 = vunpack.c.l.b16 %v307
  %v1288 = vunpack.c.l.b16 %v308
  %v1289 = vunpack.c.l.b16 %v309
  %v1290 = vunpack.c.l.b16 %v310
  %v1291 = vunpack.c.l.b16 %v311
  %v1292 = vunpack.c.l.b16 %v312
  %v1293 = vunpack.c.l.b16 %v313
  %v1294 = vunpack.c.l.b16 %v314
  %v1295 = vunpack.c.l.b16 %v315
  %v1296 = vunpack.c.l.b16 %v316
  %v1297 = vunpack.c.l.b16 %v317
  %v1298 = vunpack.c.l.b16 %v318
  %v1299 = vunpack.c.l.b16 %v319
  %v1300 = vunpack.c.l.b16 %v320
  %v1301 = vunpack.c.l.b16 %v321
  %v1302 = vunpack.c.l.b16 %v322
  %v1303 = vunpack.c.l.b16 %v323
  %v1304 = vunpack.c.l.b16 %v324
  %v1305 = vunpack.c.l.b16 %v325
  %v1306 = vunpack.c.l.b16 %v326
  %v1307 = vunpack.c.l.b16 %v327
  %v1308 = vunpack.c.l.b16 %v328
  %v1309 = vunpack.c.l.b16 %v329
  %v1310 = vunpack.c.l.b16 %v330
  %v1311 = vunpack.c.l.b16 %v331
  %v1312 = vunpack.c.l.b16 %v332
  %v1313 = vunpack.c.l.b16 %v333
  %v1314 = vunpack.c.l.b16 %v334
  %v1315 = vunpack.c.l.b16 %v335
  %v1316 = vunpack.c.l.b16 %v336
  %v1317 = vunpack.c.l.b16 %v337
  %v1318 = vunpack.c.l.b16 %v338
  %v1319 = vunpack.c.l.b16 %v339
  %v1320 = vunpack.c.l.b16 %v340
  %v1321 = vunpack.c.l.b16 %v341
  %v1322 = vunpack.c.l.b16 %v342
  %v1323 = vunpack.c.l.b16 %v343
  %v1324 = vunpack.c.l.b16 %v344
  %v1325 = vunpack.c.l.b16 %v345
  %v1326 = vunpack.c.l.b16 %v346
  %v1327 = vunpack.c.l.b16 %v347
  %v1328 = vunpack.c.l.b16 %v348
  %v1329 = vunpack.c.l.b16 %v349
  %v1330 = vunpack.c.l.b16 %v350
  %v1331 = vunpack.c.l.b16 %v351
  %v1332 = vunpack.c.l.b16 %v352
  %v1333 = vunpack.c.l.b16 %v353
  %v1334 = vunpack.c.l.b16 %v354
  %v1335 = vunpack.c.l.b16 %v355
  %v1336 = vunpack.c.l.b16 %v356
  %v1337 = vunpack.c.l.b16 %v357
  %v1338 = vunpack.c.l.b16 %v358
  %v1339 = vunpack.c.l.b16 %v359
  %v1340 = vunpack.c.l.b16 %v360
  %v1341 = vunpack.c.l.b16 %v361
  %v1342 = vunpack.c.l.b16 %v362
  %v1343 = vunpack.c.l.b16 %v363
  %v1344 = vunpack.c.l.b16 %v364
  %v1345 = vunpack.c.l.b16 %v365
  %v1346 = vunpack.c.l.b16 %v366
  %v1347 = vunpack.c.l.b16 %v367
  %v1348 = vunpack.c.l.b16 %v368
  %v1349 = vunpack.c.l.b16 %v369
  %v1350 = vunpack.c.l.b16 %v370
  %v1351 = vunpack.c.l.b16 %v371
  %v1352 = vunpack.c.l.b16 %v372
  %v1353 = vunpack.c.l.b16 %v373
  %v1354 = vunpack.c.l.b16 %v374
  %v1355 = vunpack.c.l.b16 %v375
  %v1356 = vunpack.c.l.b16 %v376
  %v1357 = vunpack.c.l.b16 %v377
  %v1358 = vunpack.c.l.b16 %v378
  %v1359 = vunpack.c.l.b16 %v379
  %v1360 = vunpack.c.l.b16 %v380
  %v1361 = vunpack.c.l.b16 %v381
  %v1362 = vunpack.c.l.b16 %v382
  %v1363 = vunpack.c.l.b16 %v383
  %v1364 = vunpack.c.l.b16 %v384
  %v1365 = vunpack.c.l.b16 %v385
  %v1366 = vunpack.c.l.b16 %v386
  %v1367 = vunpack.c.l.b16 %v387
  %v1368 = vunpack.c.l.b16 %v388
  %v1369 = vunpack.c.l.b16 %v389
  %v1370 = vunpack.c.l.b16 %v390
  %v1371 = vunpack.c.l.b16 %v391
  %v1372 = vunpack.c.l.b16 %v392
  %v1373 = vunpack.c.l.b16 %v393
  %v1374 = vunpack.c.l.b16 %v394
  %v1375 = vunpack.c.l.b16 %v395
  %v1376 = vunpack.c.l.b16 %v396
  %v1377 = vunpack.c.l.b16 %v397
  %v1378 = vunpack.c.l.b16 %v398
  %v1379 = vunpack.c.l.b16 %v399
  %v1380 = vunpack.c.l.b16 %v400
  %v1381 = vunpack.c.l.b16 %v401
  %v1382 = vunpack.c.l.b16 %v402
  %v1383 = vunpack.c.l.b16 %v403
  %v1384 = vunpack.c.l.b16 %v404
  %v1385 = vunpack.c.l.b16 %v405
  %v1386 = vunpack.c.l.b16 %v406
  %v1387 = vunpack.c.l.b16 %v407
  %v1388 = vunpack.c.l.b16 %v408
  %v1389 = vunpack.c.l.b16 %v409
  %v1390 = vunpack.c.l.b16 %v410
  %v1391 = vunpack.c.l.b16 %v411
  %v1392 = vunpack.c.l.b16 %v412
  %v1393 = vunpack.c.l.b16 %v413
  %v1394 = vunpack.c.l.b16 %v414
  %v1395 = vunpack.c.l.b16 %v415
  %v1396 = vunpack.c.l.b16 %v416
  %v1397 = vpack.c.b16 %v1006, %v1005
  %v1398 = vpack.c.b16 %v1008, %v1007
  %v1399 = vpack.c.b16 %v1010, %v1009
  %v1400 = vpack.c.b16 %v1012, %v1011
  %v1401 = vpack.c.b16 %v1014, %v1013
  %v1402 = vpack.c.b16 %v1016, %v1015
  %v1403 = vpack.c.b16 %v1018, %v1017
  %v1404 = vpack.c.b16 %v1020, %v1019
  %v1405 = vpack.c.b16 %v1022, %v1021
  %v1406 = vpack.c.b16 %v1024, %v1023
  %v1407 = vpack.c.b16 %v1026, %v1025
  %v1408 = vpack.c.b16 %v1028, %v1027
  %v1409 = vpack.c.b16 %v1030, %v1029
  %v1410 = vpack.c.b16 %v1032, %v1031
  %v1411 = vpack.c.b16 %v1034, %v1033
  %v1412 = vpack.c.b16 %v1036, %v1035
  %v1413 = vpack.c.b16 %v1038, %v1037
  %v1414 = vpack.c.b16 %v1040, %v1039
  %v1415 = vpack.c.b16 %v1042, %v1041
  %v1416 = vpack.c.b16 %v1044, %v1043
  %v1417 = vpack.c.b16 %v1046, %v1045
  %v1418 = vpack.c.b16 %v1048, %v1047
  %v1419 = vpack.c.b16 %v1050, %v1049
  %v1420 = vpack.c.b16 %v1052, %v1051
  %v1421 = vpack.c.b16 %v1054, %v1053
  %v1422 = vpack.c.b16 %v1056, %v1055
  %v1423 = vpack.c.b16 %v1058, %v1057
  %v1424 = vpack.c.b16 %v1060, %v1059
  %v1425 = vpack.c.b16 %v1062, %v1061
  %v1426 = vpack.c.b16 %v1064, %v1063
  %v1427 = vpack.c.b16 %v1066, %v1065
  %v1428 = vpack.c.b16 %v1068, %v1067
  %v1429 = vpack.c.b16 %v1070, %v1069
  %v1430 = vpack.c.b16 %v1072, %v1071
  %v1431 = vpack.c.b16 %v1074, %v1073
  %v1432 = vpack.c.b16 %v1076, %v1075
  %v1433 = vpack.c.b16 %v1078, %v1077
  %v1434 = vpack.c.b16 %v1080, %v1079
  %v1435 = vpack.c.b16 %v1082, %v1081
  %v1436 = vpack.c.b16 %v1084, %v1083
  %v1437 = vpack.c.b16 %v1086, %v1085
  %v1438 = vpack.c.b16 %v1088, %v1087
  %v1439 = vpack.c.b16 %v1090, %v1089
  %v1440 = vpack.c.b16 %v1092, %v1091
  %v1441 = vpack.c.b16 %v1094, %v1093
  %v1442 = vpack.c.b16 %v1096, %v1095
  %v1443 = vpack.c.b16 %v1098, %v1097
  %v1444 = vpack.c.b16 %v1100, %v1099
  %v1445 = vpack.c.b16 %v1102, %v1101
  %v1446 = vpack.c.b16 %v1104, %v1103
  %v1447 = vpack.c.b16 %v1106, %v1105
  %v1448 = vpack.c.b16 %v1108, %v1107
  %v1449 = vpack.c.b16 %v1110, %v1109
  %v1450 = vpack.c.b16 %v1112, %v1111
  %v1451 = vpack.c.b16 %v1114, %v1113
  %v1452 = vpack.c.b16 %v1116, %v1115
  %v1453 = vpack.c.b16 %v1118, %v1117
  %v1454 = vpack.c.b16 %v1120, %v1119
  %v1455 = vpack.c.b16 %v1122, %v1121
  %v1456 = vpack.c.b16 %v1124, %v1123
  %v1457 = vpack.c.b16 %v1126, %v1125
  %v1458 = vpack.c.b16 %v1128, %v1127
  %v1459 = vpack.c.b16 %v1130, %v1129
  %v1460 = vpack.c.b16 %v1132, %v1131
  %v1461 = vpack.c.b16 %v1134, %v1133
  %v1462 = vpack.c.b16 %v1136, %v1135
  %v1463 = vpack.c.b16 %v1138, %v1137
  %v1464 = vpack.c.b16 %v1140, %v1139
  %v1465 = vpack.c.b16 %v1142, %v1141
  %v1466 = vpack.c.b16 %v1144, %v1143
  %v1467 = vpack.c.b16 %v1146, %v1145
  %v1468 = vpack.c.b16 %v1148, %v1147
  %v1469 = vpack.c.b16 %v1150, %v1149
  %v1470 = vpack.c.b16 %v1152, %v1151
  %v1471 = vpack.c.b16 %v1154, %v1153
  %v1472 = vpack.c.b16 %v1156, %v1155
  %v1473 = vpack.c.b16 %v1158, %v1157
  %v1474 = vpack.c.b16 %v1160, %v1159
  %v1475 = vpack.c.b16 %v1162, %v1161
  %v1476 = vpack.c.b16 %v1164, %v1163
  %v1477 = vpack.c.b16 %v1166, %v1165
  %v1478 = vpack.c.b16 %v1168, %v1167
  %v1479 = vpack.c.b16 %v1170, %v1169
  %v1480 = vpack.c.b16 %v1172, %v1171
  %v1481 = vpack.c.b16 %v1174, %v1173
  %v1482 = vpack.c.b16 %v1176, %v1175
  %v1483 = vpack.c.b16 %v1178, %v1177
  %v1484 = vpack.c.b16 %v1180, %v1179
  %v1485 = vpack.c.b16 %v1182, %v1181
  %v1486 = vpack.c.b16 %v1184, %v1183
  %v1487 = vpack.c.b16 %v1186, %v1185
  %v1488 = vpack.c.b16 %v1188, %v1187
  %v1489 = vpack.c.b16 %v1190, %v1189
  %v1490 = vpack.c.b16 %v1192, %v1191
  %v1491 = vpack.c.b16 %v1194, %v1193
  %v1492 = vpack.c.b16 %v1196, %v1195
  %v1493 = vpack.c.b16 %v1198, %v1197
  %v1494 = vpack.c.b16 %v1200, %v1199
  %v1495 = vpack.c.b16 %v1202, %v1201
  %v1496 = vpack.c.b16 %v1204, %v1203
  %v1497 = vpack.c.b16 %v1206, %v1205
  %v1498 = vpack.c.b16 %v1208, %v1207
  %v1499 = vpack.c.b16 %v1210, %v1209
  %v1500 = vpack.c.b16 %v1212, %v1211
  %v1501 = vpack.c.b16 %v1214, %v1213
  %v1502 = vpack.c.b16 %v1216, %v1215
  %v1503 = vpack.c.b16 %v1218, %v1217
  %v1504 = vpack.c.b16 %v1220, %v1219
  %v1505 = vpack.c.b16 %v1222, %v1221
  %v1506 = vpack.c.b16 %v1224, %v1223
  %v1507 = vpack.c.b16 %v1226, %v1225
  %v1508 = vpack.c.b16 %v1228, %v1227
  %v1509 = vpack.c.b16 %v1230, %v1229
  %v1510 = vpack.c.b16 %v1232, %v1231
  %v1511 = vpack.c.b16 %v1234, %v1233
  %v1512 = vpack.c.b16 %v1236, %v1235
  %v1513 = vpack.c.b16 %v1238, %v1237
  %v1514 = vpack.c.b16 %v1240, %v1239
  %v1515 = vpack.c.b16 %v1242, %v1241
  %v1516 = vpack.c.b16 %v1244, %v1243
  %v1517 = vpack.c.b16 %v1246, %v1245
  %v1518 = vpack.c.b16 %v1248, %v1247
  %v1519 = vpack.c.b16 %v1250, %v1249
  %v1520 = vpack.c.b16 %v1252, %v1251
  %v1521 = vpack.c.b16 %v1254, %v1253
  %v1522 = vpack.c.b16 %v1256, %v1255
  %v1523 = vpack.c.b16 %v1258, %v1257
  %v1524 = vpack.c.b16 %v1260, %v1259
  %v1525 = vpack.c.b16 %v1262, %v1261
  %v1526 = vpack.c.b16 %v1264, %v1263
  %v1527 = vpack.c.b16 %v1266, %v1265
  %v1528 = vpack.c.b16 %v1268, %v1267
  %v1529 = vpack.c.b16 %v1270, %v1269
  %v1530 = vpack.c.b16 %v1272, %v1271
  %v1531 = vpack.c.b16 %v1274, %v1273
  %v1532 = vpack.c.b16 %v1276, %v1275
  %v1533 = vpack.c.b16 %v1278, %v1277
  %v1534 = vpack.c.b16 %v1280, %v1279
  %v1535 = vpack.c.b16 %v1282, %v1281
  %v1536 = vpack.c.b16 %v1284, %v1283
  %v1537 = vpack.c.b16 %v1286, %v1285
  %v1538 = vpack.c.b16 %v1288, %v1287
  %v1539 = vpack.c.b16 %v1290, %v1289
  %v1540 = vpack.c.b16 %v1292, %v1291
  %v1541 = vpack.c.b16 %v1294, %v1293
  %v1542 = vpack.c.b16 %v1296, %v1295
  %v1543 = vpack.c.b16 %v1298, %v1297
  %v1544 = vpack.c.b16 %v1300, %v1299
  %v1545 = vpack.c.b16 %v1302, %v1301
  %v1546 = vpack.c.b16 %v1304, %v1303
  %v1547 = vpack.c.b16 %v1306, %v1305
  %v1548 = vpack.c.b16 %v1308, %v1307
  %v1549 = vpack.c.b16 %v1310, %v1309
  %v1550 = vpack.c.b16 %v1312, %v1311
  %v1551 = vpack.c.b16 %v1314, %v1313
  %v1552 = vpack.c.b16 %v1316, %v1315
  %v1553 = vpack.c.b16 %v1318, %v1317
  %v1554 = vpack.c.b16 %v1320, %v1319
  %v1555 = vpack.c.b16 %v1322, %v1321
  %v1556 = vpack.c.b16 %v1324, %v1323
  %v1557 = vpack.c.b16 %v1326, %v1325
  %v1558 = vpack.c.b16 %v1328, %v1327
  %v1559 = vpack.c.b16 %v1330, %v1329
  %v1560 = vpack.c.b16 %v1332, %v1331
  %v1561 = vpack.c.b16 %v1334, %v1333
  %v1562 = vpack.c.b16 %v1336, %v1335
  %v1563 = vpack.c.b16 %v1338, %v1337
  %v1564 = vpack.c.b16 %v1340, %v1339
  %v1565 = vpack.c.b16 %v1342, %v1341
  %v1566 = vpack.c.b16 %v1344, %v1343
  %v1567 = vpack.c.b16 %v1346, %v1345
  %v1568 = vpack.c.b16 %v1348, %v1347
  %v1569 = vpack.c.b16 %v1350, %v1349
  %v1570 = vpack.c.b16 %v1352, %v1351
  %v1571 = vpack.c.b16 %v1354, %v1353
  %v1572 = vpack.c.b16 %v1356, %v1355
  %v1573 = vpack.c.b16 %v1358, %v1357
  %v1574 = vpack.c.b16 %v1360, %v1359
  %v1575 = vpack.c.b16 %v1362, %v1361
  %v1576 = vpack.c.b16 %v1364, %v1363
  %v1577 = vpack.c.b16 %v1366, %v1365
  %v1578 = vpack.c.b16 %v1368, %v1367
  %v1579 = vpack.c.b16 %v1370, %v1369
  %v1580 = vpack.c.b16 %v1372, %v1371
  %v1581 = vpack.c.b16 %v1374, %v1373
  %v1582 = vpack.c.b16 %v1376, %v1375
  %v1583 = vpack.c.b16 %v1378, %v1377
  %v1584 = vpack.c.b16 %v1380, %v1379
  %v1585 = vpack.c.b16 %v1382, %v1381
  %v1586 = vpack.c.b16 %v1384, %v1383
  %v1587 = vpack.c.b16 %v1386, %v1385
  %v1588 = vpack.c.b16 %v1388, %v1387
  %v1589 = vpack.c.b16 %v1390, %v1389
  %v1590 = vpack.c.b16 %v1392, %v1391
  %v1591 = vpack.c.b16 %v1394, %v1393
  %v1592 = vpack.c.b16 %v1396, %v1395
  %vm1789 = vcmask 523264
  %v1791 = vsel %vm1789, %v588, 0
  %1793 = vmatprep.subr.bf16.mxu0 0
  %1794 = vmatpush1.bf16.msra.mxu0 %v1397
  %1795 = vmatprep.subr.bf16.mxu0 0
  %1796 = vmatpush1.bf16.msra.mxu0 %v1398
  %1797 = vmatprep.subr.bf16.mxu0 0
  %1798 = vmatpush1.bf16.msra.mxu0 %v1399
  %1799 = vmatprep.subr.bf16.mxu0 0
  %1800 = vmatpush1.bf16.msra.mxu0 %v1400
  %1801 = vmatprep.subr.bf16.mxu0 0
  %1802 = vmatpush1.bf16.msra.mxu0 %v1401
  %1803 = vmatprep.subr.bf16.mxu0 0
  %1804 = vmatpush1.bf16.msra.mxu0 %v1402
  %1805 = vmatprep.subr.bf16.mxu0 0
  %1806 = vmatpush1.bf16.msra.mxu0 %v1403
  %1807 = vmatprep.subr.bf16.mxu0 0
  %1808 = vmatpush1.bf16.msra.mxu0 %v1404
  %1809 = vmatprep.subr.bf16.mxu0 0
  %1810 = vmatpush1.bf16.msra.mxu0 %v1405
  %1811 = vmatprep.subr.bf16.mxu0 0
  %1812 = vmatpush1.bf16.msra.mxu0 %v1406
  %1813 = vmatprep.subr.bf16.mxu0 0
  %1814 = vmatpush1.bf16.msra.mxu0 %v1407
  %1815 = vmatprep.subr.bf16.mxu0 0
  %1816 = vmatpush1.bf16.msra.mxu0 %v1408
  %1817 = vmatprep.subr.bf16.mxu0 0
  %1818 = vmatpush1.bf16.msra.mxu0 %v1409
  %1819 = vmatprep.subr.bf16.mxu0 0
  %1820 = vmatpush1.bf16.msra.mxu0 %v1410
  %1821 = vmatprep.subr.bf16.mxu0 0
  %1822 = vmatpush1.bf16.msra.mxu0 %v1411
  %1823 = vmatprep.subr.bf16.mxu0 0
  %1824 = vmatpush1.bf16.msra.mxu0 %v1412
  %1825 = vmatprep.mubr.bf16.mxu0 %v465
  %1826 = vmatmul.mubr.bf16.gmra.mrb[0].mxu0 %v451
  %v1827 = vpop.f32.mrb[0].mxu0
  %v1828 = vadd.f32 %v422, %v1827
  %v1829 = vpop.f32.mrb[0].mxu0
  %v1830 = vpop.f32.mrb[0].mxu0
  %v1831 = vpop.f32.mrb[0].mxu0
  %1832 = vdwg.mxu0
  %1833 = vmatprep.subr.bf16.mxu0 0
  %1834 = vmatpush1.bf16.msra.mxu0 %v1413
  %1835 = vmatprep.subr.bf16.mxu0 0
  %1836 = vmatpush1.bf16.msra.mxu0 %v1414
  %1837 = vmatprep.subr.bf16.mxu0 0
  %1838 = vmatpush1.bf16.msra.mxu0 %v1415
  %1839 = vmatprep.subr.bf16.mxu0 0
  %1840 = vmatpush1.bf16.msra.mxu0 %v1416
  %1841 = vmatprep.subr.bf16.mxu0 0
  %1842 = vmatpush1.bf16.msra.mxu0 %v1417
  %1843 = vmatprep.subr.bf16.mxu0 0
  %1844 = vmatpush1.bf16.msra.mxu0 %v1418
  %1845 = vmatprep.subr.bf16.mxu0 0
  %1846 = vmatpush1.bf16.msra.mxu0 %v1419
  %1847 = vmatprep.subr.bf16.mxu0 0
  %1848 = vmatpush1.bf16.msra.mxu0 %v1420
  %1849 = vmatprep.subr.bf16.mxu0 0
  %1850 = vmatpush1.bf16.msra.mxu0 %v1421
  %1851 = vmatprep.subr.bf16.mxu0 0
  %1852 = vmatpush1.bf16.msra.mxu0 %v1422
  %1853 = vmatprep.subr.bf16.mxu0 0
  %1854 = vmatpush1.bf16.msra.mxu0 %v1423
  %1855 = vmatprep.subr.bf16.mxu0 0
  %1856 = vmatpush1.bf16.msra.mxu0 %v1424
  %1857 = vmatprep.subr.bf16.mxu0 0
  %1858 = vmatpush1.bf16.msra.mxu0 %v1425
  %1859 = vmatprep.subr.bf16.mxu0 0
  %1860 = vmatpush1.bf16.msra.mxu0 %v1426
  %1861 = vmatprep.subr.bf16.mxu0 0
  %1862 = vmatpush1.bf16.msra.mxu0 %v1427
  %1863 = vmatprep.subr.bf16.mxu0 0
  %1864 = vmatpush1.bf16.msra.mxu0 %v1428
  %1865 = vmatprep.mubr.bf16.mxu0 %v475
  %1866 = vmatmul.mubr.bf16.gmra.mrb[0].mxu0 %v473
  %v1867 = vpop.f32.mrb[0].mxu0
  %v1868 = vadd.f32 %v1828, %v1867
  %v1869 = vpop.f32.mrb[0].mxu0
  %v1870 = vpop.f32.mrb[0].mxu0
  %v1871 = vpop.f32.mrb[0].mxu0
  %1872 = vdwg.mxu0
  %1873 = vmatprep.subr.bf16.mxu0 0
  %1874 = vmatpush1.bf16.msra.mxu0 %v1429
  %1875 = vmatprep.subr.bf16.mxu0 0
  %1876 = vmatpush1.bf16.msra.mxu0 %v1430
  %1877 = vmatprep.subr.bf16.mxu0 0
  %1878 = vmatpush1.bf16.msra.mxu0 %v1431
  %1879 = vmatprep.subr.bf16.mxu0 0
  %1880 = vmatpush1.bf16.msra.mxu0 %v1432
  %1881 = vmatprep.subr.bf16.mxu0 0
  %1882 = vmatpush1.bf16.msra.mxu0 %v1433
  %1883 = vmatprep.subr.bf16.mxu0 0
  %1884 = vmatpush1.bf16.msra.mxu0 %v1434
  %1885 = vmatprep.subr.bf16.mxu0 0
  %1886 = vmatpush1.bf16.msra.mxu0 %v1435
  %1887 = vmatprep.subr.bf16.mxu0 0
  %1888 = vmatpush1.bf16.msra.mxu0 %v1436
  %1889 = vmatprep.subr.bf16.mxu0 0
  %1890 = vmatpush1.bf16.msra.mxu0 %v1437
  %1891 = vmatprep.subr.bf16.mxu0 0
  %1892 = vmatpush1.bf16.msra.mxu0 %v1438
  %1893 = vmatprep.subr.bf16.mxu0 0
  %1894 = vmatpush1.bf16.msra.mxu0 %v1439
  %1895 = vmatprep.subr.bf16.mxu0 0
  %1896 = vmatpush1.bf16.msra.mxu0 %v1440
  %1897 = vmatprep.subr.bf16.mxu0 0
  %1898 = vmatpush1.bf16.msra.mxu0 %v1441
  %1899 = vmatprep.subr.bf16.mxu0 0
  %1900 = vmatpush1.bf16.msra.mxu0 %v1442
  %1901 = vmatprep.subr.bf16.mxu0 0
  %1902 = vmatpush1.bf16.msra.mxu0 %v1443
  %1903 = vmatprep.subr.bf16.mxu0 0
  %1904 = vmatpush1.bf16.msra.mxu0 %v1444
  %1905 = vmatprep.mubr.bf16.mxu0 %v472
  %1906 = vmatmul.mubr.bf16.gmra.mrb[0].mxu0 %v458
  %v1907 = vpop.f32.mrb[0].mxu0
  %v1908 = vadd.f32 %v1868, %v1907
  %v1909 = vpop.f32.mrb[0].mxu0
  %v1910 = vpop.f32.mrb[0].mxu0
  %v1911 = vpop.f32.mrb[0].mxu0
  %1912 = vdwg.mxu0
  %1913 = vmatprep.subr.bf16.mxu0 0
  %1914 = vmatpush1.bf16.msra.mxu0 %v1445
  %1915 = vmatprep.subr.bf16.mxu0 0
  %1916 = vmatpush1.bf16.msra.mxu0 %v1446
  %1917 = vmatprep.subr.bf16.mxu0 0
  %1918 = vmatpush1.bf16.msra.mxu0 %v1447
  %1919 = vmatprep.subr.bf16.mxu0 0
  %1920 = vmatpush1.bf16.msra.mxu0 %v1448
  %1921 = vmatprep.subr.bf16.mxu0 0
  %1922 = vmatpush1.bf16.msra.mxu0 %v1449
  %1923 = vmatprep.subr.bf16.mxu0 0
  %1924 = vmatpush1.bf16.msra.mxu0 %v1450
  %1925 = vmatprep.subr.bf16.mxu0 0
  %1926 = vmatpush1.bf16.msra.mxu0 %v1451
  %1927 = vmatprep.subr.bf16.mxu0 0
  %1928 = vmatpush1.bf16.msra.mxu0 %v1452
  %1929 = vmatprep.subr.bf16.mxu0 0
  %1930 = vmatpush1.bf16.msra.mxu0 %v1453
  %1931 = vmatprep.subr.bf16.mxu0 0
  %1932 = vmatpush1.bf16.msra.mxu0 %v1454
  %1933 = vmatprep.subr.bf16.mxu0 0
  %1934 = vmatpush1.bf16.msra.mxu0 %v1455
  %1935 = vmatprep.subr.bf16.mxu0 0
  %1936 = vmatpush1.bf16.msra.mxu0 %v1456
  %1937 = vmatprep.subr.bf16.mxu0 0
  %1938 = vmatpush1.bf16.msra.mxu0 %v1457
  %1939 = vmatprep.subr.bf16.mxu0 0
  %1940 = vmatpush1.bf16.msra.mxu0 %v1458
  %1941 = vmatprep.subr.bf16.mxu0 0
  %1942 = vmatpush1.bf16.msra.mxu0 %v1459
  %1943 = vmatprep.subr.bf16.mxu0 0
  %1944 = vmatpush1.bf16.msra.mxu0 %v1460
  %1945 = vmatprep.mubr.bf16.mxu0 %v476
  %1946 = vmatmul.mubr.bf16.gmra.mrb[0].mxu0 %v474
  %v1947 = vpop.f32.mrb[0].mxu0
  %v1948 = vadd.f32 %v1908, %v1947
  %v1949 = vpop.f32.mrb[0].mxu0
  %v1950 = vpop.f32.mrb[0].mxu0
  %v1951 = vpop.f32.mrb[0].mxu0
  %1952 = vdwg.mxu0
  %1953 = vmatprep.subr.bf16.mxu0 0
  %1954 = vmatpush1.bf16.msra.mxu0 %v1461
  %1955 = vmatprep.subr.bf16.mxu0 0
  %1956 = vmatpush1.bf16.msra.mxu0 %v1462
  %1957 = vmatprep.subr.bf16.mxu0 0
  %1958 = vmatpush1.bf16.msra.mxu0 %v1463
  %1959 = vmatprep.subr.bf16.mxu0 0
  %1960 = vmatpush1.bf16.msra.mxu0 %v1464
  %1961 = vmatprep.subr.bf16.mxu0 0
  %1962 = vmatpush1.bf16.msra.mxu0 %v1465
  %1963 = vmatprep.subr.bf16.mxu0 0
  %1964 = vmatpush1.bf16.msra.mxu0 %v1466
  %1965 = vmatprep.subr.bf16.mxu0 0
  %1966 = vmatpush1.bf16.msra.mxu0 %v1467
  %1967 = vmatprep.subr.bf16.mxu0 0
  %1968 = vmatpush1.bf16.msra.mxu0 %v1468
  %1969 = vmatprep.subr.bf16.mxu0 0
  %1970 = vmatpush1.bf16.msra.mxu0 %v1469
  %1971 = vmatprep.subr.bf16.mxu0 0
  %1972 = vmatpush1.bf16.msra.mxu0 %v1470
  %1973 = vmatprep.subr.bf16.mxu0 0
  %1974 = vmatpush1.bf16.msra.mxu0 %v1471
  %1975 = vmatprep.subr.bf16.mxu0 0
  %1976 = vmatpush1.bf16.msra.mxu0 %v1472
  %1977 = vmatprep.subr.bf16.mxu0 0
  %1978 = vmatpush1.bf16.msra.mxu0 %v1473
  %1979 = vmatprep.subr.bf16.mxu0 0
  %1980 = vmatpush1.bf16.msra.mxu0 %v1474
  %1981 = vmatprep.subr.bf16.mxu0 0
  %1982 = vmatpush1.bf16.msra.mxu0 %v1475
  %1983 = vmatprep.subr.bf16.mxu0 0
  %1984 = vmatpush1.bf16.msra.mxu0 %v1476
  %1985 = vmatprep.mubr.bf16.mxu0 %v514
  %1986 = vmatmul.mubr.bf16.gmra.mrb[0].mxu0 %v500
  %v1987 = vpop.f32.mrb[0].mxu0
  %v1988 = vadd.f32 %v1948, %v1987
  %v1989 = vpop.f32.mrb[0].mxu0
  %v1990 = vpop.f32.mrb[0].mxu0
  %v1991 = vpop.f32.mrb[0].mxu0
  %1992 = vdwg.mxu0
  %1993 = vmatprep.subr.bf16.mxu0 0
  %1994 = vmatpush1.bf16.msra.mxu0 %v1477
  %1995 = vmatprep.subr.bf16.mxu0 0
  %1996 = vmatpush1.bf16.msra.mxu0 %v1478
  %1997 = vmatprep.subr.bf16.mxu0 0
  %1998 = vmatpush1.bf16.msra.mxu0 %v1479
  %1999 = vmatprep.subr.bf16.mxu0 0
  %2000 = vmatpush1.bf16.msra.mxu0 %v1480
  %2001 = vmatprep.subr.bf16.mxu0 0
  %2002 = vmatpush1.bf16.msra.mxu0 %v1481
  %2003 = vmatprep.subr.bf16.mxu0 0
  %2004 = vmatpush1.bf16.msra.mxu0 %v1482
  %2005 = vmatprep.subr.bf16.mxu0 0
  %2006 = vmatpush1.bf16.msra.mxu0 %v1483
  %2007 = vmatprep.subr.bf16.mxu0 0
  %2008 = vmatpush1.bf16.msra.mxu0 %v1484
  %2009 = vmatprep.subr.bf16.mxu0 0
  %2010 = vmatpush1.bf16.msra.mxu0 %v1485
  %2011 = vmatprep.subr.bf16.mxu0 0
  %2012 = vmatpush1.bf16.msra.mxu0 %v1486
  %2013 = vmatprep.subr.bf16.mxu0 0
  %2014 = vmatpush1.bf16.msra.mxu0 %v1487
  %2015 = vmatprep.subr.bf16.mxu0 0
  %2016 = vmatpush1.bf16.msra.mxu0 %v1488
  %2017 = vmatprep.subr.bf16.mxu0 0
  %2018 = vmatpush1.bf16.msra.mxu0 %v1489
  %2019 = vmatprep.subr.bf16.mxu0 0
  %2020 = vmatpush1.bf16.msra.mxu0 %v1490
  %2021 = vmatprep.subr.bf16.mxu0 0
  %2022 = vmatpush1.bf16.msra.mxu0 %v1491
  %2023 = vmatprep.subr.bf16.mxu0 0
  %2024 = vmatpush1.bf16.msra.mxu0 %v1492
  %2025 = vmatprep.mubr.bf16.mxu0 %v524
  %2026 = vmatmul.mubr.bf16.gmra.mrb[0].mxu0 %v522
  %v2027 = vpop.f32.mrb[0].mxu0
  %v2028 = vadd.f32 %v1988, %v2027
  %v2029 = vpop.f32.mrb[0].mxu0
  %v2030 = vpop.f32.mrb[0].mxu0
  %v2031 = vpop.f32.mrb[0].mxu0
  %2032 = vdwg.mxu0
  %2033 = vmatprep.subr.bf16.mxu0 0
  %2034 = vmatpush1.bf16.msra.mxu0 %v1493
  %2035 = vmatprep.subr.bf16.mxu0 0
  %2036 = vmatpush1.bf16.msra.mxu0 %v1494
  %2037 = vmatprep.subr.bf16.mxu0 0
  %2038 = vmatpush1.bf16.msra.mxu0 %v1495
  %2039 = vmatprep.subr.bf16.mxu0 0
  %2040 = vmatpush1.bf16.msra.mxu0 %v1496
  %2041 = vmatprep.subr.bf16.mxu0 0
  %2042 = vmatpush1.bf16.msra.mxu0 %v1497
  %2043 = vmatprep.subr.bf16.mxu0 0
  %2044 = vmatpush1.bf16.msra.mxu0 %v1498
  %2045 = vmatprep.subr.bf16.mxu0 0
  %2046 = vmatpush1.bf16.msra.mxu0 %v1499
  %2047 = vmatprep.subr.bf16.mxu0 0
  %2048 = vmatpush1.bf16.msra.mxu0 %v1500
  %2049 = vmatprep.subr.bf16.mxu0 0
  %2050 = vmatpush1.bf16.msra.mxu0 %v1501
  %2051 = vmatprep.subr.bf16.mxu0 0
  %2052 = vmatpush1.bf16.msra.mxu0 %v1502
  %2053 = vmatprep.subr.bf16.mxu0 0
  %2054 = vmatpush1.bf16.msra.mxu0 %v1503
  %2055 = vmatprep.subr.bf16.mxu0 0
  %2056 = vmatpush1.bf16.msra.mxu0 %v1504
  %2057 = vmatprep.subr.bf16.mxu0 0
  %2058 = vmatpush1.bf16.msra.mxu0 %v1505
  %2059 = vmatprep.subr.bf16.mxu0 0
  %2060 = vmatpush1.bf16.msra.mxu0 %v1506
  %2061 = vmatprep.subr.bf16.mxu0 0
  %2062 = vmatpush1.bf16.msra.mxu0 %v1507
  %2063 = vmatprep.subr.bf16.mxu0 0
  %2064 = vmatpush1.bf16.msra.mxu0 %v1508
  %2065 = vmatprep.mubr.bf16.mxu0 %v521
  %2066 = vmatmul.mubr.bf16.gmra.mrb[0].mxu0 %v507
  %v2067 = vpop.f32.mrb[0].mxu0
  %v2068 = vadd.f32 %v2028, %v2067
  %v2069 = vpop.f32.mrb[0].mxu0
  %v2070 = vpop.f32.mrb[0].mxu0
  %v2071 = vpop.f32.mrb[0].mxu0
  %2072 = vdwg.mxu0
  %2073 = vmatprep.subr.bf16.mxu0 0
  %2074 = vmatpush1.bf16.msra.mxu0 %v1509
  %2075 = vmatprep.subr.bf16.mxu0 0
  %2076 = vmatpush1.bf16.msra.mxu0 %v1510
  %2077 = vmatprep.subr.bf16.mxu0 0
  %2078 = vmatpush1.bf16.msra.mxu0 %v1511
  %2079 = vmatprep.subr.bf16.mxu0 0
  %2080 = vmatpush1.bf16.msra.mxu0 %v1512
  %2081 = vmatprep.subr.bf16.mxu0 0
  %2082 = vmatpush1.bf16.msra.mxu0 %v1513
  %2083 = vmatprep.subr.bf16.mxu0 0
  %2084 = vmatpush1.bf16.msra.mxu0 %v1514
  %2085 = vmatprep.subr.bf16.mxu0 0
  %2086 = vmatpush1.bf16.msra.mxu0 %v1515
  %2087 = vmatprep.subr.bf16.mxu0 0
  %2088 = vmatpush1.bf16.msra.mxu0 %v1516
  %2089 = vmatprep.subr.bf16.mxu0 0
  %2090 = vmatpush1.bf16.msra.mxu0 %v1517
  %2091 = vmatprep.subr.bf16.mxu0 0
  %2092 = vmatpush1.bf16.msra.mxu0 %v1518
  %2093 = vmatprep.subr.bf16.mxu0 0
  %2094 = vmatpush1.bf16.msra.mxu0 %v1519
  %2095 = vmatprep.subr.bf16.mxu0 0
  %2096 = vmatpush1.bf16.msra.mxu0 %v1520
  %2097 = vmatprep.subr.bf16.mxu0 0
  %2098 = vmatpush1.bf16.msra.mxu0 %v1521
  %2099 = vmatprep.subr.bf16.mxu0 0
  %2100 = vmatpush1.bf16.msra.mxu0 %v1522
  %2101 = vmatprep.subr.bf16.mxu0 0
  %2102 = vmatpush1.bf16.msra.mxu0 %v1523
  %2103 = vmatprep.subr.bf16.mxu0 0
  %2104 = vmatpush1.bf16.msra.mxu0 %v1524
  %2105 = vmatprep.mubr.bf16.mxu0 %v525
  %2106 = vmatmul.mubr.bf16.gmra.mrb[0].mxu0 %v523
  %v2107 = vpop.f32.mrb[0].mxu0
  %v2108 = vadd.f32 %v2068, %v2107
  %v2109 = vpop.f32.mrb[0].mxu0
  %v2110 = vpop.f32.mrb[0].mxu0
  %v2111 = vpop.f32.mrb[0].mxu0
  %2112 = vdwg.mxu0
  %2113 = vmatprep.subr.bf16.mxu0 0
  %2114 = vmatpush1.bf16.msra.mxu0 %v1525
  %2115 = vmatprep.subr.bf16.mxu0 0
  %2116 = vmatpush1.bf16.msra.mxu0 %v1526
  %2117 = vmatprep.subr.bf16.mxu0 0
  %2118 = vmatpush1.bf16.msra.mxu0 %v1527
  %2119 = vmatprep.subr.bf16.mxu0 0
  %2120 = vmatpush1.bf16.msra.mxu0 %v1528
  %2121 = vmatprep.subr.bf16.mxu0 0
  %2122 = vmatpush1.bf16.msra.mxu0 %v1529
  %2123 = vmatprep.subr.bf16.mxu0 0
  %2124 = vmatpush1.bf16.msra.mxu0 %v1530
  %2125 = vmatprep.subr.bf16.mxu0 0
  %2126 = vmatpush1.bf16.msra.mxu0 %v1531
  %2127 = vmatprep.subr.bf16.mxu0 0
  %2128 = vmatpush1.bf16.msra.mxu0 %v1532
  %2129 = vmatprep.subr.bf16.mxu0 0
  %2130 = vmatpush1.bf16.msra.mxu0 %v1533
  %2131 = vmatprep.subr.bf16.mxu0 0
  %2132 = vmatpush1.bf16.msra.mxu0 %v1534
  %2133 = vmatprep.subr.bf16.mxu0 0
  %2134 = vmatpush1.bf16.msra.mxu0 %v1535
  %2135 = vmatprep.subr.bf16.mxu0 0
  %2136 = vmatpush1.bf16.msra.mxu0 %v1536
  %2137 = vmatprep.subr.bf16.mxu0 0
  %2138 = vmatpush1.bf16.msra.mxu0 %v1537
  %2139 = vmatprep.subr.bf16.mxu0 0
  %2140 = vmatpush1.bf16.msra.mxu0 %v1538
  %2141 = vmatprep.subr.bf16.mxu0 0
  %2142 = vmatpush1.bf16.msra.mxu0 %v1539
  %2143 = vmatprep.subr.bf16.mxu0 0
  %2144 = vmatpush1.bf16.msra.mxu0 %v1540
  %2145 = vmatprep.mubr.bf16.mxu0 %v563
  %2146 = vmatmul.mubr.bf16.gmra.mrb[0].mxu0 %v549
  %v2147 = vpop.f32.mrb[0].mxu0
  %v2148 = vadd.f32 %v2108, %v2147
  %v2149 = vpop.f32.mrb[0].mxu0
  %v2150 = vpop.f32.mrb[0].mxu0
  %v2151 = vpop.f32.mrb[0].mxu0
  %2152 = vdwg.mxu0
  %2153 = vmatprep.subr.bf16.mxu0 0
  %2154 = vmatpush1.bf16.msra.mxu0 %v1541
  %2155 = vmatprep.subr.bf16.mxu0 0
  %2156 = vmatpush1.bf16.msra.mxu0 %v1542
  %2157 = vmatprep.subr.bf16.mxu0 0
  %2158 = vmatpush1.bf16.msra.mxu0 %v1543
  %2159 = vmatprep.subr.bf16.mxu0 0
  %2160 = vmatpush1.bf16.msra.mxu0 %v1544
  %2161 = vmatprep.subr.bf16.mxu0 0
  %2162 = vmatpush1.bf16.msra.mxu0 %v1545
  %2163 = vmatprep.subr.bf16.mxu0 0
  %2164 = vmatpush1.bf16.msra.mxu0 %v1546
  %2165 = vmatprep.subr.bf16.mxu0 0
  %2166 = vmatpush1.bf16.msra.mxu0 %v1547
  %2167 = vmatprep.subr.bf16.mxu0 0
  %2168 = vmatpush1.bf16.msra.mxu0 %v1548
  %2169 = vmatprep.subr.bf16.mxu0 0
  %2170 = vmatpush1.bf16.msra.mxu0 %v1549
  %2171 = vmatprep.subr.bf16.mxu0 0
  %2172 = vmatpush1.bf16.msra.mxu0 %v1550
  %2173 = vmatprep.subr.bf16.mxu0 0
  %2174 = vmatpush1.bf16.msra.mxu0 %v1551
  %2175 = vmatprep.subr.bf16.mxu0 0
  %2176 = vmatpush1.bf16.msra.mxu0 %v1552
  %2177 = vmatprep.subr.bf16.mxu0 0
  %2178 = vmatpush1.bf16.msra.mxu0 %v1553
  %2179 = vmatprep.subr.bf16.mxu0 0
  %2180 = vmatpush1.bf16.msra.mxu0 %v1554
  %2181 = vmatprep.subr.bf16.mxu0 0
  %2182 = vmatpush1.bf16.msra.mxu0 %v1555
  %2183 = vmatprep.subr.bf16.mxu0 0
  %2184 = vmatpush1.bf16.msra.mxu0 %v1556
  %2185 = vmatprep.mubr.bf16.mxu0 %v573
  %2186 = vmatmul.mubr.bf16.gmra.mrb[0].mxu0 %v571
  %v2187 = vpop.f32.mrb[0].mxu0
  %v2188 = vadd.f32 %v2148, %v2187
  %v2189 = vpop.f32.mrb[0].mxu0
  %v2190 = vpop.f32.mrb[0].mxu0
  %v2191 = vpop.f32.mrb[0].mxu0
  %2192 = vdwg.mxu0
  %2193 = vmatprep.subr.bf16.mxu0 0
  %2194 = vmatpush1.bf16.msra.mxu0 %v1557
  %2195 = vmatprep.subr.bf16.mxu0 0
  %2196 = vmatpush1.bf16.msra.mxu0 %v1558
  %2197 = vmatprep.subr.bf16.mxu0 0
  %2198 = vmatpush1.bf16.msra.mxu0 %v1559
  %2199 = vmatprep.subr.bf16.mxu0 0
  %2200 = vmatpush1.bf16.msra.mxu0 %v1560
  %2201 = vmatprep.subr.bf16.mxu0 0
  %2202 = vmatpush1.bf16.msra.mxu0 %v1561
  %2203 = vmatprep.subr.bf16.mxu0 0
  %2204 = vmatpush1.bf16.msra.mxu0 %v1562
  %2205 = vmatprep.subr.bf16.mxu0 0
  %2206 = vmatpush1.bf16.msra.mxu0 %v1563
  %2207 = vmatprep.subr.bf16.mxu0 0
  %2208 = vmatpush1.bf16.msra.mxu0 %v1564
  %2209 = vmatprep.subr.bf16.mxu0 0
  %2210 = vmatpush1.bf16.msra.mxu0 %v1565
  %2211 = vmatprep.subr.bf16.mxu0 0
  %2212 = vmatpush1.bf16.msra.mxu0 %v1566
  %2213 = vmatprep.subr.bf16.mxu0 0
  %2214 = vmatpush1.bf16.msra.mxu0 %v1567
  %2215 = vmatprep.subr.bf16.mxu0 0
  %2216 = vmatpush1.bf16.msra.mxu0 %v1568
  %2217 = vmatprep.subr.bf16.mxu0 0
  %2218 = vmatpush1.bf16.msra.mxu0 %v1569
  %2219 = vmatprep.subr.bf16.mxu0 0
  %2220 = vmatpush1.bf16.msra.mxu0 %v1570
  %2221 = vmatprep.subr.bf16.mxu0 0
  %2222 = vmatpush1.bf16.msra.mxu0 %v1571
  %2223 = vmatprep.subr.bf16.mxu0 0
  %2224 = vmatpush1.bf16.msra.mxu0 %v1572
  %2225 = vmatprep.mubr.bf16.mxu0 %v570
  %2226 = vmatmul.mubr.bf16.gmra.mrb[0].mxu0 %v556
  %v2227 = vpop.f32.mrb[0].mxu0
  %v2228 = vadd.f32 %v2188, %v2227
  %v2229 = vpop.f32.mrb[0].mxu0
  %v2230 = vpop.f32.mrb[0].mxu0
  %v2231 = vpop.f32.mrb[0].mxu0
  %2232 = vdwg.mxu0
  %2233 = vmatprep.subr.bf16.mxu0 0
  %2234 = vmatpush1.bf16.msra.mxu0 %v1573
  %2235 = vmatprep.subr.bf16.mxu0 0
  %2236 = vmatpush1.bf16.msra.mxu0 %v1574
  %2237 = vmatprep.subr.bf16.mxu0 0
  %2238 = vmatpush1.bf16.msra.mxu0 %v1575
  %2239 = vmatprep.subr.bf16.mxu0 0
  %2240 = vmatpush1.bf16.msra.mxu0 %v1576
  %2241 = vmatprep.subr.bf16.mxu0 0
  %2242 = vmatpush1.bf16.msra.mxu0 %v1577
  %2243 = vmatprep.subr.bf16.mxu0 0
  %2244 = vmatpush1.bf16.msra.mxu0 %v1578
  %2245 = vmatprep.subr.bf16.mxu0 0
  %2246 = vmatpush1.bf16.msra.mxu0 %v1579
  %2247 = vmatprep.subr.bf16.mxu0 0
  %2248 = vmatpush1.bf16.msra.mxu0 %v1580
  %2249 = vmatprep.subr.bf16.mxu0 0
  %2250 = vmatpush1.bf16.msra.mxu0 %v1581
  %2251 = vmatprep.subr.bf16.mxu0 0
  %2252 = vmatpush1.bf16.msra.mxu0 %v1582
  %2253 = vmatprep.subr.bf16.mxu0 0
  %2254 = vmatpush1.bf16.msra.mxu0 %v1583
  %2255 = vmatprep.subr.bf16.mxu0 0
  %2256 = vmatpush1.bf16.msra.mxu0 %v1584
  %2257 = vmatprep.subr.bf16.mxu0 0
  %2258 = vmatpush1.bf16.msra.mxu0 %v1585
  %2259 = vmatprep.subr.bf16.mxu0 0
  %2260 = vmatpush1.bf16.msra.mxu0 %v1586
  %2261 = vmatprep.subr.bf16.mxu0 0
  %2262 = vmatpush1.bf16.msra.mxu0 %v1587
  %2263 = vmatprep.subr.bf16.mxu0 0
  %2264 = vmatpush1.bf16.msra.mxu0 %v1588
  %2265 = vmatprep.mubr.bf16.mxu0 %v574
  %2266 = vmatmul.mubr.bf16.gmra.mrb[0].mxu0 %v572
  %v2267 = vpop.f32.mrb[0].mxu0
  %v2268 = vadd.f32 %v2228, %v2267
  %v2269 = vpop.f32.mrb[0].mxu0
  %v2270 = vpop.f32.mrb[0].mxu0
  %v2271 = vpop.f32.mrb[0].mxu0
  %2272 = vdwg.mxu0
  %2273 = vmatprep.subr.bf16.mxu0 0
  %2274 = vmatpush1.bf16.msra.mxu0 %v1589
  %2275 = vmatprep.subr.bf16.mxu0 0
  %2276 = vmatpush1.bf16.msra.mxu0 %v1590
  %2277 = vmatprep.subr.bf16.mxu0 0
  %2278 = vmatpush1.bf16.msra.mxu0 %v1591
  %2279 = vmatprep.subr.bf16.mxu0 0
  %2280 = vmatpush1.bf16.msra.mxu0 %v1592
  %2281 = vmatprep.subr.bf16.mxu0 0
  %2282 = vmatpush1.bf16.msra.mxu0 0
  %2283 = vmatprep.subr.bf16.mxu0 0
  %2284 = vmatpush1.bf16.msra.mxu0 0
  %2285 = vmatprep.subr.bf16.mxu0 0
  %2286 = vmatpush1.bf16.msra.mxu0 0
  %2287 = vmatprep.subr.bf16.mxu0 0
  %2288 = vmatpush1.bf16.msra.mxu0 0
  %2289 = vmatprep.subr.bf16.mxu0 0
  %2290 = vmatpush1.bf16.msra.mxu0 0
  %2291 = vmatprep.subr.bf16.mxu0 0
  %2292 = vmatpush1.bf16.msra.mxu0 0
  %2293 = vmatprep.subr.bf16.mxu0 0
  %2294 = vmatpush1.bf16.msra.mxu0 0
  %2295 = vmatprep.subr.bf16.mxu0 0
  %2296 = vmatpush1.bf16.msra.mxu0 0
  %2297 = vmatprep.subr.bf16.mxu0 0
  %2298 = vmatpush1.bf16.msra.mxu0 0
  %2299 = vmatprep.subr.bf16.mxu0 0
  %2300 = vmatpush1.bf16.msra.mxu0 0
  %2301 = vmatprep.subr.bf16.mxu0 0
  %2302 = vmatpush1.bf16.msra.mxu0 0
  %2303 = vmatprep.subr.bf16.mxu0 0
  %2304 = vmatpush1.bf16.msra.mxu0 0
  %2305 = vmatprep.mubr.bf16.mxu0 0
  %2306 = vmatmul.mubr.bf16.gmra.mrb[0].mxu0 %v1791
  %v2307 = vpop.f32.mrb[0].mxu0
  %v2308 = vadd.f32 %v2268, %v2307
  %v2309 = vpop.f32.mrb[0].mxu0
  %v2310 = vpop.f32.mrb[0].mxu0
  %v2311 = vpop.f32.mrb[0].mxu0
  %2312 = vdwg.mxu0
  %v2313 = vpack.c.bf16 %v2308, %v2308
  %v2314 = vld [vmem:[%s3] sm:$0xff]
  %v2315 = vld [vmem:[%s3 + $0x8] sm:$0xff]
  %v2316 = vld [vmem:[%s3 + $0x10] sm:$0xff]
  %v2317 = vld [vmem:[%s3 + $0x18] sm:$0xff]
  %v2318 = vld [vmem:[%s3 + $0x20] sm:$0xff]
  %v2319 = vld [vmem:[%s3 + $0x28] sm:$0xff]
  %v2320 = vld [vmem:[%s3 + $0x30] sm:$0xff]
  %v2321 = vld [vmem:[%s3 + $0x38] sm:$0xff]
  %v2322 = vld [vmem:[%s3 + $0x40] sm:$0xff]
  %v2323 = vld [vmem:[%s3 + $0x48] sm:$0xff]
  %v2324 = vld [vmem:[%s3 + $0x50] sm:$0xff]
  %v2325 = vld [vmem:[%s3 + $0x58] sm:$0xff]
  %v2326 = vld [vmem:[%s3 + $0x60] sm:$0xf]
  %v2327 = vld [vmem:[%s3 + $0x64] sm:$0xff]
  %v2328 = vld [vmem:[%s3 + $0x6c] sm:$0xff]
  %v2329 = vld [vmem:[%s3 + $0x74] sm:$0xff]
  %v2330 = vld [vmem:[%s3 + $0x7c] sm:$0xff]
  %v2331 = vld [vmem:[%s3 + $0x84] sm:$0xff]
  %v2332 = vld [vmem:[%s3 + $0x8c] sm:$0xff]
  %v2333 = vld [vmem:[%s3 + $0x94] sm:$0xff]
  %v2334 = vld [vmem:[%s3 + $0x9c] sm:$0xff]
  %v2335 = vld [vmem:[%s3 + $0xa4] sm:$0xff]
  %v2336 = vld [vmem:[%s3 + $0xac] sm:$0xff]
  %v2337 = vld [vmem:[%s3 + $0xb4] sm:$0xff]
  %v2338 = vld [vmem:[%s3 + $0xbc] sm:$0xff]
  %v2339 = vld [vmem:[%s3 + $0xc4] sm:$0xf]
  %v2340 = vld [vmem:[%s3 + $0xc8] sm:$0xff]
  %v2341 = vld [vmem:[%s3 + $0xd0] sm:$0xff]
  %v2342 = vld [vmem:[%s3 + $0xd8] sm:$0xff]
  %v2343 = vld [vmem:[%s3 + $0xe0] sm:$0xff]
  %v2344 = vld [vmem:[%s3 + $0xe8] sm:$0xff]
  %v2345 = vld [vmem:[%s3 + $0xf0] sm:$0xff]
  %v2346 = vld [vmem:[%s3 + $0xf8] sm:$0xff]
  %v2347 = vld [vmem:[%s3 + $0x100] sm:$0xff]
  %v2348 = vld [vmem:[%s3 + $0x108] sm:$0xff]
  %v2349 = vld [vmem:[%s3 + $0x110] sm:$0xff]
  %v2350 = vld [vmem:[%s3 + $0x118] sm:$0xff]
  %v2351 = vld [vmem:[%s3 + $0x120] sm:$0xff]
  %v2352 = vld [vmem:[%s3 + $0x128] sm:$0xf]
  %v2353 = vld [vmem:[%s3 + $0x12c] sm:$0xff]
  %v2354 = vld [vmem:[%s3 + $0x134] sm:$0xff]
  %v2355 = vld [vmem:[%s3 + $0x13c] sm:$0xff]
  %v2356 = vld [vmem:[%s3 + $0x144] sm:$0xff]
  %v2357 = vld [vmem:[%s3 + $0x14c] sm:$0xff]
  %v2358 = vld [vmem:[%s3 + $0x154] sm:$0xff]
  %v2359 = vld [vmem:[%s3 + $0x15c] sm:$0xff]
  %v2360 = vld [vmem:[%s3 + $0x164] sm:$0xff]
  %v2361 = vld [vmem:[%s3 + $0x16c] sm:$0xff]
  %v2362 = vld [vmem:[%s3 + $0x174] sm:$0xff]
  %v2363 = vld [vmem:[%s3 + $0x17c] sm:$0xff]
  %v2364 = vld [vmem:[%s3 + $0x184] sm:$0xff]
  %v2365 = vld [vmem:[%s3 + $0x18c] sm:$0xf]
  %v2366 = vld [vmem:[%s4] sm:$0xff]
  %v2367 = vld [vmem:[%s4 + $0x8] sm:$0xff]
  %v2368 = vld [vmem:[%s4 + $0x10] sm:$0xff]
  %v2369 = vld [vmem:[%s4 + $0x18] sm:$0x1]
  %v2374 = vlaneseq
  %v2375 = vshrl.u32 %v2374, 7
  %v2376 = vsub.s32 0, %v2375
  %v2377 = vrot.slane %v2366, %v2376
  %v2378 = vlaneseq
  %v2379 = vshrl.u32 %v2378, 7
  %v2380 = vsub.s32 1, %v2379
  %v2381 = vrot.slane %v2366, %v2380
  %v2382 = vlaneseq
  %v2383 = vshrl.u32 %v2382, 7
  %v2384 = vsub.s32 2, %v2383
  %v2385 = vrot.slane %v2366, %v2384
  %v2386 = vlaneseq
  %v2387 = vshrl.u32 %v2386, 7
  %v2388 = vsub.s32 3, %v2387
  %v2389 = vrot.slane %v2366, %v2388
  %v2390 = vlaneseq
  %v2391 = vshrl.u32 %v2390, 7
  %v2392 = vsub.s32 4, %v2391
  %v2393 = vrot.slane %v2366, %v2392
  %v2394 = vlaneseq
  %v2395 = vshrl.u32 %v2394, 7
  %v2396 = vsub.s32 5, %v2395
  %v2397 = vrot.slane %v2366, %v2396
  %v2398 = vlaneseq
  %v2399 = vshrl.u32 %v2398, 7
  %v2400 = vsub.s32 6, %v2399
  %v2401 = vrot.slane %v2366, %v2400
  %v2402 = vlaneseq
  %v2403 = vshrl.u32 %v2402, 7
  %v2404 = vsub.s32 7, %v2403
  %v2405 = vrot.slane %v2366, %v2404
  %v2406 = vlaneseq
  %v2407 = vshrl.u32 %v2406, 7
  %v2408 = vsub.s32 0, %v2407
  %v2409 = vrot.slane %v2367, %v2408
  %v2410 = vlaneseq
  %v2411 = vshrl.u32 %v2410, 7
  %v2412 = vsub.s32 1, %v2411
  %v2413 = vrot.slane %v2367, %v2412
  %v2414 = vlaneseq
  %v2415 = vshrl.u32 %v2414, 7
  %v2416 = vsub.s32 2, %v2415
  %v2417 = vrot.slane %v2367, %v2416
  %v2418 = vlaneseq
  %v2419 = vshrl.u32 %v2418, 7
  %v2420 = vsub.s32 3, %v2419
  %v2421 = vrot.slane %v2367, %v2420
  %v2422 = vlaneseq
  %v2423 = vshrl.u32 %v2422, 7
  %v2424 = vsub.s32 4, %v2423
  %v2425 = vrot.slane %v2367, %v2424
  %v2426 = vlaneseq
  %v2427 = vshrl.u32 %v2426, 7
  %v2428 = vsub.s32 5, %v2427
  %v2429 = vrot.slane %v2367, %v2428
  %v2430 = vlaneseq
  %v2431 = vshrl.u32 %v2430, 7
  %v2432 = vsub.s32 6, %v2431
  %v2433 = vrot.slane %v2367, %v2432
  %v2434 = vlaneseq
  %v2435 = vshrl.u32 %v2434, 7
  %v2436 = vsub.s32 7, %v2435
  %v2437 = vrot.slane %v2367, %v2436
  %v2438 = vlaneseq
  %v2439 = vshrl.u32 %v2438, 7
  %v2440 = vsub.s32 0, %v2439
  %v2441 = vrot.slane %v2368, %v2440
  %v2442 = vlaneseq
  %v2443 = vshrl.u32 %v2442, 7
  %v2444 = vsub.s32 1, %v2443
  %v2445 = vrot.slane %v2368, %v2444
  %v2446 = vlaneseq
  %v2447 = vshrl.u32 %v2446, 7
  %v2448 = vsub.s32 2, %v2447
  %v2449 = vrot.slane %v2368, %v2448
  %v2450 = vlaneseq
  %v2451 = vshrl.u32 %v2450, 7
  %v2452 = vsub.s32 3, %v2451
  %v2453 = vrot.slane %v2368, %v2452
  %v2454 = vlaneseq
  %v2455 = vshrl.u32 %v2454, 7
  %v2456 = vsub.s32 4, %v2455
  %v2457 = vrot.slane %v2368, %v2456
  %v2458 = vlaneseq
  %v2459 = vshrl.u32 %v2458, 7
  %v2460 = vsub.s32 5, %v2459
  %v2461 = vrot.slane %v2368, %v2460
  %v2462 = vlaneseq
  %v2463 = vshrl.u32 %v2462, 7
  %v2464 = vsub.s32 6, %v2463
  %v2465 = vrot.slane %v2368, %v2464
  %v2466 = vlaneseq
  %v2467 = vshrl.u32 %v2466, 7
  %v2468 = vsub.s32 7, %v2467
  %v2469 = vrot.slane %v2368, %v2468
  %v2470 = vlaneseq
  %v2471 = vshrl.u32 %v2470, 7
  %v2472 = vsub.s32 0, %v2471
  %v2473 = vrot.slane %v2369, %v2472
  %v2551 = vunpack.c.l.b16 %v2314
  %v2552 = vunpack.c.h.b16 %v2314
  %v2553 = vunpack.c.l.b16 %v2315
  %v2554 = vunpack.c.h.b16 %v2315
  %v2555 = vunpack.c.l.b16 %v2316
  %v2556 = vunpack.c.h.b16 %v2316
  %v2557 = vunpack.c.l.b16 %v2317
  %v2558 = vunpack.c.h.b16 %v2317
  %v2559 = vunpack.c.l.b16 %v2318
  %v2560 = vunpack.c.h.b16 %v2318
  %v2561 = vunpack.c.l.b16 %v2319
  %v2562 = vunpack.c.h.b16 %v2319
  %v2563 = vunpack.c.l.b16 %v2320
  %v2564 = vunpack.c.h.b16 %v2320
  %v2565 = vunpack.c.l.b16 %v2321
  %v2566 = vunpack.c.h.b16 %v2321
  %v2567 = vunpack.c.l.b16 %v2322
  %v2568 = vunpack.c.h.b16 %v2322
  %v2569 = vunpack.c.l.b16 %v2323
  %v2570 = vunpack.c.h.b16 %v2323
  %v2571 = vunpack.c.l.b16 %v2324
  %v2572 = vunpack.c.h.b16 %v2324
  %v2573 = vunpack.c.l.b16 %v2325
  %v2574 = vunpack.c.h.b16 %v2325
  %v2575 = vunpack.c.l.b16 %v2326
  %v2576 = vunpack.c.l.b16 %v2327
  %v2577 = vunpack.c.h.b16 %v2327
  %v2578 = vunpack.c.l.b16 %v2328
  %v2579 = vunpack.c.h.b16 %v2328
  %v2580 = vunpack.c.l.b16 %v2329
  %v2581 = vunpack.c.h.b16 %v2329
  %v2582 = vunpack.c.l.b16 %v2330
  %v2583 = vunpack.c.h.b16 %v2330
  %v2584 = vunpack.c.l.b16 %v2331
  %v2585 = vunpack.c.h.b16 %v2331
  %v2586 = vunpack.c.l.b16 %v2332
  %v2587 = vunpack.c.h.b16 %v2332
  %v2588 = vunpack.c.l.b16 %v2333
  %v2589 = vunpack.c.h.b16 %v2333
  %v2590 = vunpack.c.l.b16 %v2334
  %v2591 = vunpack.c.h.b16 %v2334
  %v2592 = vunpack.c.l.b16 %v2335
  %v2593 = vunpack.c.h.b16 %v2335
  %v2594 = vunpack.c.l.b16 %v2336
  %v2595 = vunpack.c.h.b16 %v2336
  %v2596 = vunpack.c.l.b16 %v2337
  %v2597 = vunpack.c.h.b16 %v2337
  %v2598 = vunpack.c.l.b16 %v2338
  %v2599 = vunpack.c.h.b16 %v2338
  %v2600 = vunpack.c.l.b16 %v2339
  %v2601 = vunpack.c.l.b16 %v2340
  %v2602 = vunpack.c.h.b16 %v2340
  %v2603 = vunpack.c.l.b16 %v2341
  %v2604 = vunpack.c.h.b16 %v2341
  %v2605 = vunpack.c.l.b16 %v2342
  %v2606 = vunpack.c.h.b16 %v2342
  %v2607 = vunpack.c.l.b16 %v2343
  %v2608 = vunpack.c.h.b16 %v2343
  %v2609 = vunpack.c.l.b16 %v2344
  %v2610 = vunpack.c.h.b16 %v2344
  %v2611 = vunpack.c.l.b16 %v2345
  %v2612 = vunpack.c.h.b16 %v2345
  %v2613 = vunpack.c.l.b16 %v2346
  %v2614 = vunpack.c.h.b16 %v2346
  %v2615 = vunpack.c.l.b16 %v2347
  %v2616 = vunpack.c.h.b16 %v2347
  %v2617 = vunpack.c.l.b16 %v2348
  %v2618 = vunpack.c.h.b16 %v2348
  %v2619 = vunpack.c.l.b16 %v2349
  %v2620 = vunpack.c.h.b16 %v2349
  %v2621 = vunpack.c.l.b16 %v2350
  %v2622 = vunpack.c.h.b16 %v2350
  %v2623 = vunpack.c.l.b16 %v2351
  %v2624 = vunpack.c.h.b16 %v2351
  %v2625 = vunpack.c.l.b16 %v2352
  %v2626 = vunpack.c.l.b16 %v2353
  %v2627 = vunpack.c.h.b16 %v2353
  %v2628 = vunpack.c.l.b16 %v2354
  %v2629 = vunpack.c.h.b16 %v2354
  %v2630 = vunpack.c.l.b16 %v2355
  %v2631 = vunpack.c.h.b16 %v2355
  %v2632 = vunpack.c.l.b16 %v2356
  %v2633 = vunpack.c.h.b16 %v2356
  %v2634 = vunpack.c.l.b16 %v2357
  %v2635 = vunpack.c.h.b16 %v2357
  %v2636 = vunpack.c.l.b16 %v2358
  %v2637 = vunpack.c.h.b16 %v2358
  %v2638 = vunpack.c.l.b16 %v2359
  %v2639 = vunpack.c.h.b16 %v2359
  %v2640 = vunpack.c.l.b16 %v2360
  %v2641 = vunpack.c.h.b16 %v2360
  %v2642 = vunpack.c.l.b16 %v2361
  %v2643 = vunpack.c.h.b16 %v2361
  %v2644 = vunpack.c.l.b16 %v2362
  %v2645 = vunpack.c.h.b16 %v2362
  %v2646 = vunpack.c.l.b16 %v2363
  %v2647 = vunpack.c.h.b16 %v2363
  %v2648 = vunpack.c.l.b16 %v2364
  %v2649 = vunpack.c.h.b16 %v2364
  %v2650 = vunpack.c.l.b16 %v2365
  %v2651 = vpack.c.b16 %v2576, %v2551
  %v2652 = vpack.c.b16 %v2577, %v2552
  %v2653 = vpack.c.b16 %v2578, %v2553
  %v2654 = vpack.c.b16 %v2579, %v2554
  %v2655 = vpack.c.b16 %v2580, %v2555
  %v2656 = vpack.c.b16 %v2581, %v2556
  %v2657 = vpack.c.b16 %v2582, %v2557
  %v2658 = vpack.c.b16 %v2583, %v2558
  %v2659 = vpack.c.b16 %v2584, %v2559
  %v2660 = vpack.c.b16 %v2585, %v2560
  %v2661 = vpack.c.b16 %v2586, %v2561
  %v2662 = vpack.c.b16 %v2587, %v2562
  %v2663 = vpack.c.b16 %v2588, %v2563
  %v2664 = vpack.c.b16 %v2589, %v2564
  %v2665 = vpack.c.b16 %v2590, %v2565
  %v2666 = vpack.c.b16 %v2591, %v2566
  %v2667 = vpack.c.b16 %v2592, %v2567
  %v2668 = vpack.c.b16 %v2593, %v2568
  %v2669 = vpack.c.b16 %v2594, %v2569
  %v2670 = vpack.c.b16 %v2595, %v2570
  %v2671 = vpack.c.b16 %v2596, %v2571
  %v2672 = vpack.c.b16 %v2597, %v2572
  %v2673 = vpack.c.b16 %v2598, %v2573
  %v2674 = vpack.c.b16 %v2599, %v2574
  %v2675 = vpack.c.b16 %v2600, %v2575
  %v2676 = vpack.c.b16 %v2626, %v2601
  %v2677 = vpack.c.b16 %v2627, %v2602
  %v2678 = vpack.c.b16 %v2628, %v2603
  %v2679 = vpack.c.b16 %v2629, %v2604
  %v2680 = vpack.c.b16 %v2630, %v2605
  %v2681 = vpack.c.b16 %v2631, %v2606
  %v2682 = vpack.c.b16 %v2632, %v2607
  %v2683 = vpack.c.b16 %v2633, %v2608
  %v2684 = vpack.c.b16 %v2634, %v2609
  %v2685 = vpack.c.b16 %v2635, %v2610
  %v2686 = vpack.c.b16 %v2636, %v2611
  %v2687 = vpack.c.b16 %v2637, %v2612
  %v2688 = vpack.c.b16 %v2638, %v2613
  %v2689 = vpack.c.b16 %v2639, %v2614
  %v2690 = vpack.c.b16 %v2640, %v2615
  %v2691 = vpack.c.b16 %v2641, %v2616
  %v2692 = vpack.c.b16 %v2642, %v2617
  %v2693 = vpack.c.b16 %v2643, %v2618
  %v2694 = vpack.c.b16 %v2644, %v2619
  %v2695 = vpack.c.b16 %v2645, %v2620
  %v2696 = vpack.c.b16 %v2646, %v2621
  %v2697 = vpack.c.b16 %v2647, %v2622
  %v2698 = vpack.c.b16 %v2648, %v2623
  %v2699 = vpack.c.b16 %v2649, %v2624
  %v2700 = vpack.c.b16 %v2650, %v2625
  %vm2751 = vcmask 261120
  %v2753 = vsel %vm2751, %v2313, 0
  %2755 = vmatprep.subr.bf16.mxu0 %v2652
  %2756 = vmatpush1.bf16.msra.mxu0 %v2651
  %2757 = vmatprep.subr.bf16.mxu0 %v2677
  %2758 = vmatpush1.bf16.msra.mxu0 %v2676
  %2759 = vmatprep.subr.bf16.mxu0 0
  %2760 = vmatpush1.bf16.msra.mxu0 0
  %2761 = vmatprep.subr.bf16.mxu0 0
  %2762 = vmatpush1.bf16.msra.mxu0 0
  %2763 = vmatprep.subr.bf16.mxu0 0
  %2764 = vmatpush1.bf16.msra.mxu0 0
  %2765 = vmatprep.subr.bf16.mxu0 0
  %2766 = vmatpush1.bf16.msra.mxu0 0
  %2767 = vmatprep.subr.bf16.mxu0 0
  %2768 = vmatpush1.bf16.msra.mxu0 0
  %2769 = vmatprep.subr.bf16.mxu0 0
  %2770 = vmatpush1.bf16.msra.mxu0 0
  %2771 = vmatprep.subr.bf16.mxu0 0
  %2772 = vmatpush1.bf16.msra.mxu0 0
  %2773 = vmatprep.subr.bf16.mxu0 0
  %2774 = vmatpush1.bf16.msra.mxu0 0
  %2775 = vmatprep.subr.bf16.mxu0 0
  %2776 = vmatpush1.bf16.msra.mxu0 0
  %2777 = vmatprep.subr.bf16.mxu0 0
  %2778 = vmatpush1.bf16.msra.mxu0 0
  %2779 = vmatprep.subr.bf16.mxu0 0
  %2780 = vmatpush1.bf16.msra.mxu0 0
  %2781 = vmatprep.subr.bf16.mxu0 0
  %2782 = vmatpush1.bf16.msra.mxu0 0
  %2783 = vmatprep.subr.bf16.mxu0 0
  %2784 = vmatpush1.bf16.msra.mxu0 0
  %2785 = vmatprep.subr.bf16.mxu0 0
  %2786 = vmatpush1.bf16.msra.mxu0 0
  %2787 = vmatprep.mubr.bf16.mxu0 0
  %2788 = vmatmul.mubr.bf16.gmra.mrb[0].mxu0 %v2753
  %v2789 = vpop.f32.mrb[0].mxu0
  %v2790 = vadd.f32 %v2377, %v2789
  %v2791 = vpop.f32.mrb[0].mxu0
  %v2792 = vadd.f32 %v2381, %v2791
  %v2793 = vpop.f32.mrb[0].mxu0
  %v2794 = vpop.f32.mrb[0].mxu0
  %2795 = vdwg.mxu0
  %2796 = vmatprep.subr.bf16.mxu0 %v2654
  %2797 = vmatpush1.bf16.msra.mxu0 %v2653
  %2798 = vmatprep.subr.bf16.mxu0 %v2679
  %2799 = vmatpush1.bf16.msra.mxu0 %v2678
  %2800 = vmatprep.subr.bf16.mxu0 0
  %2801 = vmatpush1.bf16.msra.mxu0 0
  %2802 = vmatprep.subr.bf16.mxu0 0
  %2803 = vmatpush1.bf16.msra.mxu0 0
  %2804 = vmatprep.subr.bf16.mxu0 0
  %2805 = vmatpush1.bf16.msra.mxu0 0
  %2806 = vmatprep.subr.bf16.mxu0 0
  %2807 = vmatpush1.bf16.msra.mxu0 0
  %2808 = vmatprep.subr.bf16.mxu0 0
  %2809 = vmatpush1.bf16.msra.mxu0 0
  %2810 = vmatprep.subr.bf16.mxu0 0
  %2811 = vmatpush1.bf16.msra.mxu0 0
  %2812 = vmatprep.subr.bf16.mxu0 0
  %2813 = vmatpush1.bf16.msra.mxu0 0
  %2814 = vmatprep.subr.bf16.mxu0 0
  %2815 = vmatpush1.bf16.msra.mxu0 0
  %2816 = vmatprep.subr.bf16.mxu0 0
  %2817 = vmatpush1.bf16.msra.mxu0 0
  %2818 = vmatprep.subr.bf16.mxu0 0
  %2819 = vmatpush1.bf16.msra.mxu0 0
  %2820 = vmatprep.subr.bf16.mxu0 0
  %2821 = vmatpush1.bf16.msra.mxu0 0
  %2822 = vmatprep.subr.bf16.mxu0 0
  %2823 = vmatpush1.bf16.msra.mxu0 0
  %2824 = vmatprep.subr.bf16.mxu0 0
  %2825 = vmatpush1.bf16.msra.mxu0 0
  %2826 = vmatprep.subr.bf16.mxu0 0
  %2827 = vmatpush1.bf16.msra.mxu0 0
  %2828 = vmatprep.mubr.bf16.mxu0 0
  %2829 = vmatmul.mubr.bf16.gmra.mrb[0].mxu0 %v2753
  %v2830 = vpop.f32.mrb[0].mxu0
  %v2831 = vadd.f32 %v2385, %v2830
  %v2832 = vpop.f32.mrb[0].mxu0
  %v2833 = vadd.f32 %v2389, %v2832
  %v2834 = vpop.f32.mrb[0].mxu0
  %v2835 = vpop.f32.mrb[0].mxu0
  %2836 = vdwg.mxu0
  %2837 = vmatprep.subr.bf16.mxu0 %v2656
  %2838 = vmatpush1.bf16.msra.mxu0 %v2655
  %2839 = vmatprep.subr.bf16.mxu0 %v2681
  %2840 = vmatpush1.bf16.msra.mxu0 %v2680
  %2841 = vmatprep.subr.bf16.mxu0 0
  %2842 = vmatpush1.bf16.msra.mxu0 0
  %2843 = vmatprep.subr.bf16.mxu0 0
  %2844 = vmatpush1.bf16.msra.mxu0 0
  %2845 = vmatprep.subr.bf16.mxu0 0
  %2846 = vmatpush1.bf16.msra.mxu0 0
  %2847 = vmatprep.subr.bf16.mxu0 0
  %2848 = vmatpush1.bf16.msra.mxu0 0
  %2849 = vmatprep.subr.bf16.mxu0 0
  %2850 = vmatpush1.bf16.msra.mxu0 0
  %2851 = vmatprep.subr.bf16.mxu0 0
  %2852 = vmatpush1.bf16.msra.mxu0 0
  %2853 = vmatprep.subr.bf16.mxu0 0
  %2854 = vmatpush1.bf16.msra.mxu0 0
  %2855 = vmatprep.subr.bf16.mxu0 0
  %2856 = vmatpush1.bf16.msra.mxu0 0
  %2857 = vmatprep.subr.bf16.mxu0 0
  %2858 = vmatpush1.bf16.msra.mxu0 0
  %2859 = vmatprep.subr.bf16.mxu0 0
  %2860 = vmatpush1.bf16.msra.mxu0 0
  %2861 = vmatprep.subr.bf16.mxu0 0
  %2862 = vmatpush1.bf16.msra.mxu0 0
  %2863 = vmatprep.subr.bf16.mxu0 0
  %2864 = vmatpush1.bf16.msra.mxu0 0
  %2865 = vmatprep.subr.bf16.mxu0 0
  %2866 = vmatpush1.bf16.msra.mxu0 0
  %2867 = vmatprep.subr.bf16.mxu0 0
  %2868 = vmatpush1.bf16.msra.mxu0 0
  %2869 = vmatprep.mubr.bf16.mxu0 0
  %2870 = vmatmul.mubr.bf16.gmra.mrb[0].mxu0 %v2753
  %v2871 = vpop.f32.mrb[0].mxu0
  %v2872 = vadd.f32 %v2393, %v2871
  %v2873 = vpop.f32.mrb[0].mxu0
  %v2874 = vadd.f32 %v2397, %v2873
  %v2875 = vpop.f32.mrb[0].mxu0
  %v2876 = vpop.f32.mrb[0].mxu0
  %2877 = vdwg.mxu0
  %2878 = vmatprep.subr.bf16.mxu0 %v2658
  %2879 = vmatpush1.bf16.msra.mxu0 %v2657
  %2880 = vmatprep.subr.bf16.mxu0 %v2683
  %2881 = vmatpush1.bf16.msra.mxu0 %v2682
  %2882 = vmatprep.subr.bf16.mxu0 0
  %2883 = vmatpush1.bf16.msra.mxu0 0
  %2884 = vmatprep.subr.bf16.mxu0 0
  %2885 = vmatpush1.bf16.msra.mxu0 0
  %2886 = vmatprep.subr.bf16.mxu0 0
  %2887 = vmatpush1.bf16.msra.mxu0 0
  %2888 = vmatprep.subr.bf16.mxu0 0
  %2889 = vmatpush1.bf16.msra.mxu0 0
  %2890 = vmatprep.subr.bf16.mxu0 0
  %2891 = vmatpush1.bf16.msra.mxu0 0
  %2892 = vmatprep.subr.bf16.mxu0 0
  %2893 = vmatpush1.bf16.msra.mxu0 0
  %2894 = vmatprep.subr.bf16.mxu0 0
  %2895 = vmatpush1.bf16.msra.mxu0 0
  %2896 = vmatprep.subr.bf16.mxu0 0
  %2897 = vmatpush1.bf16.msra.mxu0 0
  %2898 = vmatprep.subr.bf16.mxu0 0
  %2899 = vmatpush1.bf16.msra.mxu0 0
  %2900 = vmatprep.subr.bf16.mxu0 0
  %2901 = vmatpush1.bf16.msra.mxu0 0
  %2902 = vmatprep.subr.bf16.mxu0 0
  %2903 = vmatpush1.bf16.msra.mxu0 0
  %2904 = vmatprep.subr.bf16.mxu0 0
  %2905 = vmatpush1.bf16.msra.mxu0 0
  %2906 = vmatprep.subr.bf16.mxu0 0
  %2907 = vmatpush1.bf16.msra.mxu0 0
  %2908 = vmatprep.subr.bf16.mxu0 0
  %2909 = vmatpush1.bf16.msra.mxu0 0
  %2910 = vmatprep.mubr.bf16.mxu0 0
  %2911 = vmatmul.mubr.bf16.gmra.mrb[0].mxu0 %v2753
  %v2912 = vpop.f32.mrb[0].mxu0
  %v2913 = vadd.f32 %v2401, %v2912
  %v2914 = vpop.f32.mrb[0].mxu0
  %v2915 = vadd.f32 %v2405, %v2914
  %v2916 = vpop.f32.mrb[0].mxu0
  %v2917 = vpop.f32.mrb[0].mxu0
  %2918 = vdwg.mxu0
  %2919 = vmatprep.subr.bf16.mxu0 %v2660
  %2920 = vmatpush1.bf16.msra.mxu0 %v2659
  %2921 = vmatprep.subr.bf16.mxu0 %v2685
  %2922 = vmatpush1.bf16.msra.mxu0 %v2684
  %2923 = vmatprep.subr.bf16.mxu0 0
  %2924 = vmatpush1.bf16.msra.mxu0 0
  %2925 = vmatprep.subr.bf16.mxu0 0
  %2926 = vmatpush1.bf16.msra.mxu0 0
  %2927 = vmatprep.subr.bf16.mxu0 0
  %2928 = vmatpush1.bf16.msra.mxu0 0
  %2929 = vmatprep.subr.bf16.mxu0 0
  %2930 = vmatpush1.bf16.msra.mxu0 0
  %2931 = vmatprep.subr.bf16.mxu0 0
  %2932 = vmatpush1.bf16.msra.mxu0 0
  %2933 = vmatprep.subr.bf16.mxu0 0
  %2934 = vmatpush1.bf16.msra.mxu0 0
  %2935 = vmatprep.subr.bf16.mxu0 0
  %2936 = vmatpush1.bf16.msra.mxu0 0
  %2937 = vmatprep.subr.bf16.mxu0 0
  %2938 = vmatpush1.bf16.msra.mxu0 0
  %2939 = vmatprep.subr.bf16.mxu0 0
  %2940 = vmatpush1.bf16.msra.mxu0 0
  %2941 = vmatprep.subr.bf16.mxu0 0
  %2942 = vmatpush1.bf16.msra.mxu0 0
  %2943 = vmatprep.subr.bf16.mxu0 0
  %2944 = vmatpush1.bf16.msra.mxu0 0
  %2945 = vmatprep.subr.bf16.mxu0 0
  %2946 = vmatpush1.bf16.msra.mxu0 0
  %2947 = vmatprep.subr.bf16.mxu0 0
  %2948 = vmatpush1.bf16.msra.mxu0 0
  %2949 = vmatprep.subr.bf16.mxu0 0
  %2950 = vmatpush1.bf16.msra.mxu0 0
  %2951 = vmatprep.mubr.bf16.mxu0 0
  %2952 = vmatmul.mubr.bf16.gmra.mrb[0].mxu0 %v2753
  %v2953 = vpop.f32.mrb[0].mxu0
  %v2954 = vadd.f32 %v2409, %v2953
  %v2955 = vpop.f32.mrb[0].mxu0
  %v2956 = vadd.f32 %v2413, %v2955
  %v2957 = vpop.f32.mrb[0].mxu0
  %v2958 = vpop.f32.mrb[0].mxu0
  %2959 = vdwg.mxu0
  %2960 = vmatprep.subr.bf16.mxu0 %v2662
  %2961 = vmatpush1.bf16.msra.mxu0 %v2661
  %2962 = vmatprep.subr.bf16.mxu0 %v2687
  %2963 = vmatpush1.bf16.msra.mxu0 %v2686
  %2964 = vmatprep.subr.bf16.mxu0 0
  %2965 = vmatpush1.bf16.msra.mxu0 0
  %2966 = vmatprep.subr.bf16.mxu0 0
  %2967 = vmatpush1.bf16.msra.mxu0 0
  %2968 = vmatprep.subr.bf16.mxu0 0
  %2969 = vmatpush1.bf16.msra.mxu0 0
  %2970 = vmatprep.subr.bf16.mxu0 0
  %2971 = vmatpush1.bf16.msra.mxu0 0
  %2972 = vmatprep.subr.bf16.mxu0 0
  %2973 = vmatpush1.bf16.msra.mxu0 0
  %2974 = vmatprep.subr.bf16.mxu0 0
  %2975 = vmatpush1.bf16.msra.mxu0 0
  %2976 = vmatprep.subr.bf16.mxu0 0
  %2977 = vmatpush1.bf16.msra.mxu0 0
  %2978 = vmatprep.subr.bf16.mxu0 0
  %2979 = vmatpush1.bf16.msra.mxu0 0
  %2980 = vmatprep.subr.bf16.mxu0 0
  %2981 = vmatpush1.bf16.msra.mxu0 0
  %2982 = vmatprep.subr.bf16.mxu0 0
  %2983 = vmatpush1.bf16.msra.mxu0 0
  %2984 = vmatprep.subr.bf16.mxu0 0
  %2985 = vmatpush1.bf16.msra.mxu0 0
  %2986 = vmatprep.subr.bf16.mxu0 0
  %2987 = vmatpush1.bf16.msra.mxu0 0
  %2988 = vmatprep.subr.bf16.mxu0 0
  %2989 = vmatpush1.bf16.msra.mxu0 0
  %2990 = vmatprep.subr.bf16.mxu0 0
  %2991 = vmatpush1.bf16.msra.mxu0 0
  %2992 = vmatprep.mubr.bf16.mxu0 0
  %2993 = vmatmul.mubr.bf16.gmra.mrb[0].mxu0 %v2753
  %v2994 = vpop.f32.mrb[0].mxu0
  %v2995 = vadd.f32 %v2417, %v2994
  %v2996 = vpop.f32.mrb[0].mxu0
  %v2997 = vadd.f32 %v2421, %v2996
  %v2998 = vpop.f32.mrb[0].mxu0
  %v2999 = vpop.f32.mrb[0].mxu0
  %3000 = vdwg.mxu0
  %3001 = vmatprep.subr.bf16.mxu0 %v2664
  %3002 = vmatpush1.bf16.msra.mxu0 %v2663
  %3003 = vmatprep.subr.bf16.mxu0 %v2689
  %3004 = vmatpush1.bf16.msra.mxu0 %v2688
  %3005 = vmatprep.subr.bf16.mxu0 0
  %3006 = vmatpush1.bf16.msra.mxu0 0
  %3007 = vmatprep.subr.bf16.mxu0 0
  %3008 = vmatpush1.bf16.msra.mxu0 0
  %3009 = vmatprep.subr.bf16.mxu0 0
  %3010 = vmatpush1.bf16.msra.mxu0 0
  %3011 = vmatprep.subr.bf16.mxu0 0
  %3012 = vmatpush1.bf16.msra.mxu0 0
  %3013 = vmatprep.subr.bf16.mxu0 0
  %3014 = vmatpush1.bf16.msra.mxu0 0
  %3015 = vmatprep.subr.bf16.mxu0 0
  %3016 = vmatpush1.bf16.msra.mxu0 0
  %3017 = vmatprep.subr.bf16.mxu0 0
  %3018 = vmatpush1.bf16.msra.mxu0 0
  %3019 = vmatprep.subr.bf16.mxu0 0
  %3020 = vmatpush1.bf16.msra.mxu0 0
  %3021 = vmatprep.subr.bf16.mxu0 0
  %3022 = vmatpush1.bf16.msra.mxu0 0
  %3023 = vmatprep.subr.bf16.mxu0 0
  %3024 = vmatpush1.bf16.msra.mxu0 0
  %3025 = vmatprep.subr.bf16.mxu0 0
  %3026 = vmatpush1.bf16.msra.mxu0 0
  %3027 = vmatprep.subr.bf16.mxu0 0
  %3028 = vmatpush1.bf16.msra.mxu0 0
  %3029 = vmatprep.subr.bf16.mxu0 0
  %3030 = vmatpush1.bf16.msra.mxu0 0
  %3031 = vmatprep.subr.bf16.mxu0 0
  %3032 = vmatpush1.bf16.msra.mxu0 0
  %3033 = vmatprep.mubr.bf16.mxu0 0
  %3034 = vmatmul.mubr.bf16.gmra.mrb[0].mxu0 %v2753
  %v3035 = vpop.f32.mrb[0].mxu0
  %v3036 = vadd.f32 %v2425, %v3035
  %v3037 = vpop.f32.mrb[0].mxu0
  %v3038 = vadd.f32 %v2429, %v3037
  %v3039 = vpop.f32.mrb[0].mxu0
  %v3040 = vpop.f32.mrb[0].mxu0
  %3041 = vdwg.mxu0
  %3042 = vmatprep.subr.bf16.mxu0 %v2666
  %3043 = vmatpush1.bf16.msra.mxu0 %v2665
  %3044 = vmatprep.subr.bf16.mxu0 %v2691
  %3045 = vmatpush1.bf16.msra.mxu0 %v2690
  %3046 = vmatprep.subr.bf16.mxu0 0
  %3047 = vmatpush1.bf16.msra.mxu0 0
  %3048 = vmatprep.subr.bf16.mxu0 0
  %3049 = vmatpush1.bf16.msra.mxu0 0
  %3050 = vmatprep.subr.bf16.mxu0 0
  %3051 = vmatpush1.bf16.msra.mxu0 0
  %3052 = vmatprep.subr.bf16.mxu0 0
  %3053 = vmatpush1.bf16.msra.mxu0 0
  %3054 = vmatprep.subr.bf16.mxu0 0
  %3055 = vmatpush1.bf16.msra.mxu0 0
  %3056 = vmatprep.subr.bf16.mxu0 0
  %3057 = vmatpush1.bf16.msra.mxu0 0
  %3058 = vmatprep.subr.bf16.mxu0 0
  %3059 = vmatpush1.bf16.msra.mxu0 0
  %3060 = vmatprep.subr.bf16.mxu0 0
  %3061 = vmatpush1.bf16.msra.mxu0 0
  %3062 = vmatprep.subr.bf16.mxu0 0
  %3063 = vmatpush1.bf16.msra.mxu0 0
  %3064 = vmatprep.subr.bf16.mxu0 0
  %3065 = vmatpush1.bf16.msra.mxu0 0
  %3066 = vmatprep.subr.bf16.mxu0 0
  %3067 = vmatpush1.bf16.msra.mxu0 0
  %3068 = vmatprep.subr.bf16.mxu0 0
  %3069 = vmatpush1.bf16.msra.mxu0 0
  %3070 = vmatprep.subr.bf16.mxu0 0
  %3071 = vmatpush1.bf16.msra.mxu0 0
  %3072 = vmatprep.subr.bf16.mxu0 0
  %3073 = vmatpush1.bf16.msra.mxu0 0
  %3074 = vmatprep.mubr.bf16.mxu0 0
  %3075 = vmatmul.mubr.bf16.gmra.mrb[0].mxu0 %v2753
  %v3076 = vpop.f32.mrb[0].mxu0
  %v3077 = vadd.f32 %v2433, %v3076
  %v3078 = vpop.f32.mrb[0].mxu0
  %v3079 = vadd.f32 %v2437, %v3078
  %v3080 = vpop.f32.mrb[0].mxu0
  %v3081 = vpop.f32.mrb[0].mxu0
  %3082 = vdwg.mxu0
  %3083 = vmatprep.subr.bf16.mxu0 %v2668
  %3084 = vmatpush1.bf16.msra.mxu0 %v2667
  %3085 = vmatprep.subr.bf16.mxu0 %v2693
  %3086 = vmatpush1.bf16.msra.mxu0 %v2692
  %3087 = vmatprep.subr.bf16.mxu0 0
  %3088 = vmatpush1.bf16.msra.mxu0 0
  %3089 = vmatprep.subr.bf16.mxu0 0
  %3090 = vmatpush1.bf16.msra.mxu0 0
  %3091 = vmatprep.subr.bf16.mxu0 0
  %3092 = vmatpush1.bf16.msra.mxu0 0
  %3093 = vmatprep.subr.bf16.mxu0 0
  %3094 = vmatpush1.bf16.msra.mxu0 0
  %3095 = vmatprep.subr.bf16.mxu0 0
  %3096 = vmatpush1.bf16.msra.mxu0 0
  %3097 = vmatprep.subr.bf16.mxu0 0
  %3098 = vmatpush1.bf16.msra.mxu0 0
  %3099 = vmatprep.subr.bf16.mxu0 0
  %3100 = vmatpush1.bf16.msra.mxu0 0
  %3101 = vmatprep.subr.bf16.mxu0 0
  %3102 = vmatpush1.bf16.msra.mxu0 0
  %3103 = vmatprep.subr.bf16.mxu0 0
  %3104 = vmatpush1.bf16.msra.mxu0 0
  %3105 = vmatprep.subr.bf16.mxu0 0
  %3106 = vmatpush1.bf16.msra.mxu0 0
  %3107 = vmatprep.subr.bf16.mxu0 0
  %3108 = vmatpush1.bf16.msra.mxu0 0
  %3109 = vmatprep.subr.bf16.mxu0 0
  %3110 = vmatpush1.bf16.msra.mxu0 0
  %3111 = vmatprep.subr.bf16.mxu0 0
  %3112 = vmatpush1.bf16.msra.mxu0 0
  %3113 = vmatprep.subr.bf16.mxu0 0
  %3114 = vmatpush1.bf16.msra.mxu0 0
  %3115 = vmatprep.mubr.bf16.mxu0 0
  %3116 = vmatmul.mubr.bf16.gmra.mrb[0].mxu0 %v2753
  %v3117 = vpop.f32.mrb[0].mxu0
  %v3118 = vadd.f32 %v2441, %v3117
  %v3119 = vpop.f32.mrb[0].mxu0
  %v3120 = vadd.f32 %v2445, %v3119
  %v3121 = vpop.f32.mrb[0].mxu0
  %v3122 = vpop.f32.mrb[0].mxu0
  %3123 = vdwg.mxu0
  %3124 = vmatprep.subr.bf16.mxu0 %v2670
  %3125 = vmatpush1.bf16.msra.mxu0 %v2669
  %3126 = vmatprep.subr.bf16.mxu0 %v2695
  %3127 = vmatpush1.bf16.msra.mxu0 %v2694
  %3128 = vmatprep.subr.bf16.mxu0 0
  %3129 = vmatpush1.bf16.msra.mxu0 0
  %3130 = vmatprep.subr.bf16.mxu0 0
  %3131 = vmatpush1.bf16.msra.mxu0 0
  %3132 = vmatprep.subr.bf16.mxu0 0
  %3133 = vmatpush1.bf16.msra.mxu0 0
  %3134 = vmatprep.subr.bf16.mxu0 0
  %3135 = vmatpush1.bf16.msra.mxu0 0
  %3136 = vmatprep.subr.bf16.mxu0 0
  %3137 = vmatpush1.bf16.msra.mxu0 0
  %3138 = vmatprep.subr.bf16.mxu0 0
  %3139 = vmatpush1.bf16.msra.mxu0 0
  %3140 = vmatprep.subr.bf16.mxu0 0
  %3141 = vmatpush1.bf16.msra.mxu0 0
  %3142 = vmatprep.subr.bf16.mxu0 0
  %3143 = vmatpush1.bf16.msra.mxu0 0
  %3144 = vmatprep.subr.bf16.mxu0 0
  %3145 = vmatpush1.bf16.msra.mxu0 0
  %3146 = vmatprep.subr.bf16.mxu0 0
  %3147 = vmatpush1.bf16.msra.mxu0 0
  %3148 = vmatprep.subr.bf16.mxu0 0
  %3149 = vmatpush1.bf16.msra.mxu0 0
  %3150 = vmatprep.subr.bf16.mxu0 0
  %3151 = vmatpush1.bf16.msra.mxu0 0
  %3152 = vmatprep.subr.bf16.mxu0 0
  %3153 = vmatpush1.bf16.msra.mxu0 0
  %3154 = vmatprep.subr.bf16.mxu0 0
  %3155 = vmatpush1.bf16.msra.mxu0 0
  %3156 = vmatprep.mubr.bf16.mxu0 0
  %3157 = vmatmul.mubr.bf16.gmra.mrb[0].mxu0 %v2753
  %v3158 = vpop.f32.mrb[0].mxu0
  %v3159 = vadd.f32 %v2449, %v3158
  %v3160 = vpop.f32.mrb[0].mxu0
  %v3161 = vadd.f32 %v2453, %v3160
  %v3162 = vpop.f32.mrb[0].mxu0
  %v3163 = vpop.f32.mrb[0].mxu0
  %3164 = vdwg.mxu0
  %3165 = vmatprep.subr.bf16.mxu0 %v2672
  %3166 = vmatpush1.bf16.msra.mxu0 %v2671
  %3167 = vmatprep.subr.bf16.mxu0 %v2697
  %3168 = vmatpush1.bf16.msra.mxu0 %v2696
  %3169 = vmatprep.subr.bf16.mxu0 0
  %3170 = vmatpush1.bf16.msra.mxu0 0
  %3171 = vmatprep.subr.bf16.mxu0 0
  %3172 = vmatpush1.bf16.msra.mxu0 0
  %3173 = vmatprep.subr.bf16.mxu0 0
  %3174 = vmatpush1.bf16.msra.mxu0 0
  %3175 = vmatprep.subr.bf16.mxu0 0
  %3176 = vmatpush1.bf16.msra.mxu0 0
  %3177 = vmatprep.subr.bf16.mxu0 0
  %3178 = vmatpush1.bf16.msra.mxu0 0
  %3179 = vmatprep.subr.bf16.mxu0 0
  %3180 = vmatpush1.bf16.msra.mxu0 0
  %3181 = vmatprep.subr.bf16.mxu0 0
  %3182 = vmatpush1.bf16.msra.mxu0 0
  %3183 = vmatprep.subr.bf16.mxu0 0
  %3184 = vmatpush1.bf16.msra.mxu0 0
  %3185 = vmatprep.subr.bf16.mxu0 0
  %3186 = vmatpush1.bf16.msra.mxu0 0
  %3187 = vmatprep.subr.bf16.mxu0 0
  %3188 = vmatpush1.bf16.msra.mxu0 0
  %3189 = vmatprep.subr.bf16.mxu0 0
  %3190 = vmatpush1.bf16.msra.mxu0 0
  %3191 = vmatprep.subr.bf16.mxu0 0
  %3192 = vmatpush1.bf16.msra.mxu0 0
  %3193 = vmatprep.subr.bf16.mxu0 0
  %3194 = vmatpush1.bf16.msra.mxu0 0
  %3195 = vmatprep.subr.bf16.mxu0 0
  %3196 = vmatpush1.bf16.msra.mxu0 0
  %3197 = vmatprep.mubr.bf16.mxu0 0
  %3198 = vmatmul.mubr.bf16.gmra.mrb[0].mxu0 %v2753
  %v3199 = vpop.f32.mrb[0].mxu0
  %v3200 = vadd.f32 %v2457, %v3199
  %v3201 = vpop.f32.mrb[0].mxu0
  %v3202 = vadd.f32 %v2461, %v3201
  %v3203 = vpop.f32.mrb[0].mxu0
  %v3204 = vpop.f32.mrb[0].mxu0
  %3205 = vdwg.mxu0
  %3206 = vmatprep.subr.bf16.mxu0 %v2674
  %3207 = vmatpush1.bf16.msra.mxu0 %v2673
  %3208 = vmatprep.subr.bf16.mxu0 %v2699
  %3209 = vmatpush1.bf16.msra.mxu0 %v2698
  %3210 = vmatprep.subr.bf16.mxu0 0
  %3211 = vmatpush1.bf16.msra.mxu0 0
  %3212 = vmatprep.subr.bf16.mxu0 0
  %3213 = vmatpush1.bf16.msra.mxu0 0
  %3214 = vmatprep.subr.bf16.mxu0 0
  %3215 = vmatpush1.bf16.msra.mxu0 0
  %3216 = vmatprep.subr.bf16.mxu0 0
  %3217 = vmatpush1.bf16.msra.mxu0 0
  %3218 = vmatprep.subr.bf16.mxu0 0
  %3219 = vmatpush1.bf16.msra.mxu0 0
  %3220 = vmatprep.subr.bf16.mxu0 0
  %3221 = vmatpush1.bf16.msra.mxu0 0
  %3222 = vmatprep.subr.bf16.mxu0 0
  %3223 = vmatpush1.bf16.msra.mxu0 0
  %3224 = vmatprep.subr.bf16.mxu0 0
  %3225 = vmatpush1.bf16.msra.mxu0 0
  %3226 = vmatprep.subr.bf16.mxu0 0
  %3227 = vmatpush1.bf16.msra.mxu0 0
  %3228 = vmatprep.subr.bf16.mxu0 0
  %3229 = vmatpush1.bf16.msra.mxu0 0
  %3230 = vmatprep.subr.bf16.mxu0 0
  %3231 = vmatpush1.bf16.msra.mxu0 0
  %3232 = vmatprep.subr.bf16.mxu0 0
  %3233 = vmatpush1.bf16.msra.mxu0 0
  %3234 = vmatprep.subr.bf16.mxu0 0
  %3235 = vmatpush1.bf16.msra.mxu0 0
  %3236 = vmatprep.subr.bf16.mxu0 0
  %3237 = vmatpush1.bf16.msra.mxu0 0
  %3238 = vmatprep.mubr.bf16.mxu0 0
  %3239 = vmatmul.mubr.bf16.gmra.mrb[0].mxu0 %v2753
  %v3240 = vpop.f32.mrb[0].mxu0
  %v3241 = vadd.f32 %v2465, %v3240
  %v3242 = vpop.f32.mrb[0].mxu0
  %v3243 = vadd.f32 %v2469, %v3242
  %v3244 = vpop.f32.mrb[0].mxu0
  %v3245 = vpop.f32.mrb[0].mxu0
  %3246 = vdwg.mxu0
  %3247 = vmatprep.subr.bf16.mxu0 0
  %3248 = vmatpush1.bf16.msra.mxu0 %v2675
  %3249 = vmatprep.subr.bf16.mxu0 0
  %3250 = vmatpush1.bf16.msra.mxu0 %v2700
  %3251 = vmatprep.subr.bf16.mxu0 0
  %3252 = vmatpush1.bf16.msra.mxu0 0
  %3253 = vmatprep.subr.bf16.mxu0 0
  %3254 = vmatpush1.bf16.msra.mxu0 0
  %3255 = vmatprep.subr.bf16.mxu0 0
  %3256 = vmatpush1.bf16.msra.mxu0 0
  %3257 = vmatprep.subr.bf16.mxu0 0
  %3258 = vmatpush1.bf16.msra.mxu0 0
  %3259 = vmatprep.subr.bf16.mxu0 0
  %3260 = vmatpush1.bf16.msra.mxu0 0
  %3261 = vmatprep.subr.bf16.mxu0 0
  %3262 = vmatpush1.bf16.msra.mxu0 0
  %3263 = vmatprep.subr.bf16.mxu0 0
  %3264 = vmatpush1.bf16.msra.mxu0 0
  %3265 = vmatprep.subr.bf16.mxu0 0
  %3266 = vmatpush1.bf16.msra.mxu0 0
  %3267 = vmatprep.subr.bf16.mxu0 0
  %3268 = vmatpush1.bf16.msra.mxu0 0
  %3269 = vmatprep.subr.bf16.mxu0 0
  %3270 = vmatpush1.bf16.msra.mxu0 0
  %3271 = vmatprep.subr.bf16.mxu0 0
  %3272 = vmatpush1.bf16.msra.mxu0 0
  %3273 = vmatprep.subr.bf16.mxu0 0
  %3274 = vmatpush1.bf16.msra.mxu0 0
  %3275 = vmatprep.subr.bf16.mxu0 0
  %3276 = vmatpush1.bf16.msra.mxu0 0
  %3277 = vmatprep.subr.bf16.mxu0 0
  %3278 = vmatpush1.bf16.msra.mxu0 0
  %3279 = vmatprep.mubr.bf16.mxu0 0
  %3280 = vmatmul.mubr.bf16.gmra.mrb[0].mxu0 %v2753
  %v3281 = vpop.f32.mrb[0].mxu0
  %v3282 = vadd.f32 %v2473, %v3281
  %v3283 = vpop.f32.mrb[0].mxu0
  %v3284 = vpop.f32.mrb[0].mxu0
  %v3285 = vpop.f32.mrb[0].mxu0
  %3286 = vdwg.mxu0
  %v3287 = vmax.f32 %v2790, 0.0
  %v3288 = vmax.f32 %v2792, 0.0
  %v3289 = vmax.f32 %v2831, 0.0
  %v3290 = vmax.f32 %v2833, 0.0
  %v3291 = vmax.f32 %v2872, 0.0
  %v3292 = vmax.f32 %v2874, 0.0
  %v3293 = vmax.f32 %v2913, 0.0
  %v3294 = vmax.f32 %v2915, 0.0
  %v3295 = vmax.f32 %v2954, 0.0
  %v3296 = vmax.f32 %v2956, 0.0
  %v3297 = vmax.f32 %v2995, 0.0
  %v3298 = vmax.f32 %v2997, 0.0
  %v3299 = vmax.f32 %v3036, 0.0
  %v3300 = vmax.f32 %v3038, 0.0
  %v3301 = vmax.f32 %v3077, 0.0
  %v3302 = vmax.f32 %v3079, 0.0
  %v3303 = vmax.f32 %v3118, 0.0
  %v3304 = vmax.f32 %v3120, 0.0
  %v3305 = vmax.f32 %v3159, 0.0
  %v3306 = vmax.f32 %v3161, 0.0
  %v3307 = vmax.f32 %v3200, 0.0
  %v3308 = vmax.f32 %v3202, 0.0
  %v3309 = vmax.f32 %v3241, 0.0
  %v3310 = vmax.f32 %v3243, 0.0
  %v3311 = vmax.f32 %v3282, 0.0
  %v3312 = vpack.c.bf16 %v3287, %v3287
  %v3313 = vpack.c.bf16 %v3288, %v3288
  %v3314 = vpack.c.bf16 %v3289, %v3289
  %v3315 = vpack.c.bf16 %v3290, %v3290
  %v3316 = vpack.c.bf16 %v3291, %v3291
  %v3317 = vpack.c.bf16 %v3292, %v3292
  %v3318 = vpack.c.bf16 %v3293, %v3293
  %v3319 = vpack.c.bf16 %v3294, %v3294
  %v3320 = vpack.c.bf16 %v3295, %v3295
  %v3321 = vpack.c.bf16 %v3296, %v3296
  %v3322 = vpack.c.bf16 %v3297, %v3297
  %v3323 = vpack.c.bf16 %v3298, %v3298
  %v3324 = vpack.c.bf16 %v3299, %v3299
  %v3325 = vpack.c.bf16 %v3300, %v3300
  %v3326 = vpack.c.bf16 %v3301, %v3301
  %v3327 = vpack.c.bf16 %v3302, %v3302
  %v3328 = vpack.c.bf16 %v3303, %v3303
  %v3329 = vpack.c.bf16 %v3304, %v3304
  %v3330 = vpack.c.bf16 %v3305, %v3305
  %v3331 = vpack.c.bf16 %v3306, %v3306
  %v3332 = vpack.c.bf16 %v3307, %v3307
  %v3333 = vpack.c.bf16 %v3308, %v3308
  %v3334 = vpack.c.bf16 %v3309, %v3309
  %v3335 = vpack.c.bf16 %v3310, %v3310
  %v3336 = vpack.c.bf16 %v3311, %v3311
  %v3362 = vcombine.low %v3312, %v3313
  %v3363 = vcombine.low %v3314, %v3315
  %v3364 = vcombine.low %v3316, %v3317
  %v3365 = vcombine.low %v3318, %v3319
  %v3367 = vunpack.c.l.s4 1966171168
  %v3368 = vunpack.c.0.s8 %v3367
  %v3369 = vlaneseq
  %v3370 = vshrl.u32 %v3369, 7
  %v3371 = vsub.s32 %v3368, %v3370
  %v3372 = vrot.slane %v3362, %v3371
  %v3374 = vunpack.c.l.s4 1966171168
  %v3375 = vunpack.c.0.s8 %v3374
  %v3376 = vlaneseq
  %v3377 = vshrl.u32 %v3376, 7
  %v3378 = vsub.s32 %v3375, %v3377
  %v3379 = vrot.slane %v3363, %v3378
  %v3381 = vunpack.c.l.s4 1966171168
  %v3382 = vunpack.c.0.s8 %v3381
  %v3383 = vlaneseq
  %v3384 = vshrl.u32 %v3383, 7
  %v3385 = vsub.s32 %v3382, %v3384
  %v3386 = vrot.slane %v3364, %v3385
  %v3388 = vunpack.c.l.s4 1966171168
  %v3389 = vunpack.c.0.s8 %v3388
  %v3390 = vlaneseq
  %v3391 = vshrl.u32 %v3390, 7
  %v3392 = vsub.s32 %v3389, %v3391
  %v3393 = vrot.slane %v3365, %v3392
  %v3394 = vcombine.low %v3372, %v3379
  %v3395 = vcombine.low %v3386, %v3393
  %v3397 = vunpack.c.l.s4 1966171168
  %v3398 = vunpack.c.0.s8 %v3397
  %v3399 = vlaneseq
  %v3400 = vshrl.u32 %v3399, 7
  %v3401 = vsub.s32 %v3398, %v3400
  %v3402 = vrot.slane %v3394, %v3401
  %v3404 = vunpack.c.l.s4 1966171168
  %v3405 = vunpack.c.0.s8 %v3404
  %v3406 = vlaneseq
  %v3407 = vshrl.u32 %v3406, 7
  %v3408 = vsub.s32 %v3405, %v3407
  %v3409 = vrot.slane %v3395, %v3408
  %v3410 = vcombine.low %v3402, %v3409
  %v3411 = vcombine.low %v3320, %v3321
  %v3412 = vcombine.low %v3322, %v3323
  %v3413 = vcombine.low %v3324, %v3325
  %v3414 = vcombine.low %v3326, %v3327
  %v3416 = vunpack.c.l.s4 1966171168
  %v3417 = vunpack.c.0.s8 %v3416
  %v3418 = vlaneseq
  %v3419 = vshrl.u32 %v3418, 7
  %v3420 = vsub.s32 %v3417, %v3419
  %v3421 = vrot.slane %v3411, %v3420
  %v3423 = vunpack.c.l.s4 1966171168
  %v3424 = vunpack.c.0.s8 %v3423
  %v3425 = vlaneseq
  %v3426 = vshrl.u32 %v3425, 7
  %v3427 = vsub.s32 %v3424, %v3426
  %v3428 = vrot.slane %v3412, %v3427
  %v3430 = vunpack.c.l.s4 1966171168
  %v3431 = vunpack.c.0.s8 %v3430
  %v3432 = vlaneseq
  %v3433 = vshrl.u32 %v3432, 7
  %v3434 = vsub.s32 %v3431, %v3433
  %v3435 = vrot.slane %v3413, %v3434
  %v3437 = vunpack.c.l.s4 1966171168
  %v3438 = vunpack.c.0.s8 %v3437
  %v3439 = vlaneseq
  %v3440 = vshrl.u32 %v3439, 7
  %v3441 = vsub.s32 %v3438, %v3440
  %v3442 = vrot.slane %v3414, %v3441
  %v3443 = vcombine.low %v3421, %v3428
  %v3444 = vcombine.low %v3435, %v3442
  %v3446 = vunpack.c.l.s4 1966171168
  %v3447 = vunpack.c.0.s8 %v3446
  %v3448 = vlaneseq
  %v3449 = vshrl.u32 %v3448, 7
  %v3450 = vsub.s32 %v3447, %v3449
  %v3451 = vrot.slane %v3443, %v3450
  %v3453 = vunpack.c.l.s4 1966171168
  %v3454 = vunpack.c.0.s8 %v3453
  %v3455 = vlaneseq
  %v3456 = vshrl.u32 %v3455, 7
  %v3457 = vsub.s32 %v3454, %v3456
  %v3458 = vrot.slane %v3444, %v3457
  %v3459 = vcombine.low %v3451, %v3458
  %v3460 = vcombine.low %v3328, %v3329
  %v3461 = vcombine.low %v3330, %v3331
  %v3462 = vcombine.low %v3332, %v3333
  %v3463 = vcombine.low %v3334, %v3335
  %v3465 = vunpack.c.l.s4 1966171168
  %v3466 = vunpack.c.0.s8 %v3465
  %v3467 = vlaneseq
  %v3468 = vshrl.u32 %v3467, 7
  %v3469 = vsub.s32 %v3466, %v3468
  %v3470 = vrot.slane %v3460, %v3469
  %v3472 = vunpack.c.l.s4 1966171168
  %v3473 = vunpack.c.0.s8 %v3472
  %v3474 = vlaneseq
  %v3475 = vshrl.u32 %v3474, 7
  %v3476 = vsub.s32 %v3473, %v3475
  %v3477 = vrot.slane %v3461, %v3476
  %v3479 = vunpack.c.l.s4 1966171168
  %v3480 = vunpack.c.0.s8 %v3479
  %v3481 = vlaneseq
  %v3482 = vshrl.u32 %v3481, 7
  %v3483 = vsub.s32 %v3480, %v3482
  %v3484 = vrot.slane %v3462, %v3483
  %v3486 = vunpack.c.l.s4 1966171168
  %v3487 = vunpack.c.0.s8 %v3486
  %v3488 = vlaneseq
  %v3489 = vshrl.u32 %v3488, 7
  %v3490 = vsub.s32 %v3487, %v3489
  %v3491 = vrot.slane %v3463, %v3490
  %v3492 = vcombine.low %v3470, %v3477
  %v3493 = vcombine.low %v3484, %v3491
  %v3495 = vunpack.c.l.s4 1966171168
  %v3496 = vunpack.c.0.s8 %v3495
  %v3497 = vlaneseq
  %v3498 = vshrl.u32 %v3497, 7
  %v3499 = vsub.s32 %v3496, %v3498
  %v3500 = vrot.slane %v3492, %v3499
  %v3502 = vunpack.c.l.s4 1966171168
  %v3503 = vunpack.c.0.s8 %v3502
  %v3504 = vlaneseq
  %v3505 = vshrl.u32 %v3504, 7
  %v3506 = vsub.s32 %v3503, %v3505
  %v3507 = vrot.slane %v3493, %v3506
  %v3508 = vcombine.low %v3500, %v3507
  %v3510 = vunpack.c.l.s4 1966171168
  %v3511 = vunpack.c.0.s8 %v3510
  %v3512 = vlaneseq
  %v3513 = vshrl.u32 %v3512, 7
  %v3514 = vsub.s32 %v3511, %v3513
  %v3515 = vrot.slane %v3336, %v3514
  %v3517 = vunpack.c.l.s4 1966171168
  %v3518 = vunpack.c.0.s8 %v3517
  %v3519 = vlaneseq
  %v3520 = vshrl.u32 %v3519, 7
  %v3521 = vsub.s32 %v3518, %v3520
  %v3522 = vrot.slane %v3515, %v3521
  %3527 = vst [vmem:[%s5] sm:$0xff] %v3410
  %3528 = vst [vmem:[%s5 + $0x8] sm:$0xff] %v3459
  %3529 = vst [vmem:[%s5 + $0x10] sm:$0xff] %v3508
  %vm3530 = vcmask 516096
  %3531 = vst.msk [vmem:[%s5 + $0x18] sm:$0x1] %vm3530, %v3522
  // Predicated region
  $region22: #{autoencoder_forward.7} parent=0 // pred_check
    _
  $region23: #{autoencoder_forward.7} parent=0 // pred_check_branch
    %3533 = sbr.rel (0) target = $region25
  $region24: #{autoencoder_forward.7} parent=0 // pred_region
    _
  $region25: #{autoencoder_forward.7} parent=0 // pred_fallthru
    _
  // Predicated region
  $region26: #{autoencoder_forward.7} parent=0 // pred_check
    _
  $region27: #{autoencoder_forward.7} parent=0 // pred_check_branch
    %3535 = sbr.rel (0) target = $region29
  $region28: #{autoencoder_forward.7} parent=0 // pred_region
    _
  $region29: #{autoencoder_forward.7} parent=0 // pred_fallthru
    _

// kernel: autoencoder_forward.8
$region0: #{autoencoder_forward.8}
  #allocation0 [shape = 'u32[]', space=smem, size = 0x4, offset = 0x4, fixed_abs, tag = 'smem constant byte address 0x4 - core index']
  #allocation1 [shape = 'u32[144,128]{1,0:T(1,128)}', space=vmem, size = 0x12000, scoped, tag = 'internal scratch']
  %s0 = inlined_call_operand.vmem [shape: bf16[32,576], index: 0, kind: input, shape index: {}]
  %s1 = inlined_call_operand.vmem [shape: bf16[576,392], index: 1, kind: input, shape index: {}]
  %s2 = inlined_call_operand.vmem [shape: f32[32,1], index: 2, kind: input, shape index: {}]
  %s3 = inlined_call_operand.vmem [shape: bf16[32,392], index: 3, kind: output, shape index: {}]
  %s4 = sld [smem:[#allocation0]]
  $region22: #{autoencoder_forward.8} parent=0
    _
  %s6 = ssub.s32 1, %s4
  %s7 = scalar_select 0, %s6, %s4
  // Predicated region
  $region2: #{autoencoder_forward.8} parent=0 // pred_check
    _
  $region3: #{autoencoder_forward.8} parent=0 // pred_check_branch
    %9 = sbr.rel (0) target = $region5
  $region4: #{autoencoder_forward.8} parent=0 // pred_region
    _
  $region5: #{autoencoder_forward.8} parent=0 // pred_fallthru
    _
  // Predicated region
  $region6: #{autoencoder_forward.8} parent=0 // pred_check
    _
  $region7: #{autoencoder_forward.8} parent=0 // pred_check_branch
    %11 = sbr.rel (0) target = $region9
  $region8: #{autoencoder_forward.8} parent=0 // pred_region
    _
  $region9: #{autoencoder_forward.8} parent=0 // pred_fallthru
    _
  // Predicated region
  $region10: #{autoencoder_forward.8} parent=0 // pred_check
    _
  $region11: #{autoencoder_forward.8} parent=0 // pred_check_branch
    %13 = sbr.rel (0) target = $region13
  $region12: #{autoencoder_forward.8} parent=0 // pred_region
    _
  $region13: #{autoencoder_forward.8} parent=0 // pred_fallthru
    _
  %v15 = vld [vmem:[%s0] sm:$0xff]
  %v16 = vld [vmem:[%s0 + $0x8] sm:$0xff]
  %v17 = vld [vmem:[%s0 + $0x10] sm:$0xf]
  %v18 = vld [vmem:[%s0 + $0x14] sm:$0xff]
  %v19 = vld [vmem:[%s0 + $0x1c] sm:$0xff]
  %v20 = vld [vmem:[%s0 + $0x24] sm:$0xf]
  %v21 = vld [vmem:[%s0 + $0x28] sm:$0xff]
  %v22 = vld [vmem:[%s0 + $0x30] sm:$0xff]
  %v23 = vld [vmem:[%s0 + $0x38] sm:$0xf]
  %v24 = vld [vmem:[%s0 + $0x3c] sm:$0xff]
  %v25 = vld [vmem:[%s0 + $0x44] sm:$0xff]
  %v26 = vld [vmem:[%s0 + $0x4c] sm:$0xf]
  %v27 = vld [vmem:[%s1] sm:$0xff]
  %v28 = vld [vmem:[%s1 + $0x8] sm:$0xff]
  %v29 = vld [vmem:[%s1 + $0x10] sm:$0xff]
  %v30 = vld [vmem:[%s1 + $0x18] sm:$0xff]
  %v31 = vld [vmem:[%s1 + $0x20] sm:$0xff]
  %v32 = vld [vmem:[%s1 + $0x28] sm:$0xff]
  %v33 = vld [vmem:[%s1 + $0x30] sm:$0xff]
  %v34 = vld [vmem:[%s1 + $0x38] sm:$0xff]
  %v35 = vld [vmem:[%s1 + $0x40] sm:$0xff]
  %v36 = vld [vmem:[%s1 + $0x48] sm:$0xff]
  %v37 = vld [vmem:[%s1 + $0x50] sm:$0xff]
  %v38 = vld [vmem:[%s1 + $0x58] sm:$0xff]
  %v39 = vld [vmem:[%s1 + $0x60] sm:$0xff]
  %v40 = vld [vmem:[%s1 + $0x68] sm:$0xff]
  %v41 = vld [vmem:[%s1 + $0x70] sm:$0xff]
  %v42 = vld [vmem:[%s1 + $0x78] sm:$0xff]
  %v43 = vld [vmem:[%s1 + $0x80] sm:$0xff]
  %v44 = vld [vmem:[%s1 + $0x88] sm:$0xff]
  %v45 = vld [vmem:[%s1 + $0x90] sm:$0xff]
  %v46 = vld [vmem:[%s1 + $0x98] sm:$0xff]
  %v47 = vld [vmem:[%s1 + $0xa0] sm:$0xff]
  %v48 = vld [vmem:[%s1 + $0xa8] sm:$0xff]
  %v49 = vld [vmem:[%s1 + $0xb0] sm:$0xff]
  %v50 = vld [vmem:[%s1 + $0xb8] sm:$0xff]
  %v51 = vld [vmem:[%s1 + $0xc0] sm:$0xff]
  %v52 = vld [vmem:[%s1 + $0xc8] sm:$0xff]
  %v53 = vld [vmem:[%s1 + $0xd0] sm:$0xff]
  %v54 = vld [vmem:[%s1 + $0xd8] sm:$0xff]
  %v55 = vld [vmem:[%s1 + $0xe0] sm:$0xff]
  %v56 = vld [vmem:[%s1 + $0xe8] sm:$0xff]
  %v57 = vld [vmem:[%s1 + $0xf0] sm:$0xff]
  %v58 = vld [vmem:[%s1 + $0xf8] sm:$0xff]
  %v59 = vld [vmem:[%s1 + $0x100] sm:$0xff]
  %v60 = vld [vmem:[%s1 + $0x108] sm:$0xff]
  %v61 = vld [vmem:[%s1 + $0x110] sm:$0xff]
  %v62 = vld [vmem:[%s1 + $0x118] sm:$0xff]
  %v63 = vld [vmem:[%s1 + $0x120] sm:$0xff]
  %v64 = vld [vmem:[%s1 + $0x128] sm:$0xff]
  %v65 = vld [vmem:[%s1 + $0x130] sm:$0xff]
  %v66 = vld [vmem:[%s1 + $0x138] sm:$0xff]
  %v67 = vld [vmem:[%s1 + $0x140] sm:$0xff]
  %v68 = vld [vmem:[%s1 + $0x148] sm:$0xff]
  %v69 = vld [vmem:[%s1 + $0x150] sm:$0xff]
  %v70 = vld [vmem:[%s1 + $0x158] sm:$0xff]
  %v71 = vld [vmem:[%s1 + $0x160] sm:$0xff]
  %v72 = vld [vmem:[%s1 + $0x168] sm:$0xff]
  %v73 = vld [vmem:[%s1 + $0x170] sm:$0xff]
  %v74 = vld [vmem:[%s1 + $0x178] sm:$0xff]
  %v75 = vld [vmem:[%s1 + $0x180] sm:$0xff]
  %v76 = vld [vmem:[%s1 + $0x188] sm:$0xff]
  %v77 = vld [vmem:[%s1 + $0x190] sm:$0xff]
  %v78 = vld [vmem:[%s1 + $0x198] sm:$0xff]
  %v79 = vld [vmem:[%s1 + $0x1a0] sm:$0xff]
  %v80 = vld [vmem:[%s1 + $0x1a8] sm:$0xff]
  %v81 = vld [vmem:[%s1 + $0x1b0] sm:$0xff]
  %v82 = vld [vmem:[%s1 + $0x1b8] sm:$0xff]
  %v83 = vld [vmem:[%s1 + $0x1c0] sm:$0xff]
  %v84 = vld [vmem:[%s1 + $0x1c8] sm:$0xff]
  %v85 = vld [vmem:[%s1 + $0x1d0] sm:$0xff]
  %v86 = vld [vmem:[%s1 + $0x1d8] sm:$0xff]
  %v87 = vld [vmem:[%s1 + $0x1e0] sm:$0xff]
  %v88 = vld [vmem:[%s1 + $0x1e8] sm:$0xff]
  %v89 = vld [vmem:[%s1 + $0x1f0] sm:$0xff]
  %v90 = vld [vmem:[%s1 + $0x1f8] sm:$0xff]
  %v91 = vld [vmem:[%s1 + $0x200] sm:$0xff]
  %v92 = vld [vmem:[%s1 + $0x208] sm:$0xff]
  %v93 = vld [vmem:[%s1 + $0x210] sm:$0xff]
  %v94 = vld [vmem:[%s1 + $0x218] sm:$0xff]
  %v95 = vld [vmem:[%s1 + $0x220] sm:$0xff]
  %v96 = vld [vmem:[%s1 + $0x228] sm:$0xff]
  %v97 = vld [vmem:[%s1 + $0x230] sm:$0xff]
  %v98 = vld [vmem:[%s1 + $0x238] sm:$0xff]
  %v99 = vld [vmem:[%s1 + $0x240] sm:$0xff]
  %v100 = vld [vmem:[%s1 + $0x248] sm:$0xff]
  %v101 = vld [vmem:[%s1 + $0x250] sm:$0xff]
  %v102 = vld [vmem:[%s1 + $0x258] sm:$0xff]
  %v103 = vld [vmem:[%s1 + $0x260] sm:$0xff]
  %v104 = vld [vmem:[%s1 + $0x268] sm:$0xff]
  %v105 = vld [vmem:[%s1 + $0x270] sm:$0xff]
  %v106 = vld [vmem:[%s1 + $0x278] sm:$0xff]
  %v107 = vld [vmem:[%s1 + $0x280] sm:$0xff]
  %v108 = vld [vmem:[%s1 + $0x288] sm:$0xff]
  %v109 = vld [vmem:[%s1 + $0x290] sm:$0xff]
  %v110 = vld [vmem:[%s1 + $0x298] sm:$0xff]
  %v111 = vld [vmem:[%s1 + $0x2a0] sm:$0xff]
  %v112 = vld [vmem:[%s1 + $0x2a8] sm:$0xff]
  %v113 = vld [vmem:[%s1 + $0x2b0] sm:$0xff]
  %v114 = vld [vmem:[%s1 + $0x2b8] sm:$0xff]
  %v115 = vld [vmem:[%s1 + $0x2c0] sm:$0xff]
  %v116 = vld [vmem:[%s1 + $0x2c8] sm:$0xff]
  %v117 = vld [vmem:[%s1 + $0x2d0] sm:$0xff]
  %v118 = vld [vmem:[%s1 + $0x2d8] sm:$0xff]
  %v119 = vld [vmem:[%s1 + $0x2e0] sm:$0xff]
  %v120 = vld [vmem:[%s1 + $0x2e8] sm:$0xff]
  %v121 = vld [vmem:[%s1 + $0x2f0] sm:$0xff]
  %v122 = vld [vmem:[%s1 + $0x2f8] sm:$0xff]
  %v123 = vld [vmem:[%s1 + $0x300] sm:$0xff]
  %v124 = vld [vmem:[%s1 + $0x308] sm:$0xff]
  %v125 = vld [vmem:[%s1 + $0x310] sm:$0xff]
  %v126 = vld [vmem:[%s1 + $0x318] sm:$0xff]
  %v127 = vld [vmem:[%s1 + $0x320] sm:$0xff]
  %v128 = vld [vmem:[%s1 + $0x328] sm:$0xff]
  %v129 = vld [vmem:[%s1 + $0x330] sm:$0xff]
  %v130 = vld [vmem:[%s1 + $0x338] sm:$0xff]
  %v131 = vld [vmem:[%s1 + $0x340] sm:$0xff]
  %v132 = vld [vmem:[%s1 + $0x348] sm:$0xff]
  %v133 = vld [vmem:[%s1 + $0x350] sm:$0xff]
  %v134 = vld [vmem:[%s1 + $0x358] sm:$0xff]
  %v135 = vld [vmem:[%s1 + $0x360] sm:$0xff]
  %v136 = vld [vmem:[%s1 + $0x368] sm:$0xff]
  %v137 = vld [vmem:[%s1 + $0x370] sm:$0xff]
  %v138 = vld [vmem:[%s1 + $0x378] sm:$0xff]
  %v139 = vld [vmem:[%s1 + $0x380] sm:$0xff]
  %v140 = vld [vmem:[%s1 + $0x388] sm:$0xff]
  %v141 = vld [vmem:[%s1 + $0x390] sm:$0xff]
  %v142 = vld [vmem:[%s1 + $0x398] sm:$0xff]
  %v143 = vld [vmem:[%s1 + $0x3a0] sm:$0xff]
  %v144 = vld [vmem:[%s1 + $0x3a8] sm:$0xff]
  %v145 = vld [vmem:[%s1 + $0x3b0] sm:$0xff]
  %v146 = vld [vmem:[%s1 + $0x3b8] sm:$0xff]
  %v147 = vld [vmem:[%s1 + $0x3c0] sm:$0xff]
  %v148 = vld [vmem:[%s1 + $0x3c8] sm:$0xff]
  %v149 = vld [vmem:[%s1 + $0x3d0] sm:$0xff]
  %v150 = vld [vmem:[%s1 + $0x3d8] sm:$0xff]
  %v151 = vld [vmem:[%s1 + $0x3e0] sm:$0xff]
  %v152 = vld [vmem:[%s1 + $0x3e8] sm:$0xff]
  %v153 = vld [vmem:[%s1 + $0x3f0] sm:$0xff]
  %v154 = vld [vmem:[%s1 + $0x3f8] sm:$0xff]
  %v155 = vld [vmem:[%s1 + $0x400] sm:$0xff]
  %v156 = vld [vmem:[%s1 + $0x408] sm:$0xff]
  %v157 = vld [vmem:[%s1 + $0x410] sm:$0xff]
  %v158 = vld [vmem:[%s1 + $0x418] sm:$0xff]
  %v159 = vld [vmem:[%s1 + $0x420] sm:$0xff]
  %v160 = vld [vmem:[%s1 + $0x428] sm:$0xff]
  %v161 = vld [vmem:[%s1 + $0x430] sm:$0xff]
  %v162 = vld [vmem:[%s1 + $0x438] sm:$0xff]
  %v163 = vld [vmem:[%s1 + $0x440] sm:$0xff]
  %v164 = vld [vmem:[%s1 + $0x448] sm:$0xff]
  %v165 = vld [vmem:[%s1 + $0x450] sm:$0xff]
  %v166 = vld [vmem:[%s1 + $0x458] sm:$0xff]
  %v167 = vld [vmem:[%s1 + $0x460] sm:$0xff]
  %v168 = vld [vmem:[%s1 + $0x468] sm:$0xff]
  %v169 = vld [vmem:[%s1 + $0x470] sm:$0xff]
  %v170 = vld [vmem:[%s1 + $0x478] sm:$0xff]
  %v171 = vld [vmem:[%s2] sm:$0xff]
  %v172 = vld [vmem:[%s2 + $0x8] sm:$0xff]
  %v173 = vld [vmem:[%s2 + $0x10] sm:$0xff]
  %v174 = vld [vmem:[%s2 + $0x18] sm:$0xff]
  %176 = vset.pattern.permute.xlu0 0
  %177 = vperm.xlu0 %176, %v171
  %v178 = vpop.permute.xlu0 %177
  %181 = vset.pattern.permute.xlu0 0
  %182 = vperm.xlu0 %181, %v172
  %v183 = vpop.permute.xlu0 %182
  %186 = vset.pattern.permute.xlu0 0
  %187 = vperm.xlu0 %186, %v173
  %v188 = vpop.permute.xlu0 %187
  %191 = vset.pattern.permute.xlu0 0
  %192 = vperm.xlu0 %191, %v174
  %v193 = vpop.permute.xlu0 %192
  %v207 = vunpack.c.l.b16 %v15
  %v208 = vunpack.c.h.b16 %v15
  %v209 = vunpack.c.l.b16 %v16
  %v210 = vunpack.c.h.b16 %v16
  %v211 = vunpack.c.l.b16 %v17
  %v212 = vunpack.c.l.b16 %v18
  %v213 = vunpack.c.h.b16 %v18
  %v214 = vunpack.c.l.b16 %v19
  %v215 = vunpack.c.h.b16 %v19
  %v216 = vunpack.c.l.b16 %v20
  %v217 = vunpack.c.l.b16 %v21
  %v218 = vunpack.c.h.b16 %v21
  %v219 = vunpack.c.l.b16 %v22
  %v220 = vunpack.c.h.b16 %v22
  %v221 = vunpack.c.l.b16 %v23
  %v222 = vunpack.c.l.b16 %v24
  %v223 = vunpack.c.h.b16 %v24
  %v224 = vunpack.c.l.b16 %v25
  %v225 = vunpack.c.h.b16 %v25
  %v226 = vunpack.c.l.b16 %v26
  %v227 = vpack.c.b16 %v212, %v207
  %v228 = vpack.c.b16 %v213, %v208
  %v229 = vpack.c.b16 %v214, %v209
  %v230 = vpack.c.b16 %v215, %v210
  %v231 = vpack.c.b16 %v216, %v211
  %v232 = vpack.c.b16 %v222, %v217
  %v233 = vpack.c.b16 %v223, %v218
  %v234 = vpack.c.b16 %v224, %v219
  %v235 = vpack.c.b16 %v225, %v220
  %v236 = vpack.c.b16 %v226, %v221
  %v389 = vunpack.c.l.b16 %v27
  %v390 = vunpack.c.h.b16 %v27
  %v391 = vunpack.c.l.b16 %v28
  %v392 = vunpack.c.h.b16 %v28
  %v393 = vunpack.c.l.b16 %v29
  %v394 = vunpack.c.h.b16 %v29
  %v395 = vunpack.c.l.b16 %v30
  %v396 = vunpack.c.h.b16 %v30
  %v397 = vunpack.c.l.b16 %v31
  %v398 = vunpack.c.h.b16 %v31
  %v399 = vunpack.c.l.b16 %v32
  %v400 = vunpack.c.h.b16 %v32
  %v401 = vunpack.c.l.b16 %v33
  %v402 = vunpack.c.h.b16 %v33
  %v403 = vunpack.c.l.b16 %v34
  %v404 = vunpack.c.h.b16 %v34
  %v405 = vunpack.c.l.b16 %v35
  %v406 = vunpack.c.h.b16 %v35
  %v407 = vunpack.c.l.b16 %v36
  %v408 = vunpack.c.h.b16 %v36
  %v409 = vunpack.c.l.b16 %v37
  %v410 = vunpack.c.h.b16 %v37
  %v411 = vunpack.c.l.b16 %v38
  %v412 = vunpack.c.h.b16 %v38
  %v413 = vunpack.c.l.b16 %v39
  %v414 = vunpack.c.h.b16 %v39
  %v415 = vunpack.c.l.b16 %v40
  %v416 = vunpack.c.h.b16 %v40
  %v417 = vunpack.c.l.b16 %v41
  %v418 = vunpack.c.h.b16 %v41
  %v419 = vunpack.c.l.b16 %v42
  %v420 = vunpack.c.h.b16 %v42
  %v421 = vunpack.c.l.b16 %v43
  %v422 = vunpack.c.h.b16 %v43
  %v423 = vunpack.c.l.b16 %v44
  %v424 = vunpack.c.h.b16 %v44
  %v425 = vunpack.c.l.b16 %v45
  %v426 = vunpack.c.h.b16 %v45
  %v427 = vunpack.c.l.b16 %v46
  %v428 = vunpack.c.h.b16 %v46
  %v429 = vunpack.c.l.b16 %v47
  %v430 = vunpack.c.h.b16 %v47
  %v431 = vunpack.c.l.b16 %v48
  %v432 = vunpack.c.h.b16 %v48
  %v433 = vunpack.c.l.b16 %v49
  %v434 = vunpack.c.h.b16 %v49
  %v435 = vunpack.c.l.b16 %v50
  %v436 = vunpack.c.h.b16 %v50
  %v437 = vunpack.c.l.b16 %v51
  %v438 = vunpack.c.h.b16 %v51
  %v439 = vunpack.c.l.b16 %v52
  %v440 = vunpack.c.h.b16 %v52
  %v441 = vunpack.c.l.b16 %v53
  %v442 = vunpack.c.h.b16 %v53
  %v443 = vunpack.c.l.b16 %v54
  %v444 = vunpack.c.h.b16 %v54
  %v445 = vunpack.c.l.b16 %v55
  %v446 = vunpack.c.h.b16 %v55
  %v447 = vunpack.c.l.b16 %v56
  %v448 = vunpack.c.h.b16 %v56
  %v449 = vunpack.c.l.b16 %v57
  %v450 = vunpack.c.h.b16 %v57
  %v451 = vunpack.c.l.b16 %v58
  %v452 = vunpack.c.h.b16 %v58
  %v453 = vunpack.c.l.b16 %v59
  %v454 = vunpack.c.h.b16 %v59
  %v455 = vunpack.c.l.b16 %v60
  %v456 = vunpack.c.h.b16 %v60
  %v457 = vunpack.c.l.b16 %v61
  %v458 = vunpack.c.h.b16 %v61
  %v459 = vunpack.c.l.b16 %v62
  %v460 = vunpack.c.h.b16 %v62
  %v461 = vunpack.c.l.b16 %v63
  %v462 = vunpack.c.h.b16 %v63
  %v463 = vunpack.c.l.b16 %v64
  %v464 = vunpack.c.h.b16 %v64
  %v465 = vunpack.c.l.b16 %v65
  %v466 = vunpack.c.h.b16 %v65
  %v467 = vunpack.c.l.b16 %v66
  %v468 = vunpack.c.h.b16 %v66
  %v469 = vunpack.c.l.b16 %v67
  %v470 = vunpack.c.h.b16 %v67
  %v471 = vunpack.c.l.b16 %v68
  %v472 = vunpack.c.h.b16 %v68
  %v473 = vunpack.c.l.b16 %v69
  %v474 = vunpack.c.h.b16 %v69
  %v475 = vunpack.c.l.b16 %v70
  %v476 = vunpack.c.h.b16 %v70
  %v477 = vunpack.c.l.b16 %v71
  %v478 = vunpack.c.h.b16 %v71
  %v479 = vunpack.c.l.b16 %v72
  %v480 = vunpack.c.h.b16 %v72
  %v481 = vunpack.c.l.b16 %v73
  %v482 = vunpack.c.h.b16 %v73
  %v483 = vunpack.c.l.b16 %v74
  %v484 = vunpack.c.h.b16 %v74
  %v485 = vunpack.c.l.b16 %v75
  %v486 = vunpack.c.h.b16 %v75
  %v487 = vunpack.c.l.b16 %v76
  %v488 = vunpack.c.h.b16 %v76
  %v489 = vunpack.c.l.b16 %v77
  %v490 = vunpack.c.h.b16 %v77
  %v491 = vunpack.c.l.b16 %v78
  %v492 = vunpack.c.h.b16 %v78
  %v493 = vunpack.c.l.b16 %v79
  %v494 = vunpack.c.h.b16 %v79
  %v495 = vunpack.c.l.b16 %v80
  %v496 = vunpack.c.h.b16 %v80
  %v497 = vunpack.c.l.b16 %v81
  %v498 = vunpack.c.h.b16 %v81
  %v499 = vunpack.c.l.b16 %v82
  %v500 = vunpack.c.h.b16 %v82
  %v501 = vunpack.c.l.b16 %v83
  %v502 = vunpack.c.h.b16 %v83
  %v503 = vunpack.c.l.b16 %v84
  %v504 = vunpack.c.h.b16 %v84
  %v505 = vunpack.c.l.b16 %v85
  %v506 = vunpack.c.h.b16 %v85
  %v507 = vunpack.c.l.b16 %v86
  %v508 = vunpack.c.h.b16 %v86
  %v509 = vunpack.c.l.b16 %v87
  %v510 = vunpack.c.h.b16 %v87
  %v511 = vunpack.c.l.b16 %v88
  %v512 = vunpack.c.h.b16 %v88
  %v513 = vunpack.c.l.b16 %v89
  %v514 = vunpack.c.h.b16 %v89
  %v515 = vunpack.c.l.b16 %v90
  %v516 = vunpack.c.h.b16 %v90
  %v517 = vunpack.c.l.b16 %v91
  %v518 = vunpack.c.h.b16 %v91
  %v519 = vunpack.c.l.b16 %v92
  %v520 = vunpack.c.h.b16 %v92
  %v521 = vunpack.c.l.b16 %v93
  %v522 = vunpack.c.h.b16 %v93
  %v523 = vunpack.c.l.b16 %v94
  %v524 = vunpack.c.h.b16 %v94
  %v525 = vunpack.c.l.b16 %v95
  %v526 = vunpack.c.h.b16 %v95
  %v527 = vunpack.c.l.b16 %v96
  %v528 = vunpack.c.h.b16 %v96
  %v529 = vunpack.c.l.b16 %v97
  %v530 = vunpack.c.h.b16 %v97
  %v531 = vunpack.c.l.b16 %v98
  %v532 = vunpack.c.h.b16 %v98
  %v533 = vunpack.c.l.b16 %v99
  %v534 = vunpack.c.h.b16 %v99
  %v535 = vunpack.c.l.b16 %v100
  %v536 = vunpack.c.h.b16 %v100
  %v537 = vunpack.c.l.b16 %v101
  %v538 = vunpack.c.h.b16 %v101
  %v539 = vunpack.c.l.b16 %v102
  %v540 = vunpack.c.h.b16 %v102
  %v541 = vunpack.c.l.b16 %v103
  %v542 = vunpack.c.h.b16 %v103
  %v543 = vunpack.c.l.b16 %v104
  %v544 = vunpack.c.h.b16 %v104
  %v545 = vunpack.c.l.b16 %v105
  %v546 = vunpack.c.h.b16 %v105
  %v547 = vunpack.c.l.b16 %v106
  %v548 = vunpack.c.h.b16 %v106
  %v549 = vunpack.c.l.b16 %v107
  %v550 = vunpack.c.h.b16 %v107
  %v551 = vunpack.c.l.b16 %v108
  %v552 = vunpack.c.h.b16 %v108
  %v553 = vunpack.c.l.b16 %v109
  %v554 = vunpack.c.h.b16 %v109
  %v555 = vunpack.c.l.b16 %v110
  %v556 = vunpack.c.h.b16 %v110
  %v557 = vunpack.c.l.b16 %v111
  %v558 = vunpack.c.h.b16 %v111
  %v559 = vunpack.c.l.b16 %v112
  %v560 = vunpack.c.h.b16 %v112
  %v561 = vunpack.c.l.b16 %v113
  %v562 = vunpack.c.h.b16 %v113
  %v563 = vunpack.c.l.b16 %v114
  %v564 = vunpack.c.h.b16 %v114
  %v565 = vunpack.c.l.b16 %v115
  %v566 = vunpack.c.h.b16 %v115
  %v567 = vunpack.c.l.b16 %v116
  %v568 = vunpack.c.h.b16 %v116
  %v569 = vunpack.c.l.b16 %v117
  %v570 = vunpack.c.h.b16 %v117
  %v571 = vunpack.c.l.b16 %v118
  %v572 = vunpack.c.h.b16 %v118
  %v573 = vunpack.c.l.b16 %v119
  %v574 = vunpack.c.h.b16 %v119
  %v575 = vunpack.c.l.b16 %v120
  %v576 = vunpack.c.h.b16 %v120
  %v577 = vunpack.c.l.b16 %v121
  %v578 = vunpack.c.h.b16 %v121
  %v579 = vunpack.c.l.b16 %v122
  %v580 = vunpack.c.h.b16 %v122
  %v581 = vunpack.c.l.b16 %v123
  %v582 = vunpack.c.h.b16 %v123
  %v583 = vunpack.c.l.b16 %v124
  %v584 = vunpack.c.h.b16 %v124
  %v585 = vunpack.c.l.b16 %v125
  %v586 = vunpack.c.h.b16 %v125
  %v587 = vunpack.c.l.b16 %v126
  %v588 = vunpack.c.h.b16 %v126
  %v589 = vunpack.c.l.b16 %v127
  %v590 = vunpack.c.h.b16 %v127
  %v591 = vunpack.c.l.b16 %v128
  %v592 = vunpack.c.h.b16 %v128
  %v593 = vunpack.c.l.b16 %v129
  %v594 = vunpack.c.h.b16 %v129
  %v595 = vunpack.c.l.b16 %v130
  %v596 = vunpack.c.h.b16 %v130
  %v597 = vunpack.c.l.b16 %v131
  %v598 = vunpack.c.h.b16 %v131
  %v599 = vunpack.c.l.b16 %v132
  %v600 = vunpack.c.h.b16 %v132
  %v601 = vunpack.c.l.b16 %v133
  %v602 = vunpack.c.h.b16 %v133
  %v603 = vunpack.c.l.b16 %v134
  %v604 = vunpack.c.h.b16 %v134
  %v605 = vunpack.c.l.b16 %v135
  %v606 = vunpack.c.h.b16 %v135
  %v607 = vunpack.c.l.b16 %v136
  %v608 = vunpack.c.h.b16 %v136
  %v609 = vunpack.c.l.b16 %v137
  %v610 = vunpack.c.h.b16 %v137
  %v611 = vunpack.c.l.b16 %v138
  %v612 = vunpack.c.h.b16 %v138
  %v613 = vunpack.c.l.b16 %v139
  %v614 = vunpack.c.h.b16 %v139
  %v615 = vunpack.c.l.b16 %v140
  %v616 = vunpack.c.h.b16 %v140
  %v617 = vunpack.c.l.b16 %v141
  %v618 = vunpack.c.h.b16 %v141
  %v619 = vunpack.c.l.b16 %v142
  %v620 = vunpack.c.h.b16 %v142
  %v621 = vunpack.c.l.b16 %v143
  %v622 = vunpack.c.h.b16 %v143
  %v623 = vunpack.c.l.b16 %v144
  %v624 = vunpack.c.h.b16 %v144
  %v625 = vunpack.c.l.b16 %v145
  %v626 = vunpack.c.h.b16 %v145
  %v627 = vunpack.c.l.b16 %v146
  %v628 = vunpack.c.h.b16 %v146
  %v629 = vunpack.c.l.b16 %v147
  %v630 = vunpack.c.h.b16 %v147
  %v631 = vunpack.c.l.b16 %v148
  %v632 = vunpack.c.h.b16 %v148
  %v633 = vunpack.c.l.b16 %v149
  %v634 = vunpack.c.h.b16 %v149
  %v635 = vunpack.c.l.b16 %v150
  %v636 = vunpack.c.h.b16 %v150
  %v637 = vunpack.c.l.b16 %v151
  %v638 = vunpack.c.h.b16 %v151
  %v639 = vunpack.c.l.b16 %v152
  %v640 = vunpack.c.h.b16 %v152
  %v641 = vunpack.c.l.b16 %v153
  %v642 = vunpack.c.h.b16 %v153
  %v643 = vunpack.c.l.b16 %v154
  %v644 = vunpack.c.h.b16 %v154
  %v645 = vunpack.c.l.b16 %v155
  %v646 = vunpack.c.h.b16 %v155
  %v647 = vunpack.c.l.b16 %v156
  %v648 = vunpack.c.h.b16 %v156
  %v649 = vunpack.c.l.b16 %v157
  %v650 = vunpack.c.h.b16 %v157
  %v651 = vunpack.c.l.b16 %v158
  %v652 = vunpack.c.h.b16 %v158
  %v653 = vunpack.c.l.b16 %v159
  %v654 = vunpack.c.h.b16 %v159
  %v655 = vunpack.c.l.b16 %v160
  %v656 = vunpack.c.h.b16 %v160
  %v657 = vunpack.c.l.b16 %v161
  %v658 = vunpack.c.h.b16 %v161
  %v659 = vunpack.c.l.b16 %v162
  %v660 = vunpack.c.h.b16 %v162
  %v661 = vunpack.c.l.b16 %v163
  %v662 = vunpack.c.h.b16 %v163
  %v663 = vunpack.c.l.b16 %v164
  %v664 = vunpack.c.h.b16 %v164
  %v665 = vunpack.c.l.b16 %v165
  %v666 = vunpack.c.h.b16 %v165
  %v667 = vunpack.c.l.b16 %v166
  %v668 = vunpack.c.h.b16 %v166
  %v669 = vunpack.c.l.b16 %v167
  %v670 = vunpack.c.h.b16 %v167
  %v671 = vunpack.c.l.b16 %v168
  %v672 = vunpack.c.h.b16 %v168
  %v673 = vunpack.c.l.b16 %v169
  %v674 = vunpack.c.h.b16 %v169
  %v675 = vunpack.c.l.b16 %v170
  %v676 = vunpack.c.h.b16 %v170
  %v677 = vpack.c.b16 %v393, %v389
  %v678 = vpack.c.b16 %v394, %v390
  %v679 = vpack.c.b16 %v395, %v391
  %v680 = vpack.c.b16 %v396, %v392
  %v681 = vpack.c.b16 %v401, %v397
  %v682 = vpack.c.b16 %v402, %v398
  %v683 = vpack.c.b16 %v403, %v399
  %v684 = vpack.c.b16 %v404, %v400
  %v685 = vpack.c.b16 %v409, %v405
  %v686 = vpack.c.b16 %v410, %v406
  %v687 = vpack.c.b16 %v411, %v407
  %v688 = vpack.c.b16 %v412, %v408
  %v689 = vpack.c.b16 %v417, %v413
  %v690 = vpack.c.b16 %v418, %v414
  %v691 = vpack.c.b16 %v419, %v415
  %v692 = vpack.c.b16 %v420, %v416
  %v693 = vpack.c.b16 %v425, %v421
  %v694 = vpack.c.b16 %v426, %v422
  %v695 = vpack.c.b16 %v427, %v423
  %v696 = vpack.c.b16 %v428, %v424
  %v697 = vpack.c.b16 %v433, %v429
  %v698 = vpack.c.b16 %v434, %v430
  %v699 = vpack.c.b16 %v435, %v431
  %v700 = vpack.c.b16 %v436, %v432
  %v701 = vpack.c.b16 %v441, %v437
  %v702 = vpack.c.b16 %v442, %v438
  %v703 = vpack.c.b16 %v443, %v439
  %v704 = vpack.c.b16 %v444, %v440
  %v705 = vpack.c.b16 %v449, %v445
  %v706 = vpack.c.b16 %v450, %v446
  %v707 = vpack.c.b16 %v451, %v447
  %v708 = vpack.c.b16 %v452, %v448
  %v709 = vpack.c.b16 %v457, %v453
  %v710 = vpack.c.b16 %v458, %v454
  %v711 = vpack.c.b16 %v459, %v455
  %v712 = vpack.c.b16 %v460, %v456
  %v713 = vpack.c.b16 %v465, %v461
  %v714 = vpack.c.b16 %v466, %v462
  %v715 = vpack.c.b16 %v467, %v463
  %v716 = vpack.c.b16 %v468, %v464
  %v717 = vpack.c.b16 %v473, %v469
  %v718 = vpack.c.b16 %v474, %v470
  %v719 = vpack.c.b16 %v475, %v471
  %v720 = vpack.c.b16 %v476, %v472
  %v721 = vpack.c.b16 %v481, %v477
  %v722 = vpack.c.b16 %v482, %v478
  %v723 = vpack.c.b16 %v483, %v479
  %v724 = vpack.c.b16 %v484, %v480
  %v725 = vpack.c.b16 %v489, %v485
  %v726 = vpack.c.b16 %v490, %v486
  %v727 = vpack.c.b16 %v491, %v487
  %v728 = vpack.c.b16 %v492, %v488
  %v729 = vpack.c.b16 %v497, %v493
  %v730 = vpack.c.b16 %v498, %v494
  %v731 = vpack.c.b16 %v499, %v495
  %v732 = vpack.c.b16 %v500, %v496
  %v733 = vpack.c.b16 %v505, %v501
  %v734 = vpack.c.b16 %v506, %v502
  %v735 = vpack.c.b16 %v507, %v503
  %v736 = vpack.c.b16 %v508, %v504
  %v737 = vpack.c.b16 %v513, %v509
  %v738 = vpack.c.b16 %v514, %v510
  %v739 = vpack.c.b16 %v515, %v511
  %v740 = vpack.c.b16 %v516, %v512
  %v741 = vpack.c.b16 %v521, %v517
  %v742 = vpack.c.b16 %v522, %v518
  %v743 = vpack.c.b16 %v523, %v519
  %v744 = vpack.c.b16 %v524, %v520
  %v745 = vpack.c.b16 %v529, %v525
  %v746 = vpack.c.b16 %v530, %v526
  %v747 = vpack.c.b16 %v531, %v527
  %v748 = vpack.c.b16 %v532, %v528
  %v749 = vpack.c.b16 %v537, %v533
  %v750 = vpack.c.b16 %v538, %v534
  %v751 = vpack.c.b16 %v539, %v535
  %v752 = vpack.c.b16 %v540, %v536
  %v753 = vpack.c.b16 %v545, %v541
  %v754 = vpack.c.b16 %v546, %v542
  %v755 = vpack.c.b16 %v547, %v543
  %v756 = vpack.c.b16 %v548, %v544
  %v757 = vpack.c.b16 %v553, %v549
  %v758 = vpack.c.b16 %v554, %v550
  %v759 = vpack.c.b16 %v555, %v551
  %v760 = vpack.c.b16 %v556, %v552
  %v761 = vpack.c.b16 %v561, %v557
  %v762 = vpack.c.b16 %v562, %v558
  %v763 = vpack.c.b16 %v563, %v559
  %v764 = vpack.c.b16 %v564, %v560
  %v765 = vpack.c.b16 %v569, %v565
  %v766 = vpack.c.b16 %v570, %v566
  %v767 = vpack.c.b16 %v571, %v567
  %v768 = vpack.c.b16 %v572, %v568
  %v769 = vpack.c.b16 %v577, %v573
  %v770 = vpack.c.b16 %v578, %v574
  %v771 = vpack.c.b16 %v579, %v575
  %v772 = vpack.c.b16 %v580, %v576
  %v773 = vpack.c.b16 %v585, %v581
  %v774 = vpack.c.b16 %v586, %v582
  %v775 = vpack.c.b16 %v587, %v583
  %v776 = vpack.c.b16 %v588, %v584
  %v777 = vpack.c.b16 %v593, %v589
  %v778 = vpack.c.b16 %v594, %v590
  %v779 = vpack.c.b16 %v595, %v591
  %v780 = vpack.c.b16 %v596, %v592
  %v781 = vpack.c.b16 %v601, %v597
  %v782 = vpack.c.b16 %v602, %v598
  %v783 = vpack.c.b16 %v603, %v599
  %v784 = vpack.c.b16 %v604, %v600
  %v785 = vpack.c.b16 %v609, %v605
  %v786 = vpack.c.b16 %v610, %v606
  %v787 = vpack.c.b16 %v611, %v607
  %v788 = vpack.c.b16 %v612, %v608
  %v789 = vpack.c.b16 %v617, %v613
  %v790 = vpack.c.b16 %v618, %v614
  %v791 = vpack.c.b16 %v619, %v615
  %v792 = vpack.c.b16 %v620, %v616
  %v793 = vpack.c.b16 %v625, %v621
  %v794 = vpack.c.b16 %v626, %v622
  %v795 = vpack.c.b16 %v627, %v623
  %v796 = vpack.c.b16 %v628, %v624
  %v797 = vpack.c.b16 %v633, %v629
  %v798 = vpack.c.b16 %v634, %v630
  %v799 = vpack.c.b16 %v635, %v631
  %v800 = vpack.c.b16 %v636, %v632
  %v801 = vpack.c.b16 %v641, %v637
  %v802 = vpack.c.b16 %v642, %v638
  %v803 = vpack.c.b16 %v643, %v639
  %v804 = vpack.c.b16 %v644, %v640
  %v805 = vpack.c.b16 %v649, %v645
  %v806 = vpack.c.b16 %v650, %v646
  %v807 = vpack.c.b16 %v651, %v647
  %v808 = vpack.c.b16 %v652, %v648
  %v809 = vpack.c.b16 %v657, %v653
  %v810 = vpack.c.b16 %v658, %v654
  %v811 = vpack.c.b16 %v659, %v655
  %v812 = vpack.c.b16 %v660, %v656
  %v813 = vpack.c.b16 %v665, %v661
  %v814 = vpack.c.b16 %v666, %v662
  %v815 = vpack.c.b16 %v667, %v663
  %v816 = vpack.c.b16 %v668, %v664
  %v817 = vpack.c.b16 %v673, %v669
  %v818 = vpack.c.b16 %v674, %v670
  %v819 = vpack.c.b16 %v675, %v671
  %v820 = vpack.c.b16 %v676, %v672
  %vm965 = vcmask 523264
  %v967 = vsel %vm965, %v231, 0
  %v970 = vsel %vm965, %v236, 0
  %972 = vmatprep.subr.bf16.mxu0 %v678
  %973 = vmatpush1.bf16.msra.mxu0 %v677
  %974 = vmatprep.subr.bf16.mxu0 %v682
  %975 = vmatpush1.bf16.msra.mxu0 %v681
  %976 = vmatprep.subr.bf16.mxu0 %v686
  %977 = vmatpush1.bf16.msra.mxu0 %v685
  %978 = vmatprep.subr.bf16.mxu0 %v690
  %979 = vmatpush1.bf16.msra.mxu0 %v689
  %980 = vmatprep.subr.bf16.mxu0 %v694
  %981 = vmatpush1.bf16.msra.mxu0 %v693
  %982 = vmatprep.subr.bf16.mxu0 %v698
  %983 = vmatpush1.bf16.msra.mxu0 %v697
  %984 = vmatprep.subr.bf16.mxu0 %v702
  %985 = vmatpush1.bf16.msra.mxu0 %v701
  %986 = vmatprep.subr.bf16.mxu0 %v706
  %987 = vmatpush1.bf16.msra.mxu0 %v705
  %988 = vmatprep.subr.bf16.mxu0 %v710
  %989 = vmatpush1.bf16.msra.mxu0 %v709
  %990 = vmatprep.subr.bf16.mxu0 %v714
  %991 = vmatpush1.bf16.msra.mxu0 %v713
  %992 = vmatprep.subr.bf16.mxu0 %v718
  %993 = vmatpush1.bf16.msra.mxu0 %v717
  %994 = vmatprep.subr.bf16.mxu0 %v722
  %995 = vmatpush1.bf16.msra.mxu0 %v721
  %996 = vmatprep.subr.bf16.mxu0 %v726
  %997 = vmatpush1.bf16.msra.mxu0 %v725
  %998 = vmatprep.subr.bf16.mxu0 %v730
  %999 = vmatpush1.bf16.msra.mxu0 %v729
  %1000 = vmatprep.subr.bf16.mxu0 %v734
  %1001 = vmatpush1.bf16.msra.mxu0 %v733
  %1002 = vmatprep.subr.bf16.mxu0 %v738
  %1003 = vmatpush1.bf16.msra.mxu0 %v737
  %1004 = vmatprep.mubr.bf16.mxu0 %v228
  %1005 = vmatmul.mubr.bf16.gmra.mrb[0].mxu0 %v227
  %v1006 = vpop.f32.mrb[0].mxu0
  %v1007 = vadd.f32 %v178, %v1006
  %v1008 = vpop.f32.mrb[0].mxu0
  %v1009 = vadd.f32 %v178, %v1008
  %v1010 = vpop.f32.mrb[0].mxu0
  %v1011 = vadd.f32 %v183, %v1010
  %v1012 = vpop.f32.mrb[0].mxu0
  %v1013 = vadd.f32 %v183, %v1012
  %1014 = vmatprep.mubr.bf16.mxu0 %v233
  %1015 = vmatmul.mubr.bf16.gmra.mrb[0].mxu0 %v232
  %v1016 = vpop.f32.mrb[0].mxu0
  %v1017 = vadd.f32 %v188, %v1016
  %v1018 = vpop.f32.mrb[0].mxu0
  %v1019 = vadd.f32 %v188, %v1018
  %v1020 = vpop.f32.mrb[0].mxu0
  %v1021 = vadd.f32 %v193, %v1020
  %v1022 = vpop.f32.mrb[0].mxu0
  %v1023 = vadd.f32 %v193, %v1022
  %1024 = vdwg.mxu0
  %1025 = vmatprep.subr.bf16.mxu0 %v742
  %1026 = vmatpush1.bf16.msra.mxu0 %v741
  %1027 = vmatprep.subr.bf16.mxu0 %v746
  %1028 = vmatpush1.bf16.msra.mxu0 %v745
  %1029 = vmatprep.subr.bf16.mxu0 %v750
  %1030 = vmatpush1.bf16.msra.mxu0 %v749
  %1031 = vmatprep.subr.bf16.mxu0 %v754
  %1032 = vmatpush1.bf16.msra.mxu0 %v753
  %1033 = vmatprep.subr.bf16.mxu0 %v758
  %1034 = vmatpush1.bf16.msra.mxu0 %v757
  %1035 = vmatprep.subr.bf16.mxu0 %v762
  %1036 = vmatpush1.bf16.msra.mxu0 %v761
  %1037 = vmatprep.subr.bf16.mxu0 %v766
  %1038 = vmatpush1.bf16.msra.mxu0 %v765
  %1039 = vmatprep.subr.bf16.mxu0 %v770
  %1040 = vmatpush1.bf16.msra.mxu0 %v769
  %1041 = vmatprep.subr.bf16.mxu0 %v774
  %1042 = vmatpush1.bf16.msra.mxu0 %v773
  %1043 = vmatprep.subr.bf16.mxu0 %v778
  %1044 = vmatpush1.bf16.msra.mxu0 %v777
  %1045 = vmatprep.subr.bf16.mxu0 %v782
  %1046 = vmatpush1.bf16.msra.mxu0 %v781
  %1047 = vmatprep.subr.bf16.mxu0 %v786
  %1048 = vmatpush1.bf16.msra.mxu0 %v785
  %1049 = vmatprep.subr.bf16.mxu0 %v790
  %1050 = vmatpush1.bf16.msra.mxu0 %v789
  %1051 = vmatprep.subr.bf16.mxu0 %v794
  %1052 = vmatpush1.bf16.msra.mxu0 %v793
  %1053 = vmatprep.subr.bf16.mxu0 %v798
  %1054 = vmatpush1.bf16.msra.mxu0 %v797
  %1055 = vmatprep.subr.bf16.mxu0 %v802
  %1056 = vmatpush1.bf16.msra.mxu0 %v801
  %1057 = vmatprep.mubr.bf16.mxu0 %v230
  %1058 = vmatmul.mubr.bf16.gmra.mrb[0].mxu0 %v229
  %v1059 = vpop.f32.mrb[0].mxu0
  %v1060 = vadd.f32 %v1007, %v1059
  %v1061 = vpop.f32.mrb[0].mxu0
  %v1062 = vadd.f32 %v1009, %v1061
  %v1063 = vpop.f32.mrb[0].mxu0
  %v1064 = vadd.f32 %v1011, %v1063
  %v1065 = vpop.f32.mrb[0].mxu0
  %v1066 = vadd.f32 %v1013, %v1065
  %1067 = vmatprep.mubr.bf16.mxu0 %v235
  %1068 = vmatmul.mubr.bf16.gmra.mrb[0].mxu0 %v234
  %v1069 = vpop.f32.mrb[0].mxu0
  %v1070 = vadd.f32 %v1017, %v1069
  %v1071 = vpop.f32.mrb[0].mxu0
  %v1072 = vadd.f32 %v1019, %v1071
  %v1073 = vpop.f32.mrb[0].mxu0
  %v1074 = vadd.f32 %v1021, %v1073
  %v1075 = vpop.f32.mrb[0].mxu0
  %v1076 = vadd.f32 %v1023, %v1075
  %1077 = vdwg.mxu0
  %1078 = vmatprep.subr.bf16.mxu0 %v806
  %1079 = vmatpush1.bf16.msra.mxu0 %v805
  %1080 = vmatprep.subr.bf16.mxu0 %v810
  %1081 = vmatpush1.bf16.msra.mxu0 %v809
  %1082 = vmatprep.subr.bf16.mxu0 %v814
  %1083 = vmatpush1.bf16.msra.mxu0 %v813
  %1084 = vmatprep.subr.bf16.mxu0 %v818
  %1085 = vmatpush1.bf16.msra.mxu0 %v817
  %1086 = vmatprep.subr.bf16.mxu0 0
  %1087 = vmatpush1.bf16.msra.mxu0 0
  %1088 = vmatprep.subr.bf16.mxu0 0
  %1089 = vmatpush1.bf16.msra.mxu0 0
  %1090 = vmatprep.subr.bf16.mxu0 0
  %1091 = vmatpush1.bf16.msra.mxu0 0
  %1092 = vmatprep.subr.bf16.mxu0 0
  %1093 = vmatpush1.bf16.msra.mxu0 0
  %1094 = vmatprep.subr.bf16.mxu0 0
  %1095 = vmatpush1.bf16.msra.mxu0 0
  %1096 = vmatprep.subr.bf16.mxu0 0
  %1097 = vmatpush1.bf16.msra.mxu0 0
  %1098 = vmatprep.subr.bf16.mxu0 0
  %1099 = vmatpush1.bf16.msra.mxu0 0
  %1100 = vmatprep.subr.bf16.mxu0 0
  %1101 = vmatpush1.bf16.msra.mxu0 0
  %1102 = vmatprep.subr.bf16.mxu0 0
  %1103 = vmatpush1.bf16.msra.mxu0 0
  %1104 = vmatprep.subr.bf16.mxu0 0
  %1105 = vmatpush1.bf16.msra.mxu0 0
  %1106 = vmatprep.subr.bf16.mxu0 0
  %1107 = vmatpush1.bf16.msra.mxu0 0
  %1108 = vmatprep.subr.bf16.mxu0 0
  %1109 = vmatpush1.bf16.msra.mxu0 0
  %1110 = vmatprep.mubr.bf16.mxu0 0
  %1111 = vmatmul.mubr.bf16.gmra.mrb[0].mxu0 %v967
  %v1112 = vpop.f32.mrb[0].mxu0
  %v1113 = vadd.f32 %v1060, %v1112
  %v1114 = vpop.f32.mrb[0].mxu0
  %v1115 = vadd.f32 %v1062, %v1114
  %v1116 = vpop.f32.mrb[0].mxu0
  %v1117 = vadd.f32 %v1064, %v1116
  %v1118 = vpop.f32.mrb[0].mxu0
  %v1119 = vadd.f32 %v1066, %v1118
  %1120 = vmatprep.mubr.bf16.mxu0 0
  %1121 = vmatmul.mubr.bf16.gmra.mrb[0].mxu0 %v970
  %v1122 = vpop.f32.mrb[0].mxu0
  %v1123 = vadd.f32 %v1070, %v1122
  %v1124 = vpop.f32.mrb[0].mxu0
  %v1125 = vadd.f32 %v1072, %v1124
  %v1126 = vpop.f32.mrb[0].mxu0
  %v1127 = vadd.f32 %v1074, %v1126
  %v1128 = vpop.f32.mrb[0].mxu0
  %v1129 = vadd.f32 %v1076, %v1128
  %1130 = vdwg.mxu0
  %1131 = vmatprep.subr.bf16.mxu0 %v680
  %1132 = vmatpush1.bf16.msra.mxu0 %v679
  %1133 = vmatprep.subr.bf16.mxu0 %v684
  %1134 = vmatpush1.bf16.msra.mxu0 %v683
  %1135 = vmatprep.subr.bf16.mxu0 %v688
  %1136 = vmatpush1.bf16.msra.mxu0 %v687
  %1137 = vmatprep.subr.bf16.mxu0 %v692
  %1138 = vmatpush1.bf16.msra.mxu0 %v691
  %1139 = vmatprep.subr.bf16.mxu0 %v696
  %1140 = vmatpush1.bf16.msra.mxu0 %v695
  %1141 = vmatprep.subr.bf16.mxu0 %v700
  %1142 = vmatpush1.bf16.msra.mxu0 %v699
  %1143 = vmatprep.subr.bf16.mxu0 %v704
  %1144 = vmatpush1.bf16.msra.mxu0 %v703
  %1145 = vmatprep.subr.bf16.mxu0 %v708
  %1146 = vmatpush1.bf16.msra.mxu0 %v707
  %1147 = vmatprep.subr.bf16.mxu0 %v712
  %1148 = vmatpush1.bf16.msra.mxu0 %v711
  %1149 = vmatprep.subr.bf16.mxu0 %v716
  %1150 = vmatpush1.bf16.msra.mxu0 %v715
  %1151 = vmatprep.subr.bf16.mxu0 %v720
  %1152 = vmatpush1.bf16.msra.mxu0 %v719
  %1153 = vmatprep.subr.bf16.mxu0 %v724
  %1154 = vmatpush1.bf16.msra.mxu0 %v723
  %1155 = vmatprep.subr.bf16.mxu0 %v728
  %1156 = vmatpush1.bf16.msra.mxu0 %v727
  %1157 = vmatprep.subr.bf16.mxu0 %v732
  %1158 = vmatpush1.bf16.msra.mxu0 %v731
  %1159 = vmatprep.subr.bf16.mxu0 %v736
  %1160 = vmatpush1.bf16.msra.mxu0 %v735
  %1161 = vmatprep.subr.bf16.mxu0 %v740
  %1162 = vmatpush1.bf16.msra.mxu0 %v739
  %1163 = vmatprep.mubr.bf16.mxu0 %v228
  %1164 = vmatmul.mubr.bf16.gmra.mrb[0].mxu0 %v227
  %v1165 = vpop.f32.mrb[0].mxu0
  %v1166 = vadd.f32 %v178, %v1165
  %v1167 = vpop.f32.mrb[0].mxu0
  %v1168 = vadd.f32 %v178, %v1167
  %v1169 = vpop.f32.mrb[0].mxu0
  %v1170 = vadd.f32 %v183, %v1169
  %v1171 = vpop.f32.mrb[0].mxu0
  %v1172 = vadd.f32 %v183, %v1171
  %1173 = vmatprep.mubr.bf16.mxu0 %v233
  %1174 = vmatmul.mubr.bf16.gmra.mrb[0].mxu0 %v232
  %v1175 = vpop.f32.mrb[0].mxu0
  %v1176 = vadd.f32 %v188, %v1175
  %v1177 = vpop.f32.mrb[0].mxu0
  %v1178 = vadd.f32 %v188, %v1177
  %v1179 = vpop.f32.mrb[0].mxu0
  %v1180 = vadd.f32 %v193, %v1179
  %v1181 = vpop.f32.mrb[0].mxu0
  %v1182 = vadd.f32 %v193, %v1181
  %1183 = vdwg.mxu0
  %1184 = vmatprep.subr.bf16.mxu0 %v744
  %1185 = vmatpush1.bf16.msra.mxu0 %v743
  %1186 = vmatprep.subr.bf16.mxu0 %v748
  %1187 = vmatpush1.bf16.msra.mxu0 %v747
  %1188 = vmatprep.subr.bf16.mxu0 %v752
  %1189 = vmatpush1.bf16.msra.mxu0 %v751
  %1190 = vmatprep.subr.bf16.mxu0 %v756
  %1191 = vmatpush1.bf16.msra.mxu0 %v755
  %1192 = vmatprep.subr.bf16.mxu0 %v760
  %1193 = vmatpush1.bf16.msra.mxu0 %v759
  %1194 = vmatprep.subr.bf16.mxu0 %v764
  %1195 = vmatpush1.bf16.msra.mxu0 %v763
  %1196 = vmatprep.subr.bf16.mxu0 %v768
  %1197 = vmatpush1.bf16.msra.mxu0 %v767
  %1198 = vmatprep.subr.bf16.mxu0 %v772
  %1199 = vmatpush1.bf16.msra.mxu0 %v771
  %1200 = vmatprep.subr.bf16.mxu0 %v776
  %1201 = vmatpush1.bf16.msra.mxu0 %v775
  %1202 = vmatprep.subr.bf16.mxu0 %v780
  %1203 = vmatpush1.bf16.msra.mxu0 %v779
  %1204 = vmatprep.subr.bf16.mxu0 %v784
  %1205 = vmatpush1.bf16.msra.mxu0 %v783
  %1206 = vmatprep.subr.bf16.mxu0 %v788
  %1207 = vmatpush1.bf16.msra.mxu0 %v787
  %1208 = vmatprep.subr.bf16.mxu0 %v792
  %1209 = vmatpush1.bf16.msra.mxu0 %v791
  %1210 = vmatprep.subr.bf16.mxu0 %v796
  %1211 = vmatpush1.bf16.msra.mxu0 %v795
  %1212 = vmatprep.subr.bf16.mxu0 %v800
  %1213 = vmatpush1.bf16.msra.mxu0 %v799
  %1214 = vmatprep.subr.bf16.mxu0 %v804
  %1215 = vmatpush1.bf16.msra.mxu0 %v803
  %1216 = vmatprep.mubr.bf16.mxu0 %v230
  %1217 = vmatmul.mubr.bf16.gmra.mrb[0].mxu0 %v229
  %v1218 = vpop.f32.mrb[0].mxu0
  %v1219 = vadd.f32 %v1166, %v1218
  %v1220 = vpop.f32.mrb[0].mxu0
  %v1221 = vadd.f32 %v1168, %v1220
  %v1222 = vpop.f32.mrb[0].mxu0
  %v1223 = vadd.f32 %v1170, %v1222
  %v1224 = vpop.f32.mrb[0].mxu0
  %v1225 = vadd.f32 %v1172, %v1224
  %1226 = vmatprep.mubr.bf16.mxu0 %v235
  %1227 = vmatmul.mubr.bf16.gmra.mrb[0].mxu0 %v234
  %v1228 = vpop.f32.mrb[0].mxu0
  %v1229 = vadd.f32 %v1176, %v1228
  %v1230 = vpop.f32.mrb[0].mxu0
  %v1231 = vadd.f32 %v1178, %v1230
  %v1232 = vpop.f32.mrb[0].mxu0
  %v1233 = vadd.f32 %v1180, %v1232
  %v1234 = vpop.f32.mrb[0].mxu0
  %v1235 = vadd.f32 %v1182, %v1234
  %1236 = vdwg.mxu0
  %1237 = vmatprep.subr.bf16.mxu0 %v808
  %1238 = vmatpush1.bf16.msra.mxu0 %v807
  %1239 = vmatprep.subr.bf16.mxu0 %v812
  %1240 = vmatpush1.bf16.msra.mxu0 %v811
  %1241 = vmatprep.subr.bf16.mxu0 %v816
  %1242 = vmatpush1.bf16.msra.mxu0 %v815
  %1243 = vmatprep.subr.bf16.mxu0 %v820
  %1244 = vmatpush1.bf16.msra.mxu0 %v819
  %1245 = vmatprep.subr.bf16.mxu0 0
  %1246 = vmatpush1.bf16.msra.mxu0 0
  %1247 = vmatprep.subr.bf16.mxu0 0
  %1248 = vmatpush1.bf16.msra.mxu0 0
  %1249 = vmatprep.subr.bf16.mxu0 0
  %1250 = vmatpush1.bf16.msra.mxu0 0
  %1251 = vmatprep.subr.bf16.mxu0 0
  %1252 = vmatpush1.bf16.msra.mxu0 0
  %1253 = vmatprep.subr.bf16.mxu0 0
  %1254 = vmatpush1.bf16.msra.mxu0 0
  %1255 = vmatprep.subr.bf16.mxu0 0
  %1256 = vmatpush1.bf16.msra.mxu0 0
  %1257 = vmatprep.subr.bf16.mxu0 0
  %1258 = vmatpush1.bf16.msra.mxu0 0
  %1259 = vmatprep.subr.bf16.mxu0 0
  %1260 = vmatpush1.bf16.msra.mxu0 0
  %1261 = vmatprep.subr.bf16.mxu0 0
  %1262 = vmatpush1.bf16.msra.mxu0 0
  %1263 = vmatprep.subr.bf16.mxu0 0
  %1264 = vmatpush1.bf16.msra.mxu0 0
  %1265 = vmatprep.subr.bf16.mxu0 0
  %1266 = vmatpush1.bf16.msra.mxu0 0
  %1267 = vmatprep.subr.bf16.mxu0 0
  %1268 = vmatpush1.bf16.msra.mxu0 0
  %1269 = vmatprep.mubr.bf16.mxu0 0
  %1270 = vmatmul.mubr.bf16.gmra.mrb[0].mxu0 %v967
  %v1271 = vpop.f32.mrb[0].mxu0
  %v1272 = vadd.f32 %v1219, %v1271
  %v1273 = vpop.f32.mrb[0].mxu0
  %v1274 = vadd.f32 %v1221, %v1273
  %v1275 = vpop.f32.mrb[0].mxu0
  %v1276 = vadd.f32 %v1223, %v1275
  %v1277 = vpop.f32.mrb[0].mxu0
  %v1278 = vadd.f32 %v1225, %v1277
  %1279 = vmatprep.mubr.bf16.mxu0 0
  %1280 = vmatmul.mubr.bf16.gmra.mrb[0].mxu0 %v970
  %v1281 = vpop.f32.mrb[0].mxu0
  %v1282 = vadd.f32 %v1229, %v1281
  %v1283 = vpop.f32.mrb[0].mxu0
  %v1284 = vadd.f32 %v1231, %v1283
  %v1285 = vpop.f32.mrb[0].mxu0
  %v1286 = vadd.f32 %v1233, %v1285
  %v1287 = vpop.f32.mrb[0].mxu0
  %v1288 = vadd.f32 %v1235, %v1287
  %1289 = vdwg.mxu0
  %v1290 = vmax.f32 %v1113, 0.0
  %v1291 = vmax.f32 %v1115, 0.0
  %v1292 = vmax.f32 %v1272, 0.0
  %v1293 = vmax.f32 %v1274, 0.0
  %v1294 = vmax.f32 %v1117, 0.0
  %v1295 = vmax.f32 %v1119, 0.0
  %v1296 = vmax.f32 %v1276, 0.0
  %v1297 = vmax.f32 %v1278, 0.0
  %v1298 = vmax.f32 %v1123, 0.0
  %v1299 = vmax.f32 %v1125, 0.0
  %v1300 = vmax.f32 %v1282, 0.0
  %v1301 = vmax.f32 %v1284, 0.0
  %v1302 = vmax.f32 %v1127, 0.0
  %v1303 = vmax.f32 %v1129, 0.0
  %v1304 = vmax.f32 %v1286, 0.0
  %v1305 = vmax.f32 %v1288, 0.0
  %v1306 = vpack.c.bf16 %v1294, %v1290
  %v1307 = vpack.c.bf16 %v1295, %v1291
  %v1308 = vpack.c.bf16 %v1296, %v1292
  %v1309 = vpack.c.bf16 %v1297, %v1293
  %v1310 = vpack.c.bf16 %v1302, %v1298
  %v1311 = vpack.c.bf16 %v1303, %v1299
  %v1312 = vpack.c.bf16 %v1304, %v1300
  %v1313 = vpack.c.bf16 %v1305, %v1301
  %v1322 = vunpack.c.l.b16 %v1306
  %v1323 = vunpack.c.l.b16 %v1307
  %v1324 = vunpack.c.l.b16 %v1308
  %v1325 = vunpack.c.l.b16 %v1309
  %v1326 = vunpack.c.h.b16 %v1306
  %v1327 = vunpack.c.h.b16 %v1307
  %v1328 = vunpack.c.h.b16 %v1308
  %v1329 = vunpack.c.h.b16 %v1309
  %v1330 = vunpack.c.l.b16 %v1310
  %v1331 = vunpack.c.l.b16 %v1311
  %v1332 = vunpack.c.l.b16 %v1312
  %v1333 = vunpack.c.l.b16 %v1313
  %v1334 = vunpack.c.h.b16 %v1310
  %v1335 = vunpack.c.h.b16 %v1311
  %v1336 = vunpack.c.h.b16 %v1312
  %v1337 = vunpack.c.h.b16 %v1313
  %v1338 = vpack.c.b16 %v1323, %v1322
  %v1339 = vpack.c.b16 %v1325, %v1324
  %v1340 = vpack.c.b16 %v1327, %v1326
  %v1341 = vpack.c.b16 %v1329, %v1328
  %v1342 = vpack.c.b16 %v1331, %v1330
  %v1343 = vpack.c.b16 %v1333, %v1332
  %v1344 = vpack.c.b16 %v1335, %v1334
  %v1345 = vpack.c.b16 %v1337, %v1336
  %1354 = vst [vmem:[%s3] sm:$0xff] %v1338
  %vm1355 = vcmask 1043456
  %vm1356 = vcmask 64516
  %vm1357 = vmor %vm1356, %vm1355
  %1358 = vst.msk [vmem:[%s3 + $0x8] sm:$0xff] %vm1357, %v1339
  %1359 = vst [vmem:[%s3 + $0x10] sm:$0xff] %v1340
  %1360 = vst.msk [vmem:[%s3 + $0x18] sm:$0xff] %vm1357, %v1341
  %1361 = vst [vmem:[%s3 + $0x20] sm:$0xff] %v1342
  %1362 = vst.msk [vmem:[%s3 + $0x28] sm:$0xff] %vm1357, %v1343
  %1363 = vst [vmem:[%s3 + $0x30] sm:$0xff] %v1344
  %1364 = vst.msk [vmem:[%s3 + $0x38] sm:$0xff] %vm1357, %v1345
  // Predicated region
  $region14: #{autoencoder_forward.8} parent=0 // pred_check
    _
  $region15: #{autoencoder_forward.8} parent=0 // pred_check_branch
    %1366 = sbr.rel (0) target = $region17
  $region16: #{autoencoder_forward.8} parent=0 // pred_region
    _
  $region17: #{autoencoder_forward.8} parent=0 // pred_fallthru
    _
  // Predicated region
  $region18: #{autoencoder_forward.8} parent=0 // pred_check
    _
  $region19: #{autoencoder_forward.8} parent=0 // pred_check_branch
    %1368 = sbr.rel (0) target = $region21
  $region20: #{autoencoder_forward.8} parent=0 // pred_region
    _
  $region21: #{autoencoder_forward.8} parent=0 // pred_fallthru
    _

// kernel: autoencoder_forward.9
$region0: #{autoencoder_forward.9}
  #allocation0 [shape = 'u32[]', space=smem, size = 0x4, offset = 0x4, fixed_abs, tag = 'smem constant byte address 0x4 - core index']
  #allocation1 [shape = 'u32[144,128]{1,0:T(1,128)}', space=vmem, size = 0x12000, scoped, tag = 'internal scratch']
  #allocation2 [shape = 'f32[1,1]{1,0:T(1,128)S(1)}', space=vmem, size = 0x200, scoped, tag = 'scoped memory for autoencoder_forward.9']
  %s0 = inlined_call_operand.vmem [shape: bf16[1,288], index: 0, kind: input, shape index: {}]
  %s1 = inlined_call_operand.vmem [shape: bf16[288,1568], index: 1, kind: input, shape index: {}]
  %s2 = inlined_call_operand.<no memory space> [shape: f32[1,1], index: 2, kind: input, shape index: {}]
  %s3 = inlined_call_operand.vmem [shape: f32[1,1568], index: 3, kind: output, shape index: {}]
  %s4 = sld [smem:[#allocation0]]
  $region173: #{autoencoder_forward.9} parent=0
    _
  %s6 = ssub.s32 1, %s4
  %s7 = scalar_select 0, %s6, %s4
  %v8 = vstv %s2
  %9 = vst [vmem:[#allocation2] sm:$0x1] %v8
  $region1: #{autoencoder_forward.9} parent=0
    #allocation3 [shape = 'u8[589824]{0}', space=vmem, size = 0x90000, scoped, tag = 'input window, operand 1']
    #allocation4 [shape = 'u8[4096]{0}', space=vmem, size = 0x1000, scoped, tag = 'output window, operand 0']
    loop: start=0, step=1, limit=6
    $region2: #{autoencoder_forward.9} parent=1 // loop_pre_header
      _
    $region3: #{autoencoder_forward.9} parent=1 // loop_header
      %s11 = sphi 0, %s15
      %p12 = scmp.ge.s32.totalorder %s11, 6
      %s19 = sphi 0, %s19
      %s21 = sphi 0, %s19
      %s22 = sphi 0, %s21
      %s36 = sphi 0, %s22
      %s42 = sphi 0, %s44
      %s45 = sphi 0, %s42
      %s46 = sphi 0, %s45
      %s62 = sphi 0, %s46
      %s66 = sphi 0, %s66
      %s68 = sphi 0, %s66
      %s69 = sphi 0, %s68
      %s83 = sphi 0, %s69
      %s89 = sphi 0, %s91
      %s92 = sphi 0, %s89
      %s93 = sphi 0, %s92
      %s109 = sphi 0, %s93
    $region4: #{autoencoder_forward.9} parent=1 // loop_header_branch
      %14 = sbr.rel (%p12) target = $region8
    $region5: #{autoencoder_forward.9} parent=1 // loop_body
      %s16 = ssub.s32 %s11, 1
      %s17 = ssub.s32 %s11, 2
      %s18 = sadd.s32 %s11, 1
      %s20 = sadd.s32 %s19, 1
      %p23 = scmp.eq.s32.totalorder %s11, 3
      %p24 = scmp.ne.s32.totalorder %s19, %s21
      %p25 = scmp.eq.s32.totalorder %s11, 0
      %p26 = por %p24, %p25
      %p27 = scmp.ne.s32.totalorder %s19, %s21
      %p28 = scmp.eq.s32.totalorder %s16, 3
      %p29 = por %p27, %p28
      %p30 = scmp.ne.s32.totalorder %s21, %s22
      %p31 = scmp.eq.s32.totalorder %s16, 0
      %p32 = por %p30, %p31
      %p33 = scmp.ne.s32.totalorder %s21, %s22
      %p34 = scmp.eq.s32.totalorder %s17, 3
      %p35 = por %p33, %p34
      %p37 = scmp.ne.s32.totalorder %s22, %s36
      %p38 = scmp.eq.s32.totalorder %s17, 0
      %p39 = por %p37, %p38
      %s40 = ssub.s32 %s11, %s18
      %p41 = scmp.eq.s32.totalorder %s40, 0
      %s43 = sadd.s32 %s42, 1
      %s44 = scalar_select %p41, %s42, %s43
      %p47 = pneg %p41
      %p48 = scmp.eq.s32.totalorder %s11, 3
      %p49 = por %p47, %p48
      %p50 = scmp.ne.s32.totalorder %s42, %s45
      %p51 = scmp.eq.s32.totalorder %s11, 0
      %p52 = por %p50, %p51
      %p53 = scmp.ne.s32.totalorder %s42, %s45
      %p54 = scmp.eq.s32.totalorder %s16, 3
      %p55 = por %p53, %p54
      %p56 = scmp.ne.s32.totalorder %s45, %s46
      %p57 = scmp.eq.s32.totalorder %s16, 0
      %p58 = por %p56, %p57
      %p59 = scmp.ne.s32.totalorder %s45, %s46
      %p60 = scmp.eq.s32.totalorder %s17, 3
      %p61 = por %p59, %p60
      %p63 = scmp.ne.s32.totalorder %s46, %s62
      %p64 = scmp.eq.s32.totalorder %s17, 0
      %p65 = por %p63, %p64
      %s67 = sadd.s32 %s66, 1
      %p70 = scmp.eq.s32.totalorder %s11, 3
      %p71 = scmp.ne.s32.totalorder %s66, %s68
      %p72 = scmp.eq.s32.totalorder %s11, 0
      %p73 = por %p71, %p72
      %p74 = scmp.ne.s32.totalorder %s66, %s68
      %p75 = scmp.eq.s32.totalorder %s16, 3
      %p76 = por %p74, %p75
      %p77 = scmp.ne.s32.totalorder %s68, %s69
      %p78 = scmp.eq.s32.totalorder %s16, 0
      %p79 = por %p77, %p78
      %p80 = scmp.ne.s32.totalorder %s68, %s69
      %p81 = scmp.eq.s32.totalorder %s17, 3
      %p82 = por %p80, %p81
      %p84 = scmp.ne.s32.totalorder %s69, %s83
      %p85 = scmp.eq.s32.totalorder %s17, 0
      %p86 = por %p84, %p85
      %s87 = ssub.s32 %s11, %s18
      %p88 = scmp.eq.s32.totalorder %s87, 0
      %s90 = sadd.s32 %s89, 1
      %s91 = scalar_select %p88, %s89, %s90
      %p94 = pneg %p88
      %p95 = scmp.eq.s32.totalorder %s11, 3
      %p96 = por %p94, %p95
      %p97 = scmp.ne.s32.totalorder %s89, %s92
      %p98 = scmp.eq.s32.totalorder %s11, 0
      %p99 = por %p97, %p98
      %p100 = scmp.ne.s32.totalorder %s89, %s92
      %p101 = scmp.eq.s32.totalorder %s16, 3
      %p102 = por %p100, %p101
      %p103 = scmp.ne.s32.totalorder %s92, %s93
      %p104 = scmp.eq.s32.totalorder %s16, 0
      %p105 = por %p103, %p104
      %p106 = scmp.ne.s32.totalorder %s92, %s93
      %p107 = scmp.eq.s32.totalorder %s17, 3
      %p108 = por %p106, %p107
      %p110 = scmp.ne.s32.totalorder %s93, %s109
      %p111 = scmp.eq.s32.totalorder %s17, 0
      %p112 = por %p110, %p111
      %p113 = scmp.le.s32.totalorder 1, %s11
      %p114 = scmp.lt.s32.totalorder %s11, 5
      %p115 = pnand %p113, %p114
      %p116 = pneg %p115
      // Predicated region
      $region9: #{autoencoder_forward.9} parent=5 // pred_check
        _
      $region10: #{autoencoder_forward.9} parent=5 // pred_check_branch
        %118 = sbr.rel (%p115) target = $region12
      $region11: #{autoencoder_forward.9} parent=5 // pred_region
        %s119 = ssub.s32 %s11, 1
        // Predicated region
        $region13: #{autoencoder_forward.9} parent=11 // pred_check
          %p120 = pneg %p32
        $region14: #{autoencoder_forward.9} parent=11 // pred_check_branch
          %122 = sbr.rel (%p120) target = $region16
        $region15: #{autoencoder_forward.9} parent=11 // pred_region
          _
        $region16: #{autoencoder_forward.9} parent=11 // pred_fallthru
          _
        // Predicated region
        $region17: #{autoencoder_forward.9} parent=11 // pred_check
          %p123 = pneg %p79
        $region18: #{autoencoder_forward.9} parent=11 // pred_check_branch
          %125 = sbr.rel (%p123) target = $region20
        $region19: #{autoencoder_forward.9} parent=11 // pred_region
          _
        $region20: #{autoencoder_forward.9} parent=11 // pred_fallthru
          _
      $region12: #{autoencoder_forward.9} parent=5 // pred_fallthru
        _
      %p126 = scmp.lt.s32.totalorder %s11, 4
      // Predicated region
      $region21: #{autoencoder_forward.9} parent=5 // pred_check
        %p127 = pneg %p126
      $region22: #{autoencoder_forward.9} parent=5 // pred_check_branch
        %129 = sbr.rel (%p127) target = $region24
      $region23: #{autoencoder_forward.9} parent=5 // pred_region
        // Predicated region
        $region25: #{autoencoder_forward.9} parent=23 // pred_check
          %p130 = pneg %p52
        $region26: #{autoencoder_forward.9} parent=23 // pred_check_branch
          %132 = sbr.rel (%p130) target = $region28
        $region27: #{autoencoder_forward.9} parent=23 // pred_region
          %s133 = sand.u32 %s42, 1
          %s134 = sand.u32 %s42, 1
          %s135 = smul.addr %s134, 576
          %s136 = scalar_lea.vmem [#allocation3], %s135
          %s137 = smul.u32 4, %s11
          %s138 = ssub.s32 13, %s137
          %p139 = scmp.lt.s32.totalorder %s138, 4
          %s140 = scalar_select %p139, %s138, 4
          %s141 = smul.u32 2304, %s140
          %p142 = scmp.ne.s32.totalorder 0, %s141
          %s143 = smul.addr %s137, 4
          %s144 = scalar_lea.vmem %s1, %s143
          %s145 = smul.u32 %s140, 4
          // Predicated region
          $region29: #{autoencoder_forward.9} parent=27 // pred_check
            %p146 = pneg %p142
          $region30: #{autoencoder_forward.9} parent=27 // pred_check_branch
            %148 = sbr.rel (%p146) target = $region32
          $region31: #{autoencoder_forward.9} parent=27 // pred_region
            %p149 = scmp.lt.u32.totalorder %s145, 8
            %p150 = pneg %p149
            // Predicated region
            $region33: #{autoencoder_forward.9} parent=31 // pred_check
              _
            $region34: #{autoencoder_forward.9} parent=31 // pred_check_branch
              %152 = sbr.rel (%p149) target = $region36
            $region35: #{autoencoder_forward.9} parent=31 // pred_region
              %s237 = sand.u32 %s145, 7
              %p238 = scmp.eq.s32.totalorder %s237, 0
              // Predicated region
              $region48: #{autoencoder_forward.9} parent=35 // pred_check
                %p239 = pneg %p238
              $region49: #{autoencoder_forward.9} parent=35 // pred_check_branch
                %241 = sbr.rel (%p239) target = $region51
              $region50: #{autoencoder_forward.9} parent=35 // pred_region
                %s242 = sshrl.u32 %s145, 3
                %s243 = sshrl.u32 %s242, 1
                // While loop
                $region52: #{autoencoder_forward.9} parent=50 // loop_pre_header
                  _
                $region53: #{autoencoder_forward.9} parent=50 // loop_header
                  %s247 = sphi 0, %s249
                  %p248 = scmp.ge.s32.totalorder %s247, %s243
                  %s252 = sphi 0, %s401
                  %s253 = sphi %s144, %s404
                  %s254 = sphi %s136, %s405
                $region54: #{autoencoder_forward.9} parent=50 // loop_header_branch
                  %251 = sbr.rel (%p248) target = $region58
                $region55: #{autoencoder_forward.9} parent=50 // loop_body
                  %v255 = vld [vmem:[%s253] sm:$0xff]
                  %256 = vst [vmem:[%s254] sm:$0xff] %v255
                  %v257 = vld [vmem:[%s253 + $0x8] sm:$0xff]
                  %258 = vst [vmem:[%s254 + $0x8] sm:$0xff] %v257
                  %v259 = vld [vmem:[%s253 + $0x34] sm:$0xff]
                  %260 = vst [vmem:[%s254 + $0x10] sm:$0xff] %v259
                  %v261 = vld [vmem:[%s253 + $0x3c] sm:$0xff]
                  %262 = vst [vmem:[%s254 + $0x18] sm:$0xff] %v261
                  %v263 = vld [vmem:[%s253 + $0x68] sm:$0xff]
                  %264 = vst [vmem:[%s254 + $0x20] sm:$0xff] %v263
                  %v265 = vld [vmem:[%s253 + $0x70] sm:$0xff]
                  %266 = vst [vmem:[%s254 + $0x28] sm:$0xff] %v265
                  %v267 = vld [vmem:[%s253 + $0x9c] sm:$0xff]
                  %268 = vst [vmem:[%s254 + $0x30] sm:$0xff] %v267
                  %v269 = vld [vmem:[%s253 + $0xa4] sm:$0xff]
                  %270 = vst [vmem:[%s254 + $0x38] sm:$0xff] %v269
                  %v271 = vld [vmem:[%s253 + $0xd0] sm:$0xff]
                  %272 = vst [vmem:[%s254 + $0x40] sm:$0xff] %v271
                  %v273 = vld [vmem:[%s253 + $0xd8] sm:$0xff]
                  %274 = vst [vmem:[%s254 + $0x48] sm:$0xff] %v273
                  %v275 = vld [vmem:[%s253 + $0x104] sm:$0xff]
                  %276 = vst [vmem:[%s254 + $0x50] sm:$0xff] %v275
                  %v277 = vld [vmem:[%s253 + $0x10c] sm:$0xff]
                  %278 = vst [vmem:[%s254 + $0x58] sm:$0xff] %v277
                  %v279 = vld [vmem:[%s253 + $0x138] sm:$0xff]
                  %280 = vst [vmem:[%s254 + $0x60] sm:$0xff] %v279
                  %v281 = vld [vmem:[%s253 + $0x140] sm:$0xff]
                  %282 = vst [vmem:[%s254 + $0x68] sm:$0xff] %v281
                  %v283 = vld [vmem:[%s253 + $0x16c] sm:$0xff]
                  %284 = vst [vmem:[%s254 + $0x70] sm:$0xff] %v283
                  %v285 = vld [vmem:[%s253 + $0x174] sm:$0xff]
                  %286 = vst [vmem:[%s254 + $0x78] sm:$0xff] %v285
                  %v287 = vld [vmem:[%s253 + $0x1a0] sm:$0xff]
                  %288 = vst [vmem:[%s254 + $0x80] sm:$0xff] %v287
                  %v289 = vld [vmem:[%s253 + $0x1a8] sm:$0xff]
                  %290 = vst [vmem:[%s254 + $0x88] sm:$0xff] %v289
                  %v291 = vld [vmem:[%s253 + $0x1d4] sm:$0xff]
                  %292 = vst [vmem:[%s254 + $0x90] sm:$0xff] %v291
                  %v293 = vld [vmem:[%s253 + $0x1dc] sm:$0xff]
                  %294 = vst [vmem:[%s254 + $0x98] sm:$0xff] %v293
                  %v295 = vld [vmem:[%s253 + $0x208] sm:$0xff]
                  %296 = vst [vmem:[%s254 + $0xa0] sm:$0xff] %v295
                  %v297 = vld [vmem:[%s253 + $0x210] sm:$0xff]
                  %298 = vst [vmem:[%s254 + $0xa8] sm:$0xff] %v297
                  %v299 = vld [vmem:[%s253 + $0x23c] sm:$0xff]
                  %300 = vst [vmem:[%s254 + $0xb0] sm:$0xff] %v299
                  %v301 = vld [vmem:[%s253 + $0x244] sm:$0xff]
                  %302 = vst [vmem:[%s254 + $0xb8] sm:$0xff] %v301
                  %v303 = vld [vmem:[%s253 + $0x270] sm:$0xff]
                  %304 = vst [vmem:[%s254 + $0xc0] sm:$0xff] %v303
                  %v305 = vld [vmem:[%s253 + $0x278] sm:$0xff]
                  %306 = vst [vmem:[%s254 + $0xc8] sm:$0xff] %v305
                  %v307 = vld [vmem:[%s253 + $0x2a4] sm:$0xff]
                  %308 = vst [vmem:[%s254 + $0xd0] sm:$0xff] %v307
                  %v309 = vld [vmem:[%s253 + $0x2ac] sm:$0xff]
                  %310 = vst [vmem:[%s254 + $0xd8] sm:$0xff] %v309
                  %v311 = vld [vmem:[%s253 + $0x2d8] sm:$0xff]
                  %312 = vst [vmem:[%s254 + $0xe0] sm:$0xff] %v311
                  %v313 = vld [vmem:[%s253 + $0x2e0] sm:$0xff]
                  %314 = vst [vmem:[%s254 + $0xe8] sm:$0xff] %v313
                  %v315 = vld [vmem:[%s253 + $0x30c] sm:$0xff]
                  %316 = vst [vmem:[%s254 + $0xf0] sm:$0xff] %v315
                  %v317 = vld [vmem:[%s253 + $0x314] sm:$0xff]
                  %318 = vst [vmem:[%s254 + $0xf8] sm:$0xff] %v317
                  %v319 = vld [vmem:[%s253 + $0x340] sm:$0xff]
                  %320 = vst [vmem:[%s254 + $0x100] sm:$0xff] %v319
                  %v321 = vld [vmem:[%s253 + $0x348] sm:$0xff]
                  %322 = vst [vmem:[%s254 + $0x108] sm:$0xff] %v321
                  %v323 = vld [vmem:[%s253 + $0x374] sm:$0xff]
                  %324 = vst [vmem:[%s254 + $0x110] sm:$0xff] %v323
                  %v325 = vld [vmem:[%s253 + $0x37c] sm:$0xff]
                  %326 = vst [vmem:[%s254 + $0x118] sm:$0xff] %v325
                  %v327 = vld [vmem:[%s253 + $0x3a8] sm:$0xff]
                  %328 = vst [vmem:[%s254 + $0x120] sm:$0xff] %v327
                  %v329 = vld [vmem:[%s253 + $0x3b0] sm:$0xff]
                  %330 = vst [vmem:[%s254 + $0x128] sm:$0xff] %v329
                  %v331 = vld [vmem:[%s253 + $0x3dc] sm:$0xff]
                  %332 = vst [vmem:[%s254 + $0x130] sm:$0xff] %v331
                  %v333 = vld [vmem:[%s253 + $0x3e4] sm:$0xff]
                  %334 = vst [vmem:[%s254 + $0x138] sm:$0xff] %v333
                  %v335 = vld [vmem:[%s253 + $0x410] sm:$0xff]
                  %336 = vst [vmem:[%s254 + $0x140] sm:$0xff] %v335
                  %v337 = vld [vmem:[%s253 + $0x418] sm:$0xff]
                  %338 = vst [vmem:[%s254 + $0x148] sm:$0xff] %v337
                  %v339 = vld [vmem:[%s253 + $0x444] sm:$0xff]
                  %340 = vst [vmem:[%s254 + $0x150] sm:$0xff] %v339
                  %v341 = vld [vmem:[%s253 + $0x44c] sm:$0xff]
                  %342 = vst [vmem:[%s254 + $0x158] sm:$0xff] %v341
                  %v343 = vld [vmem:[%s253 + $0x478] sm:$0xff]
                  %344 = vst [vmem:[%s254 + $0x160] sm:$0xff] %v343
                  %v345 = vld [vmem:[%s253 + $0x480] sm:$0xff]
                  %346 = vst [vmem:[%s254 + $0x168] sm:$0xff] %v345
                  %v347 = vld [vmem:[%s253 + $0x4ac] sm:$0xff]
                  %348 = vst [vmem:[%s254 + $0x170] sm:$0xff] %v347
                  %v349 = vld [vmem:[%s253 + $0x4b4] sm:$0xff]
                  %350 = vst [vmem:[%s254 + $0x178] sm:$0xff] %v349
                  %v351 = vld [vmem:[%s253 + $0x4e0] sm:$0xff]
                  %352 = vst [vmem:[%s254 + $0x180] sm:$0xff] %v351
                  %v353 = vld [vmem:[%s253 + $0x4e8] sm:$0xff]
                  %354 = vst [vmem:[%s254 + $0x188] sm:$0xff] %v353
                  %v355 = vld [vmem:[%s253 + $0x514] sm:$0xff]
                  %356 = vst [vmem:[%s254 + $0x190] sm:$0xff] %v355
                  %v357 = vld [vmem:[%s253 + $0x51c] sm:$0xff]
                  %358 = vst [vmem:[%s254 + $0x198] sm:$0xff] %v357
                  %v359 = vld [vmem:[%s253 + $0x548] sm:$0xff]
                  %360 = vst [vmem:[%s254 + $0x1a0] sm:$0xff] %v359
                  %v361 = vld [vmem:[%s253 + $0x550] sm:$0xff]
                  %362 = vst [vmem:[%s254 + $0x1a8] sm:$0xff] %v361
                  %v363 = vld [vmem:[%s253 + $0x57c] sm:$0xff]
                  %364 = vst [vmem:[%s254 + $0x1b0] sm:$0xff] %v363
                  %v365 = vld [vmem:[%s253 + $0x584] sm:$0xff]
                  %366 = vst [vmem:[%s254 + $0x1b8] sm:$0xff] %v365
                  %v367 = vld [vmem:[%s253 + $0x5b0] sm:$0xff]
                  %368 = vst [vmem:[%s254 + $0x1c0] sm:$0xff] %v367
                  %v369 = vld [vmem:[%s253 + $0x5b8] sm:$0xff]
                  %370 = vst [vmem:[%s254 + $0x1c8] sm:$0xff] %v369
                  %v371 = vld [vmem:[%s253 + $0x5e4] sm:$0xff]
                  %372 = vst [vmem:[%s254 + $0x1d0] sm:$0xff] %v371
                  %v373 = vld [vmem:[%s253 + $0x5ec] sm:$0xff]
                  %374 = vst [vmem:[%s254 + $0x1d8] sm:$0xff] %v373
                  %v375 = vld [vmem:[%s253 + $0x618] sm:$0xff]
                  %376 = vst [vmem:[%s254 + $0x1e0] sm:$0xff] %v375
                  %v377 = vld [vmem:[%s253 + $0x620] sm:$0xff]
                  %378 = vst [vmem:[%s254 + $0x1e8] sm:$0xff] %v377
                  %v379 = vld [vmem:[%s253 + $0x64c] sm:$0xff]
                  %380 = vst [vmem:[%s254 + $0x1f0] sm:$0xff] %v379
                  %v381 = vld [vmem:[%s253 + $0x654] sm:$0xff]
                  %382 = vst [vmem:[%s254 + $0x1f8] sm:$0xff] %v381
                  %v383 = vld [vmem:[%s253 + $0x680] sm:$0xff]
                  %384 = vst [vmem:[%s254 + $0x200] sm:$0xff] %v383
                  %v385 = vld [vmem:[%s253 + $0x688] sm:$0xff]
                  %386 = vst [vmem:[%s254 + $0x208] sm:$0xff] %v385
                  %v387 = vld [vmem:[%s253 + $0x6b4] sm:$0xff]
                  %388 = vst [vmem:[%s254 + $0x210] sm:$0xff] %v387
                  %v389 = vld [vmem:[%s253 + $0x6bc] sm:$0xff]
                  %390 = vst [vmem:[%s254 + $0x218] sm:$0xff] %v389
                  %v391 = vld [vmem:[%s253 + $0x6e8] sm:$0xff]
                  %392 = vst [vmem:[%s254 + $0x220] sm:$0xff] %v391
                  %v393 = vld [vmem:[%s253 + $0x6f0] sm:$0xff]
                  %394 = vst [vmem:[%s254 + $0x228] sm:$0xff] %v393
                  %v395 = vld [vmem:[%s253 + $0x71c] sm:$0xff]
                  %396 = vst [vmem:[%s254 + $0x230] sm:$0xff] %v395
                  %v397 = vld [vmem:[%s253 + $0x724] sm:$0xff]
                  %398 = vst [vmem:[%s254 + $0x238] sm:$0xff] %v397
                  %s399 = sadd.s32 1, %s252
                  %p400 = scmp.ge.s32.totalorder %s399, %s243
                  %s401 = scalar_select %p400, 0, %s399
                  %s402 = smul.u32 %s401, 16
                  %s403 = smul.u32 %s401, 16
                  %s404 = scalar_lea.vmem %s144, %s402
                  %s405 = scalar_lea.vmem %s136, %s403 [#allocation3]
                $region56: #{autoencoder_forward.9} parent=50 // loop_footer
                  %s249 = sadd.s32 %s247, 1
                $region57: #{autoencoder_forward.9} parent=50 // loop_footer_branch
                  %246 = sbr.rel target = $region53
                $region58: #{autoencoder_forward.9} parent=50 // loop_exit
                  _
                %s406 = sshrl.u32 %s242, 1
                %s407 = sand.u32 %s242, 1
                %s408 = smul.u32 %s406, 2
                %s409 = smul.u32 128, %s408
                %s410 = sshra.s32 %s409, 4
                %s411 = scalar_lea.vmem %s144, %s410
                %s412 = smul.u32 128, %s408
                %s413 = sshra.s32 %s412, 4
                %s414 = scalar_lea.vmem %s136, %s413 [#allocation3]
                // While loop
                $region59: #{autoencoder_forward.9} parent=50 // loop_pre_header
                  _
                $region60: #{autoencoder_forward.9} parent=50 // loop_header
                  %s418 = sphi 0, %s420
                  %p419 = scmp.ge.s32.totalorder %s418, %s407
                  %s423 = sphi 0, %s500
                  %s424 = sphi %s411, %s503
                  %s425 = sphi %s414, %s504
                $region61: #{autoencoder_forward.9} parent=50 // loop_header_branch
                  %422 = sbr.rel (%p419) target = $region65
                $region62: #{autoencoder_forward.9} parent=50 // loop_body
                  %v426 = vld [vmem:[%s424] sm:$0xff]
                  %427 = vst [vmem:[%s425] sm:$0xff] %v426
                  %v428 = vld [vmem:[%s424 + $0x34] sm:$0xff]
                  %429 = vst [vmem:[%s425 + $0x10] sm:$0xff] %v428
                  %v430 = vld [vmem:[%s424 + $0x68] sm:$0xff]
                  %431 = vst [vmem:[%s425 + $0x20] sm:$0xff] %v430
                  %v432 = vld [vmem:[%s424 + $0x9c] sm:$0xff]
                  %433 = vst [vmem:[%s425 + $0x30] sm:$0xff] %v432
                  %v434 = vld [vmem:[%s424 + $0xd0] sm:$0xff]
                  %435 = vst [vmem:[%s425 + $0x40] sm:$0xff] %v434
                  %v436 = vld [vmem:[%s424 + $0x104] sm:$0xff]
                  %437 = vst [vmem:[%s425 + $0x50] sm:$0xff] %v436
                  %v438 = vld [vmem:[%s424 + $0x138] sm:$0xff]
                  %439 = vst [vmem:[%s425 + $0x60] sm:$0xff] %v438
                  %v440 = vld [vmem:[%s424 + $0x16c] sm:$0xff]
                  %441 = vst [vmem:[%s425 + $0x70] sm:$0xff] %v440
                  %v442 = vld [vmem:[%s424 + $0x1a0] sm:$0xff]
                  %443 = vst [vmem:[%s425 + $0x80] sm:$0xff] %v442
                  %v444 = vld [vmem:[%s424 + $0x1d4] sm:$0xff]
                  %445 = vst [vmem:[%s425 + $0x90] sm:$0xff] %v444
                  %v446 = vld [vmem:[%s424 + $0x208] sm:$0xff]
                  %447 = vst [vmem:[%s425 + $0xa0] sm:$0xff] %v446
                  %v448 = vld [vmem:[%s424 + $0x23c] sm:$0xff]
                  %449 = vst [vmem:[%s425 + $0xb0] sm:$0xff] %v448
                  %v450 = vld [vmem:[%s424 + $0x270] sm:$0xff]
                  %451 = vst [vmem:[%s425 + $0xc0] sm:$0xff] %v450
                  %v452 = vld [vmem:[%s424 + $0x2a4] sm:$0xff]
                  %453 = vst [vmem:[%s425 + $0xd0] sm:$0xff] %v452
                  %v454 = vld [vmem:[%s424 + $0x2d8] sm:$0xff]
                  %455 = vst [vmem:[%s425 + $0xe0] sm:$0xff] %v454
                  %v456 = vld [vmem:[%s424 + $0x30c] sm:$0xff]
                  %457 = vst [vmem:[%s425 + $0xf0] sm:$0xff] %v456
                  %v458 = vld [vmem:[%s424 + $0x340] sm:$0xff]
                  %459 = vst [vmem:[%s425 + $0x100] sm:$0xff] %v458
                  %v460 = vld [vmem:[%s424 + $0x374] sm:$0xff]
                  %461 = vst [vmem:[%s425 + $0x110] sm:$0xff] %v460
                  %v462 = vld [vmem:[%s424 + $0x3a8] sm:$0xff]
                  %463 = vst [vmem:[%s425 + $0x120] sm:$0xff] %v462
                  %v464 = vld [vmem:[%s424 + $0x3dc] sm:$0xff]
                  %465 = vst [vmem:[%s425 + $0x130] sm:$0xff] %v464
                  %v466 = vld [vmem:[%s424 + $0x410] sm:$0xff]
                  %467 = vst [vmem:[%s425 + $0x140] sm:$0xff] %v466
                  %v468 = vld [vmem:[%s424 + $0x444] sm:$0xff]
                  %469 = vst [vmem:[%s425 + $0x150] sm:$0xff] %v468
                  %v470 = vld [vmem:[%s424 + $0x478] sm:$0xff]
                  %471 = vst [vmem:[%s425 + $0x160] sm:$0xff] %v470
                  %v472 = vld [vmem:[%s424 + $0x4ac] sm:$0xff]
                  %473 = vst [vmem:[%s425 + $0x170] sm:$0xff] %v472
                  %v474 = vld [vmem:[%s424 + $0x4e0] sm:$0xff]
                  %475 = vst [vmem:[%s425 + $0x180] sm:$0xff] %v474
                  %v476 = vld [vmem:[%s424 + $0x514] sm:$0xff]
                  %477 = vst [vmem:[%s425 + $0x190] sm:$0xff] %v476
                  %v478 = vld [vmem:[%s424 + $0x548] sm:$0xff]
                  %479 = vst [vmem:[%s425 + $0x1a0] sm:$0xff] %v478
                  %v480 = vld [vmem:[%s424 + $0x57c] sm:$0xff]
                  %481 = vst [vmem:[%s425 + $0x1b0] sm:$0xff] %v480
                  %v482 = vld [vmem:[%s424 + $0x5b0] sm:$0xff]
                  %483 = vst [vmem:[%s425 + $0x1c0] sm:$0xff] %v482
                  %v484 = vld [vmem:[%s424 + $0x5e4] sm:$0xff]
                  %485 = vst [vmem:[%s425 + $0x1d0] sm:$0xff] %v484
                  %v486 = vld [vmem:[%s424 + $0x618] sm:$0xff]
                  %487 = vst [vmem:[%s425 + $0x1e0] sm:$0xff] %v486
                  %v488 = vld [vmem:[%s424 + $0x64c] sm:$0xff]
                  %489 = vst [vmem:[%s425 + $0x1f0] sm:$0xff] %v488
                  %v490 = vld [vmem:[%s424 + $0x680] sm:$0xff]
                  %491 = vst [vmem:[%s425 + $0x200] sm:$0xff] %v490
                  %v492 = vld [vmem:[%s424 + $0x6b4] sm:$0xff]
                  %493 = vst [vmem:[%s425 + $0x210] sm:$0xff] %v492
                  %v494 = vld [vmem:[%s424 + $0x6e8] sm:$0xff]
                  %495 = vst [vmem:[%s425 + $0x220] sm:$0xff] %v494
                  %v496 = vld [vmem:[%s424 + $0x71c] sm:$0xff]
                  %497 = vst [vmem:[%s425 + $0x230] sm:$0xff] %v496
                  %s498 = sadd.s32 1, %s423
                  %p499 = scmp.ge.s32.totalorder %s498, %s407
                  %s500 = scalar_select %p499, 0, %s498
                  %s501 = smul.u32 %s500, 8
                  %s502 = smul.u32 %s500, 8
                  %s503 = scalar_lea.vmem %s411, %s501
                  %s504 = scalar_lea.vmem %s414, %s502 [#allocation3]
                $region63: #{autoencoder_forward.9} parent=50 // loop_footer
                  %s420 = sadd.s32 %s418, 1
                $region64: #{autoencoder_forward.9} parent=50 // loop_footer_branch
                  %417 = sbr.rel target = $region60
                $region65: #{autoencoder_forward.9} parent=50 // loop_exit
                  _
              $region51: #{autoencoder_forward.9} parent=35 // pred_fallthru
                _
              %p505 = pneg %p238
              // Predicated region
              $region66: #{autoencoder_forward.9} parent=35 // pred_check
                _
              $region67: #{autoencoder_forward.9} parent=35 // pred_check_branch
                %507 = sbr.rel (%p238) target = $region69
              $region68: #{autoencoder_forward.9} parent=35 // pred_region
                %s508 = sand.u32 %s145, 7
                %s509 = ssub.s32 %s145, %s508
                %s510 = scalar_lea.vmem %s144, %s509
                %s511 = ssub.s32 %s145, %s508
                %s512 = scalar_lea.vmem %s136, %s511 [#allocation3]
                %s513 = sshrl.u32 %s145, 3
                %s514 = sshrl.u32 %s513, 1
                // While loop
                $region70: #{autoencoder_forward.9} parent=68 // loop_pre_header
                  _
                $region71: #{autoencoder_forward.9} parent=68 // loop_header
                  %s518 = sphi 0, %s520
                  %p519 = scmp.ge.s32.totalorder %s518, %s514
                  %s523 = sphi 0, %s672
                  %s524 = sphi %s144, %s675
                  %s525 = sphi %s136, %s676
                $region72: #{autoencoder_forward.9} parent=68 // loop_header_branch
                  %522 = sbr.rel (%p519) target = $region76
                $region73: #{autoencoder_forward.9} parent=68 // loop_body
                  %v526 = vld [vmem:[%s524] sm:$0xff]
                  %527 = vst [vmem:[%s525] sm:$0xff] %v526
                  %v528 = vld [vmem:[%s524 + $0x8] sm:$0xff]
                  %529 = vst [vmem:[%s525 + $0x8] sm:$0xff] %v528
                  %v530 = vld [vmem:[%s524 + $0x34] sm:$0xff]
                  %531 = vst [vmem:[%s525 + $0x10] sm:$0xff] %v530
                  %v532 = vld [vmem:[%s524 + $0x3c] sm:$0xff]
                  %533 = vst [vmem:[%s525 + $0x18] sm:$0xff] %v532
                  %v534 = vld [vmem:[%s524 + $0x68] sm:$0xff]
                  %535 = vst [vmem:[%s525 + $0x20] sm:$0xff] %v534
                  %v536 = vld [vmem:[%s524 + $0x70] sm:$0xff]
                  %537 = vst [vmem:[%s525 + $0x28] sm:$0xff] %v536
                  %v538 = vld [vmem:[%s524 + $0x9c] sm:$0xff]
                  %539 = vst [vmem:[%s525 + $0x30] sm:$0xff] %v538
                  %v540 = vld [vmem:[%s524 + $0xa4] sm:$0xff]
                  %541 = vst [vmem:[%s525 + $0x38] sm:$0xff] %v540
                  %v542 = vld [vmem:[%s524 + $0xd0] sm:$0xff]
                  %543 = vst [vmem:[%s525 + $0x40] sm:$0xff] %v542
                  %v544 = vld [vmem:[%s524 + $0xd8] sm:$0xff]
                  %545 = vst [vmem:[%s525 + $0x48] sm:$0xff] %v544
                  %v546 = vld [vmem:[%s524 + $0x104] sm:$0xff]
                  %547 = vst [vmem:[%s525 + $0x50] sm:$0xff] %v546
                  %v548 = vld [vmem:[%s524 + $0x10c] sm:$0xff]
                  %549 = vst [vmem:[%s525 + $0x58] sm:$0xff] %v548
                  %v550 = vld [vmem:[%s524 + $0x138] sm:$0xff]
                  %551 = vst [vmem:[%s525 + $0x60] sm:$0xff] %v550
                  %v552 = vld [vmem:[%s524 + $0x140] sm:$0xff]
                  %553 = vst [vmem:[%s525 + $0x68] sm:$0xff] %v552
                  %v554 = vld [vmem:[%s524 + $0x16c] sm:$0xff]
                  %555 = vst [vmem:[%s525 + $0x70] sm:$0xff] %v554
                  %v556 = vld [vmem:[%s524 + $0x174] sm:$0xff]
                  %557 = vst [vmem:[%s525 + $0x78] sm:$0xff] %v556
                  %v558 = vld [vmem:[%s524 + $0x1a0] sm:$0xff]
                  %559 = vst [vmem:[%s525 + $0x80] sm:$0xff] %v558
                  %v560 = vld [vmem:[%s524 + $0x1a8] sm:$0xff]
                  %561 = vst [vmem:[%s525 + $0x88] sm:$0xff] %v560
                  %v562 = vld [vmem:[%s524 + $0x1d4] sm:$0xff]
                  %563 = vst [vmem:[%s525 + $0x90] sm:$0xff] %v562
                  %v564 = vld [vmem:[%s524 + $0x1dc] sm:$0xff]
                  %565 = vst [vmem:[%s525 + $0x98] sm:$0xff] %v564
                  %v566 = vld [vmem:[%s524 + $0x208] sm:$0xff]
                  %567 = vst [vmem:[%s525 + $0xa0] sm:$0xff] %v566
                  %v568 = vld [vmem:[%s524 + $0x210] sm:$0xff]
                  %569 = vst [vmem:[%s525 + $0xa8] sm:$0xff] %v568
                  %v570 = vld [vmem:[%s524 + $0x23c] sm:$0xff]
                  %571 = vst [vmem:[%s525 + $0xb0] sm:$0xff] %v570
                  %v572 = vld [vmem:[%s524 + $0x244] sm:$0xff]
                  %573 = vst [vmem:[%s525 + $0xb8] sm:$0xff] %v572
                  %v574 = vld [vmem:[%s524 + $0x270] sm:$0xff]
                  %575 = vst [vmem:[%s525 + $0xc0] sm:$0xff] %v574
                  %v576 = vld [vmem:[%s524 + $0x278] sm:$0xff]
                  %577 = vst [vmem:[%s525 + $0xc8] sm:$0xff] %v576
                  %v578 = vld [vmem:[%s524 + $0x2a4] sm:$0xff]
                  %579 = vst [vmem:[%s525 + $0xd0] sm:$0xff] %v578
                  %v580 = vld [vmem:[%s524 + $0x2ac] sm:$0xff]
                  %581 = vst [vmem:[%s525 + $0xd8] sm:$0xff] %v580
                  %v582 = vld [vmem:[%s524 + $0x2d8] sm:$0xff]
                  %583 = vst [vmem:[%s525 + $0xe0] sm:$0xff] %v582
                  %v584 = vld [vmem:[%s524 + $0x2e0] sm:$0xff]
                  %585 = vst [vmem:[%s525 + $0xe8] sm:$0xff] %v584
                  %v586 = vld [vmem:[%s524 + $0x30c] sm:$0xff]
                  %587 = vst [vmem:[%s525 + $0xf0] sm:$0xff] %v586
                  %v588 = vld [vmem:[%s524 + $0x314] sm:$0xff]
                  %589 = vst [vmem:[%s525 + $0xf8] sm:$0xff] %v588
                  %v590 = vld [vmem:[%s524 + $0x340] sm:$0xff]
                  %591 = vst [vmem:[%s525 + $0x100] sm:$0xff] %v590
                  %v592 = vld [vmem:[%s524 + $0x348] sm:$0xff]
                  %593 = vst [vmem:[%s525 + $0x108] sm:$0xff] %v592
                  %v594 = vld [vmem:[%s524 + $0x374] sm:$0xff]
                  %595 = vst [vmem:[%s525 + $0x110] sm:$0xff] %v594
                  %v596 = vld [vmem:[%s524 + $0x37c] sm:$0xff]
                  %597 = vst [vmem:[%s525 + $0x118] sm:$0xff] %v596
                  %v598 = vld [vmem:[%s524 + $0x3a8] sm:$0xff]
                  %599 = vst [vmem:[%s525 + $0x120] sm:$0xff] %v598
                  %v600 = vld [vmem:[%s524 + $0x3b0] sm:$0xff]
                  %601 = vst [vmem:[%s525 + $0x128] sm:$0xff] %v600
                  %v602 = vld [vmem:[%s524 + $0x3dc] sm:$0xff]
                  %603 = vst [vmem:[%s525 + $0x130] sm:$0xff] %v602
                  %v604 = vld [vmem:[%s524 + $0x3e4] sm:$0xff]
                  %605 = vst [vmem:[%s525 + $0x138] sm:$0xff] %v604
                  %v606 = vld [vmem:[%s524 + $0x410] sm:$0xff]
                  %607 = vst [vmem:[%s525 + $0x140] sm:$0xff] %v606
                  %v608 = vld [vmem:[%s524 + $0x418] sm:$0xff]
                  %609 = vst [vmem:[%s525 + $0x148] sm:$0xff] %v608
                  %v610 = vld [vmem:[%s524 + $0x444] sm:$0xff]
                  %611 = vst [vmem:[%s525 + $0x150] sm:$0xff] %v610
                  %v612 = vld [vmem:[%s524 + $0x44c] sm:$0xff]
                  %613 = vst [vmem:[%s525 + $0x158] sm:$0xff] %v612
                  %v614 = vld [vmem:[%s524 + $0x478] sm:$0xff]
                  %615 = vst [vmem:[%s525 + $0x160] sm:$0xff] %v614
                  %v616 = vld [vmem:[%s524 + $0x480] sm:$0xff]
                  %617 = vst [vmem:[%s525 + $0x168] sm:$0xff] %v616
                  %v618 = vld [vmem:[%s524 + $0x4ac] sm:$0xff]
                  %619 = vst [vmem:[%s525 + $0x170] sm:$0xff] %v618
                  %v620 = vld [vmem:[%s524 + $0x4b4] sm:$0xff]
                  %621 = vst [vmem:[%s525 + $0x178] sm:$0xff] %v620
                  %v622 = vld [vmem:[%s524 + $0x4e0] sm:$0xff]
                  %623 = vst [vmem:[%s525 + $0x180] sm:$0xff] %v622
                  %v624 = vld [vmem:[%s524 + $0x4e8] sm:$0xff]
                  %625 = vst [vmem:[%s525 + $0x188] sm:$0xff] %v624
                  %v626 = vld [vmem:[%s524 + $0x514] sm:$0xff]
                  %627 = vst [vmem:[%s525 + $0x190] sm:$0xff] %v626
                  %v628 = vld [vmem:[%s524 + $0x51c] sm:$0xff]
                  %629 = vst [vmem:[%s525 + $0x198] sm:$0xff] %v628
                  %v630 = vld [vmem:[%s524 + $0x548] sm:$0xff]
                  %631 = vst [vmem:[%s525 + $0x1a0] sm:$0xff] %v630
                  %v632 = vld [vmem:[%s524 + $0x550] sm:$0xff]
                  %633 = vst [vmem:[%s525 + $0x1a8] sm:$0xff] %v632
                  %v634 = vld [vmem:[%s524 + $0x57c] sm:$0xff]
                  %635 = vst [vmem:[%s525 + $0x1b0] sm:$0xff] %v634
                  %v636 = vld [vmem:[%s524 + $0x584] sm:$0xff]
                  %637 = vst [vmem:[%s525 + $0x1b8] sm:$0xff] %v636
                  %v638 = vld [vmem:[%s524 + $0x5b0] sm:$0xff]
                  %639 = vst [vmem:[%s525 + $0x1c0] sm:$0xff] %v638
                  %v640 = vld [vmem:[%s524 + $0x5b8] sm:$0xff]
                  %641 = vst [vmem:[%s525 + $0x1c8] sm:$0xff] %v640
                  %v642 = vld [vmem:[%s524 + $0x5e4] sm:$0xff]
                  %643 = vst [vmem:[%s525 + $0x1d0] sm:$0xff] %v642
                  %v644 = vld [vmem:[%s524 + $0x5ec] sm:$0xff]
                  %645 = vst [vmem:[%s525 + $0x1d8] sm:$0xff] %v644
                  %v646 = vld [vmem:[%s524 + $0x618] sm:$0xff]
                  %647 = vst [vmem:[%s525 + $0x1e0] sm:$0xff] %v646
                  %v648 = vld [vmem:[%s524 + $0x620] sm:$0xff]
                  %649 = vst [vmem:[%s525 + $0x1e8] sm:$0xff] %v648
                  %v650 = vld [vmem:[%s524 + $0x64c] sm:$0xff]
                  %651 = vst [vmem:[%s525 + $0x1f0] sm:$0xff] %v650
                  %v652 = vld [vmem:[%s524 + $0x654] sm:$0xff]
                  %653 = vst [vmem:[%s525 + $0x1f8] sm:$0xff] %v652
                  %v654 = vld [vmem:[%s524 + $0x680] sm:$0xff]
                  %655 = vst [vmem:[%s525 + $0x200] sm:$0xff] %v654
                  %v656 = vld [vmem:[%s524 + $0x688] sm:$0xff]
                  %657 = vst [vmem:[%s525 + $0x208] sm:$0xff] %v656
                  %v658 = vld [vmem:[%s524 + $0x6b4] sm:$0xff]
                  %659 = vst [vmem:[%s525 + $0x210] sm:$0xff] %v658
                  %v660 = vld [vmem:[%s524 + $0x6bc] sm:$0xff]
                  %661 = vst [vmem:[%s525 + $0x218] sm:$0xff] %v660
                  %v662 = vld [vmem:[%s524 + $0x6e8] sm:$0xff]
                  %663 = vst [vmem:[%s525 + $0x220] sm:$0xff] %v662
                  %v664 = vld [vmem:[%s524 + $0x6f0] sm:$0xff]
                  %665 = vst [vmem:[%s525 + $0x228] sm:$0xff] %v664
                  %v666 = vld [vmem:[%s524 + $0x71c] sm:$0xff]
                  %667 = vst [vmem:[%s525 + $0x230] sm:$0xff] %v666
                  %v668 = vld [vmem:[%s524 + $0x724] sm:$0xff]
                  %669 = vst [vmem:[%s525 + $0x238] sm:$0xff] %v668
                  %s670 = sadd.s32 1, %s523
                  %p671 = scmp.ge.s32.totalorder %s670, %s514
                  %s672 = scalar_select %p671, 0, %s670
                  %s673 = smul.u32 %s672, 16
                  %s674 = smul.u32 %s672, 16
                  %s675 = scalar_lea.vmem %s144, %s673
                  %s676 = scalar_lea.vmem %s136, %s674 [#allocation3]
                $region74: #{autoencoder_forward.9} parent=68 // loop_footer
                  %s520 = sadd.s32 %s518, 1
                $region75: #{autoencoder_forward.9} parent=68 // loop_footer_branch
                  %517 = sbr.rel target = $region71
                $region76: #{autoencoder_forward.9} parent=68 // loop_exit
                  _
                %s677 = sshrl.u32 %s513, 1
                %s678 = sand.u32 %s513, 1
                %s679 = smul.u32 %s677, 2
                %s680 = smul.u32 128, %s679
                %s681 = sshra.s32 %s680, 4
                %s682 = scalar_lea.vmem %s144, %s681
                %s683 = smul.u32 128, %s679
                %s684 = sshra.s32 %s683, 4
                %s685 = scalar_lea.vmem %s136, %s684 [#allocation3]
                // While loop
                $region77: #{autoencoder_forward.9} parent=68 // loop_pre_header
                  _
                $region78: #{autoencoder_forward.9} parent=68 // loop_header
                  %s689 = sphi 0, %s691
                  %p690 = scmp.ge.s32.totalorder %s689, %s678
                  %s694 = sphi 0, %s771
                  %s695 = sphi %s682, %s774
                  %s696 = sphi %s685, %s775
                $region79: #{autoencoder_forward.9} parent=68 // loop_header_branch
                  %693 = sbr.rel (%p690) target = $region83
                $region80: #{autoencoder_forward.9} parent=68 // loop_body
                  %v697 = vld [vmem:[%s695] sm:$0xff]
                  %698 = vst [vmem:[%s696] sm:$0xff] %v697
                  %v699 = vld [vmem:[%s695 + $0x34] sm:$0xff]
                  %700 = vst [vmem:[%s696 + $0x10] sm:$0xff] %v699
                  %v701 = vld [vmem:[%s695 + $0x68] sm:$0xff]
                  %702 = vst [vmem:[%s696 + $0x20] sm:$0xff] %v701
                  %v703 = vld [vmem:[%s695 + $0x9c] sm:$0xff]
                  %704 = vst [vmem:[%s696 + $0x30] sm:$0xff] %v703
                  %v705 = vld [vmem:[%s695 + $0xd0] sm:$0xff]
                  %706 = vst [vmem:[%s696 + $0x40] sm:$0xff] %v705
                  %v707 = vld [vmem:[%s695 + $0x104] sm:$0xff]
                  %708 = vst [vmem:[%s696 + $0x50] sm:$0xff] %v707
                  %v709 = vld [vmem:[%s695 + $0x138] sm:$0xff]
                  %710 = vst [vmem:[%s696 + $0x60] sm:$0xff] %v709
                  %v711 = vld [vmem:[%s695 + $0x16c] sm:$0xff]
                  %712 = vst [vmem:[%s696 + $0x70] sm:$0xff] %v711
                  %v713 = vld [vmem:[%s695 + $0x1a0] sm:$0xff]
                  %714 = vst [vmem:[%s696 + $0x80] sm:$0xff] %v713
                  %v715 = vld [vmem:[%s695 + $0x1d4] sm:$0xff]
                  %716 = vst [vmem:[%s696 + $0x90] sm:$0xff] %v715
                  %v717 = vld [vmem:[%s695 + $0x208] sm:$0xff]
                  %718 = vst [vmem:[%s696 + $0xa0] sm:$0xff] %v717
                  %v719 = vld [vmem:[%s695 + $0x23c] sm:$0xff]
                  %720 = vst [vmem:[%s696 + $0xb0] sm:$0xff] %v719
                  %v721 = vld [vmem:[%s695 + $0x270] sm:$0xff]
                  %722 = vst [vmem:[%s696 + $0xc0] sm:$0xff] %v721
                  %v723 = vld [vmem:[%s695 + $0x2a4] sm:$0xff]
                  %724 = vst [vmem:[%s696 + $0xd0] sm:$0xff] %v723
                  %v725 = vld [vmem:[%s695 + $0x2d8] sm:$0xff]
                  %726 = vst [vmem:[%s696 + $0xe0] sm:$0xff] %v725
                  %v727 = vld [vmem:[%s695 + $0x30c] sm:$0xff]
                  %728 = vst [vmem:[%s696 + $0xf0] sm:$0xff] %v727
                  %v729 = vld [vmem:[%s695 + $0x340] sm:$0xff]
                  %730 = vst [vmem:[%s696 + $0x100] sm:$0xff] %v729
                  %v731 = vld [vmem:[%s695 + $0x374] sm:$0xff]
                  %732 = vst [vmem:[%s696 + $0x110] sm:$0xff] %v731
                  %v733 = vld [vmem:[%s695 + $0x3a8] sm:$0xff]
                  %734 = vst [vmem:[%s696 + $0x120] sm:$0xff] %v733
                  %v735 = vld [vmem:[%s695 + $0x3dc] sm:$0xff]
                  %736 = vst [vmem:[%s696 + $0x130] sm:$0xff] %v735
                  %v737 = vld [vmem:[%s695 + $0x410] sm:$0xff]
                  %738 = vst [vmem:[%s696 + $0x140] sm:$0xff] %v737
                  %v739 = vld [vmem:[%s695 + $0x444] sm:$0xff]
                  %740 = vst [vmem:[%s696 + $0x150] sm:$0xff] %v739
                  %v741 = vld [vmem:[%s695 + $0x478] sm:$0xff]
                  %742 = vst [vmem:[%s696 + $0x160] sm:$0xff] %v741
                  %v743 = vld [vmem:[%s695 + $0x4ac] sm:$0xff]
                  %744 = vst [vmem:[%s696 + $0x170] sm:$0xff] %v743
                  %v745 = vld [vmem:[%s695 + $0x4e0] sm:$0xff]
                  %746 = vst [vmem:[%s696 + $0x180] sm:$0xff] %v745
                  %v747 = vld [vmem:[%s695 + $0x514] sm:$0xff]
                  %748 = vst [vmem:[%s696 + $0x190] sm:$0xff] %v747
                  %v749 = vld [vmem:[%s695 + $0x548] sm:$0xff]
                  %750 = vst [vmem:[%s696 + $0x1a0] sm:$0xff] %v749
                  %v751 = vld [vmem:[%s695 + $0x57c] sm:$0xff]
                  %752 = vst [vmem:[%s696 + $0x1b0] sm:$0xff] %v751
                  %v753 = vld [vmem:[%s695 + $0x5b0] sm:$0xff]
                  %754 = vst [vmem:[%s696 + $0x1c0] sm:$0xff] %v753
                  %v755 = vld [vmem:[%s695 + $0x5e4] sm:$0xff]
                  %756 = vst [vmem:[%s696 + $0x1d0] sm:$0xff] %v755
                  %v757 = vld [vmem:[%s695 + $0x618] sm:$0xff]
                  %758 = vst [vmem:[%s696 + $0x1e0] sm:$0xff] %v757
                  %v759 = vld [vmem:[%s695 + $0x64c] sm:$0xff]
                  %760 = vst [vmem:[%s696 + $0x1f0] sm:$0xff] %v759
                  %v761 = vld [vmem:[%s695 + $0x680] sm:$0xff]
                  %762 = vst [vmem:[%s696 + $0x200] sm:$0xff] %v761
                  %v763 = vld [vmem:[%s695 + $0x6b4] sm:$0xff]
                  %764 = vst [vmem:[%s696 + $0x210] sm:$0xff] %v763
                  %v765 = vld [vmem:[%s695 + $0x6e8] sm:$0xff]
                  %766 = vst [vmem:[%s696 + $0x220] sm:$0xff] %v765
                  %v767 = vld [vmem:[%s695 + $0x71c] sm:$0xff]
                  %768 = vst [vmem:[%s696 + $0x230] sm:$0xff] %v767
                  %s769 = sadd.s32 1, %s694
                  %p770 = scmp.ge.s32.totalorder %s769, %s678
                  %s771 = scalar_select %p770, 0, %s769
                  %s772 = smul.u32 %s771, 8
                  %s773 = smul.u32 %s771, 8
                  %s774 = scalar_lea.vmem %s682, %s772
                  %s775 = scalar_lea.vmem %s685, %s773 [#allocation3]
                $region81: #{autoencoder_forward.9} parent=68 // loop_footer
                  %s691 = sadd.s32 %s689, 1
                $region82: #{autoencoder_forward.9} parent=68 // loop_footer_branch
                  %688 = sbr.rel target = $region78
                $region83: #{autoencoder_forward.9} parent=68 // loop_exit
                  _
                %s776 = sshllo.u32 0, %s508
                loop: start=0, step=1, limit=1
                $region84: #{autoencoder_forward.9} parent=68 // loop_pre_header
                  _
                $region85: #{autoencoder_forward.9} parent=68 // loop_header
                  %s778 = sphi 0, %s782
                  %p779 = scmp.ge.s32.totalorder %s778, 1
                  %s783 = sphi %s510, %s510
                  %s784 = sphi %s512, %s512
                $region86: #{autoencoder_forward.9} parent=68 // loop_header_branch
                  %781 = sbr.rel (%p779) target = $region90
                $region87: #{autoencoder_forward.9} parent=68 // loop_body
                  %v785 = vld [vmem:[%s783] sm:%s776]
                  %786 = vst [vmem:[%s784] sm:%s776] %v785
                  %v787 = vld [vmem:[%s783 + $0x34] sm:%s776]
                  %788 = vst [vmem:[%s784 + $0x10] sm:%s776] %v787
                  %v789 = vld [vmem:[%s783 + $0x68] sm:%s776]
                  %790 = vst [vmem:[%s784 + $0x20] sm:%s776] %v789
                  %v791 = vld [vmem:[%s783 + $0x9c] sm:%s776]
                  %792 = vst [vmem:[%s784 + $0x30] sm:%s776] %v791
                  %v793 = vld [vmem:[%s783 + $0xd0] sm:%s776]
                  %794 = vst [vmem:[%s784 + $0x40] sm:%s776] %v793
                  %v795 = vld [vmem:[%s783 + $0x104] sm:%s776]
                  %796 = vst [vmem:[%s784 + $0x50] sm:%s776] %v795
                  %v797 = vld [vmem:[%s783 + $0x138] sm:%s776]
                  %798 = vst [vmem:[%s784 + $0x60] sm:%s776] %v797
                  %v799 = vld [vmem:[%s783 + $0x16c] sm:%s776]
                  %800 = vst [vmem:[%s784 + $0x70] sm:%s776] %v799
                  %v801 = vld [vmem:[%s783 + $0x1a0] sm:%s776]
                  %802 = vst [vmem:[%s784 + $0x80] sm:%s776] %v801
                  %v803 = vld [vmem:[%s783 + $0x1d4] sm:%s776]
                  %804 = vst [vmem:[%s784 + $0x90] sm:%s776] %v803
                  %v805 = vld [vmem:[%s783 + $0x208] sm:%s776]
                  %806 = vst [vmem:[%s784 + $0xa0] sm:%s776] %v805
                  %v807 = vld [vmem:[%s783 + $0x23c] sm:%s776]
                  %808 = vst [vmem:[%s784 + $0xb0] sm:%s776] %v807
                  %v809 = vld [vmem:[%s783 + $0x270] sm:%s776]
                  %810 = vst [vmem:[%s784 + $0xc0] sm:%s776] %v809
                  %v811 = vld [vmem:[%s783 + $0x2a4] sm:%s776]
                  %812 = vst [vmem:[%s784 + $0xd0] sm:%s776] %v811
                  %v813 = vld [vmem:[%s783 + $0x2d8] sm:%s776]
                  %814 = vst [vmem:[%s784 + $0xe0] sm:%s776] %v813
                  %v815 = vld [vmem:[%s783 + $0x30c] sm:%s776]
                  %816 = vst [vmem:[%s784 + $0xf0] sm:%s776] %v815
                  %v817 = vld [vmem:[%s783 + $0x340] sm:%s776]
                  %818 = vst [vmem:[%s784 + $0x100] sm:%s776] %v817
                  %v819 = vld [vmem:[%s783 + $0x374] sm:%s776]
                  %820 = vst [vmem:[%s784 + $0x110] sm:%s776] %v819
                  %v821 = vld [vmem:[%s783 + $0x3a8] sm:%s776]
                  %822 = vst [vmem:[%s784 + $0x120] sm:%s776] %v821
                  %v823 = vld [vmem:[%s783 + $0x3dc] sm:%s776]
                  %824 = vst [vmem:[%s784 + $0x130] sm:%s776] %v823
                  %v825 = vld [vmem:[%s783 + $0x410] sm:%s776]
                  %826 = vst [vmem:[%s784 + $0x140] sm:%s776] %v825
                  %v827 = vld [vmem:[%s783 + $0x444] sm:%s776]
                  %828 = vst [vmem:[%s784 + $0x150] sm:%s776] %v827
                  %v829 = vld [vmem:[%s783 + $0x478] sm:%s776]
                  %830 = vst [vmem:[%s784 + $0x160] sm:%s776] %v829
                  %v831 = vld [vmem:[%s783 + $0x4ac] sm:%s776]
                  %832 = vst [vmem:[%s784 + $0x170] sm:%s776] %v831
                  %v833 = vld [vmem:[%s783 + $0x4e0] sm:%s776]
                  %834 = vst [vmem:[%s784 + $0x180] sm:%s776] %v833
                  %v835 = vld [vmem:[%s783 + $0x514] sm:%s776]
                  %836 = vst [vmem:[%s784 + $0x190] sm:%s776] %v835
                  %v837 = vld [vmem:[%s783 + $0x548] sm:%s776]
                  %838 = vst [vmem:[%s784 + $0x1a0] sm:%s776] %v837
                  %v839 = vld [vmem:[%s783 + $0x57c] sm:%s776]
                  %840 = vst [vmem:[%s784 + $0x1b0] sm:%s776] %v839
                  %v841 = vld [vmem:[%s783 + $0x5b0] sm:%s776]
                  %842 = vst [vmem:[%s784 + $0x1c0] sm:%s776] %v841
                  %v843 = vld [vmem:[%s783 + $0x5e4] sm:%s776]
                  %844 = vst [vmem:[%s784 + $0x1d0] sm:%s776] %v843
                  %v845 = vld [vmem:[%s783 + $0x618] sm:%s776]
                  %846 = vst [vmem:[%s784 + $0x1e0] sm:%s776] %v845
                  %v847 = vld [vmem:[%s783 + $0x64c] sm:%s776]
                  %848 = vst [vmem:[%s784 + $0x1f0] sm:%s776] %v847
                  %v849 = vld [vmem:[%s783 + $0x680] sm:%s776]
                  %850 = vst [vmem:[%s784 + $0x200] sm:%s776] %v849
                  %v851 = vld [vmem:[%s783 + $0x6b4] sm:%s776]
                  %852 = vst [vmem:[%s784 + $0x210] sm:%s776] %v851
                  %v853 = vld [vmem:[%s783 + $0x6e8] sm:%s776]
                  %854 = vst [vmem:[%s784 + $0x220] sm:%s776] %v853
                  %v855 = vld [vmem:[%s783 + $0x71c] sm:%s776]
                  %856 = vst [vmem:[%s784 + $0x230] sm:%s776] %v855
                $region88: #{autoencoder_forward.9} parent=68 // loop_footer
                  %s782 = sadd.s32 1, %s778
                $region89: #{autoencoder_forward.9} parent=68 // loop_footer_branch
                  %777 = sbr.rel target = $region85
                $region90: #{autoencoder_forward.9} parent=68 // loop_exit
                  _
              $region69: #{autoencoder_forward.9} parent=35 // pred_fallthru
                _
            $region36: #{autoencoder_forward.9} parent=31 // pred_fallthru
              _
            // Predicated region
            $region37: #{autoencoder_forward.9} parent=31 // pred_check
              %p153 = pneg %p149
            $region38: #{autoencoder_forward.9} parent=31 // pred_check_branch
              %155 = sbr.rel (%p153) target = $region40
            $region39: #{autoencoder_forward.9} parent=31 // pred_region
              %s156 = sshllo.u32 0, %s145
              loop: start=0, step=1, limit=1
              $region41: #{autoencoder_forward.9} parent=39 // loop_pre_header
                _
              $region42: #{autoencoder_forward.9} parent=39 // loop_header
                %s158 = sphi 0, %s162
                %p159 = scmp.ge.s32.totalorder %s158, 1
                %s163 = sphi %s144, %s144
                %s164 = sphi %s136, %s136
              $region43: #{autoencoder_forward.9} parent=39 // loop_header_branch
                %161 = sbr.rel (%p159) target = $region47
              $region44: #{autoencoder_forward.9} parent=39 // loop_body
                %v165 = vld [vmem:[%s163] sm:%s156]
                %166 = vst [vmem:[%s164] sm:%s156] %v165
                %v167 = vld [vmem:[%s163 + $0x34] sm:%s156]
                %168 = vst [vmem:[%s164 + $0x10] sm:%s156] %v167
                %v169 = vld [vmem:[%s163 + $0x68] sm:%s156]
                %170 = vst [vmem:[%s164 + $0x20] sm:%s156] %v169
                %v171 = vld [vmem:[%s163 + $0x9c] sm:%s156]
                %172 = vst [vmem:[%s164 + $0x30] sm:%s156] %v171
                %v173 = vld [vmem:[%s163 + $0xd0] sm:%s156]
                %174 = vst [vmem:[%s164 + $0x40] sm:%s156] %v173
                %v175 = vld [vmem:[%s163 + $0x104] sm:%s156]
                %176 = vst [vmem:[%s164 + $0x50] sm:%s156] %v175
                %v177 = vld [vmem:[%s163 + $0x138] sm:%s156]
                %178 = vst [vmem:[%s164 + $0x60] sm:%s156] %v177
                %v179 = vld [vmem:[%s163 + $0x16c] sm:%s156]
                %180 = vst [vmem:[%s164 + $0x70] sm:%s156] %v179
                %v181 = vld [vmem:[%s163 + $0x1a0] sm:%s156]
                %182 = vst [vmem:[%s164 + $0x80] sm:%s156] %v181
                %v183 = vld [vmem:[%s163 + $0x1d4] sm:%s156]
                %184 = vst [vmem:[%s164 + $0x90] sm:%s156] %v183
                %v185 = vld [vmem:[%s163 + $0x208] sm:%s156]
                %186 = vst [vmem:[%s164 + $0xa0] sm:%s156] %v185
                %v187 = vld [vmem:[%s163 + $0x23c] sm:%s156]
                %188 = vst [vmem:[%s164 + $0xb0] sm:%s156] %v187
                %v189 = vld [vmem:[%s163 + $0x270] sm:%s156]
                %190 = vst [vmem:[%s164 + $0xc0] sm:%s156] %v189
                %v191 = vld [vmem:[%s163 + $0x2a4] sm:%s156]
                %192 = vst [vmem:[%s164 + $0xd0] sm:%s156] %v191
                %v193 = vld [vmem:[%s163 + $0x2d8] sm:%s156]
                %194 = vst [vmem:[%s164 + $0xe0] sm:%s156] %v193
                %v195 = vld [vmem:[%s163 + $0x30c] sm:%s156]
                %196 = vst [vmem:[%s164 + $0xf0] sm:%s156] %v195
                %v197 = vld [vmem:[%s163 + $0x340] sm:%s156]
                %198 = vst [vmem:[%s164 + $0x100] sm:%s156] %v197
                %v199 = vld [vmem:[%s163 + $0x374] sm:%s156]
                %200 = vst [vmem:[%s164 + $0x110] sm:%s156] %v199
                %v201 = vld [vmem:[%s163 + $0x3a8] sm:%s156]
                %202 = vst [vmem:[%s164 + $0x120] sm:%s156] %v201
                %v203 = vld [vmem:[%s163 + $0x3dc] sm:%s156]
                %204 = vst [vmem:[%s164 + $0x130] sm:%s156] %v203
                %v205 = vld [vmem:[%s163 + $0x410] sm:%s156]
                %206 = vst [vmem:[%s164 + $0x140] sm:%s156] %v205
                %v207 = vld [vmem:[%s163 + $0x444] sm:%s156]
                %208 = vst [vmem:[%s164 + $0x150] sm:%s156] %v207
                %v209 = vld [vmem:[%s163 + $0x478] sm:%s156]
                %210 = vst [vmem:[%s164 + $0x160] sm:%s156] %v209
                %v211 = vld [vmem:[%s163 + $0x4ac] sm:%s156]
                %212 = vst [vmem:[%s164 + $0x170] sm:%s156] %v211
                %v213 = vld [vmem:[%s163 + $0x4e0] sm:%s156]
                %214 = vst [vmem:[%s164 + $0x180] sm:%s156] %v213
                %v215 = vld [vmem:[%s163 + $0x514] sm:%s156]
                %216 = vst [vmem:[%s164 + $0x190] sm:%s156] %v215
                %v217 = vld [vmem:[%s163 + $0x548] sm:%s156]
                %218 = vst [vmem:[%s164 + $0x1a0] sm:%s156] %v217
                %v219 = vld [vmem:[%s163 + $0x57c] sm:%s156]
                %220 = vst [vmem:[%s164 + $0x1b0] sm:%s156] %v219
                %v221 = vld [vmem:[%s163 + $0x5b0] sm:%s156]
                %222 = vst [vmem:[%s164 + $0x1c0] sm:%s156] %v221
                %v223 = vld [vmem:[%s163 + $0x5e4] sm:%s156]
                %224 = vst [vmem:[%s164 + $0x1d0] sm:%s156] %v223
                %v225 = vld [vmem:[%s163 + $0x618] sm:%s156]
                %226 = vst [vmem:[%s164 + $0x1e0] sm:%s156] %v225
                %v227 = vld [vmem:[%s163 + $0x64c] sm:%s156]
                %228 = vst [vmem:[%s164 + $0x1f0] sm:%s156] %v227
                %v229 = vld [vmem:[%s163 + $0x680] sm:%s156]
                %230 = vst [vmem:[%s164 + $0x200] sm:%s156] %v229
                %v231 = vld [vmem:[%s163 + $0x6b4] sm:%s156]
                %232 = vst [vmem:[%s164 + $0x210] sm:%s156] %v231
                %v233 = vld [vmem:[%s163 + $0x6e8] sm:%s156]
                %234 = vst [vmem:[%s164 + $0x220] sm:%s156] %v233
                %v235 = vld [vmem:[%s163 + $0x71c] sm:%s156]
                %236 = vst [vmem:[%s164 + $0x230] sm:%s156] %v235
              $region45: #{autoencoder_forward.9} parent=39 // loop_footer
                %s162 = sadd.s32 1, %s158
              $region46: #{autoencoder_forward.9} parent=39 // loop_footer_branch
                %157 = sbr.rel target = $region42
              $region47: #{autoencoder_forward.9} parent=39 // loop_exit
                _
            $region40: #{autoencoder_forward.9} parent=31 // pred_fallthru
              _
          $region32: #{autoencoder_forward.9} parent=27 // pred_fallthru
            _
          %857 = vnop
        $region28: #{autoencoder_forward.9} parent=23 // pred_fallthru
          _
      $region24: #{autoencoder_forward.9} parent=5 // pred_fallthru
        _
      %p858 = scmp.le.s32.totalorder 1, %s11
      %p859 = scmp.lt.s32.totalorder %s11, 5
      %p860 = pnand %p858, %p859
      %p861 = pneg %p860
      // Predicated region
      $region91: #{autoencoder_forward.9} parent=5 // pred_check
        _
      $region92: #{autoencoder_forward.9} parent=5 // pred_check_branch
        %863 = sbr.rel (%p860) target = $region94
      $region93: #{autoencoder_forward.9} parent=5 // pred_region
        %s864 = ssub.s32 %s11, 1
        %s865 = sand.u32 %s45, 1
        %s866 = sand.u32 %s45, 1
        %s867 = smul.addr %s866, 576
        %s868 = scalar_lea.vmem [#allocation3], %s867
        // Predicated region
        $region95: #{autoencoder_forward.9} parent=93 // pred_check
          %p869 = pneg %p58
        $region96: #{autoencoder_forward.9} parent=93 // pred_check_branch
          %871 = sbr.rel (%p869) target = $region98
        $region97: #{autoencoder_forward.9} parent=93 // pred_region
          _
        $region98: #{autoencoder_forward.9} parent=93 // pred_fallthru
          _
        %p872 = pneg %p32
        %p873 = pneg %p29
        %s874 = sand.u32 %s45, 1
        %s875 = sand.u32 %s45, 1
        %s876 = smul.addr %s875, 576
        %s877 = scalar_lea.vmem [#allocation3], %s876
        %p878 = pneg %p58
        %p879 = pneg %p55
        %p880 = pneg %p79
        %p881 = pneg %p76
        %p882 = pneg %p105
        %p883 = pneg %p102
        %s884 = sand.u32 %s92, 1
        %s885 = sand.u32 %s92, 1
        %s886 = smul.addr %s885, 4
        %s887 = scalar_lea.vmem [#allocation4], %s886
        %s888 = smul.u32 4, %s16
        %s889 = ssub.s32 13, %s888
        %p890 = scmp.lt.s32.totalorder %s889, 4
        %s891 = scalar_select %p890, %s889, 4
        %s892 = smul.u32 2304, %s891
        %s893 = smul.u32 4, %s16
        %s894 = ssub.s32 13, %s893
        %p895 = scmp.lt.s32.totalorder %s894, 4
        %s896 = scalar_select %p895, %s894, 4
        %s897 = smul.u32 16, %s896
        %v899 = vld [vmem:[%s0] sm:$0x7]
        %v900 = vld [vmem:[%s868] sm:$0xff]
        %v901 = vld [vmem:[%s868 + $0x8] sm:$0xff]
        %v902 = vld [vmem:[%s868 + $0x10] sm:$0xff]
        %v903 = vld [vmem:[%s868 + $0x18] sm:$0xff]
        %v904 = vld [vmem:[%s868 + $0x20] sm:$0xff]
        %v905 = vld [vmem:[%s868 + $0x28] sm:$0xff]
        %v906 = vld [vmem:[%s868 + $0x30] sm:$0xff]
        %v907 = vld [vmem:[%s868 + $0x38] sm:$0xff]
        %v908 = vld [vmem:[%s868 + $0x40] sm:$0xff]
        %v909 = vld [vmem:[%s868 + $0x48] sm:$0xff]
        %v910 = vld [vmem:[%s868 + $0x50] sm:$0xff]
        %v911 = vld [vmem:[%s868 + $0x58] sm:$0xff]
        %v912 = vld [vmem:[%s868 + $0x60] sm:$0xff]
        %v913 = vld [vmem:[%s868 + $0x68] sm:$0xff]
        %v914 = vld [vmem:[%s868 + $0x70] sm:$0xff]
        %v915 = vld [vmem:[%s868 + $0x78] sm:$0xff]
        %v916 = vld [vmem:[%s868 + $0x80] sm:$0xff]
        %v917 = vld [vmem:[%s868 + $0x88] sm:$0xff]
        %v918 = vld [vmem:[%s868 + $0x90] sm:$0xff]
        %v919 = vld [vmem:[%s868 + $0x98] sm:$0xff]
        %v920 = vld [vmem:[%s868 + $0xa0] sm:$0xff]
        %v921 = vld [vmem:[%s868 + $0xa8] sm:$0xff]
        %v922 = vld [vmem:[%s868 + $0xb0] sm:$0xff]
        %v923 = vld [vmem:[%s868 + $0xb8] sm:$0xff]
        %v924 = vld [vmem:[%s868 + $0xc0] sm:$0xff]
        %v925 = vld [vmem:[%s868 + $0xc8] sm:$0xff]
        %v926 = vld [vmem:[%s868 + $0xd0] sm:$0xff]
        %v927 = vld [vmem:[%s868 + $0xd8] sm:$0xff]
        %v928 = vld [vmem:[%s868 + $0xe0] sm:$0xff]
        %v929 = vld [vmem:[%s868 + $0xe8] sm:$0xff]
        %v930 = vld [vmem:[%s868 + $0xf0] sm:$0xff]
        %v931 = vld [vmem:[%s868 + $0xf8] sm:$0xff]
        %v932 = vld [vmem:[%s868 + $0x100] sm:$0xff]
        %v933 = vld [vmem:[%s868 + $0x108] sm:$0xff]
        %v934 = vld [vmem:[%s868 + $0x110] sm:$0xff]
        %v935 = vld [vmem:[%s868 + $0x118] sm:$0xff]
        %v936 = vld [vmem:[%s868 + $0x120] sm:$0xff]
        %v937 = vld [vmem:[%s868 + $0x128] sm:$0xff]
        %v938 = vld [vmem:[%s868 + $0x130] sm:$0xff]
        %v939 = vld [vmem:[%s868 + $0x138] sm:$0xff]
        %v940 = vld [vmem:[%s868 + $0x140] sm:$0xff]
        %v941 = vld [vmem:[%s868 + $0x148] sm:$0xff]
        %v942 = vld [vmem:[%s868 + $0x150] sm:$0xff]
        %v943 = vld [vmem:[%s868 + $0x158] sm:$0xff]
        %v944 = vld [vmem:[%s868 + $0x160] sm:$0xff]
        %v945 = vld [vmem:[%s868 + $0x168] sm:$0xff]
        %v946 = vld [vmem:[%s868 + $0x170] sm:$0xff]
        %v947 = vld [vmem:[%s868 + $0x178] sm:$0xff]
        %v948 = vld [vmem:[%s868 + $0x180] sm:$0xff]
        %v949 = vld [vmem:[%s868 + $0x188] sm:$0xff]
        %v950 = vld [vmem:[%s868 + $0x190] sm:$0xff]
        %v951 = vld [vmem:[%s868 + $0x198] sm:$0xff]
        %v952 = vld [vmem:[%s868 + $0x1a0] sm:$0xff]
        %v953 = vld [vmem:[%s868 + $0x1a8] sm:$0xff]
        %v954 = vld [vmem:[%s868 + $0x1b0] sm:$0xff]
        %v955 = vld [vmem:[%s868 + $0x1b8] sm:$0xff]
        %v956 = vld [vmem:[%s868 + $0x1c0] sm:$0xff]
        %v957 = vld [vmem:[%s868 + $0x1c8] sm:$0xff]
        %v958 = vld [vmem:[%s868 + $0x1d0] sm:$0xff]
        %v959 = vld [vmem:[%s868 + $0x1d8] sm:$0xff]
        %v960 = vld [vmem:[%s868 + $0x1e0] sm:$0xff]
        %v961 = vld [vmem:[%s868 + $0x1e8] sm:$0xff]
        %v962 = vld [vmem:[%s868 + $0x1f0] sm:$0xff]
        %v963 = vld [vmem:[%s868 + $0x1f8] sm:$0xff]
        %v964 = vld [vmem:[%s868 + $0x200] sm:$0xff]
        %v965 = vld [vmem:[%s868 + $0x208] sm:$0xff]
        %v966 = vld [vmem:[%s868 + $0x210] sm:$0xff]
        %v967 = vld [vmem:[%s868 + $0x218] sm:$0xff]
        %v968 = vld [vmem:[%s868 + $0x220] sm:$0xff]
        %v969 = vld [vmem:[%s868 + $0x228] sm:$0xff]
        %v970 = vld [vmem:[%s868 + $0x230] sm:$0xff]
        %v971 = vld [vmem:[%s868 + $0x238] sm:$0xff]
        %v972 = vld [vmem:[#allocation2] sm:$0x1]
        %974 = vset.pattern.permute.xlu0 0
        %975 = vperm.xlu0 %974, %v972
        %v976 = vpop.permute.xlu0 %975
        %v978 = vlaneseq
        %v979 = vshrl.u32 %v978, 7
        %v980 = vsub.s32 0, %v979
        %v981 = vrot.slane %v976, %v980
        %v984 = vunpack.c.l.s4 1966171168
        %v985 = vunpack.c.0.s8 %v984
        %v986 = vlaneseq
        %v987 = vshrl.u32 %v986, 7
        %v988 = vsub.s32 %v985, %v987
        %v989 = vrot.slane %v899, %v988
        %v990 = vcombine.high %v989, %v989
        %v992 = vunpack.c.l.s4 1966171168
        %v993 = vunpack.c.0.s8 %v992
        %v994 = vlaneseq
        %v995 = vshrl.u32 %v994, 7
        %v996 = vsub.s32 %v993, %v995
        %v997 = vrot.slane %v989, %v996
        %v999 = vunpack.c.l.s4 1966171168
        %v1000 = vunpack.c.0.s8 %v999
        %v1001 = vlaneseq
        %v1002 = vshrl.u32 %v1001, 7
        %v1003 = vsub.s32 %v1000, %v1002
        %v1004 = vrot.slane %v990, %v1003
        %v1005 = vcombine.high %v997, %v997
        %v1080 = vunpack.c.l.b16 %v900
        %v1081 = vunpack.c.h.b16 %v900
        %v1082 = vunpack.c.l.b16 %v901
        %v1083 = vunpack.c.h.b16 %v901
        %v1084 = vunpack.c.l.b16 %v902
        %v1085 = vunpack.c.h.b16 %v902
        %v1086 = vunpack.c.l.b16 %v903
        %v1087 = vunpack.c.h.b16 %v903
        %v1088 = vunpack.c.l.b16 %v904
        %v1089 = vunpack.c.h.b16 %v904
        %v1090 = vunpack.c.l.b16 %v905
        %v1091 = vunpack.c.h.b16 %v905
        %v1092 = vunpack.c.l.b16 %v906
        %v1093 = vunpack.c.h.b16 %v906
        %v1094 = vunpack.c.l.b16 %v907
        %v1095 = vunpack.c.h.b16 %v907
        %v1096 = vunpack.c.l.b16 %v908
        %v1097 = vunpack.c.h.b16 %v908
        %v1098 = vunpack.c.l.b16 %v909
        %v1099 = vunpack.c.h.b16 %v909
        %v1100 = vunpack.c.l.b16 %v910
        %v1101 = vunpack.c.h.b16 %v910
        %v1102 = vunpack.c.l.b16 %v911
        %v1103 = vunpack.c.h.b16 %v911
        %v1104 = vunpack.c.l.b16 %v912
        %v1105 = vunpack.c.h.b16 %v912
        %v1106 = vunpack.c.l.b16 %v913
        %v1107 = vunpack.c.h.b16 %v913
        %v1108 = vunpack.c.l.b16 %v914
        %v1109 = vunpack.c.h.b16 %v914
        %v1110 = vunpack.c.l.b16 %v915
        %v1111 = vunpack.c.h.b16 %v915
        %v1112 = vunpack.c.l.b16 %v916
        %v1113 = vunpack.c.h.b16 %v916
        %v1114 = vunpack.c.l.b16 %v917
        %v1115 = vunpack.c.h.b16 %v917
        %v1116 = vunpack.c.l.b16 %v918
        %v1117 = vunpack.c.h.b16 %v918
        %v1118 = vunpack.c.l.b16 %v919
        %v1119 = vunpack.c.h.b16 %v919
        %v1120 = vunpack.c.l.b16 %v920
        %v1121 = vunpack.c.h.b16 %v920
        %v1122 = vunpack.c.l.b16 %v921
        %v1123 = vunpack.c.h.b16 %v921
        %v1124 = vunpack.c.l.b16 %v922
        %v1125 = vunpack.c.h.b16 %v922
        %v1126 = vunpack.c.l.b16 %v923
        %v1127 = vunpack.c.h.b16 %v923
        %v1128 = vunpack.c.l.b16 %v924
        %v1129 = vunpack.c.h.b16 %v924
        %v1130 = vunpack.c.l.b16 %v925
        %v1131 = vunpack.c.h.b16 %v925
        %v1132 = vunpack.c.l.b16 %v926
        %v1133 = vunpack.c.h.b16 %v926
        %v1134 = vunpack.c.l.b16 %v927
        %v1135 = vunpack.c.h.b16 %v927
        %v1136 = vunpack.c.l.b16 %v928
        %v1137 = vunpack.c.h.b16 %v928
        %v1138 = vunpack.c.l.b16 %v929
        %v1139 = vunpack.c.h.b16 %v929
        %v1140 = vunpack.c.l.b16 %v930
        %v1141 = vunpack.c.h.b16 %v930
        %v1142 = vunpack.c.l.b16 %v931
        %v1143 = vunpack.c.h.b16 %v931
        %v1144 = vunpack.c.l.b16 %v932
        %v1145 = vunpack.c.h.b16 %v932
        %v1146 = vunpack.c.l.b16 %v933
        %v1147 = vunpack.c.h.b16 %v933
        %v1148 = vunpack.c.l.b16 %v934
        %v1149 = vunpack.c.h.b16 %v934
        %v1150 = vunpack.c.l.b16 %v935
        %v1151 = vunpack.c.h.b16 %v935
        %v1152 = vunpack.c.l.b16 %v936
        %v1153 = vunpack.c.h.b16 %v936
        %v1154 = vunpack.c.l.b16 %v937
        %v1155 = vunpack.c.h.b16 %v937
        %v1156 = vunpack.c.l.b16 %v938
        %v1157 = vunpack.c.h.b16 %v938
        %v1158 = vunpack.c.l.b16 %v939
        %v1159 = vunpack.c.h.b16 %v939
        %v1160 = vunpack.c.l.b16 %v940
        %v1161 = vunpack.c.h.b16 %v940
        %v1162 = vunpack.c.l.b16 %v941
        %v1163 = vunpack.c.h.b16 %v941
        %v1164 = vunpack.c.l.b16 %v942
        %v1165 = vunpack.c.h.b16 %v942
        %v1166 = vunpack.c.l.b16 %v943
        %v1167 = vunpack.c.h.b16 %v943
        %v1168 = vunpack.c.l.b16 %v944
        %v1169 = vunpack.c.h.b16 %v944
        %v1170 = vunpack.c.l.b16 %v945
        %v1171 = vunpack.c.h.b16 %v945
        %v1172 = vunpack.c.l.b16 %v946
        %v1173 = vunpack.c.h.b16 %v946
        %v1174 = vunpack.c.l.b16 %v947
        %v1175 = vunpack.c.h.b16 %v947
        %v1176 = vunpack.c.l.b16 %v948
        %v1177 = vunpack.c.h.b16 %v948
        %v1178 = vunpack.c.l.b16 %v949
        %v1179 = vunpack.c.h.b16 %v949
        %v1180 = vunpack.c.l.b16 %v950
        %v1181 = vunpack.c.h.b16 %v950
        %v1182 = vunpack.c.l.b16 %v951
        %v1183 = vunpack.c.h.b16 %v951
        %v1184 = vunpack.c.l.b16 %v952
        %v1185 = vunpack.c.h.b16 %v952
        %v1186 = vunpack.c.l.b16 %v953
        %v1187 = vunpack.c.h.b16 %v953
        %v1188 = vunpack.c.l.b16 %v954
        %v1189 = vunpack.c.h.b16 %v954
        %v1190 = vunpack.c.l.b16 %v955
        %v1191 = vunpack.c.h.b16 %v955
        %v1192 = vunpack.c.l.b16 %v956
        %v1193 = vunpack.c.h.b16 %v956
        %v1194 = vunpack.c.l.b16 %v957
        %v1195 = vunpack.c.h.b16 %v957
        %v1196 = vunpack.c.l.b16 %v958
        %v1197 = vunpack.c.h.b16 %v958
        %v1198 = vunpack.c.l.b16 %v959
        %v1199 = vunpack.c.h.b16 %v959
        %v1200 = vunpack.c.l.b16 %v960
        %v1201 = vunpack.c.h.b16 %v960
        %v1202 = vunpack.c.l.b16 %v961
        %v1203 = vunpack.c.h.b16 %v961
        %v1204 = vunpack.c.l.b16 %v962
        %v1205 = vunpack.c.h.b16 %v962
        %v1206 = vunpack.c.l.b16 %v963
        %v1207 = vunpack.c.h.b16 %v963
        %v1208 = vunpack.c.l.b16 %v964
        %v1209 = vunpack.c.h.b16 %v964
        %v1210 = vunpack.c.l.b16 %v965
        %v1211 = vunpack.c.h.b16 %v965
        %v1212 = vunpack.c.l.b16 %v966
        %v1213 = vunpack.c.h.b16 %v966
        %v1214 = vunpack.c.l.b16 %v967
        %v1215 = vunpack.c.h.b16 %v967
        %v1216 = vunpack.c.l.b16 %v968
        %v1217 = vunpack.c.h.b16 %v968
        %v1218 = vunpack.c.l.b16 %v969
        %v1219 = vunpack.c.h.b16 %v969
        %v1220 = vunpack.c.l.b16 %v970
        %v1221 = vunpack.c.h.b16 %v970
        %v1222 = vunpack.c.l.b16 %v971
        %v1223 = vunpack.c.h.b16 %v971
        %v1224 = vpack.c.b16 %v1084, %v1080
        %v1225 = vpack.c.b16 %v1085, %v1081
        %v1226 = vpack.c.b16 %v1086, %v1082
        %v1227 = vpack.c.b16 %v1087, %v1083
        %v1228 = vpack.c.b16 %v1092, %v1088
        %v1229 = vpack.c.b16 %v1093, %v1089
        %v1230 = vpack.c.b16 %v1094, %v1090
        %v1231 = vpack.c.b16 %v1095, %v1091
        %v1232 = vpack.c.b16 %v1100, %v1096
        %v1233 = vpack.c.b16 %v1101, %v1097
        %v1234 = vpack.c.b16 %v1102, %v1098
        %v1235 = vpack.c.b16 %v1103, %v1099
        %v1236 = vpack.c.b16 %v1108, %v1104
        %v1237 = vpack.c.b16 %v1109, %v1105
        %v1238 = vpack.c.b16 %v1110, %v1106
        %v1239 = vpack.c.b16 %v1111, %v1107
        %v1240 = vpack.c.b16 %v1116, %v1112
        %v1241 = vpack.c.b16 %v1117, %v1113
        %v1242 = vpack.c.b16 %v1118, %v1114
        %v1243 = vpack.c.b16 %v1119, %v1115
        %v1244 = vpack.c.b16 %v1124, %v1120
        %v1245 = vpack.c.b16 %v1125, %v1121
        %v1246 = vpack.c.b16 %v1126, %v1122
        %v1247 = vpack.c.b16 %v1127, %v1123
        %v1248 = vpack.c.b16 %v1132, %v1128
        %v1249 = vpack.c.b16 %v1133, %v1129
        %v1250 = vpack.c.b16 %v1134, %v1130
        %v1251 = vpack.c.b16 %v1135, %v1131
        %v1252 = vpack.c.b16 %v1140, %v1136
        %v1253 = vpack.c.b16 %v1141, %v1137
        %v1254 = vpack.c.b16 %v1142, %v1138
        %v1255 = vpack.c.b16 %v1143, %v1139
        %v1256 = vpack.c.b16 %v1148, %v1144
        %v1257 = vpack.c.b16 %v1149, %v1145
        %v1258 = vpack.c.b16 %v1150, %v1146
        %v1259 = vpack.c.b16 %v1151, %v1147
        %v1260 = vpack.c.b16 %v1156, %v1152
        %v1261 = vpack.c.b16 %v1157, %v1153
        %v1262 = vpack.c.b16 %v1158, %v1154
        %v1263 = vpack.c.b16 %v1159, %v1155
        %v1264 = vpack.c.b16 %v1164, %v1160
        %v1265 = vpack.c.b16 %v1165, %v1161
        %v1266 = vpack.c.b16 %v1166, %v1162
        %v1267 = vpack.c.b16 %v1167, %v1163
        %v1268 = vpack.c.b16 %v1172, %v1168
        %v1269 = vpack.c.b16 %v1173, %v1169
        %v1270 = vpack.c.b16 %v1174, %v1170
        %v1271 = vpack.c.b16 %v1175, %v1171
        %v1272 = vpack.c.b16 %v1180, %v1176
        %v1273 = vpack.c.b16 %v1181, %v1177
        %v1274 = vpack.c.b16 %v1182, %v1178
        %v1275 = vpack.c.b16 %v1183, %v1179
        %v1276 = vpack.c.b16 %v1188, %v1184
        %v1277 = vpack.c.b16 %v1189, %v1185
        %v1278 = vpack.c.b16 %v1190, %v1186
        %v1279 = vpack.c.b16 %v1191, %v1187
        %v1280 = vpack.c.b16 %v1196, %v1192
        %v1281 = vpack.c.b16 %v1197, %v1193
        %v1282 = vpack.c.b16 %v1198, %v1194
        %v1283 = vpack.c.b16 %v1199, %v1195
        %v1284 = vpack.c.b16 %v1204, %v1200
        %v1285 = vpack.c.b16 %v1205, %v1201
        %v1286 = vpack.c.b16 %v1206, %v1202
        %v1287 = vpack.c.b16 %v1207, %v1203
        %v1288 = vpack.c.b16 %v1212, %v1208
        %v1289 = vpack.c.b16 %v1213, %v1209
        %v1290 = vpack.c.b16 %v1214, %v1210
        %v1291 = vpack.c.b16 %v1215, %v1211
        %v1292 = vpack.c.b16 %v1220, %v1216
        %v1293 = vpack.c.b16 %v1221, %v1217
        %v1294 = vpack.c.b16 %v1222, %v1218
        %v1295 = vpack.c.b16 %v1223, %v1219
        %vm1368 = vcmask 261120
        %v1370 = vsel %vm1368, %v1005, 0
        %1372 = vmatprep.subr.bf16.mxu0 %v1225
        %1373 = vmatpush1.bf16.msra.mxu0 %v1224
        %1374 = vmatprep.subr.bf16.mxu0 %v1229
        %1375 = vmatpush1.bf16.msra.mxu0 %v1228
        %1376 = vmatprep.subr.bf16.mxu0 %v1233
        %1377 = vmatpush1.bf16.msra.mxu0 %v1232
        %1378 = vmatprep.subr.bf16.mxu0 %v1237
        %1379 = vmatpush1.bf16.msra.mxu0 %v1236
        %1380 = vmatprep.subr.bf16.mxu0 %v1241
        %1381 = vmatpush1.bf16.msra.mxu0 %v1240
        %1382 = vmatprep.subr.bf16.mxu0 %v1245
        %1383 = vmatpush1.bf16.msra.mxu0 %v1244
        %1384 = vmatprep.subr.bf16.mxu0 %v1249
        %1385 = vmatpush1.bf16.msra.mxu0 %v1248
        %1386 = vmatprep.subr.bf16.mxu0 %v1253
        %1387 = vmatpush1.bf16.msra.mxu0 %v1252
        %1388 = vmatprep.subr.bf16.mxu0 %v1257
        %1389 = vmatpush1.bf16.msra.mxu0 %v1256
        %1390 = vmatprep.subr.bf16.mxu0 %v1261
        %1391 = vmatpush1.bf16.msra.mxu0 %v1260
        %1392 = vmatprep.subr.bf16.mxu0 %v1265
        %1393 = vmatpush1.bf16.msra.mxu0 %v1264
        %1394 = vmatprep.subr.bf16.mxu0 %v1269
        %1395 = vmatpush1.bf16.msra.mxu0 %v1268
        %1396 = vmatprep.subr.bf16.mxu0 %v1273
        %1397 = vmatpush1.bf16.msra.mxu0 %v1272
        %1398 = vmatprep.subr.bf16.mxu0 %v1277
        %1399 = vmatpush1.bf16.msra.mxu0 %v1276
        %1400 = vmatprep.subr.bf16.mxu0 %v1281
        %1401 = vmatpush1.bf16.msra.mxu0 %v1280
        %1402 = vmatprep.subr.bf16.mxu0 %v1285
        %1403 = vmatpush1.bf16.msra.mxu0 %v1284
        %1404 = vmatprep.mubr.bf16.mxu0 %v1004
        %1405 = vmatmul.mubr.bf16.gmra.mrb[0].mxu0 %v997
        %v1406 = vpop.f32.mrb[0].mxu0
        %v1407 = vadd.f32 %v981, %v1406
        %v1408 = vpop.f32.mrb[0].mxu0
        %v1409 = vadd.f32 %v981, %v1408
        %v1410 = vpop.f32.mrb[0].mxu0
        %v1411 = vpop.f32.mrb[0].mxu0
        %1412 = vdwg.mxu0
        %1413 = vmatprep.subr.bf16.mxu0 %v1289
        %1414 = vmatpush1.bf16.msra.mxu0 %v1288
        %1415 = vmatprep.subr.bf16.mxu0 %v1293
        %1416 = vmatpush1.bf16.msra.mxu0 %v1292
        %1417 = vmatprep.subr.bf16.mxu0 0
        %1418 = vmatpush1.bf16.msra.mxu0 0
        %1419 = vmatprep.subr.bf16.mxu0 0
        %1420 = vmatpush1.bf16.msra.mxu0 0
        %1421 = vmatprep.subr.bf16.mxu0 0
        %1422 = vmatpush1.bf16.msra.mxu0 0
        %1423 = vmatprep.subr.bf16.mxu0 0
        %1424 = vmatpush1.bf16.msra.mxu0 0
        %1425 = vmatprep.subr.bf16.mxu0 0
        %1426 = vmatpush1.bf16.msra.mxu0 0
        %1427 = vmatprep.subr.bf16.mxu0 0
        %1428 = vmatpush1.bf16.msra.mxu0 0
        %1429 = vmatprep.subr.bf16.mxu0 0
        %1430 = vmatpush1.bf16.msra.mxu0 0
        %1431 = vmatprep.subr.bf16.mxu0 0
        %1432 = vmatpush1.bf16.msra.mxu0 0
        %1433 = vmatprep.subr.bf16.mxu0 0
        %1434 = vmatpush1.bf16.msra.mxu0 0
        %1435 = vmatprep.subr.bf16.mxu0 0
        %1436 = vmatpush1.bf16.msra.mxu0 0
        %1437 = vmatprep.subr.bf16.mxu0 0
        %1438 = vmatpush1.bf16.msra.mxu0 0
        %1439 = vmatprep.subr.bf16.mxu0 0
        %1440 = vmatpush1.bf16.msra.mxu0 0
        %1441 = vmatprep.subr.bf16.mxu0 0
        %1442 = vmatpush1.bf16.msra.mxu0 0
        %1443 = vmatprep.subr.bf16.mxu0 0
        %1444 = vmatpush1.bf16.msra.mxu0 0
        %1445 = vmatprep.mubr.bf16.mxu0 0
        %1446 = vmatmul.mubr.bf16.gmra.mrb[0].mxu0 %v1370
        %v1447 = vpop.f32.mrb[0].mxu0
        %v1448 = vadd.f32 %v1407, %v1447
        %v1449 = vpop.f32.mrb[0].mxu0
        %v1450 = vadd.f32 %v1409, %v1449
        %v1451 = vpop.f32.mrb[0].mxu0
        %v1452 = vpop.f32.mrb[0].mxu0
        %1453 = vdwg.mxu0
        %1454 = vmatprep.subr.bf16.mxu0 %v1227
        %1455 = vmatpush1.bf16.msra.mxu0 %v1226
        %1456 = vmatprep.subr.bf16.mxu0 %v1231
        %1457 = vmatpush1.bf16.msra.mxu0 %v1230
        %1458 = vmatprep.subr.bf16.mxu0 %v1235
        %1459 = vmatpush1.bf16.msra.mxu0 %v1234
        %1460 = vmatprep.subr.bf16.mxu0 %v1239
        %1461 = vmatpush1.bf16.msra.mxu0 %v1238
        %1462 = vmatprep.subr.bf16.mxu0 %v1243
        %1463 = vmatpush1.bf16.msra.mxu0 %v1242
        %1464 = vmatprep.subr.bf16.mxu0 %v1247
        %1465 = vmatpush1.bf16.msra.mxu0 %v1246
        %1466 = vmatprep.subr.bf16.mxu0 %v1251
        %1467 = vmatpush1.bf16.msra.mxu0 %v1250
        %1468 = vmatprep.subr.bf16.mxu0 %v1255
        %1469 = vmatpush1.bf16.msra.mxu0 %v1254
        %1470 = vmatprep.subr.bf16.mxu0 %v1259
        %1471 = vmatpush1.bf16.msra.mxu0 %v1258
        %1472 = vmatprep.subr.bf16.mxu0 %v1263
        %1473 = vmatpush1.bf16.msra.mxu0 %v1262
        %1474 = vmatprep.subr.bf16.mxu0 %v1267
        %1475 = vmatpush1.bf16.msra.mxu0 %v1266
        %1476 = vmatprep.subr.bf16.mxu0 %v1271
        %1477 = vmatpush1.bf16.msra.mxu0 %v1270
        %1478 = vmatprep.subr.bf16.mxu0 %v1275
        %1479 = vmatpush1.bf16.msra.mxu0 %v1274
        %1480 = vmatprep.subr.bf16.mxu0 %v1279
        %1481 = vmatpush1.bf16.msra.mxu0 %v1278
        %1482 = vmatprep.subr.bf16.mxu0 %v1283
        %1483 = vmatpush1.bf16.msra.mxu0 %v1282
        %1484 = vmatprep.subr.bf16.mxu0 %v1287
        %1485 = vmatpush1.bf16.msra.mxu0 %v1286
        %1486 = vmatprep.mubr.bf16.mxu0 %v1004
        %1487 = vmatmul.mubr.bf16.gmra.mrb[0].mxu0 %v997
        %v1488 = vpop.f32.mrb[0].mxu0
        %v1489 = vadd.f32 %v981, %v1488
        %v1490 = vpop.f32.mrb[0].mxu0
        %v1491 = vadd.f32 %v981, %v1490
        %v1492 = vpop.f32.mrb[0].mxu0
        %v1493 = vpop.f32.mrb[0].mxu0
        %1494 = vdwg.mxu0
        %1495 = vmatprep.subr.bf16.mxu0 %v1291
        %1496 = vmatpush1.bf16.msra.mxu0 %v1290
        %1497 = vmatprep.subr.bf16.mxu0 %v1295
        %1498 = vmatpush1.bf16.msra.mxu0 %v1294
        %1499 = vmatprep.subr.bf16.mxu0 0
        %1500 = vmatpush1.bf16.msra.mxu0 0
        %1501 = vmatprep.subr.bf16.mxu0 0
        %1502 = vmatpush1.bf16.msra.mxu0 0
        %1503 = vmatprep.subr.bf16.mxu0 0
        %1504 = vmatpush1.bf16.msra.mxu0 0
        %1505 = vmatprep.subr.bf16.mxu0 0
        %1506 = vmatpush1.bf16.msra.mxu0 0
        %1507 = vmatprep.subr.bf16.mxu0 0
        %1508 = vmatpush1.bf16.msra.mxu0 0
        %1509 = vmatprep.subr.bf16.mxu0 0
        %1510 = vmatpush1.bf16.msra.mxu0 0
        %1511 = vmatprep.subr.bf16.mxu0 0
        %1512 = vmatpush1.bf16.msra.mxu0 0
        %1513 = vmatprep.subr.bf16.mxu0 0
        %1514 = vmatpush1.bf16.msra.mxu0 0
        %1515 = vmatprep.subr.bf16.mxu0 0
        %1516 = vmatpush1.bf16.msra.mxu0 0
        %1517 = vmatprep.subr.bf16.mxu0 0
        %1518 = vmatpush1.bf16.msra.mxu0 0
        %1519 = vmatprep.subr.bf16.mxu0 0
        %1520 = vmatpush1.bf16.msra.mxu0 0
        %1521 = vmatprep.subr.bf16.mxu0 0
        %1522 = vmatpush1.bf16.msra.mxu0 0
        %1523 = vmatprep.subr.bf16.mxu0 0
        %1524 = vmatpush1.bf16.msra.mxu0 0
        %1525 = vmatprep.subr.bf16.mxu0 0
        %1526 = vmatpush1.bf16.msra.mxu0 0
        %1527 = vmatprep.mubr.bf16.mxu0 0
        %1528 = vmatmul.mubr.bf16.gmra.mrb[0].mxu0 %v1370
        %v1529 = vpop.f32.mrb[0].mxu0
        %v1530 = vadd.f32 %v1489, %v1529
        %v1531 = vpop.f32.mrb[0].mxu0
        %v1532 = vadd.f32 %v1491, %v1531
        %v1533 = vpop.f32.mrb[0].mxu0
        %v1534 = vpop.f32.mrb[0].mxu0
        %1535 = vdwg.mxu0
        %v1536 = vsub.f32 0.0, %v1448
        %v1537 = vsub.f32 0.0, %v1450
        %v1538 = vsub.f32 0.0, %v1530
        %v1539 = vsub.f32 0.0, %v1532
        %v1540 = vmul.f32 %v1536, 1.442695
        %v1541 = vpow.pop %v1540
        %v1542 = vmul.f32 %v1537, 1.442695
        %v1543 = vpow.pop %v1542
        %v1544 = vmul.f32 %v1538, 1.442695
        %v1545 = vpow.pop %v1544
        %v1546 = vmul.f32 %v1539, 1.442695
        %v1547 = vpow.pop %v1546
        %v1548 = vadd.f32 %v1541, 1.0
        %v1549 = vadd.f32 %v1543, 1.0
        %v1550 = vadd.f32 %v1545, 1.0
        %v1551 = vadd.f32 %v1547, 1.0
        %v1552 = vrcp.pop %v1548
        %v1553 = vrcp.pop %v1549
        %v1554 = vrcp.pop %v1550
        %v1555 = vrcp.pop %v1551
        %v1560 = vcombine.low %v1552, %v1553
        %v1561 = vcombine.low %v1554, %v1555
        %v1563 = vunpack.c.l.s4 1966171168
        %v1564 = vunpack.c.0.s8 %v1563
        %v1565 = vlaneseq
        %v1566 = vshrl.u32 %v1565, 7
        %v1567 = vsub.s32 %v1564, %v1566
        %v1568 = vrot.slane %v1560, %v1567
        %v1570 = vunpack.c.l.s4 1966171168
        %v1571 = vunpack.c.0.s8 %v1570
        %v1572 = vlaneseq
        %v1573 = vshrl.u32 %v1572, 7
        %v1574 = vsub.s32 %v1571, %v1573
        %v1575 = vrot.slane %v1561, %v1574
        %v1576 = vcombine.low %v1568, %v1575
        %v1578 = vunpack.c.l.s4 1966171168
        %v1579 = vunpack.c.0.s8 %v1578
        %v1580 = vlaneseq
        %v1581 = vshrl.u32 %v1580, 7
        %v1582 = vsub.s32 %v1579, %v1581
        %v1583 = vrot.slane %v1576, %v1582
        %v1585 = vlaneseq
        %vm1586 = vcmp.ge.s32.totalorder %v1585, 0
        %vm1587 = vcmp.lt.s32.totalorder %v1585, 512
        %vm1588 = vmand %vm1586, %vm1587
        %1589 = vst.msk [vmem:[%s887] sm:$0xf] %vm1588, %v1583
        %s1590 = sand.u32 %s92, 1
        %s1591 = sand.u32 %s92, 1
        %s1592 = smul.addr %s1591, 4
        %s1593 = scalar_lea.vmem [#allocation4], %s1592
        // Predicated region
        $region99: #{autoencoder_forward.9} parent=93 // pred_check
          %p1594 = pneg %p102
        $region100: #{autoencoder_forward.9} parent=93 // pred_check_branch
          %1596 = sbr.rel (%p1594) target = $region102
        $region101: #{autoencoder_forward.9} parent=93 // pred_region
          %s1597 = smul.u32 4, %s16
          %s1598 = ssub.s32 13, %s1597
          %p1599 = scmp.lt.s32.totalorder %s1598, 4
          %s1600 = scalar_select %p1599, %s1598, 4
          %s1601 = smul.u32 16, %s1600
          %p1602 = scmp.ne.s32.totalorder 0, %s1601
          %s1603 = scalar_lea.vmem %s3, %s1597
          // Predicated region
          $region103: #{autoencoder_forward.9} parent=101 // pred_check
            %p1604 = pneg %p1602
          $region104: #{autoencoder_forward.9} parent=101 // pred_check_branch
            %1606 = sbr.rel (%p1604) target = $region106
          $region105: #{autoencoder_forward.9} parent=101 // pred_region
            %p1607 = scmp.lt.u32.totalorder %s1600, 8
            %p1608 = pneg %p1607
            // Predicated region
            $region107: #{autoencoder_forward.9} parent=105 // pred_check
              _
            $region108: #{autoencoder_forward.9} parent=105 // pred_check_branch
              %1610 = sbr.rel (%p1607) target = $region110
            $region109: #{autoencoder_forward.9} parent=105 // pred_region
              %s1625 = sand.u32 %s1600, 7
              %p1626 = scmp.eq.s32.totalorder %s1625, 0
              // Predicated region
              $region122: #{autoencoder_forward.9} parent=109 // pred_check
                %p1627 = pneg %p1626
              $region123: #{autoencoder_forward.9} parent=109 // pred_check_branch
                %1629 = sbr.rel (%p1627) target = $region125
              $region124: #{autoencoder_forward.9} parent=109 // pred_region
                %s1630 = sshrl.u32 %s1600, 3
                %s1631 = sshrl.u32 %s1630, 6
                // While loop
                $region126: #{autoencoder_forward.9} parent=124 // loop_pre_header
                  _
                $region127: #{autoencoder_forward.9} parent=124 // loop_header
                  %s1635 = sphi 0, %s1637
                  %p1636 = scmp.ge.s32.totalorder %s1635, %s1631
                  %s1640 = sphi 0, %s1773
                  %s1641 = sphi %s1593, %s1776
                  %s1642 = sphi %s1603, %s1777
                $region128: #{autoencoder_forward.9} parent=124 // loop_header_branch
                  %1639 = sbr.rel (%p1636) target = $region132
                $region129: #{autoencoder_forward.9} parent=124 // loop_body
                  %v1643 = vld [vmem:[%s1641] sm:$0xff]
                  %1644 = vst [vmem:[%s1642] sm:$0xff] %v1643
                  %v1645 = vld [vmem:[%s1641 + $0x8] sm:$0xff]
                  %1646 = vst [vmem:[%s1642 + $0x8] sm:$0xff] %v1645
                  %v1647 = vld [vmem:[%s1641 + $0x10] sm:$0xff]
                  %1648 = vst [vmem:[%s1642 + $0x10] sm:$0xff] %v1647
                  %v1649 = vld [vmem:[%s1641 + $0x18] sm:$0xff]
                  %1650 = vst [vmem:[%s1642 + $0x18] sm:$0xff] %v1649
                  %v1651 = vld [vmem:[%s1641 + $0x20] sm:$0xff]
                  %1652 = vst [vmem:[%s1642 + $0x20] sm:$0xff] %v1651
                  %v1653 = vld [vmem:[%s1641 + $0x28] sm:$0xff]
                  %1654 = vst [vmem:[%s1642 + $0x28] sm:$0xff] %v1653
                  %v1655 = vld [vmem:[%s1641 + $0x30] sm:$0xff]
                  %1656 = vst [vmem:[%s1642 + $0x30] sm:$0xff] %v1655
                  %v1657 = vld [vmem:[%s1641 + $0x38] sm:$0xff]
                  %1658 = vst [vmem:[%s1642 + $0x38] sm:$0xff] %v1657
                  %v1659 = vld [vmem:[%s1641 + $0x40] sm:$0xff]
                  %1660 = vst [vmem:[%s1642 + $0x40] sm:$0xff] %v1659
                  %v1661 = vld [vmem:[%s1641 + $0x48] sm:$0xff]
                  %1662 = vst [vmem:[%s1642 + $0x48] sm:$0xff] %v1661
                  %v1663 = vld [vmem:[%s1641 + $0x50] sm:$0xff]
                  %1664 = vst [vmem:[%s1642 + $0x50] sm:$0xff] %v1663
                  %v1665 = vld [vmem:[%s1641 + $0x58] sm:$0xff]
                  %1666 = vst [vmem:[%s1642 + $0x58] sm:$0xff] %v1665
                  %v1667 = vld [vmem:[%s1641 + $0x60] sm:$0xff]
                  %1668 = vst [vmem:[%s1642 + $0x60] sm:$0xff] %v1667
                  %v1669 = vld [vmem:[%s1641 + $0x68] sm:$0xff]
                  %1670 = vst [vmem:[%s1642 + $0x68] sm:$0xff] %v1669
                  %v1671 = vld [vmem:[%s1641 + $0x70] sm:$0xff]
                  %1672 = vst [vmem:[%s1642 + $0x70] sm:$0xff] %v1671
                  %v1673 = vld [vmem:[%s1641 + $0x78] sm:$0xff]
                  %1674 = vst [vmem:[%s1642 + $0x78] sm:$0xff] %v1673
                  %v1675 = vld [vmem:[%s1641 + $0x80] sm:$0xff]
                  %1676 = vst [vmem:[%s1642 + $0x80] sm:$0xff] %v1675
                  %v1677 = vld [vmem:[%s1641 + $0x88] sm:$0xff]
                  %1678 = vst [vmem:[%s1642 + $0x88] sm:$0xff] %v1677
                  %v1679 = vld [vmem:[%s1641 + $0x90] sm:$0xff]
                  %1680 = vst [vmem:[%s1642 + $0x90] sm:$0xff] %v1679
                  %v1681 = vld [vmem:[%s1641 + $0x98] sm:$0xff]
                  %1682 = vst [vmem:[%s1642 + $0x98] sm:$0xff] %v1681
                  %v1683 = vld [vmem:[%s1641 + $0xa0] sm:$0xff]
                  %1684 = vst [vmem:[%s1642 + $0xa0] sm:$0xff] %v1683
                  %v1685 = vld [vmem:[%s1641 + $0xa8] sm:$0xff]
                  %1686 = vst [vmem:[%s1642 + $0xa8] sm:$0xff] %v1685
                  %v1687 = vld [vmem:[%s1641 + $0xb0] sm:$0xff]
                  %1688 = vst [vmem:[%s1642 + $0xb0] sm:$0xff] %v1687
                  %v1689 = vld [vmem:[%s1641 + $0xb8] sm:$0xff]
                  %1690 = vst [vmem:[%s1642 + $0xb8] sm:$0xff] %v1689
                  %v1691 = vld [vmem:[%s1641 + $0xc0] sm:$0xff]
                  %1692 = vst [vmem:[%s1642 + $0xc0] sm:$0xff] %v1691
                  %v1693 = vld [vmem:[%s1641 + $0xc8] sm:$0xff]
                  %1694 = vst [vmem:[%s1642 + $0xc8] sm:$0xff] %v1693
                  %v1695 = vld [vmem:[%s1641 + $0xd0] sm:$0xff]
                  %1696 = vst [vmem:[%s1642 + $0xd0] sm:$0xff] %v1695
                  %v1697 = vld [vmem:[%s1641 + $0xd8] sm:$0xff]
                  %1698 = vst [vmem:[%s1642 + $0xd8] sm:$0xff] %v1697
                  %v1699 = vld [vmem:[%s1641 + $0xe0] sm:$0xff]
                  %1700 = vst [vmem:[%s1642 + $0xe0] sm:$0xff] %v1699
                  %v1701 = vld [vmem:[%s1641 + $0xe8] sm:$0xff]
                  %1702 = vst [vmem:[%s1642 + $0xe8] sm:$0xff] %v1701
                  %v1703 = vld [vmem:[%s1641 + $0xf0] sm:$0xff]
                  %1704 = vst [vmem:[%s1642 + $0xf0] sm:$0xff] %v1703
                  %v1705 = vld [vmem:[%s1641 + $0xf8] sm:$0xff]
                  %1706 = vst [vmem:[%s1642 + $0xf8] sm:$0xff] %v1705
                  %v1707 = vld [vmem:[%s1641 + $0x100] sm:$0xff]
                  %1708 = vst [vmem:[%s1642 + $0x100] sm:$0xff] %v1707
                  %v1709 = vld [vmem:[%s1641 + $0x108] sm:$0xff]
                  %1710 = vst [vmem:[%s1642 + $0x108] sm:$0xff] %v1709
                  %v1711 = vld [vmem:[%s1641 + $0x110] sm:$0xff]
                  %1712 = vst [vmem:[%s1642 + $0x110] sm:$0xff] %v1711
                  %v1713 = vld [vmem:[%s1641 + $0x118] sm:$0xff]
                  %1714 = vst [vmem:[%s1642 + $0x118] sm:$0xff] %v1713
                  %v1715 = vld [vmem:[%s1641 + $0x120] sm:$0xff]
                  %1716 = vst [vmem:[%s1642 + $0x120] sm:$0xff] %v1715
                  %v1717 = vld [vmem:[%s1641 + $0x128] sm:$0xff]
                  %1718 = vst [vmem:[%s1642 + $0x128] sm:$0xff] %v1717
                  %v1719 = vld [vmem:[%s1641 + $0x130] sm:$0xff]
                  %1720 = vst [vmem:[%s1642 + $0x130] sm:$0xff] %v1719
                  %v1721 = vld [vmem:[%s1641 + $0x138] sm:$0xff]
                  %1722 = vst [vmem:[%s1642 + $0x138] sm:$0xff] %v1721
                  %v1723 = vld [vmem:[%s1641 + $0x140] sm:$0xff]
                  %1724 = vst [vmem:[%s1642 + $0x140] sm:$0xff] %v1723
                  %v1725 = vld [vmem:[%s1641 + $0x148] sm:$0xff]
                  %1726 = vst [vmem:[%s1642 + $0x148] sm:$0xff] %v1725
                  %v1727 = vld [vmem:[%s1641 + $0x150] sm:$0xff]
                  %1728 = vst [vmem:[%s1642 + $0x150] sm:$0xff] %v1727
                  %v1729 = vld [vmem:[%s1641 + $0x158] sm:$0xff]
                  %1730 = vst [vmem:[%s1642 + $0x158] sm:$0xff] %v1729
                  %v1731 = vld [vmem:[%s1641 + $0x160] sm:$0xff]
                  %1732 = vst [vmem:[%s1642 + $0x160] sm:$0xff] %v1731
                  %v1733 = vld [vmem:[%s1641 + $0x168] sm:$0xff]
                  %1734 = vst [vmem:[%s1642 + $0x168] sm:$0xff] %v1733
                  %v1735 = vld [vmem:[%s1641 + $0x170] sm:$0xff]
                  %1736 = vst [vmem:[%s1642 + $0x170] sm:$0xff] %v1735
                  %v1737 = vld [vmem:[%s1641 + $0x178] sm:$0xff]
                  %1738 = vst [vmem:[%s1642 + $0x178] sm:$0xff] %v1737
                  %v1739 = vld [vmem:[%s1641 + $0x180] sm:$0xff]
                  %1740 = vst [vmem:[%s1642 + $0x180] sm:$0xff] %v1739
                  %v1741 = vld [vmem:[%s1641 + $0x188] sm:$0xff]
                  %1742 = vst [vmem:[%s1642 + $0x188] sm:$0xff] %v1741
                  %v1743 = vld [vmem:[%s1641 + $0x190] sm:$0xff]
                  %1744 = vst [vmem:[%s1642 + $0x190] sm:$0xff] %v1743
                  %v1745 = vld [vmem:[%s1641 + $0x198] sm:$0xff]
                  %1746 = vst [vmem:[%s1642 + $0x198] sm:$0xff] %v1745
                  %v1747 = vld [vmem:[%s1641 + $0x1a0] sm:$0xff]
                  %1748 = vst [vmem:[%s1642 + $0x1a0] sm:$0xff] %v1747
                  %v1749 = vld [vmem:[%s1641 + $0x1a8] sm:$0xff]
                  %1750 = vst [vmem:[%s1642 + $0x1a8] sm:$0xff] %v1749
                  %v1751 = vld [vmem:[%s1641 + $0x1b0] sm:$0xff]
                  %1752 = vst [vmem:[%s1642 + $0x1b0] sm:$0xff] %v1751
                  %v1753 = vld [vmem:[%s1641 + $0x1b8] sm:$0xff]
                  %1754 = vst [vmem:[%s1642 + $0x1b8] sm:$0xff] %v1753
                  %v1755 = vld [vmem:[%s1641 + $0x1c0] sm:$0xff]
                  %1756 = vst [vmem:[%s1642 + $0x1c0] sm:$0xff] %v1755
                  %v1757 = vld [vmem:[%s1641 + $0x1c8] sm:$0xff]
                  %1758 = vst [vmem:[%s1642 + $0x1c8] sm:$0xff] %v1757
                  %v1759 = vld [vmem:[%s1641 + $0x1d0] sm:$0xff]
                  %1760 = vst [vmem:[%s1642 + $0x1d0] sm:$0xff] %v1759
                  %v1761 = vld [vmem:[%s1641 + $0x1d8] sm:$0xff]
                  %1762 = vst [vmem:[%s1642 + $0x1d8] sm:$0xff] %v1761
                  %v1763 = vld [vmem:[%s1641 + $0x1e0] sm:$0xff]
                  %1764 = vst [vmem:[%s1642 + $0x1e0] sm:$0xff] %v1763
                  %v1765 = vld [vmem:[%s1641 + $0x1e8] sm:$0xff]
                  %1766 = vst [vmem:[%s1642 + $0x1e8] sm:$0xff] %v1765
                  %v1767 = vld [vmem:[%s1641 + $0x1f0] sm:$0xff]
                  %1768 = vst [vmem:[%s1642 + $0x1f0] sm:$0xff] %v1767
                  %v1769 = vld [vmem:[%s1641 + $0x1f8] sm:$0xff]
                  %1770 = vst [vmem:[%s1642 + $0x1f8] sm:$0xff] %v1769
                  %s1771 = sadd.s32 1, %s1640
                  %p1772 = scmp.ge.s32.totalorder %s1771, %s1631
                  %s1773 = scalar_select %p1772, 0, %s1771
                  %s1774 = smul.u32 %s1773, 512
                  %s1775 = smul.u32 %s1773, 512
                  %s1776 = scalar_lea.vmem %s1593, %s1774 [#allocation4]
                  %s1777 = scalar_lea.vmem %s1603, %s1775
                $region130: #{autoencoder_forward.9} parent=124 // loop_footer
                  %s1637 = sadd.s32 %s1635, 1
                $region131: #{autoencoder_forward.9} parent=124 // loop_footer_branch
                  %1634 = sbr.rel target = $region127
                $region132: #{autoencoder_forward.9} parent=124 // loop_exit
                  _
                %s1778 = sshrl.u32 %s1630, 6
                %s1779 = sand.u32 %s1630, 63
                %s1780 = smul.u32 %s1778, 64
                %s1781 = smul.u32 128, %s1780
                %s1782 = sshra.s32 %s1781, 4
                %s1783 = scalar_lea.vmem %s1593, %s1782 [#allocation4]
                %s1784 = smul.u32 128, %s1780
                %s1785 = sshra.s32 %s1784, 4
                %s1786 = scalar_lea.vmem %s1603, %s1785
                // While loop
                $region133: #{autoencoder_forward.9} parent=124 // loop_pre_header
                  _
                $region134: #{autoencoder_forward.9} parent=124 // loop_header
                  %s1790 = sphi 0, %s1792
                  %p1791 = scmp.ge.s32.totalorder %s1790, %s1779
                  %s1795 = sphi 0, %s1802
                  %s1796 = sphi %s1783, %s1805
                  %s1797 = sphi %s1786, %s1806
                $region135: #{autoencoder_forward.9} parent=124 // loop_header_branch
                  %1794 = sbr.rel (%p1791) target = $region139
                $region136: #{autoencoder_forward.9} parent=124 // loop_body
                  %v1798 = vld [vmem:[%s1796] sm:$0xff]
                  %1799 = vst [vmem:[%s1797] sm:$0xff] %v1798
                  %s1800 = sadd.s32 1, %s1795
                  %p1801 = scmp.ge.s32.totalorder %s1800, %s1779
                  %s1802 = scalar_select %p1801, 0, %s1800
                  %s1803 = smul.u32 %s1802, 8
                  %s1804 = smul.u32 %s1802, 8
                  %s1805 = scalar_lea.vmem %s1783, %s1803 [#allocation4]
                  %s1806 = scalar_lea.vmem %s1786, %s1804
                $region137: #{autoencoder_forward.9} parent=124 // loop_footer
                  %s1792 = sadd.s32 %s1790, 1
                $region138: #{autoencoder_forward.9} parent=124 // loop_footer_branch
                  %1789 = sbr.rel target = $region134
                $region139: #{autoencoder_forward.9} parent=124 // loop_exit
                  _
              $region125: #{autoencoder_forward.9} parent=109 // pred_fallthru
                _
              %p1807 = pneg %p1626
              // Predicated region
              $region140: #{autoencoder_forward.9} parent=109 // pred_check
                _
              $region141: #{autoencoder_forward.9} parent=109 // pred_check_branch
                %1809 = sbr.rel (%p1626) target = $region143
              $region142: #{autoencoder_forward.9} parent=109 // pred_region
                %s1810 = sand.u32 %s1600, 7
                %s1811 = ssub.s32 %s1600, %s1810
                %s1812 = scalar_lea.vmem %s1593, %s1811 [#allocation4]
                %s1813 = ssub.s32 %s1600, %s1810
                %s1814 = scalar_lea.vmem %s1603, %s1813
                %s1815 = sshrl.u32 %s1600, 3
                %s1816 = sshrl.u32 %s1815, 6
                // While loop
                $region144: #{autoencoder_forward.9} parent=142 // loop_pre_header
                  _
                $region145: #{autoencoder_forward.9} parent=142 // loop_header
                  %s1820 = sphi 0, %s1822
                  %p1821 = scmp.ge.s32.totalorder %s1820, %s1816
                  %s1825 = sphi 0, %s1958
                  %s1826 = sphi %s1593, %s1961
                  %s1827 = sphi %s1603, %s1962
                $region146: #{autoencoder_forward.9} parent=142 // loop_header_branch
                  %1824 = sbr.rel (%p1821) target = $region150
                $region147: #{autoencoder_forward.9} parent=142 // loop_body
                  %v1828 = vld [vmem:[%s1826] sm:$0xff]
                  %1829 = vst [vmem:[%s1827] sm:$0xff] %v1828
                  %v1830 = vld [vmem:[%s1826 + $0x8] sm:$0xff]
                  %1831 = vst [vmem:[%s1827 + $0x8] sm:$0xff] %v1830
                  %v1832 = vld [vmem:[%s1826 + $0x10] sm:$0xff]
                  %1833 = vst [vmem:[%s1827 + $0x10] sm:$0xff] %v1832
                  %v1834 = vld [vmem:[%s1826 + $0x18] sm:$0xff]
                  %1835 = vst [vmem:[%s1827 + $0x18] sm:$0xff] %v1834
                  %v1836 = vld [vmem:[%s1826 + $0x20] sm:$0xff]
                  %1837 = vst [vmem:[%s1827 + $0x20] sm:$0xff] %v1836
                  %v1838 = vld [vmem:[%s1826 + $0x28] sm:$0xff]
                  %1839 = vst [vmem:[%s1827 + $0x28] sm:$0xff] %v1838
                  %v1840 = vld [vmem:[%s1826 + $0x30] sm:$0xff]
                  %1841 = vst [vmem:[%s1827 + $0x30] sm:$0xff] %v1840
                  %v1842 = vld [vmem:[%s1826 + $0x38] sm:$0xff]
                  %1843 = vst [vmem:[%s1827 + $0x38] sm:$0xff] %v1842
                  %v1844 = vld [vmem:[%s1826 + $0x40] sm:$0xff]
                  %1845 = vst [vmem:[%s1827 + $0x40] sm:$0xff] %v1844
                  %v1846 = vld [vmem:[%s1826 + $0x48] sm:$0xff]
                  %1847 = vst [vmem:[%s1827 + $0x48] sm:$0xff] %v1846
                  %v1848 = vld [vmem:[%s1826 + $0x50] sm:$0xff]
                  %1849 = vst [vmem:[%s1827 + $0x50] sm:$0xff] %v1848
                  %v1850 = vld [vmem:[%s1826 + $0x58] sm:$0xff]
                  %1851 = vst [vmem:[%s1827 + $0x58] sm:$0xff] %v1850
                  %v1852 = vld [vmem:[%s1826 + $0x60] sm:$0xff]
                  %1853 = vst [vmem:[%s1827 + $0x60] sm:$0xff] %v1852
                  %v1854 = vld [vmem:[%s1826 + $0x68] sm:$0xff]
                  %1855 = vst [vmem:[%s1827 + $0x68] sm:$0xff] %v1854
                  %v1856 = vld [vmem:[%s1826 + $0x70] sm:$0xff]
                  %1857 = vst [vmem:[%s1827 + $0x70] sm:$0xff] %v1856
                  %v1858 = vld [vmem:[%s1826 + $0x78] sm:$0xff]
                  %1859 = vst [vmem:[%s1827 + $0x78] sm:$0xff] %v1858
                  %v1860 = vld [vmem:[%s1826 + $0x80] sm:$0xff]
                  %1861 = vst [vmem:[%s1827 + $0x80] sm:$0xff] %v1860
                  %v1862 = vld [vmem:[%s1826 + $0x88] sm:$0xff]
                  %1863 = vst [vmem:[%s1827 + $0x88] sm:$0xff] %v1862
                  %v1864 = vld [vmem:[%s1826 + $0x90] sm:$0xff]
                  %1865 = vst [vmem:[%s1827 + $0x90] sm:$0xff] %v1864
                  %v1866 = vld [vmem:[%s1826 + $0x98] sm:$0xff]
                  %1867 = vst [vmem:[%s1827 + $0x98] sm:$0xff] %v1866
                  %v1868 = vld [vmem:[%s1826 + $0xa0] sm:$0xff]
                  %1869 = vst [vmem:[%s1827 + $0xa0] sm:$0xff] %v1868
                  %v1870 = vld [vmem:[%s1826 + $0xa8] sm:$0xff]
                  %1871 = vst [vmem:[%s1827 + $0xa8] sm:$0xff] %v1870
                  %v1872 = vld [vmem:[%s1826 + $0xb0] sm:$0xff]
                  %1873 = vst [vmem:[%s1827 + $0xb0] sm:$0xff] %v1872
                  %v1874 = vld [vmem:[%s1826 + $0xb8] sm:$0xff]
                  %1875 = vst [vmem:[%s1827 + $0xb8] sm:$0xff] %v1874
                  %v1876 = vld [vmem:[%s1826 + $0xc0] sm:$0xff]
                  %1877 = vst [vmem:[%s1827 + $0xc0] sm:$0xff] %v1876
                  %v1878 = vld [vmem:[%s1826 + $0xc8] sm:$0xff]
                  %1879 = vst [vmem:[%s1827 + $0xc8] sm:$0xff] %v1878
                  %v1880 = vld [vmem:[%s1826 + $0xd0] sm:$0xff]
                  %1881 = vst [vmem:[%s1827 + $0xd0] sm:$0xff] %v1880
                  %v1882 = vld [vmem:[%s1826 + $0xd8] sm:$0xff]
                  %1883 = vst [vmem:[%s1827 + $0xd8] sm:$0xff] %v1882
                  %v1884 = vld [vmem:[%s1826 + $0xe0] sm:$0xff]
                  %1885 = vst [vmem:[%s1827 + $0xe0] sm:$0xff] %v1884
                  %v1886 = vld [vmem:[%s1826 + $0xe8] sm:$0xff]
                  %1887 = vst [vmem:[%s1827 + $0xe8] sm:$0xff] %v1886
                  %v1888 = vld [vmem:[%s1826 + $0xf0] sm:$0xff]
                  %1889 = vst [vmem:[%s1827 + $0xf0] sm:$0xff] %v1888
                  %v1890 = vld [vmem:[%s1826 + $0xf8] sm:$0xff]
                  %1891 = vst [vmem:[%s1827 + $0xf8] sm:$0xff] %v1890
                  %v1892 = vld [vmem:[%s1826 + $0x100] sm:$0xff]
                  %1893 = vst [vmem:[%s1827 + $0x100] sm:$0xff] %v1892
                  %v1894 = vld [vmem:[%s1826 + $0x108] sm:$0xff]
                  %1895 = vst [vmem:[%s1827 + $0x108] sm:$0xff] %v1894
                  %v1896 = vld [vmem:[%s1826 + $0x110] sm:$0xff]
                  %1897 = vst [vmem:[%s1827 + $0x110] sm:$0xff] %v1896
                  %v1898 = vld [vmem:[%s1826 + $0x118] sm:$0xff]
                  %1899 = vst [vmem:[%s1827 + $0x118] sm:$0xff] %v1898
                  %v1900 = vld [vmem:[%s1826 + $0x120] sm:$0xff]
                  %1901 = vst [vmem:[%s1827 + $0x120] sm:$0xff] %v1900
                  %v1902 = vld [vmem:[%s1826 + $0x128] sm:$0xff]
                  %1903 = vst [vmem:[%s1827 + $0x128] sm:$0xff] %v1902
                  %v1904 = vld [vmem:[%s1826 + $0x130] sm:$0xff]
                  %1905 = vst [vmem:[%s1827 + $0x130] sm:$0xff] %v1904
                  %v1906 = vld [vmem:[%s1826 + $0x138] sm:$0xff]
                  %1907 = vst [vmem:[%s1827 + $0x138] sm:$0xff] %v1906
                  %v1908 = vld [vmem:[%s1826 + $0x140] sm:$0xff]
                  %1909 = vst [vmem:[%s1827 + $0x140] sm:$0xff] %v1908
                  %v1910 = vld [vmem:[%s1826 + $0x148] sm:$0xff]
                  %1911 = vst [vmem:[%s1827 + $0x148] sm:$0xff] %v1910
                  %v1912 = vld [vmem:[%s1826 + $0x150] sm:$0xff]
                  %1913 = vst [vmem:[%s1827 + $0x150] sm:$0xff] %v1912
                  %v1914 = vld [vmem:[%s1826 + $0x158] sm:$0xff]
                  %1915 = vst [vmem:[%s1827 + $0x158] sm:$0xff] %v1914
                  %v1916 = vld [vmem:[%s1826 + $0x160] sm:$0xff]
                  %1917 = vst [vmem:[%s1827 + $0x160] sm:$0xff] %v1916
                  %v1918 = vld [vmem:[%s1826 + $0x168] sm:$0xff]
                  %1919 = vst [vmem:[%s1827 + $0x168] sm:$0xff] %v1918
                  %v1920 = vld [vmem:[%s1826 + $0x170] sm:$0xff]
                  %1921 = vst [vmem:[%s1827 + $0x170] sm:$0xff] %v1920
                  %v1922 = vld [vmem:[%s1826 + $0x178] sm:$0xff]
                  %1923 = vst [vmem:[%s1827 + $0x178] sm:$0xff] %v1922
                  %v1924 = vld [vmem:[%s1826 + $0x180] sm:$0xff]
                  %1925 = vst [vmem:[%s1827 + $0x180] sm:$0xff] %v1924
                  %v1926 = vld [vmem:[%s1826 + $0x188] sm:$0xff]
                  %1927 = vst [vmem:[%s1827 + $0x188] sm:$0xff] %v1926
                  %v1928 = vld [vmem:[%s1826 + $0x190] sm:$0xff]
                  %1929 = vst [vmem:[%s1827 + $0x190] sm:$0xff] %v1928
                  %v1930 = vld [vmem:[%s1826 + $0x198] sm:$0xff]
                  %1931 = vst [vmem:[%s1827 + $0x198] sm:$0xff] %v1930
                  %v1932 = vld [vmem:[%s1826 + $0x1a0] sm:$0xff]
                  %1933 = vst [vmem:[%s1827 + $0x1a0] sm:$0xff] %v1932
                  %v1934 = vld [vmem:[%s1826 + $0x1a8] sm:$0xff]
                  %1935 = vst [vmem:[%s1827 + $0x1a8] sm:$0xff] %v1934
                  %v1936 = vld [vmem:[%s1826 + $0x1b0] sm:$0xff]
                  %1937 = vst [vmem:[%s1827 + $0x1b0] sm:$0xff] %v1936
                  %v1938 = vld [vmem:[%s1826 + $0x1b8] sm:$0xff]
                  %1939 = vst [vmem:[%s1827 + $0x1b8] sm:$0xff] %v1938
                  %v1940 = vld [vmem:[%s1826 + $0x1c0] sm:$0xff]
                  %1941 = vst [vmem:[%s1827 + $0x1c0] sm:$0xff] %v1940
                  %v1942 = vld [vmem:[%s1826 + $0x1c8] sm:$0xff]
                  %1943 = vst [vmem:[%s1827 + $0x1c8] sm:$0xff] %v1942
                  %v1944 = vld [vmem:[%s1826 + $0x1d0] sm:$0xff]
                  %1945 = vst [vmem:[%s1827 + $0x1d0] sm:$0xff] %v1944
                  %v1946 = vld [vmem:[%s1826 + $0x1d8] sm:$0xff]
                  %1947 = vst [vmem:[%s1827 + $0x1d8] sm:$0xff] %v1946
                  %v1948 = vld [vmem:[%s1826 + $0x1e0] sm:$0xff]
                  %1949 = vst [vmem:[%s1827 + $0x1e0] sm:$0xff] %v1948
                  %v1950 = vld [vmem:[%s1826 + $0x1e8] sm:$0xff]
                  %1951 = vst [vmem:[%s1827 + $0x1e8] sm:$0xff] %v1950
                  %v1952 = vld [vmem:[%s1826 + $0x1f0] sm:$0xff]
                  %1953 = vst [vmem:[%s1827 + $0x1f0] sm:$0xff] %v1952
                  %v1954 = vld [vmem:[%s1826 + $0x1f8] sm:$0xff]
                  %1955 = vst [vmem:[%s1827 + $0x1f8] sm:$0xff] %v1954
                  %s1956 = sadd.s32 1, %s1825
                  %p1957 = scmp.ge.s32.totalorder %s1956, %s1816
                  %s1958 = scalar_select %p1957, 0, %s1956
                  %s1959 = smul.u32 %s1958, 512
                  %s1960 = smul.u32 %s1958, 512
                  %s1961 = scalar_lea.vmem %s1593, %s1959 [#allocation4]
                  %s1962 = scalar_lea.vmem %s1603, %s1960
                $region148: #{autoencoder_forward.9} parent=142 // loop_footer
                  %s1822 = sadd.s32 %s1820, 1
                $region149: #{autoencoder_forward.9} parent=142 // loop_footer_branch
                  %1819 = sbr.rel target = $region145
                $region150: #{autoencoder_forward.9} parent=142 // loop_exit
                  _
                %s1963 = sshrl.u32 %s1815, 6
                %s1964 = sand.u32 %s1815, 63
                %s1965 = smul.u32 %s1963, 64
                %s1966 = smul.u32 128, %s1965
                %s1967 = sshra.s32 %s1966, 4
                %s1968 = scalar_lea.vmem %s1593, %s1967 [#allocation4]
                %s1969 = smul.u32 128, %s1965
                %s1970 = sshra.s32 %s1969, 4
                %s1971 = scalar_lea.vmem %s1603, %s1970
                // While loop
                $region151: #{autoencoder_forward.9} parent=142 // loop_pre_header
                  _
                $region152: #{autoencoder_forward.9} parent=142 // loop_header
                  %s1975 = sphi 0, %s1977
                  %p1976 = scmp.ge.s32.totalorder %s1975, %s1964
                  %s1980 = sphi 0, %s1987
                  %s1981 = sphi %s1968, %s1990
                  %s1982 = sphi %s1971, %s1991
                $region153: #{autoencoder_forward.9} parent=142 // loop_header_branch
                  %1979 = sbr.rel (%p1976) target = $region157
                $region154: #{autoencoder_forward.9} parent=142 // loop_body
                  %v1983 = vld [vmem:[%s1981] sm:$0xff]
                  %1984 = vst [vmem:[%s1982] sm:$0xff] %v1983
                  %s1985 = sadd.s32 1, %s1980
                  %p1986 = scmp.ge.s32.totalorder %s1985, %s1964
                  %s1987 = scalar_select %p1986, 0, %s1985
                  %s1988 = smul.u32 %s1987, 8
                  %s1989 = smul.u32 %s1987, 8
                  %s1990 = scalar_lea.vmem %s1968, %s1988 [#allocation4]
                  %s1991 = scalar_lea.vmem %s1971, %s1989
                $region155: #{autoencoder_forward.9} parent=142 // loop_footer
                  %s1977 = sadd.s32 %s1975, 1
                $region156: #{autoencoder_forward.9} parent=142 // loop_footer_branch
                  %1974 = sbr.rel target = $region152
                $region157: #{autoencoder_forward.9} parent=142 // loop_exit
                  _
                %s1992 = sshllo.u32 0, %s1810
                loop: start=0, step=1, limit=1
                $region158: #{autoencoder_forward.9} parent=142 // loop_pre_header
                  _
                $region159: #{autoencoder_forward.9} parent=142 // loop_header
                  %s1994 = sphi 0, %s1998
                  %p1995 = scmp.ge.s32.totalorder %s1994, 1
                  %s1999 = sphi %s1812, %s1812
                  %s2000 = sphi %s1814, %s1814
                $region160: #{autoencoder_forward.9} parent=142 // loop_header_branch
                  %1997 = sbr.rel (%p1995) target = $region164
                $region161: #{autoencoder_forward.9} parent=142 // loop_body
                  %v2001 = vld [vmem:[%s1999] sm:%s1992]
                  %2002 = vst [vmem:[%s2000] sm:%s1992] %v2001
                $region162: #{autoencoder_forward.9} parent=142 // loop_footer
                  %s1998 = sadd.s32 1, %s1994
                $region163: #{autoencoder_forward.9} parent=142 // loop_footer_branch
                  %1993 = sbr.rel target = $region159
                $region164: #{autoencoder_forward.9} parent=142 // loop_exit
                  _
              $region143: #{autoencoder_forward.9} parent=109 // pred_fallthru
                _
            $region110: #{autoencoder_forward.9} parent=105 // pred_fallthru
              _
            // Predicated region
            $region111: #{autoencoder_forward.9} parent=105 // pred_check
              %p1611 = pneg %p1607
            $region112: #{autoencoder_forward.9} parent=105 // pred_check_branch
              %1613 = sbr.rel (%p1611) target = $region114
            $region113: #{autoencoder_forward.9} parent=105 // pred_region
              %s1614 = sshllo.u32 0, %s1600
              loop: start=0, step=1, limit=1
              $region115: #{autoencoder_forward.9} parent=113 // loop_pre_header
                _
              $region116: #{autoencoder_forward.9} parent=113 // loop_header
                %s1616 = sphi 0, %s1620
                %p1617 = scmp.ge.s32.totalorder %s1616, 1
                %s1621 = sphi %s1593, %s1593
                %s1622 = sphi %s1603, %s1603
              $region117: #{autoencoder_forward.9} parent=113 // loop_header_branch
                %1619 = sbr.rel (%p1617) target = $region121
              $region118: #{autoencoder_forward.9} parent=113 // loop_body
                %v1623 = vld [vmem:[%s1621] sm:%s1614]
                %1624 = vst [vmem:[%s1622] sm:%s1614] %v1623
              $region119: #{autoencoder_forward.9} parent=113 // loop_footer
                %s1620 = sadd.s32 1, %s1616
              $region120: #{autoencoder_forward.9} parent=113 // loop_footer_branch
                %1615 = sbr.rel target = $region116
              $region121: #{autoencoder_forward.9} parent=113 // loop_exit
                _
            $region114: #{autoencoder_forward.9} parent=105 // pred_fallthru
              _
          $region106: #{autoencoder_forward.9} parent=101 // pred_fallthru
            _
          %2003 = vnop
        $region102: #{autoencoder_forward.9} parent=93 // pred_fallthru
          _
      $region94: #{autoencoder_forward.9} parent=5 // pred_fallthru
        _
      %p2004 = scmp.le.s32.totalorder 2, %s11
      // Predicated region
      $region165: #{autoencoder_forward.9} parent=5 // pred_check
        %p2005 = pneg %p2004
      $region166: #{autoencoder_forward.9} parent=5 // pred_check_branch
        %2007 = sbr.rel (%p2005) target = $region168
      $region167: #{autoencoder_forward.9} parent=5 // pred_region
        %s2008 = ssub.s32 %s11, 2
        // Predicated region
        $region169: #{autoencoder_forward.9} parent=167 // pred_check
          %p2009 = pneg %p108
        $region170: #{autoencoder_forward.9} parent=167 // pred_check_branch
          %2011 = sbr.rel (%p2009) target = $region172
        $region171: #{autoencoder_forward.9} parent=167 // pred_region
          %s2012 = sand.u32 %s93, 1
          %s2013 = sand.u32 %s93, 1
          %s2014 = smul.addr %s2013, 4
          %s2015 = scalar_lea.vmem [#allocation4], %s2014
        $region172: #{autoencoder_forward.9} parent=167 // pred_fallthru
          _
      $region168: #{autoencoder_forward.9} parent=5 // pred_fallthru
        _
    $region6: #{autoencoder_forward.9} parent=1 // loop_footer
      %s15 = sadd.s32 1, %s11
    $region7: #{autoencoder_forward.9} parent=1 // loop_footer_branch
      %10 = sbr.rel target = $region3
    $region8: #{autoencoder_forward.9} parent=1 // loop_exit
      _

</llo_original>
